<compile_context>
chip_gen: v7x
topology: tpu7x:2x2x1
jax: 0.10.0
libtpu: 0.0.40
codegen_flags: <defaults>
</compile_context>

<pallas_src>
import math

import jax
import jax.numpy as jnp
from jax import lax
from jax.experimental import pallas as pl
from jax.experimental.pallas import tpu as pltpu

LN_EPS = 1e-5                 # F.layer_norm default
L2_EPS = 1e-12
ATTN_SCALE = 8.0              # muse Attention default `scale`
MASK_NEG = -1e9               # large finite additive mask (exp underflows to 0 in f32)
_INV_SQRT2 = 0.7071067811865476
_LANE = 128
_SUBLANE = 8

WEIGHT_NAMES = [
    "sa_g", "sa_wq", "sa_wk", "sa_wv", "sa_qs", "sa_ks", "sa_nk", "sa_nv", "sa_wo",
    "ca_g", "ca_wq", "ca_wk", "ca_wv", "ca_qs", "ca_ks", "ca_nk", "ca_nv", "ca_wo",
    "ff_g1", "ff_w1", "ff_g2", "ff_w2",
]


def _round_up(v, m):
    return ((v + m - 1) // m) * m


# ---------------------------------------------------------------------------
# math helpers (shared by the kernel body and the pure-JAX reference)
# ---------------------------------------------------------------------------
def _layer_norm(x, gamma):
    mean = jnp.mean(x, axis=-1, keepdims=True)
    var = jnp.mean(jnp.square(x - mean), axis=-1, keepdims=True)
    return (x - mean) * lax.rsqrt(var + LN_EPS) * gamma          # beta == 0


def _l2norm(x):
    return x * lax.rsqrt(jnp.sum(x * x, axis=-1, keepdims=True) + L2_EPS)


def _gelu(x):   # exact erf-based gelu (torch F.gelu default)
    return 0.5 * x * (1.0 + lax.erf(x * _INV_SQRT2))


def _cross_bias(context_mask, B, M, kp):
    """Additive attention bias (0 keep / MASK_NEG drop), key layout = [null, ctx, pad]."""
    if context_mask is None:
        keep = jnp.ones((B, M), bool)
    else:
        keep = context_mask.astype(bool)
    keep = jnp.concatenate([jnp.ones((B, 1), bool), keep], axis=1)   # null kv visible
    keep = jnp.pad(keep, ((0, 0), (0, kp - (M + 1))), constant_values=False)
    return jnp.where(keep, 0.0, MASK_NEG).astype(jnp.float32).reshape(B, 1, kp)


# ---------------------------------------------------------------------------
# in-kernel sub-blocks
# ---------------------------------------------------------------------------
def _attn_delta(x2, kv2, bias, gamma, wq, wk, wv, qscale, kscale, nk, nv, wo,
                *, batch, n_q, n_kv, heads, dim_head, kp):
    """Cosine-sim attention output (no residual), on the flattened (B*Nq, D) stream.

    kv2 is None for self-attention (keys/values come from the normed x), otherwise the
    flattened (B*n_kv, D) context.  Fused weights: wq/wk/wv (D, H*dh) bf16 with
    head-major columns, wo (H*dh, D) bf16, nk/nv (1, H*dh) f32, qscale/kscale (1, dh)
    f32, gamma (1, D) f32.  Keys/values get a learned null row at position 0 and are
    zero-padded to `kp` (lane-dense); masking is via the additive `bias`.
    """
    HD = heads * dim_head
    xn = _layer_norm(x2, gamma)                                   # (B*Nq, D) f32
    kv = xn if kv2 is None else kv2                               # (B*n_kv, D)

    xb = xn.astype(jnp.bfloat16)
    kb = kv.astype(jnp.bfloat16)

    # wide fused projections: full MXU lane width (H*dh), no per-head LHS broadcast
    q = jnp.dot(xb, wq, preferred_element_type=jnp.float32).reshape(batch, n_q, HD)
    k = jnp.dot(kb, wk, preferred_element_type=jnp.float32).reshape(batch, n_kv, HD)
    v = jnp.dot(kb, wv, preferred_element_type=jnp.float32).reshape(batch, n_kv, HD)

    # prepend learned null k/v, zero-pad keys to the lane-dense length kp
    nk_b = jnp.broadcast_to(nk.reshape(1, 1, HD), (batch, 1, HD))
    nv_b = jnp.broadcast_to(nv.reshape(1, 1, HD), (batch, 1, HD))
    parts_k, parts_v = [nk_b, k], [nv_b, v]
    pad = kp - 1 - n_kv
    if pad > 0:
        z = jnp.zeros((batch, pad, HD), jnp.float32)
        parts_k.append(z)
        parts_v.append(z)
    kf = jnp.concatenate(parts_k, axis=1)                         # (B, kp, HD)
    vf = jnp.concatenate(parts_v, axis=1)

    # per-head attention core (batched over B via dot_general batch dims); on TPU a
    # head-batched dot unrolls into per-head matmuls anyway, so a static loop is fine.
    head_outs = []
    for h in range(heads):
        lo, hi = h * dim_head, (h + 1) * dim_head
        qh = _l2norm(q[:, :, lo:hi]) * qscale                     # (B, Nq, dh)
        kh = _l2norm(kf[:, :, lo:hi]) * kscale                    # (B, kp, dh)
        vh = vf[:, :, lo:hi]
        sim = jnp.einsum('bne,bke->bnk', qh.astype(jnp.bfloat16), kh.astype(jnp.bfloat16),
                         preferred_element_type=jnp.float32) * ATTN_SCALE
        sim = sim + bias                                          # additive mask
        m = jnp.max(sim, axis=-1, keepdims=True)
        p = jnp.exp(sim - m)
        attn = p * pl.reciprocal(jnp.sum(p, axis=-1, keepdims=True), approx=True)
        head_outs.append(
            jnp.einsum('bnk,bke->bne', attn.astype(jnp.bfloat16), vh.astype(jnp.bfloat16),
                       preferred_element_type=jnp.float32))       # (B, Nq, dh)

    # concat heads on the lane axis, single fused output projection (head-sum in MXU)
    o = jnp.concatenate(head_outs, axis=-1).reshape(batch * n_q, HD)
    return jnp.dot(o.astype(jnp.bfloat16), wo, preferred_element_type=jnp.float32)


def _ff_delta(x2, g1, w1, g2, w2, *, inner):
    """GEGLU feed-forward output (no residual). x2: (B*N, D) f32."""
    xn = _layer_norm(x2, g1)
    h = jnp.dot(xn.astype(jnp.bfloat16), w1, preferred_element_type=jnp.float32)
    a = h[:, :inner]
    gate = h[:, inner:]
    gn = _layer_norm(gate * _gelu(a), g2)
    return jnp.dot(gn.astype(jnp.bfloat16), w2, preferred_element_type=jnp.float32)


# ---------------------------------------------------------------------------
# fused transformer kernel: grid = (depth,); residual stream carried in VMEM scratch
# ---------------------------------------------------------------------------
def _make_kernel(*, batch, n_q, n_ctx, heads, dim_head, inner_ff, kp_self, kp_cross):
    def kernel(x_ref, ctx_ref, sbias_ref, cbias_ref,
               sa_g, sa_wq, sa_wk, sa_wv, sa_qs, sa_ks, sa_nk, sa_nv, sa_wo,
               ca_g, ca_wq, ca_wk, ca_wv, ca_qs, ca_ks, ca_nk, ca_nv, ca_wo,
               ff_g1, ff_w1, ff_g2, ff_w2, fin_g,
               out_ref, x_sc):
        layer = pl.program_id(0)

        @pl.when(layer == 0)
        def _():
            x_sc[...] = x_ref[...]

        x = x_sc[...]                                             # (B*N, D) f32

        # self-attention (keys = normed x + null kv; pad keys masked via sbias)
        x = x + _attn_delta(
            x, None, sbias_ref[0],
            sa_g[0], sa_wq[0], sa_wk[0], sa_wv[0], sa_qs[0], sa_ks[0],
            sa_nk[0], sa_nv[0], sa_wo[0],
            batch=batch, n_q=n_q, n_kv=n_q, heads=heads, dim_head=dim_head,
            kp=kp_self)

        # cross-attention over the (raw, un-normed) context with additive mask
        x = x + _attn_delta(
            x, ctx_ref[...], cbias_ref[...],
            ca_g[0], ca_wq[0], ca_wk[0], ca_wv[0], ca_qs[0], ca_ks[0],
            ca_nk[0], ca_nv[0], ca_wo[0],
            batch=batch, n_q=n_q, n_kv=n_ctx, heads=heads, dim_head=dim_head,
            kp=kp_cross)

        # GEGLU feed-forward
        x = x + _ff_delta(x, ff_g1[0], ff_w1[0], ff_g2[0], ff_w2[0], inner=inner_ff)

        x_sc[...] = x

        @pl.when(layer == pl.num_programs(0) - 1)
        def _():
            out_ref[...] = _layer_norm(x, fin_g[...])

    return kernel


def transformer_blocks_forward(x, context, context_mask, params):
    B, N, D = x.shape
    M = context.shape[1]
    depth = params["sa_wq"].shape[0]
    HD = params["sa_wq"].shape[-1]
    dim_head = params["sa_qs"].shape[-1]
    heads = HD // dim_head
    inner_ff = params["ff_g2"].shape[-1]

    assert N % _SUBLANE == 0, "sequence length must be a multiple of 8 (pad upstream)"
    Mp = _round_up(M, _SUBLANE)
    kp_self = _round_up(N + 1, _LANE)
    kp_cross = _round_up(Mp + 1, _LANE)

    # pad context rows to a sublane multiple; padded rows are masked out via cbias
    ctx_p = jnp.pad(context.astype(jnp.float32), ((0, 0), (0, Mp - M), (0, 0)))
    cbias = _cross_bias(context_mask, B, M, kp_cross)                  # (B, 1, kp_cross)
    sbias = jnp.where(jnp.arange(kp_self)[None, None, :] < N + 1,
                      0.0, MASK_NEG).astype(jnp.float32)               # (1, 1, kp_self)

    x2 = x.astype(jnp.float32).reshape(B * N, D)
    ctx2 = ctx_p.reshape(B * Mp, D)

    w_args = [params[n] for n in WEIGHT_NAMES]
    fin_g = params["final_gamma"]

    def wspec(p):   # per-layer stacked weight: stream one layer's slice per grid step
        nd = p.ndim
        return pl.BlockSpec((1,) + p.shape[1:],
                            lambda l, nd=nd: (l,) + (0,) * (nd - 1))

    def fullspec(p):  # whole-array block, constant index -> DMA'd once, stays resident
        nd = p.ndim
        return pl.BlockSpec(p.shape, lambda l, nd=nd: (0,) * nd)

    in_specs = ([fullspec(x2), fullspec(ctx2), fullspec(sbias), fullspec(cbias)]
                + [wspec(p) for p in w_args]
                + [fullspec(fin_g)])

    kernel = _make_kernel(batch=B, n_q=N, n_ctx=Mp, heads=heads, dim_head=dim_head,
                          inner_ff=inner_ff, kp_self=kp_self, kp_cross=kp_cross)

    out2 = pl.pallas_call(
        kernel,
        out_shape=jax.ShapeDtypeStruct((B * N, D), jnp.float32),
        grid=(depth,),
        in_specs=in_specs,
        out_specs=pl.BlockSpec((B * N, D), lambda l: (0, 0)),
        scratch_shapes=[pltpu.VMEM((B * N, D), jnp.float32)],
        compiler_params=pltpu.CompilerParams(
            dimension_semantics=("arbitrary",)),   # layer axis is sequential
    )(x2, ctx2, sbias, cbias, *w_args, fin_g)

    return out2.reshape(B, N, D)


# ---------------------------------------------------------------------------
# parameter init (deterministic, synthetic), stored directly in kernel layout
# ---------------------------------------------------------------------------
def init_params(key, *, dim, depth, heads, dim_head, inner_ff):
    hd = heads * dim_head

    def lin(k, fi, fo):
        b = 1.0 / math.sqrt(fi)
        return jax.random.uniform(k, (fi, fo), jnp.float32, -b, b)

    per_layer = {n: [] for n in WEIGHT_NAMES}
    for l in range(depth):
        it = iter(jax.random.split(jax.random.fold_in(key, l), 32))
        for pre in ("sa", "ca"):
            wq = lin(next(it), dim, hd)                    # head-major columns
            wkv = lin(next(it), dim, 2 * hd)
            wo = lin(next(it), hd, dim)
            per_layer[pre + "_g"].append(
                1.0 + 0.1 * jax.random.normal(next(it), (1, dim), jnp.float32))
            per_layer[pre + "_wq"].append(wq.astype(jnp.bfloat16))
            per_layer[pre + "_wk"].append(wkv[:, :hd].astype(jnp.bfloat16))
            per_layer[pre + "_wv"].append(wkv[:, hd:].astype(jnp.bfloat16))
            per_layer[pre + "_qs"].append(
                1.0 + 0.1 * jax.random.normal(next(it), (1, dim_head), jnp.float32))
            per_layer[pre + "_ks"].append(
                1.0 + 0.1 * jax.random.normal(next(it), (1, dim_head), jnp.float32))
            per_layer[pre + "_nk"].append(
                jax.random.normal(next(it), (heads, dim_head),
                                  jnp.float32).reshape(1, hd))
            per_layer[pre + "_nv"].append(
                jax.random.normal(next(it), (heads, dim_head),
                                  jnp.float32).reshape(1, hd))
            per_layer[pre + "_wo"].append(wo.astype(jnp.bfloat16))
        per_layer["ff_g1"].append(
            1.0 + 0.1 * jax.random.normal(next(it), (1, dim), jnp.float32))
        per_layer["ff_w1"].append(lin(next(it), dim, inner_ff * 2).astype(jnp.bfloat16))
        per_layer["ff_g2"].append(
            1.0 + 0.1 * jax.random.normal(next(it), (1, inner_ff), jnp.float32))
        per_layer["ff_w2"].append(lin(next(it), inner_ff, dim).astype(jnp.bfloat16))

    params = {n: jnp.stack(v, axis=0) for n, v in per_layer.items()}
    params["final_gamma"] = 1.0 + 0.1 * jax.random.normal(
        jax.random.fold_in(key, 10_000), (1, dim), jnp.float32)
    return params


# ---------------------------------------------------------------------------
# pure-JAX reference (same math / same bf16 matmul precision) for self-check
# ---------------------------------------------------------------------------
def _ref_forward(x, context, context_mask, params):
    B, N, D = x.shape
    M = context.shape[1]
    depth = params["sa_wq"].shape[0]
    HD = params["sa_wq"].shape[-1]
    dh = params["sa_qs"].shape[-1]
    H = HD // dh
    inner = params["ff_g2"].shape[-1]

    if context_mask is None:
        cm = jnp.ones((B, M), bool)
    else:
        cm = context_mask.astype(bool)
    ckeep = jnp.concatenate([jnp.ones((B, 1), bool), cm], axis=1)       # (B, M+1)
    cbias = jnp.where(ckeep, 0.0, MASK_NEG)[:, None, None, :].astype(jnp.float32)
    sbias = jnp.zeros((1, 1, 1, 1), jnp.float32)                        # all visible

    def attn(xx, kv, bias, g, wq, wk, wv, qs, ks, nk, nv, wo):
        xn = _layer_norm(xx, g)
        kvi = xn if kv is None else kv
        S = kvi.shape[1]
        q = jnp.einsum('bnd,df->bnf', xn.astype(jnp.bfloat16), wq,
                       preferred_element_type=jnp.float32
                       ).reshape(B, -1, H, dh).transpose(0, 2, 1, 3)
        k = jnp.einsum('bsd,df->bsf', kvi.astype(jnp.bfloat16), wk,
                       preferred_element_type=jnp.float32
                       ).reshape(B, S, H, dh).transpose(0, 2, 1, 3)
        v = jnp.einsum('bsd,df->bsf', kvi.astype(jnp.bfloat16), wv,
                       preferred_element_type=jnp.float32
                       ).reshape(B, S, H, dh).transpose(0, 2, 1, 3)
        nk4 = jnp.broadcast_to(nk.reshape(1, H, 1, dh), (B, H, 1, dh))
        nv4 = jnp.broadcast_to(nv.reshape(1, H, 1, dh), (B, H, 1, dh))
        k = jnp.concatenate([nk4, k], axis=2)
        v = jnp.concatenate([nv4, v], axis=2)
        q = _l2norm(q) * qs
        k = _l2norm(k) * ks
        sim = jnp.einsum('bhne,bhke->bhnk', q.astype(jnp.bfloat16),
                         k.astype(jnp.bfloat16),
                         preferred_element_type=jnp.float32) * ATTN_SCALE + bias
        w = jax.nn.softmax(sim, axis=-1)
        o = jnp.einsum('bhnk,bhke->bhne', w.astype(jnp.bfloat16),
                       v.astype(jnp.bfloat16), preferred_element_type=jnp.float32)
        o = o.transpose(0, 2, 1, 3).reshape(B, -1, HD)
        return jnp.einsum('bnf,fd->bnd', o.astype(jnp.bfloat16), wo,
                          preferred_element_type=jnp.float32)

    def ff(xx, g1, w1, g2, w2):
        xn = _layer_norm(xx, g1)
        h = jnp.einsum('bnd,df->bnf', xn.astype(jnp.bfloat16), w1,
                       preferred_element_type=jnp.float32)
        a, gate = h[..., :inner], h[..., inner:]
        gn = _layer_norm(gate * _gelu(a), g2)
        return jnp.einsum('bnf,fd->bnd', gn.astype(jnp.bfloat16), w2,
                          preferred_element_type=jnp.float32)

    for l in range(depth):
        p = {n: params[n][l] for n in WEIGHT_NAMES}
        x = x + attn(x, None, sbias, p["sa_g"], p["sa_wq"], p["sa_wk"], p["sa_wv"],
                     p["sa_qs"], p["sa_ks"], p["sa_nk"], p["sa_nv"], p["sa_wo"])
        x = x + attn(x, context, cbias, p["ca_g"], p["ca_wq"], p["ca_wk"], p["ca_wv"],
                     p["ca_qs"], p["ca_ks"], p["ca_nk"], p["ca_nv"], p["ca_wo"])
        x = x + ff(x, p["ff_g1"], p["ff_w1"], p["ff_g2"], p["ff_w2"])
    return _layer_norm(x, params["final_gamma"])


# ---------------------------------------------------------------------------
if __name__ == "__main__":
    dim, depth, heads, dim_head, ff_mult = 128, 2, 4, 64, 3
    B, N, M = 2, 8, 6
    inner_ff = int(dim * ff_mult * 2 / 3)          # 256

    root = jax.random.PRNGKey(0)
    kx, kc, kpar = jax.random.split(root, 3)
    x = jax.random.normal(kx, (B, N, dim), jnp.float32)
    context = jax.random.normal(kc, (B, M, dim), jnp.float32)
    context_mask = jnp.array([[True] * M, [True] * 4 + [False] * 2])

    params = init_params(kpar, dim=dim, depth=depth, heads=heads,
                         dim_head=dim_head, inner_ff=inner_ff)

    out = transformer_blocks_forward(x, context, context_mask, params)
    out = jax.block_until_ready(out)

    ref = _ref_forward(x, context, context_mask, params)
    err = float(jnp.max(jnp.abs(out - ref)))

    assert out.shape == (B, N, dim)
    assert bool(jnp.allclose(out, ref, atol=3e-2, rtol=3e-2)), err
    print("KERNEL_OK")
</pallas_src>

<mosaic_0001>
module attributes {stable_mosaic.version = 11 : i64} {
  func.func @kernel(%arg0: i32, %arg1: memref<16x128xf32, #tpu.memory_space<vmem>>, %arg2: memref<16x128xf32, #tpu.memory_space<vmem>>, %arg3: memref<1x1x128xf32, #tpu.memory_space<vmem>>, %arg4: memref<2x1x128xf32, #tpu.memory_space<vmem>>, %arg5: memref<1x1x128xf32, #tpu.memory_space<vmem>>, %arg6: memref<1x128x256xbf16, #tpu.memory_space<vmem>>, %arg7: memref<1x128x256xbf16, #tpu.memory_space<vmem>>, %arg8: memref<1x128x256xbf16, #tpu.memory_space<vmem>>, %arg9: memref<1x1x64xf32, #tpu.memory_space<vmem>>, %arg10: memref<1x1x64xf32, #tpu.memory_space<vmem>>, %arg11: memref<1x1x256xf32, #tpu.memory_space<vmem>>, %arg12: memref<1x1x256xf32, #tpu.memory_space<vmem>>, %arg13: memref<1x256x128xbf16, #tpu.memory_space<vmem>>, %arg14: memref<1x1x128xf32, #tpu.memory_space<vmem>>, %arg15: memref<1x128x256xbf16, #tpu.memory_space<vmem>>, %arg16: memref<1x128x256xbf16, #tpu.memory_space<vmem>>, %arg17: memref<1x128x256xbf16, #tpu.memory_space<vmem>>, %arg18: memref<1x1x64xf32, #tpu.memory_space<vmem>>, %arg19: memref<1x1x64xf32, #tpu.memory_space<vmem>>, %arg20: memref<1x1x256xf32, #tpu.memory_space<vmem>>, %arg21: memref<1x1x256xf32, #tpu.memory_space<vmem>>, %arg22: memref<1x256x128xbf16, #tpu.memory_space<vmem>>, %arg23: memref<1x1x128xf32, #tpu.memory_space<vmem>>, %arg24: memref<1x128x512xbf16, #tpu.memory_space<vmem>>, %arg25: memref<1x1x256xf32, #tpu.memory_space<vmem>>, %arg26: memref<1x256x128xbf16, #tpu.memory_space<vmem>>, %arg27: memref<1x128xf32, #tpu.memory_space<vmem>>, %arg28: memref<16x128xf32, #tpu.memory_space<vmem>>, %arg29: memref<16x128xf32, #tpu.memory_space<vmem>>) attributes {dimension_semantics = [#tpu.dimension_semantics<arbitrary>], iteration_bounds = array<i64: 2>, scalar_prefetch = 0 : i64, scratch_operands = 1 : i64, tpu.core_type = #tpu.core_type<tc>, window_params = [{pipeline_mode = #tpu.pipeline_mode<synchronous>, transform_indices = @transform_0, window_bounds = array<i64: 16, 128>}, {pipeline_mode = #tpu.pipeline_mode<synchronous>, transform_indices = @transform_1, window_bounds = array<i64: 16, 128>}, {pipeline_mode = #tpu.pipeline_mode<synchronous>, transform_indices = @transform_2, window_bounds = array<i64: 1, 1, 128>}, {pipeline_mode = #tpu.pipeline_mode<synchronous>, transform_indices = @transform_3, window_bounds = array<i64: 2, 1, 128>}, {transform_indices = @transform_4, window_bounds = array<i64: 1, 1, 128>}, {transform_indices = @transform_5, window_bounds = array<i64: 1, 128, 256>}, {transform_indices = @transform_6, window_bounds = array<i64: 1, 128, 256>}, {transform_indices = @transform_7, window_bounds = array<i64: 1, 128, 256>}, {transform_indices = @transform_8, window_bounds = array<i64: 1, 1, 64>}, {transform_indices = @transform_9, window_bounds = array<i64: 1, 1, 64>}, {transform_indices = @transform_10, window_bounds = array<i64: 1, 1, 256>}, {transform_indices = @transform_11, window_bounds = array<i64: 1, 1, 256>}, {transform_indices = @transform_12, window_bounds = array<i64: 1, 256, 128>}, {transform_indices = @transform_13, window_bounds = array<i64: 1, 1, 128>}, {transform_indices = @transform_14, window_bounds = array<i64: 1, 128, 256>}, {transform_indices = @transform_15, window_bounds = array<i64: 1, 128, 256>}, {transform_indices = @transform_16, window_bounds = array<i64: 1, 128, 256>}, {transform_indices = @transform_17, window_bounds = array<i64: 1, 1, 64>}, {transform_indices = @transform_18, window_bounds = array<i64: 1, 1, 64>}, {transform_indices = @transform_19, window_bounds = array<i64: 1, 1, 256>}, {transform_indices = @transform_20, window_bounds = array<i64: 1, 1, 256>}, {transform_indices = @transform_21, window_bounds = array<i64: 1, 256, 128>}, {transform_indices = @transform_22, window_bounds = array<i64: 1, 1, 128>}, {transform_indices = @transform_23, window_bounds = array<i64: 1, 128, 512>}, {transform_indices = @transform_24, window_bounds = array<i64: 1, 1, 256>}, {transform_indices = @transform_25, window_bounds = array<i64: 1, 256, 128>}, {pipeline_mode = #tpu.pipeline_mode<synchronous>, transform_indices = @transform_26, window_bounds = array<i64: 1, 128>}, {pipeline_mode = #tpu.pipeline_mode<synchronous>, transform_indices = @transform_27, window_bounds = array<i64: 16, 128>}]} {
    %c0_i32 = arith.constant 0 : i32
    %0 = arith.cmpi eq, %arg0, %c0_i32 : i32
    %1 = arith.extui %0 : i1 to i32
    %c0_i32_0 = arith.constant 0 : i32
    %2 = arith.cmpi ne, %1, %c0_i32_0 : i32
    scf.if %2 {
      %c0_185 = arith.constant 0 : index
      %c0_186 = arith.constant 0 : index
      %560 = vector.load %arg1[%c0_185, %c0_186] : memref<16x128xf32, #tpu.memory_space<vmem>>, vector<16x128xf32>
      %c0_187 = arith.constant 0 : index
      %c0_188 = arith.constant 0 : index
      %561 = vector.load %arg29[%c0_187, %c0_188] : memref<16x128xf32, #tpu.memory_space<vmem>>, vector<16x128xf32>
      tpu.vector_store %arg29[%c0_187, %c0_188], %560 {strides = array<i32>} : memref<16x128xf32, #tpu.memory_space<vmem>>, vector<16x128xf32>,
    } else {
    }
    %c0 = arith.constant 0 : index
    %c0_1 = arith.constant 0 : index
    %3 = vector.load %arg29[%c0, %c0_1] : memref<16x128xf32, #tpu.memory_space<vmem>>, vector<16x128xf32>
    %c0_2 = arith.constant 0 : index
    %c0_3 = arith.constant 0 : index
    %c0_4 = arith.constant 0 : index
    %4 = vector.load %arg3[%c0_2, %c0_3, %c0_4] : memref<1x1x128xf32, #tpu.memory_space<vmem>>, vector<1x1x128xf32>
    %5 = vector.shape_cast %4 : vector<1x1x128xf32> to vector<1x128xf32>
    %c0_5 = arith.constant 0 : index
    %c0_6 = arith.constant 0 : index
    %c0_7 = arith.constant 0 : index
    %6 = vector.load %arg5[%c0_5, %c0_6, %c0_7] : memref<1x1x128xf32, #tpu.memory_space<vmem>>, vector<1x1x128xf32>
    %7 = vector.shape_cast %6 : vector<1x1x128xf32> to vector<1x128xf32>
    %c0_8 = arith.constant 0 : index
    %c0_9 = arith.constant 0 : index
    %c0_10 = arith.constant 0 : index
    %8 = vector.load %arg6[%c0_8, %c0_9, %c0_10] : memref<1x128x256xbf16, #tpu.memory_space<vmem>>, vector<1x128x256xbf16>
    %9 = vector.shape_cast %8 : vector<1x128x256xbf16> to vector<128x256xbf16>
    %c0_11 = arith.constant 0 : index
    %c0_12 = arith.constant 0 : index
    %c0_13 = arith.constant 0 : index
    %10 = vector.load %arg7[%c0_11, %c0_12, %c0_13] : memref<1x128x256xbf16, #tpu.memory_space<vmem>>, vector<1x128x256xbf16>
    %11 = vector.shape_cast %10 : vector<1x128x256xbf16> to vector<128x256xbf16>
    %c0_14 = arith.constant 0 : index
    %c0_15 = arith.constant 0 : index
    %c0_16 = arith.constant 0 : index
    %12 = vector.load %arg8[%c0_14, %c0_15, %c0_16] : memref<1x128x256xbf16, #tpu.memory_space<vmem>>, vector<1x128x256xbf16>
    %13 = vector.shape_cast %12 : vector<1x128x256xbf16> to vector<128x256xbf16>
    %c0_17 = arith.constant 0 : index
    %c0_18 = arith.constant 0 : index
    %c0_19 = arith.constant 0 : index
    %14 = vector.load %arg9[%c0_17, %c0_18, %c0_19] : memref<1x1x64xf32, #tpu.memory_space<vmem>>, vector<1x1x64xf32>
    %15 = vector.shape_cast %14 : vector<1x1x64xf32> to vector<1x64xf32>
    %c0_20 = arith.constant 0 : index
    %c0_21 = arith.constant 0 : index
    %c0_22 = arith.constant 0 : index
    %16 = vector.load %arg10[%c0_20, %c0_21, %c0_22] : memref<1x1x64xf32, #tpu.memory_space<vmem>>, vector<1x1x64xf32>
    %17 = vector.shape_cast %16 : vector<1x1x64xf32> to vector<1x64xf32>
    %c0_23 = arith.constant 0 : index
    %c0_24 = arith.constant 0 : index
    %c0_25 = arith.constant 0 : index
    %18 = vector.load %arg11[%c0_23, %c0_24, %c0_25] : memref<1x1x256xf32, #tpu.memory_space<vmem>>, vector<1x1x256xf32>
    %19 = vector.shape_cast %18 : vector<1x1x256xf32> to vector<1x256xf32>
    %c0_26 = arith.constant 0 : index
    %c0_27 = arith.constant 0 : index
    %c0_28 = arith.constant 0 : index
    %20 = vector.load %arg12[%c0_26, %c0_27, %c0_28] : memref<1x1x256xf32, #tpu.memory_space<vmem>>, vector<1x1x256xf32>
    %21 = vector.shape_cast %20 : vector<1x1x256xf32> to vector<1x256xf32>
    %c0_29 = arith.constant 0 : index
    %c0_30 = arith.constant 0 : index
    %c0_31 = arith.constant 0 : index
    %22 = vector.load %arg13[%c0_29, %c0_30, %c0_31] : memref<1x256x128xbf16, #tpu.memory_space<vmem>>, vector<1x256x128xbf16>
    %23 = vector.shape_cast %22 : vector<1x256x128xbf16> to vector<256x128xbf16>
    %cst = arith.constant dense<0.000000e+00> : vector<16xf32>
    %24 = vector.multi_reduction <add>, %3, %cst [1] : vector<16x128xf32> to vector<16xf32>
    %25 = vector.shape_cast %24 : vector<16xf32> to vector<16x1xf32>
    %cst_32 = arith.constant 1.280000e+02 : f32
    %26 = vector.broadcast %cst_32 : f32 to vector<16x1xf32>
    %27 = arith.divf %25, %26 : vector<16x1xf32>
    %28 = vector.broadcast %27 : vector<16x1xf32> to vector<16x128xf32>
    %29 = arith.subf %3, %28 : vector<16x128xf32>
    %30 = arith.mulf %29, %29 : vector<16x128xf32>
    %cst_33 = arith.constant dense<0.000000e+00> : vector<16xf32>
    %31 = vector.multi_reduction <add>, %30, %cst_33 [1] : vector<16x128xf32> to vector<16xf32>
    %32 = vector.shape_cast %31 : vector<16xf32> to vector<16x1xf32>
    %cst_34 = arith.constant 1.280000e+02 : f32
    %33 = vector.broadcast %cst_34 : f32 to vector<16x1xf32>
    %34 = arith.divf %32, %33 : vector<16x1xf32>
    %35 = vector.broadcast %27 : vector<16x1xf32> to vector<16x128xf32>
    %36 = arith.subf %3, %35 : vector<16x128xf32>
    %cst_35 = arith.constant 9.99999974E-6 : f32
    %37 = vector.broadcast %cst_35 : f32 to vector<16x1xf32>
    %38 = arith.addf %34, %37 : vector<16x1xf32>
    %39 = math.rsqrt %38 : vector<16x1xf32>
    %40 = vector.broadcast %39 : vector<16x1xf32> to vector<16x128xf32>
    %41 = arith.mulf %36, %40 : vector<16x128xf32>
    %42 = vector.broadcast %7 : vector<1x128xf32> to vector<16x128xf32>
    %43 = arith.mulf %41, %42 : vector<16x128xf32>
    %44 = arith.truncf %43 : vector<16x128xf32> to vector<16x128xbf16>
    %45 = arith.truncf %43 : vector<16x128xf32> to vector<16x128xbf16>
    %cst_36 = arith.constant dense<0.000000e+00> : vector<16x256xf32>
    %46 = tpu.matmul %44, %9, %cst_36 {dimension_numbers = #tpu.dot_dimension_numbers<[1], [0], [0], [1], [0, 0, 1, 1], [], []>} : vector<16x128xbf16>, vector<128x256xbf16>, vector<16x256xf32> -> vector<16x256xf32>
    %47 = vector.shape_cast %46 : vector<16x256xf32> to vector<2x8x256xf32>
    %cst_37 = arith.constant dense<0.000000e+00> : vector<16x256xf32>
    %48 = tpu.matmul %45, %11, %cst_37 {dimension_numbers = #tpu.dot_dimension_numbers<[1], [0], [0], [1], [0, 0, 1, 1], [], []>} : vector<16x128xbf16>, vector<128x256xbf16>, vector<16x256xf32> -> vector<16x256xf32>
    %49 = vector.shape_cast %48 : vector<16x256xf32> to vector<2x8x256xf32>
    %cst_38 = arith.constant dense<0.000000e+00> : vector<16x256xf32>
    %50 = tpu.matmul %45, %13, %cst_38 {dimension_numbers = #tpu.dot_dimension_numbers<[1], [0], [0], [1], [0, 0, 1, 1], [], []>} : vector<16x128xbf16>, vector<128x256xbf16>, vector<16x256xf32> -> vector<16x256xf32>
    %51 = vector.shape_cast %50 : vector<16x256xf32> to vector<2x8x256xf32>
    %52 = vector.shape_cast %19 : vector<1x256xf32> to vector<1x1x256xf32>
    %53 = vector.shape_cast %52 : vector<1x1x256xf32> to vector<1x1x256xf32>
    %54 = vector.broadcast %53 : vector<1x1x256xf32> to vector<2x1x256xf32>
    %55 = vector.shape_cast %21 : vector<1x256xf32> to vector<1x1x256xf32>
    %56 = vector.shape_cast %55 : vector<1x1x256xf32> to vector<1x1x256xf32>
    %57 = vector.broadcast %56 : vector<1x1x256xf32> to vector<2x1x256xf32>
    %cst_39 = arith.constant 0.000000e+00 : f32
    %58 = vector.broadcast %cst_39 : f32 to vector<2x119x256xf32>
    %59 = tpu.concatenate %54, %49, %58 in 1 : vector<2x1x256xf32>, vector<2x8x256xf32>, vector<2x119x256xf32> -> vector<2x128x256xf32>
    %60 = tpu.concatenate %57, %51, %58 in 1 : vector<2x1x256xf32>, vector<2x8x256xf32>, vector<2x119x256xf32> -> vector<2x128x256xf32>
    %61 = vector.extract_strided_slice %47 {offsets = [0, 0, 0], sizes = [2, 8, 64], strides = [1, 1, 1]} : vector<2x8x256xf32> to vector<2x8x64xf32>
    %62 = arith.mulf %61, %61 : vector<2x8x64xf32>
    %cst_40 = arith.constant dense<0.000000e+00> : vector<2x8xf32>
    %63 = vector.multi_reduction <add>, %62, %cst_40 [2] : vector<2x8x64xf32> to vector<2x8xf32>
    %64 = vector.shape_cast %63 : vector<2x8xf32> to vector<2x8x1xf32>
    %cst_41 = arith.constant 9.99999996E-13 : f32
    %65 = vector.broadcast %cst_41 : f32 to vector<2x8x1xf32>
    %66 = arith.addf %64, %65 : vector<2x8x1xf32>
    %67 = math.rsqrt %66 : vector<2x8x1xf32>
    %68 = vector.broadcast %67 : vector<2x8x1xf32> to vector<2x8x64xf32>
    %69 = arith.mulf %61, %68 : vector<2x8x64xf32>
    %70 = vector.shape_cast %15 : vector<1x64xf32> to vector<1x1x64xf32>
    %71 = vector.broadcast %70 : vector<1x1x64xf32> to vector<2x8x64xf32>
    %72 = arith.mulf %69, %71 : vector<2x8x64xf32>
    %73 = vector.extract_strided_slice %59 {offsets = [0, 0, 0], sizes = [2, 128, 64], strides = [1, 1, 1]} : vector<2x128x256xf32> to vector<2x128x64xf32>
    %74 = arith.mulf %73, %73 : vector<2x128x64xf32>
    %cst_42 = arith.constant dense<0.000000e+00> : vector<2x128xf32>
    %75 = vector.multi_reduction <add>, %74, %cst_42 [2] : vector<2x128x64xf32> to vector<2x128xf32>
    %76 = vector.shape_cast %75 : vector<2x128xf32> to vector<2x128x1xf32>
    %cst_43 = arith.constant 9.99999996E-13 : f32
    %77 = vector.broadcast %cst_43 : f32 to vector<2x128x1xf32>
    %78 = arith.addf %76, %77 : vector<2x128x1xf32>
    %79 = math.rsqrt %78 : vector<2x128x1xf32>
    %80 = vector.broadcast %79 : vector<2x128x1xf32> to vector<2x128x64xf32>
    %81 = arith.mulf %73, %80 : vector<2x128x64xf32>
    %82 = vector.shape_cast %17 : vector<1x64xf32> to vector<1x1x64xf32>
    %83 = vector.broadcast %82 : vector<1x1x64xf32> to vector<2x128x64xf32>
    %84 = arith.mulf %81, %83 : vector<2x128x64xf32>
    %85 = vector.extract_strided_slice %60 {offsets = [0, 0, 0], sizes = [2, 128, 64], strides = [1, 1, 1]} : vector<2x128x256xf32> to vector<2x128x64xf32>
    %86 = arith.truncf %72 : vector<2x8x64xf32> to vector<2x8x64xbf16>
    %87 = arith.truncf %84 : vector<2x128x64xf32> to vector<2x128x64xbf16>
    "tpu.trace_start"() <{level = 10 : i32, message = "bne,bke->bnk"}> : () -> ()
    %cst_44 = arith.constant dense<0.000000e+00> : vector<2x8x128xf32>
    %88 = tpu.matmul %86, %87, %cst_44 {dimension_numbers = #tpu.dot_dimension_numbers<[2], [2], [1], [1], [0, 0, 0, 1, 1, 1], [0], [0]>} : vector<2x8x64xbf16>, vector<2x128x64xbf16>, vector<2x8x128xf32> -> vector<2x8x128xf32>
    "tpu.trace_stop"() : () -> ()
    %cst_45 = arith.constant 8.000000e+00 : f32
    %89 = vector.broadcast %cst_45 : f32 to vector<2x8x128xf32>
    %90 = arith.mulf %88, %89 : vector<2x8x128xf32>
    %91 = vector.shape_cast %5 : vector<1x128xf32> to vector<1x1x128xf32>
    %92 = vector.broadcast %91 : vector<1x1x128xf32> to vector<2x8x128xf32>
    %93 = arith.addf %90, %92 : vector<2x8x128xf32>
    %cst_46 = arith.constant dense<0xFF800000> : vector<2x8xf32>
    %94 = vector.multi_reduction <maximumf>, %93, %cst_46 [2] : vector<2x8x128xf32> to vector<2x8xf32>
    %95 = vector.shape_cast %94 : vector<2x8xf32> to vector<2x8x1xf32>
    %96 = vector.broadcast %95 : vector<2x8x1xf32> to vector<2x8x128xf32>
    %97 = arith.subf %93, %96 : vector<2x8x128xf32>
    %98 = math.exp %97 : vector<2x8x128xf32>
    %cst_47 = arith.constant dense<0.000000e+00> : vector<2x8xf32>
    %99 = vector.multi_reduction <add>, %98, %cst_47 [2] : vector<2x8x128xf32> to vector<2x8xf32>
    %100 = vector.shape_cast %99 : vector<2x8xf32> to vector<2x8x1xf32>
    %101 = tpu.reciprocal %100 {approx = true} : vector<2x8x1xf32> -> vector<2x8x1xf32>
    %102 = vector.broadcast %101 : vector<2x8x1xf32> to vector<2x8x128xf32>
    %103 = arith.mulf %98, %102 : vector<2x8x128xf32>
    %104 = arith.truncf %103 : vector<2x8x128xf32> to vector<2x8x128xbf16>
    %105 = arith.truncf %85 : vector<2x128x64xf32> to vector<2x128x64xbf16>
    "tpu.trace_start"() <{level = 10 : i32, message = "bnk,bke->bne"}> : () -> ()
    %cst_48 = arith.constant dense<0.000000e+00> : vector<2x8x64xf32>
    %106 = tpu.matmul %104, %105, %cst_48 {dimension_numbers = #tpu.dot_dimension_numbers<[2], [1], [1], [2], [0, 0, 0, 1, 1, 2], [0], [0]>} : vector<2x8x128xbf16>, vector<2x128x64xbf16>, vector<2x8x64xf32> -> vector<2x8x64xf32>
    "tpu.trace_stop"() : () -> ()
    %107 = vector.extract_strided_slice %47 {offsets = [0, 0, 64], sizes = [2, 8, 64], strides = [1, 1, 1]} : vector<2x8x256xf32> to vector<2x8x64xf32>
    %108 = arith.mulf %107, %107 : vector<2x8x64xf32>
    %cst_49 = arith.constant dense<0.000000e+00> : vector<2x8xf32>
    %109 = vector.multi_reduction <add>, %108, %cst_49 [2] : vector<2x8x64xf32> to vector<2x8xf32>
    %110 = vector.shape_cast %109 : vector<2x8xf32> to vector<2x8x1xf32>
    %cst_50 = arith.constant 9.99999996E-13 : f32
    %111 = vector.broadcast %cst_50 : f32 to vector<2x8x1xf32>
    %112 = arith.addf %110, %111 : vector<2x8x1xf32>
    %113 = math.rsqrt %112 : vector<2x8x1xf32>
    %114 = vector.broadcast %113 : vector<2x8x1xf32> to vector<2x8x64xf32>
    %115 = arith.mulf %107, %114 : vector<2x8x64xf32>
    %116 = vector.shape_cast %15 : vector<1x64xf32> to vector<1x1x64xf32>
    %117 = vector.broadcast %116 : vector<1x1x64xf32> to vector<2x8x64xf32>
    %118 = arith.mulf %115, %117 : vector<2x8x64xf32>
    %119 = vector.extract_strided_slice %59 {offsets = [0, 0, 64], sizes = [2, 128, 64], strides = [1, 1, 1]} : vector<2x128x256xf32> to vector<2x128x64xf32>
    %120 = arith.mulf %119, %119 : vector<2x128x64xf32>
    %cst_51 = arith.constant dense<0.000000e+00> : vector<2x128xf32>
    %121 = vector.multi_reduction <add>, %120, %cst_51 [2] : vector<2x128x64xf32> to vector<2x128xf32>
    %122 = vector.shape_cast %121 : vector<2x128xf32> to vector<2x128x1xf32>
    %cst_52 = arith.constant 9.99999996E-13 : f32
    %123 = vector.broadcast %cst_52 : f32 to vector<2x128x1xf32>
    %124 = arith.addf %122, %123 : vector<2x128x1xf32>
    %125 = math.rsqrt %124 : vector<2x128x1xf32>
    %126 = vector.broadcast %125 : vector<2x128x1xf32> to vector<2x128x64xf32>
    %127 = arith.mulf %119, %126 : vector<2x128x64xf32>
    %128 = vector.shape_cast %17 : vector<1x64xf32> to vector<1x1x64xf32>
    %129 = vector.broadcast %128 : vector<1x1x64xf32> to vector<2x128x64xf32>
    %130 = arith.mulf %127, %129 : vector<2x128x64xf32>
    %131 = vector.extract_strided_slice %60 {offsets = [0, 0, 64], sizes = [2, 128, 64], strides = [1, 1, 1]} : vector<2x128x256xf32> to vector<2x128x64xf32>
    %132 = arith.truncf %118 : vector<2x8x64xf32> to vector<2x8x64xbf16>
    %133 = arith.truncf %130 : vector<2x128x64xf32> to vector<2x128x64xbf16>
    "tpu.trace_start"() <{level = 10 : i32, message = "bne,bke->bnk"}> : () -> ()
    %cst_53 = arith.constant dense<0.000000e+00> : vector<2x8x128xf32>
    %134 = tpu.matmul %132, %133, %cst_53 {dimension_numbers = #tpu.dot_dimension_numbers<[2], [2], [1], [1], [0, 0, 0, 1, 1, 1], [0], [0]>} : vector<2x8x64xbf16>, vector<2x128x64xbf16>, vector<2x8x128xf32> -> vector<2x8x128xf32>
    "tpu.trace_stop"() : () -> ()
    %cst_54 = arith.constant 8.000000e+00 : f32
    %135 = vector.broadcast %cst_54 : f32 to vector<2x8x128xf32>
    %136 = arith.mulf %134, %135 : vector<2x8x128xf32>
    %137 = vector.shape_cast %5 : vector<1x128xf32> to vector<1x1x128xf32>
    %138 = vector.broadcast %137 : vector<1x1x128xf32> to vector<2x8x128xf32>
    %139 = arith.addf %136, %138 : vector<2x8x128xf32>
    %cst_55 = arith.constant dense<0xFF800000> : vector<2x8xf32>
    %140 = vector.multi_reduction <maximumf>, %139, %cst_55 [2] : vector<2x8x128xf32> to vector<2x8xf32>
    %141 = vector.shape_cast %140 : vector<2x8xf32> to vector<2x8x1xf32>
    %142 = vector.broadcast %141 : vector<2x8x1xf32> to vector<2x8x128xf32>
    %143 = arith.subf %139, %142 : vector<2x8x128xf32>
    %144 = math.exp %143 : vector<2x8x128xf32>
    %cst_56 = arith.constant dense<0.000000e+00> : vector<2x8xf32>
    %145 = vector.multi_reduction <add>, %144, %cst_56 [2] : vector<2x8x128xf32> to vector<2x8xf32>
    %146 = vector.shape_cast %145 : vector<2x8xf32> to vector<2x8x1xf32>
    %147 = tpu.reciprocal %146 {approx = true} : vector<2x8x1xf32> -> vector<2x8x1xf32>
    %148 = vector.broadcast %147 : vector<2x8x1xf32> to vector<2x8x128xf32>
    %149 = arith.mulf %144, %148 : vector<2x8x128xf32>
    %150 = arith.truncf %149 : vector<2x8x128xf32> to vector<2x8x128xbf16>
    %151 = arith.truncf %131 : vector<2x128x64xf32> to vector<2x128x64xbf16>
    "tpu.trace_start"() <{level = 10 : i32, message = "bnk,bke->bne"}> : () -> ()
    %cst_57 = arith.constant dense<0.000000e+00> : vector<2x8x64xf32>
    %152 = tpu.matmul %150, %151, %cst_57 {dimension_numbers = #tpu.dot_dimension_numbers<[2], [1], [1], [2], [0, 0, 0, 1, 1, 2], [0], [0]>} : vector<2x8x128xbf16>, vector<2x128x64xbf16>, vector<2x8x64xf32> -> vector<2x8x64xf32>
    "tpu.trace_stop"() : () -> ()
    %153 = vector.extract_strided_slice %47 {offsets = [0, 0, 128], sizes = [2, 8, 64], strides = [1, 1, 1]} : vector<2x8x256xf32> to vector<2x8x64xf32>
    %154 = arith.mulf %153, %153 : vector<2x8x64xf32>
    %cst_58 = arith.constant dense<0.000000e+00> : vector<2x8xf32>
    %155 = vector.multi_reduction <add>, %154, %cst_58 [2] : vector<2x8x64xf32> to vector<2x8xf32>
    %156 = vector.shape_cast %155 : vector<2x8xf32> to vector<2x8x1xf32>
    %cst_59 = arith.constant 9.99999996E-13 : f32
    %157 = vector.broadcast %cst_59 : f32 to vector<2x8x1xf32>
    %158 = arith.addf %156, %157 : vector<2x8x1xf32>
    %159 = math.rsqrt %158 : vector<2x8x1xf32>
    %160 = vector.broadcast %159 : vector<2x8x1xf32> to vector<2x8x64xf32>
    %161 = arith.mulf %153, %160 : vector<2x8x64xf32>
    %162 = vector.shape_cast %15 : vector<1x64xf32> to vector<1x1x64xf32>
    %163 = vector.broadcast %162 : vector<1x1x64xf32> to vector<2x8x64xf32>
    %164 = arith.mulf %161, %163 : vector<2x8x64xf32>
    %165 = vector.extract_strided_slice %59 {offsets = [0, 0, 128], sizes = [2, 128, 64], strides = [1, 1, 1]} : vector<2x128x256xf32> to vector<2x128x64xf32>
    %166 = arith.mulf %165, %165 : vector<2x128x64xf32>
    %cst_60 = arith.constant dense<0.000000e+00> : vector<2x128xf32>
    %167 = vector.multi_reduction <add>, %166, %cst_60 [2] : vector<2x128x64xf32> to vector<2x128xf32>
    %168 = vector.shape_cast %167 : vector<2x128xf32> to vector<2x128x1xf32>
    %cst_61 = arith.constant 9.99999996E-13 : f32
    %169 = vector.broadcast %cst_61 : f32 to vector<2x128x1xf32>
    %170 = arith.addf %168, %169 : vector<2x128x1xf32>
    %171 = math.rsqrt %170 : vector<2x128x1xf32>
    %172 = vector.broadcast %171 : vector<2x128x1xf32> to vector<2x128x64xf32>
    %173 = arith.mulf %165, %172 : vector<2x128x64xf32>
    %174 = vector.shape_cast %17 : vector<1x64xf32> to vector<1x1x64xf32>
    %175 = vector.broadcast %174 : vector<1x1x64xf32> to vector<2x128x64xf32>
    %176 = arith.mulf %173, %175 : vector<2x128x64xf32>
    %177 = vector.extract_strided_slice %60 {offsets = [0, 0, 128], sizes = [2, 128, 64], strides = [1, 1, 1]} : vector<2x128x256xf32> to vector<2x128x64xf32>
    %178 = arith.truncf %164 : vector<2x8x64xf32> to vector<2x8x64xbf16>
    %179 = arith.truncf %176 : vector<2x128x64xf32> to vector<2x128x64xbf16>
    "tpu.trace_start"() <{level = 10 : i32, message = "bne,bke->bnk"}> : () -> ()
    %cst_62 = arith.constant dense<0.000000e+00> : vector<2x8x128xf32>
    %180 = tpu.matmul %178, %179, %cst_62 {dimension_numbers = #tpu.dot_dimension_numbers<[2], [2], [1], [1], [0, 0, 0, 1, 1, 1], [0], [0]>} : vector<2x8x64xbf16>, vector<2x128x64xbf16>, vector<2x8x128xf32> -> vector<2x8x128xf32>
    "tpu.trace_stop"() : () -> ()
    %cst_63 = arith.constant 8.000000e+00 : f32
    %181 = vector.broadcast %cst_63 : f32 to vector<2x8x128xf32>
    %182 = arith.mulf %180, %181 : vector<2x8x128xf32>
    %183 = vector.shape_cast %5 : vector<1x128xf32> to vector<1x1x128xf32>
    %184 = vector.broadcast %183 : vector<1x1x128xf32> to vector<2x8x128xf32>
    %185 = arith.addf %182, %184 : vector<2x8x128xf32>
    %cst_64 = arith.constant dense<0xFF800000> : vector<2x8xf32>
    %186 = vector.multi_reduction <maximumf>, %185, %cst_64 [2] : vector<2x8x128xf32> to vector<2x8xf32>
    %187 = vector.shape_cast %186 : vector<2x8xf32> to vector<2x8x1xf32>
    %188 = vector.broadcast %187 : vector<2x8x1xf32> to vector<2x8x128xf32>
    %189 = arith.subf %185, %188 : vector<2x8x128xf32>
    %190 = math.exp %189 : vector<2x8x128xf32>
    %cst_65 = arith.constant dense<0.000000e+00> : vector<2x8xf32>
    %191 = vector.multi_reduction <add>, %190, %cst_65 [2] : vector<2x8x128xf32> to vector<2x8xf32>
    %192 = vector.shape_cast %191 : vector<2x8xf32> to vector<2x8x1xf32>
    %193 = tpu.reciprocal %192 {approx = true} : vector<2x8x1xf32> -> vector<2x8x1xf32>
    %194 = vector.broadcast %193 : vector<2x8x1xf32> to vector<2x8x128xf32>
    %195 = arith.mulf %190, %194 : vector<2x8x128xf32>
    %196 = arith.truncf %195 : vector<2x8x128xf32> to vector<2x8x128xbf16>
    %197 = arith.truncf %177 : vector<2x128x64xf32> to vector<2x128x64xbf16>
    "tpu.trace_start"() <{level = 10 : i32, message = "bnk,bke->bne"}> : () -> ()
    %cst_66 = arith.constant dense<0.000000e+00> : vector<2x8x64xf32>
    %198 = tpu.matmul %196, %197, %cst_66 {dimension_numbers = #tpu.dot_dimension_numbers<[2], [1], [1], [2], [0, 0, 0, 1, 1, 2], [0], [0]>} : vector<2x8x128xbf16>, vector<2x128x64xbf16>, vector<2x8x64xf32> -> vector<2x8x64xf32>
    "tpu.trace_stop"() : () -> ()
    %199 = vector.extract_strided_slice %47 {offsets = [0, 0, 192], sizes = [2, 8, 64], strides = [1, 1, 1]} : vector<2x8x256xf32> to vector<2x8x64xf32>
    %200 = arith.mulf %199, %199 : vector<2x8x64xf32>
    %cst_67 = arith.constant dense<0.000000e+00> : vector<2x8xf32>
    %201 = vector.multi_reduction <add>, %200, %cst_67 [2] : vector<2x8x64xf32> to vector<2x8xf32>
    %202 = vector.shape_cast %201 : vector<2x8xf32> to vector<2x8x1xf32>
    %cst_68 = arith.constant 9.99999996E-13 : f32
    %203 = vector.broadcast %cst_68 : f32 to vector<2x8x1xf32>
    %204 = arith.addf %202, %203 : vector<2x8x1xf32>
    %205 = math.rsqrt %204 : vector<2x8x1xf32>
    %206 = vector.broadcast %205 : vector<2x8x1xf32> to vector<2x8x64xf32>
    %207 = arith.mulf %199, %206 : vector<2x8x64xf32>
    %208 = vector.shape_cast %15 : vector<1x64xf32> to vector<1x1x64xf32>
    %209 = vector.broadcast %208 : vector<1x1x64xf32> to vector<2x8x64xf32>
    %210 = arith.mulf %207, %209 : vector<2x8x64xf32>
    %211 = vector.extract_strided_slice %59 {offsets = [0, 0, 192], sizes = [2, 128, 64], strides = [1, 1, 1]} : vector<2x128x256xf32> to vector<2x128x64xf32>
    %212 = arith.mulf %211, %211 : vector<2x128x64xf32>
    %cst_69 = arith.constant dense<0.000000e+00> : vector<2x128xf32>
    %213 = vector.multi_reduction <add>, %212, %cst_69 [2] : vector<2x128x64xf32> to vector<2x128xf32>
    %214 = vector.shape_cast %213 : vector<2x128xf32> to vector<2x128x1xf32>
    %cst_70 = arith.constant 9.99999996E-13 : f32
    %215 = vector.broadcast %cst_70 : f32 to vector<2x128x1xf32>
    %216 = arith.addf %214, %215 : vector<2x128x1xf32>
    %217 = math.rsqrt %216 : vector<2x128x1xf32>
    %218 = vector.broadcast %217 : vector<2x128x1xf32> to vector<2x128x64xf32>
    %219 = arith.mulf %211, %218 : vector<2x128x64xf32>
    %220 = vector.shape_cast %17 : vector<1x64xf32> to vector<1x1x64xf32>
    %221 = vector.broadcast %220 : vector<1x1x64xf32> to vector<2x128x64xf32>
    %222 = arith.mulf %219, %221 : vector<2x128x64xf32>
    %223 = vector.extract_strided_slice %60 {offsets = [0, 0, 192], sizes = [2, 128, 64], strides = [1, 1, 1]} : vector<2x128x256xf32> to vector<2x128x64xf32>
    %224 = arith.truncf %210 : vector<2x8x64xf32> to vector<2x8x64xbf16>
    %225 = arith.truncf %222 : vector<2x128x64xf32> to vector<2x128x64xbf16>
    "tpu.trace_start"() <{level = 10 : i32, message = "bne,bke->bnk"}> : () -> ()
    %cst_71 = arith.constant dense<0.000000e+00> : vector<2x8x128xf32>
    %226 = tpu.matmul %224, %225, %cst_71 {dimension_numbers = #tpu.dot_dimension_numbers<[2], [2], [1], [1], [0, 0, 0, 1, 1, 1], [0], [0]>} : vector<2x8x64xbf16>, vector<2x128x64xbf16>, vector<2x8x128xf32> -> vector<2x8x128xf32>
    "tpu.trace_stop"() : () -> ()
    %cst_72 = arith.constant 8.000000e+00 : f32
    %227 = vector.broadcast %cst_72 : f32 to vector<2x8x128xf32>
    %228 = arith.mulf %226, %227 : vector<2x8x128xf32>
    %229 = vector.shape_cast %5 : vector<1x128xf32> to vector<1x1x128xf32>
    %230 = vector.broadcast %229 : vector<1x1x128xf32> to vector<2x8x128xf32>
    %231 = arith.addf %228, %230 : vector<2x8x128xf32>
    %cst_73 = arith.constant dense<0xFF800000> : vector<2x8xf32>
    %232 = vector.multi_reduction <maximumf>, %231, %cst_73 [2] : vector<2x8x128xf32> to vector<2x8xf32>
    %233 = vector.shape_cast %232 : vector<2x8xf32> to vector<2x8x1xf32>
    %234 = vector.broadcast %233 : vector<2x8x1xf32> to vector<2x8x128xf32>
    %235 = arith.subf %231, %234 : vector<2x8x128xf32>
    %236 = math.exp %235 : vector<2x8x128xf32>
    %cst_74 = arith.constant dense<0.000000e+00> : vector<2x8xf32>
    %237 = vector.multi_reduction <add>, %236, %cst_74 [2] : vector<2x8x128xf32> to vector<2x8xf32>
    %238 = vector.shape_cast %237 : vector<2x8xf32> to vector<2x8x1xf32>
    %239 = tpu.reciprocal %238 {approx = true} : vector<2x8x1xf32> -> vector<2x8x1xf32>
    %240 = vector.broadcast %239 : vector<2x8x1xf32> to vector<2x8x128xf32>
    %241 = arith.mulf %236, %240 : vector<2x8x128xf32>
    %242 = arith.truncf %241 : vector<2x8x128xf32> to vector<2x8x128xbf16>
    %243 = arith.truncf %223 : vector<2x128x64xf32> to vector<2x128x64xbf16>
    "tpu.trace_start"() <{level = 10 : i32, message = "bnk,bke->bne"}> : () -> ()
    %cst_75 = arith.constant dense<0.000000e+00> : vector<2x8x64xf32>
    %244 = tpu.matmul %242, %243, %cst_75 {dimension_numbers = #tpu.dot_dimension_numbers<[2], [1], [1], [2], [0, 0, 0, 1, 1, 2], [0], [0]>} : vector<2x8x128xbf16>, vector<2x128x64xbf16>, vector<2x8x64xf32> -> vector<2x8x64xf32>
    "tpu.trace_stop"() : () -> ()
    %245 = tpu.concatenate %106, %152, %198, %244 in 2 : vector<2x8x64xf32>, vector<2x8x64xf32>, vector<2x8x64xf32>, vector<2x8x64xf32> -> vector<2x8x256xf32>
    %246 = vector.shape_cast %245 : vector<2x8x256xf32> to vector<16x256xf32>
    %247 = arith.truncf %246 : vector<16x256xf32> to vector<16x256xbf16>
    %cst_76 = arith.constant dense<0.000000e+00> : vector<16x128xf32>
    %248 = tpu.matmul %247, %23, %cst_76 {dimension_numbers = #tpu.dot_dimension_numbers<[1], [0], [0], [1], [0, 0, 1, 1], [], []>} : vector<16x256xbf16>, vector<256x128xbf16>, vector<16x128xf32> -> vector<16x128xf32>
    %249 = arith.addf %3, %248 : vector<16x128xf32>
    %c0_77 = arith.constant 0 : index
    %c0_78 = arith.constant 0 : index
    %250 = vector.load %arg2[%c0_77, %c0_78] : memref<16x128xf32, #tpu.memory_space<vmem>>, vector<16x128xf32>
    %c0_79 = arith.constant 0 : index
    %c0_80 = arith.constant 0 : index
    %c0_81 = arith.constant 0 : index
    %251 = vector.load %arg4[%c0_79, %c0_80, %c0_81] : memref<2x1x128xf32, #tpu.memory_space<vmem>>, vector<2x1x128xf32>
    %c0_82 = arith.constant 0 : index
    %c0_83 = arith.constant 0 : index
    %c0_84 = arith.constant 0 : index
    %252 = vector.load %arg14[%c0_82, %c0_83, %c0_84] : memref<1x1x128xf32, #tpu.memory_space<vmem>>, vector<1x1x128xf32>
    %253 = vector.shape_cast %252 : vector<1x1x128xf32> to vector<1x128xf32>
    %c0_85 = arith.constant 0 : index
    %c0_86 = arith.constant 0 : index
    %c0_87 = arith.constant 0 : index
    %254 = vector.load %arg15[%c0_85, %c0_86, %c0_87] : memref<1x128x256xbf16, #tpu.memory_space<vmem>>, vector<1x128x256xbf16>
    %255 = vector.shape_cast %254 : vector<1x128x256xbf16> to vector<128x256xbf16>
    %c0_88 = arith.constant 0 : index
    %c0_89 = arith.constant 0 : index
    %c0_90 = arith.constant 0 : index
    %256 = vector.load %arg16[%c0_88, %c0_89, %c0_90] : memref<1x128x256xbf16, #tpu.memory_space<vmem>>, vector<1x128x256xbf16>
    %257 = vector.shape_cast %256 : vector<1x128x256xbf16> to vector<128x256xbf16>
    %c0_91 = arith.constant 0 : index
    %c0_92 = arith.constant 0 : index
    %c0_93 = arith.constant 0 : index
    %258 = vector.load %arg17[%c0_91, %c0_92, %c0_93] : memref<1x128x256xbf16, #tpu.memory_space<vmem>>, vector<1x128x256xbf16>
    %259 = vector.shape_cast %258 : vector<1x128x256xbf16> to vector<128x256xbf16>
    %c0_94 = arith.constant 0 : index
    %c0_95 = arith.constant 0 : index
    %c0_96 = arith.constant 0 : index
    %260 = vector.load %arg18[%c0_94, %c0_95, %c0_96] : memref<1x1x64xf32, #tpu.memory_space<vmem>>, vector<1x1x64xf32>
    %261 = vector.shape_cast %260 : vector<1x1x64xf32> to vector<1x64xf32>
    %c0_97 = arith.constant 0 : index
    %c0_98 = arith.constant 0 : index
    %c0_99 = arith.constant 0 : index
    %262 = vector.load %arg19[%c0_97, %c0_98, %c0_99] : memref<1x1x64xf32, #tpu.memory_space<vmem>>, vector<1x1x64xf32>
    %263 = vector.shape_cast %262 : vector<1x1x64xf32> to vector<1x64xf32>
    %c0_100 = arith.constant 0 : index
    %c0_101 = arith.constant 0 : index
    %c0_102 = arith.constant 0 : index
    %264 = vector.load %arg20[%c0_100, %c0_101, %c0_102] : memref<1x1x256xf32, #tpu.memory_space<vmem>>, vector<1x1x256xf32>
    %265 = vector.shape_cast %264 : vector<1x1x256xf32> to vector<1x256xf32>
    %c0_103 = arith.constant 0 : index
    %c0_104 = arith.constant 0 : index
    %c0_105 = arith.constant 0 : index
    %266 = vector.load %arg21[%c0_103, %c0_104, %c0_105] : memref<1x1x256xf32, #tpu.memory_space<vmem>>, vector<1x1x256xf32>
    %267 = vector.shape_cast %266 : vector<1x1x256xf32> to vector<1x256xf32>
    %c0_106 = arith.constant 0 : index
    %c0_107 = arith.constant 0 : index
    %c0_108 = arith.constant 0 : index
    %268 = vector.load %arg22[%c0_106, %c0_107, %c0_108] : memref<1x256x128xbf16, #tpu.memory_space<vmem>>, vector<1x256x128xbf16>
    %269 = vector.shape_cast %268 : vector<1x256x128xbf16> to vector<256x128xbf16>
    %cst_109 = arith.constant dense<0.000000e+00> : vector<16xf32>
    %270 = vector.multi_reduction <add>, %249, %cst_109 [1] : vector<16x128xf32> to vector<16xf32>
    %271 = vector.shape_cast %270 : vector<16xf32> to vector<16x1xf32>
    %cst_110 = arith.constant 1.280000e+02 : f32
    %272 = vector.broadcast %cst_110 : f32 to vector<16x1xf32>
    %273 = arith.divf %271, %272 : vector<16x1xf32>
    %274 = vector.broadcast %273 : vector<16x1xf32> to vector<16x128xf32>
    %275 = arith.subf %249, %274 : vector<16x128xf32>
    %276 = arith.mulf %275, %275 : vector<16x128xf32>
    %cst_111 = arith.constant dense<0.000000e+00> : vector<16xf32>
    %277 = vector.multi_reduction <add>, %276, %cst_111 [1] : vector<16x128xf32> to vector<16xf32>
    %278 = vector.shape_cast %277 : vector<16xf32> to vector<16x1xf32>
    %cst_112 = arith.constant 1.280000e+02 : f32
    %279 = vector.broadcast %cst_112 : f32 to vector<16x1xf32>
    %280 = arith.divf %278, %279 : vector<16x1xf32>
    %281 = vector.broadcast %273 : vector<16x1xf32> to vector<16x128xf32>
    %282 = arith.subf %249, %281 : vector<16x128xf32>
    %cst_113 = arith.constant 9.99999974E-6 : f32
    %283 = vector.broadcast %cst_113 : f32 to vector<16x1xf32>
    %284 = arith.addf %280, %283 : vector<16x1xf32>
    %285 = math.rsqrt %284 : vector<16x1xf32>
    %286 = vector.broadcast %285 : vector<16x1xf32> to vector<16x128xf32>
    %287 = arith.mulf %282, %286 : vector<16x128xf32>
    %288 = vector.broadcast %253 : vector<1x128xf32> to vector<16x128xf32>
    %289 = arith.mulf %287, %288 : vector<16x128xf32>
    %290 = arith.truncf %289 : vector<16x128xf32> to vector<16x128xbf16>
    %291 = arith.truncf %250 : vector<16x128xf32> to vector<16x128xbf16>
    %cst_114 = arith.constant dense<0.000000e+00> : vector<16x256xf32>
    %292 = tpu.matmul %290, %255, %cst_114 {dimension_numbers = #tpu.dot_dimension_numbers<[1], [0], [0], [1], [0, 0, 1, 1], [], []>} : vector<16x128xbf16>, vector<128x256xbf16>, vector<16x256xf32> -> vector<16x256xf32>
    %293 = vector.shape_cast %292 : vector<16x256xf32> to vector<2x8x256xf32>
    %cst_115 = arith.constant dense<0.000000e+00> : vector<16x256xf32>
    %294 = tpu.matmul %291, %257, %cst_115 {dimension_numbers = #tpu.dot_dimension_numbers<[1], [0], [0], [1], [0, 0, 1, 1], [], []>} : vector<16x128xbf16>, vector<128x256xbf16>, vector<16x256xf32> -> vector<16x256xf32>
    %295 = vector.shape_cast %294 : vector<16x256xf32> to vector<2x8x256xf32>
    %cst_116 = arith.constant dense<0.000000e+00> : vector<16x256xf32>
    %296 = tpu.matmul %291, %259, %cst_116 {dimension_numbers = #tpu.dot_dimension_numbers<[1], [0], [0], [1], [0, 0, 1, 1], [], []>} : vector<16x128xbf16>, vector<128x256xbf16>, vector<16x256xf32> -> vector<16x256xf32>
    %297 = vector.shape_cast %296 : vector<16x256xf32> to vector<2x8x256xf32>
    %298 = vector.shape_cast %265 : vector<1x256xf32> to vector<1x1x256xf32>
    %299 = vector.shape_cast %298 : vector<1x1x256xf32> to vector<1x1x256xf32>
    %300 = vector.broadcast %299 : vector<1x1x256xf32> to vector<2x1x256xf32>
    %301 = vector.shape_cast %267 : vector<1x256xf32> to vector<1x1x256xf32>
    %302 = vector.shape_cast %301 : vector<1x1x256xf32> to vector<1x1x256xf32>
    %303 = vector.broadcast %302 : vector<1x1x256xf32> to vector<2x1x256xf32>
    %cst_117 = arith.constant 0.000000e+00 : f32
    %304 = vector.broadcast %cst_117 : f32 to vector<2x119x256xf32>
    %305 = tpu.concatenate %300, %295, %304 in 1 : vector<2x1x256xf32>, vector<2x8x256xf32>, vector<2x119x256xf32> -> vector<2x128x256xf32>
    %306 = tpu.concatenate %303, %297, %304 in 1 : vector<2x1x256xf32>, vector<2x8x256xf32>, vector<2x119x256xf32> -> vector<2x128x256xf32>
    %307 = vector.extract_strided_slice %293 {offsets = [0, 0, 0], sizes = [2, 8, 64], strides = [1, 1, 1]} : vector<2x8x256xf32> to vector<2x8x64xf32>
    %308 = arith.mulf %307, %307 : vector<2x8x64xf32>
    %cst_118 = arith.constant dense<0.000000e+00> : vector<2x8xf32>
    %309 = vector.multi_reduction <add>, %308, %cst_118 [2] : vector<2x8x64xf32> to vector<2x8xf32>
    %310 = vector.shape_cast %309 : vector<2x8xf32> to vector<2x8x1xf32>
    %cst_119 = arith.constant 9.99999996E-13 : f32
    %311 = vector.broadcast %cst_119 : f32 to vector<2x8x1xf32>
    %312 = arith.addf %310, %311 : vector<2x8x1xf32>
    %313 = math.rsqrt %312 : vector<2x8x1xf32>
    %314 = vector.broadcast %313 : vector<2x8x1xf32> to vector<2x8x64xf32>
    %315 = arith.mulf %307, %314 : vector<2x8x64xf32>
    %316 = vector.shape_cast %261 : vector<1x64xf32> to vector<1x1x64xf32>
    %317 = vector.broadcast %316 : vector<1x1x64xf32> to vector<2x8x64xf32>
    %318 = arith.mulf %315, %317 : vector<2x8x64xf32>
    %319 = vector.extract_strided_slice %305 {offsets = [0, 0, 0], sizes = [2, 128, 64], strides = [1, 1, 1]} : vector<2x128x256xf32> to vector<2x128x64xf32>
    %320 = arith.mulf %319, %319 : vector<2x128x64xf32>
    %cst_120 = arith.constant dense<0.000000e+00> : vector<2x128xf32>
    %321 = vector.multi_reduction <add>, %320, %cst_120 [2] : vector<2x128x64xf32> to vector<2x128xf32>
    %322 = vector.shape_cast %321 : vector<2x128xf32> to vector<2x128x1xf32>
    %cst_121 = arith.constant 9.99999996E-13 : f32
    %323 = vector.broadcast %cst_121 : f32 to vector<2x128x1xf32>
    %324 = arith.addf %322, %323 : vector<2x128x1xf32>
    %325 = math.rsqrt %324 : vector<2x128x1xf32>
    %326 = vector.broadcast %325 : vector<2x128x1xf32> to vector<2x128x64xf32>
    %327 = arith.mulf %319, %326 : vector<2x128x64xf32>
    %328 = vector.shape_cast %263 : vector<1x64xf32> to vector<1x1x64xf32>
    %329 = vector.broadcast %328 : vector<1x1x64xf32> to vector<2x128x64xf32>
    %330 = arith.mulf %327, %329 : vector<2x128x64xf32>
    %331 = vector.extract_strided_slice %306 {offsets = [0, 0, 0], sizes = [2, 128, 64], strides = [1, 1, 1]} : vector<2x128x256xf32> to vector<2x128x64xf32>
    %332 = arith.truncf %318 : vector<2x8x64xf32> to vector<2x8x64xbf16>
    %333 = arith.truncf %330 : vector<2x128x64xf32> to vector<2x128x64xbf16>
    "tpu.trace_start"() <{level = 10 : i32, message = "bne,bke->bnk"}> : () -> ()
    %cst_122 = arith.constant dense<0.000000e+00> : vector<2x8x128xf32>
    %334 = tpu.matmul %332, %333, %cst_122 {dimension_numbers = #tpu.dot_dimension_numbers<[2], [2], [1], [1], [0, 0, 0, 1, 1, 1], [0], [0]>} : vector<2x8x64xbf16>, vector<2x128x64xbf16>, vector<2x8x128xf32> -> vector<2x8x128xf32>
    "tpu.trace_stop"() : () -> ()
    %cst_123 = arith.constant 8.000000e+00 : f32
    %335 = vector.broadcast %cst_123 : f32 to vector<2x8x128xf32>
    %336 = arith.mulf %334, %335 : vector<2x8x128xf32>
    %337 = vector.broadcast %251 : vector<2x1x128xf32> to vector<2x8x128xf32>
    %338 = arith.addf %336, %337 : vector<2x8x128xf32>
    %cst_124 = arith.constant dense<0xFF800000> : vector<2x8xf32>
    %339 = vector.multi_reduction <maximumf>, %338, %cst_124 [2] : vector<2x8x128xf32> to vector<2x8xf32>
    %340 = vector.shape_cast %339 : vector<2x8xf32> to vector<2x8x1xf32>
    %341 = vector.broadcast %340 : vector<2x8x1xf32> to vector<2x8x128xf32>
    %342 = arith.subf %338, %341 : vector<2x8x128xf32>
    %343 = math.exp %342 : vector<2x8x128xf32>
    %cst_125 = arith.constant dense<0.000000e+00> : vector<2x8xf32>
    %344 = vector.multi_reduction <add>, %343, %cst_125 [2] : vector<2x8x128xf32> to vector<2x8xf32>
    %345 = vector.shape_cast %344 : vector<2x8xf32> to vector<2x8x1xf32>
    %346 = tpu.reciprocal %345 {approx = true} : vector<2x8x1xf32> -> vector<2x8x1xf32>
    %347 = vector.broadcast %346 : vector<2x8x1xf32> to vector<2x8x128xf32>
    %348 = arith.mulf %343, %347 : vector<2x8x128xf32>
    %349 = arith.truncf %348 : vector<2x8x128xf32> to vector<2x8x128xbf16>
    %350 = arith.truncf %331 : vector<2x128x64xf32> to vector<2x128x64xbf16>
    "tpu.trace_start"() <{level = 10 : i32, message = "bnk,bke->bne"}> : () -> ()
    %cst_126 = arith.constant dense<0.000000e+00> : vector<2x8x64xf32>
    %351 = tpu.matmul %349, %350, %cst_126 {dimension_numbers = #tpu.dot_dimension_numbers<[2], [1], [1], [2], [0, 0, 0, 1, 1, 2], [0], [0]>} : vector<2x8x128xbf16>, vector<2x128x64xbf16>, vector<2x8x64xf32> -> vector<2x8x64xf32>
    "tpu.trace_stop"() : () -> ()
    %352 = vector.extract_strided_slice %293 {offsets = [0, 0, 64], sizes = [2, 8, 64], strides = [1, 1, 1]} : vector<2x8x256xf32> to vector<2x8x64xf32>
    %353 = arith.mulf %352, %352 : vector<2x8x64xf32>
    %cst_127 = arith.constant dense<0.000000e+00> : vector<2x8xf32>
    %354 = vector.multi_reduction <add>, %353, %cst_127 [2] : vector<2x8x64xf32> to vector<2x8xf32>
    %355 = vector.shape_cast %354 : vector<2x8xf32> to vector<2x8x1xf32>
    %cst_128 = arith.constant 9.99999996E-13 : f32
    %356 = vector.broadcast %cst_128 : f32 to vector<2x8x1xf32>
    %357 = arith.addf %355, %356 : vector<2x8x1xf32>
    %358 = math.rsqrt %357 : vector<2x8x1xf32>
    %359 = vector.broadcast %358 : vector<2x8x1xf32> to vector<2x8x64xf32>
    %360 = arith.mulf %352, %359 : vector<2x8x64xf32>
    %361 = vector.shape_cast %261 : vector<1x64xf32> to vector<1x1x64xf32>
    %362 = vector.broadcast %361 : vector<1x1x64xf32> to vector<2x8x64xf32>
    %363 = arith.mulf %360, %362 : vector<2x8x64xf32>
    %364 = vector.extract_strided_slice %305 {offsets = [0, 0, 64], sizes = [2, 128, 64], strides = [1, 1, 1]} : vector<2x128x256xf32> to vector<2x128x64xf32>
    %365 = arith.mulf %364, %364 : vector<2x128x64xf32>
    %cst_129 = arith.constant dense<0.000000e+00> : vector<2x128xf32>
    %366 = vector.multi_reduction <add>, %365, %cst_129 [2] : vector<2x128x64xf32> to vector<2x128xf32>
    %367 = vector.shape_cast %366 : vector<2x128xf32> to vector<2x128x1xf32>
    %cst_130 = arith.constant 9.99999996E-13 : f32
    %368 = vector.broadcast %cst_130 : f32 to vector<2x128x1xf32>
    %369 = arith.addf %367, %368 : vector<2x128x1xf32>
    %370 = math.rsqrt %369 : vector<2x128x1xf32>
    %371 = vector.broadcast %370 : vector<2x128x1xf32> to vector<2x128x64xf32>
    %372 = arith.mulf %364, %371 : vector<2x128x64xf32>
    %373 = vector.shape_cast %263 : vector<1x64xf32> to vector<1x1x64xf32>
    %374 = vector.broadcast %373 : vector<1x1x64xf32> to vector<2x128x64xf32>
    %375 = arith.mulf %372, %374 : vector<2x128x64xf32>
    %376 = vector.extract_strided_slice %306 {offsets = [0, 0, 64], sizes = [2, 128, 64], strides = [1, 1, 1]} : vector<2x128x256xf32> to vector<2x128x64xf32>
    %377 = arith.truncf %363 : vector<2x8x64xf32> to vector<2x8x64xbf16>
    %378 = arith.truncf %375 : vector<2x128x64xf32> to vector<2x128x64xbf16>
    "tpu.trace_start"() <{level = 10 : i32, message = "bne,bke->bnk"}> : () -> ()
    %cst_131 = arith.constant dense<0.000000e+00> : vector<2x8x128xf32>
    %379 = tpu.matmul %377, %378, %cst_131 {dimension_numbers = #tpu.dot_dimension_numbers<[2], [2], [1], [1], [0, 0, 0, 1, 1, 1], [0], [0]>} : vector<2x8x64xbf16>, vector<2x128x64xbf16>, vector<2x8x128xf32> -> vector<2x8x128xf32>
    "tpu.trace_stop"() : () -> ()
    %cst_132 = arith.constant 8.000000e+00 : f32
    %380 = vector.broadcast %cst_132 : f32 to vector<2x8x128xf32>
    %381 = arith.mulf %379, %380 : vector<2x8x128xf32>
    %382 = vector.broadcast %251 : vector<2x1x128xf32> to vector<2x8x128xf32>
    %383 = arith.addf %381, %382 : vector<2x8x128xf32>
    %cst_133 = arith.constant dense<0xFF800000> : vector<2x8xf32>
    %384 = vector.multi_reduction <maximumf>, %383, %cst_133 [2] : vector<2x8x128xf32> to vector<2x8xf32>
    %385 = vector.shape_cast %384 : vector<2x8xf32> to vector<2x8x1xf32>
    %386 = vector.broadcast %385 : vector<2x8x1xf32> to vector<2x8x128xf32>
    %387 = arith.subf %383, %386 : vector<2x8x128xf32>
    %388 = math.exp %387 : vector<2x8x128xf32>
    %cst_134 = arith.constant dense<0.000000e+00> : vector<2x8xf32>
    %389 = vector.multi_reduction <add>, %388, %cst_134 [2] : vector<2x8x128xf32> to vector<2x8xf32>
    %390 = vector.shape_cast %389 : vector<2x8xf32> to vector<2x8x1xf32>
    %391 = tpu.reciprocal %390 {approx = true} : vector<2x8x1xf32> -> vector<2x8x1xf32>
    %392 = vector.broadcast %391 : vector<2x8x1xf32> to vector<2x8x128xf32>
    %393 = arith.mulf %388, %392 : vector<2x8x128xf32>
    %394 = arith.truncf %393 : vector<2x8x128xf32> to vector<2x8x128xbf16>
    %395 = arith.truncf %376 : vector<2x128x64xf32> to vector<2x128x64xbf16>
    "tpu.trace_start"() <{level = 10 : i32, message = "bnk,bke->bne"}> : () -> ()
    %cst_135 = arith.constant dense<0.000000e+00> : vector<2x8x64xf32>
    %396 = tpu.matmul %394, %395, %cst_135 {dimension_numbers = #tpu.dot_dimension_numbers<[2], [1], [1], [2], [0, 0, 0, 1, 1, 2], [0], [0]>} : vector<2x8x128xbf16>, vector<2x128x64xbf16>, vector<2x8x64xf32> -> vector<2x8x64xf32>
    "tpu.trace_stop"() : () -> ()
    %397 = vector.extract_strided_slice %293 {offsets = [0, 0, 128], sizes = [2, 8, 64], strides = [1, 1, 1]} : vector<2x8x256xf32> to vector<2x8x64xf32>
    %398 = arith.mulf %397, %397 : vector<2x8x64xf32>
    %cst_136 = arith.constant dense<0.000000e+00> : vector<2x8xf32>
    %399 = vector.multi_reduction <add>, %398, %cst_136 [2] : vector<2x8x64xf32> to vector<2x8xf32>
    %400 = vector.shape_cast %399 : vector<2x8xf32> to vector<2x8x1xf32>
    %cst_137 = arith.constant 9.99999996E-13 : f32
    %401 = vector.broadcast %cst_137 : f32 to vector<2x8x1xf32>
    %402 = arith.addf %400, %401 : vector<2x8x1xf32>
    %403 = math.rsqrt %402 : vector<2x8x1xf32>
    %404 = vector.broadcast %403 : vector<2x8x1xf32> to vector<2x8x64xf32>
    %405 = arith.mulf %397, %404 : vector<2x8x64xf32>
    %406 = vector.shape_cast %261 : vector<1x64xf32> to vector<1x1x64xf32>
    %407 = vector.broadcast %406 : vector<1x1x64xf32> to vector<2x8x64xf32>
    %408 = arith.mulf %405, %407 : vector<2x8x64xf32>
    %409 = vector.extract_strided_slice %305 {offsets = [0, 0, 128], sizes = [2, 128, 64], strides = [1, 1, 1]} : vector<2x128x256xf32> to vector<2x128x64xf32>
    %410 = arith.mulf %409, %409 : vector<2x128x64xf32>
    %cst_138 = arith.constant dense<0.000000e+00> : vector<2x128xf32>
    %411 = vector.multi_reduction <add>, %410, %cst_138 [2] : vector<2x128x64xf32> to vector<2x128xf32>
    %412 = vector.shape_cast %411 : vector<2x128xf32> to vector<2x128x1xf32>
    %cst_139 = arith.constant 9.99999996E-13 : f32
    %413 = vector.broadcast %cst_139 : f32 to vector<2x128x1xf32>
    %414 = arith.addf %412, %413 : vector<2x128x1xf32>
    %415 = math.rsqrt %414 : vector<2x128x1xf32>
    %416 = vector.broadcast %415 : vector<2x128x1xf32> to vector<2x128x64xf32>
    %417 = arith.mulf %409, %416 : vector<2x128x64xf32>
    %418 = vector.shape_cast %263 : vector<1x64xf32> to vector<1x1x64xf32>
    %419 = vector.broadcast %418 : vector<1x1x64xf32> to vector<2x128x64xf32>
    %420 = arith.mulf %417, %419 : vector<2x128x64xf32>
    %421 = vector.extract_strided_slice %306 {offsets = [0, 0, 128], sizes = [2, 128, 64], strides = [1, 1, 1]} : vector<2x128x256xf32> to vector<2x128x64xf32>
    %422 = arith.truncf %408 : vector<2x8x64xf32> to vector<2x8x64xbf16>
    %423 = arith.truncf %420 : vector<2x128x64xf32> to vector<2x128x64xbf16>
    "tpu.trace_start"() <{level = 10 : i32, message = "bne,bke->bnk"}> : () -> ()
    %cst_140 = arith.constant dense<0.000000e+00> : vector<2x8x128xf32>
    %424 = tpu.matmul %422, %423, %cst_140 {dimension_numbers = #tpu.dot_dimension_numbers<[2], [2], [1], [1], [0, 0, 0, 1, 1, 1], [0], [0]>} : vector<2x8x64xbf16>, vector<2x128x64xbf16>, vector<2x8x128xf32> -> vector<2x8x128xf32>
    "tpu.trace_stop"() : () -> ()
    %cst_141 = arith.constant 8.000000e+00 : f32
    %425 = vector.broadcast %cst_141 : f32 to vector<2x8x128xf32>
    %426 = arith.mulf %424, %425 : vector<2x8x128xf32>
    %427 = vector.broadcast %251 : vector<2x1x128xf32> to vector<2x8x128xf32>
    %428 = arith.addf %426, %427 : vector<2x8x128xf32>
    %cst_142 = arith.constant dense<0xFF800000> : vector<2x8xf32>
    %429 = vector.multi_reduction <maximumf>, %428, %cst_142 [2] : vector<2x8x128xf32> to vector<2x8xf32>
    %430 = vector.shape_cast %429 : vector<2x8xf32> to vector<2x8x1xf32>
    %431 = vector.broadcast %430 : vector<2x8x1xf32> to vector<2x8x128xf32>
    %432 = arith.subf %428, %431 : vector<2x8x128xf32>
    %433 = math.exp %432 : vector<2x8x128xf32>
    %cst_143 = arith.constant dense<0.000000e+00> : vector<2x8xf32>
    %434 = vector.multi_reduction <add>, %433, %cst_143 [2] : vector<2x8x128xf32> to vector<2x8xf32>
    %435 = vector.shape_cast %434 : vector<2x8xf32> to vector<2x8x1xf32>
    %436 = tpu.reciprocal %435 {approx = true} : vector<2x8x1xf32> -> vector<2x8x1xf32>
    %437 = vector.broadcast %436 : vector<2x8x1xf32> to vector<2x8x128xf32>
    %438 = arith.mulf %433, %437 : vector<2x8x128xf32>
    %439 = arith.truncf %438 : vector<2x8x128xf32> to vector<2x8x128xbf16>
    %440 = arith.truncf %421 : vector<2x128x64xf32> to vector<2x128x64xbf16>
    "tpu.trace_start"() <{level = 10 : i32, message = "bnk,bke->bne"}> : () -> ()
    %cst_144 = arith.constant dense<0.000000e+00> : vector<2x8x64xf32>
    %441 = tpu.matmul %439, %440, %cst_144 {dimension_numbers = #tpu.dot_dimension_numbers<[2], [1], [1], [2], [0, 0, 0, 1, 1, 2], [0], [0]>} : vector<2x8x128xbf16>, vector<2x128x64xbf16>, vector<2x8x64xf32> -> vector<2x8x64xf32>
    "tpu.trace_stop"() : () -> ()
    %442 = vector.extract_strided_slice %293 {offsets = [0, 0, 192], sizes = [2, 8, 64], strides = [1, 1, 1]} : vector<2x8x256xf32> to vector<2x8x64xf32>
    %443 = arith.mulf %442, %442 : vector<2x8x64xf32>
    %cst_145 = arith.constant dense<0.000000e+00> : vector<2x8xf32>
    %444 = vector.multi_reduction <add>, %443, %cst_145 [2] : vector<2x8x64xf32> to vector<2x8xf32>
    %445 = vector.shape_cast %444 : vector<2x8xf32> to vector<2x8x1xf32>
    %cst_146 = arith.constant 9.99999996E-13 : f32
    %446 = vector.broadcast %cst_146 : f32 to vector<2x8x1xf32>
    %447 = arith.addf %445, %446 : vector<2x8x1xf32>
    %448 = math.rsqrt %447 : vector<2x8x1xf32>
    %449 = vector.broadcast %448 : vector<2x8x1xf32> to vector<2x8x64xf32>
    %450 = arith.mulf %442, %449 : vector<2x8x64xf32>
    %451 = vector.shape_cast %261 : vector<1x64xf32> to vector<1x1x64xf32>
    %452 = vector.broadcast %451 : vector<1x1x64xf32> to vector<2x8x64xf32>
    %453 = arith.mulf %450, %452 : vector<2x8x64xf32>
    %454 = vector.extract_strided_slice %305 {offsets = [0, 0, 192], sizes = [2, 128, 64], strides = [1, 1, 1]} : vector<2x128x256xf32> to vector<2x128x64xf32>
    %455 = arith.mulf %454, %454 : vector<2x128x64xf32>
    %cst_147 = arith.constant dense<0.000000e+00> : vector<2x128xf32>
    %456 = vector.multi_reduction <add>, %455, %cst_147 [2] : vector<2x128x64xf32> to vector<2x128xf32>
    %457 = vector.shape_cast %456 : vector<2x128xf32> to vector<2x128x1xf32>
    %cst_148 = arith.constant 9.99999996E-13 : f32
    %458 = vector.broadcast %cst_148 : f32 to vector<2x128x1xf32>
    %459 = arith.addf %457, %458 : vector<2x128x1xf32>
    %460 = math.rsqrt %459 : vector<2x128x1xf32>
    %461 = vector.broadcast %460 : vector<2x128x1xf32> to vector<2x128x64xf32>
    %462 = arith.mulf %454, %461 : vector<2x128x64xf32>
    %463 = vector.shape_cast %263 : vector<1x64xf32> to vector<1x1x64xf32>
    %464 = vector.broadcast %463 : vector<1x1x64xf32> to vector<2x128x64xf32>
    %465 = arith.mulf %462, %464 : vector<2x128x64xf32>
    %466 = vector.extract_strided_slice %306 {offsets = [0, 0, 192], sizes = [2, 128, 64], strides = [1, 1, 1]} : vector<2x128x256xf32> to vector<2x128x64xf32>
    %467 = arith.truncf %453 : vector<2x8x64xf32> to vector<2x8x64xbf16>
    %468 = arith.truncf %465 : vector<2x128x64xf32> to vector<2x128x64xbf16>
    "tpu.trace_start"() <{level = 10 : i32, message = "bne,bke->bnk"}> : () -> ()
    %cst_149 = arith.constant dense<0.000000e+00> : vector<2x8x128xf32>
    %469 = tpu.matmul %467, %468, %cst_149 {dimension_numbers = #tpu.dot_dimension_numbers<[2], [2], [1], [1], [0, 0, 0, 1, 1, 1], [0], [0]>} : vector<2x8x64xbf16>, vector<2x128x64xbf16>, vector<2x8x128xf32> -> vector<2x8x128xf32>
    "tpu.trace_stop"() : () -> ()
    %cst_150 = arith.constant 8.000000e+00 : f32
    %470 = vector.broadcast %cst_150 : f32 to vector<2x8x128xf32>
    %471 = arith.mulf %469, %470 : vector<2x8x128xf32>
    %472 = vector.broadcast %251 : vector<2x1x128xf32> to vector<2x8x128xf32>
    %473 = arith.addf %471, %472 : vector<2x8x128xf32>
    %cst_151 = arith.constant dense<0xFF800000> : vector<2x8xf32>
    %474 = vector.multi_reduction <maximumf>, %473, %cst_151 [2] : vector<2x8x128xf32> to vector<2x8xf32>
    %475 = vector.shape_cast %474 : vector<2x8xf32> to vector<2x8x1xf32>
    %476 = vector.broadcast %475 : vector<2x8x1xf32> to vector<2x8x128xf32>
    %477 = arith.subf %473, %476 : vector<2x8x128xf32>
    %478 = math.exp %477 : vector<2x8x128xf32>
    %cst_152 = arith.constant dense<0.000000e+00> : vector<2x8xf32>
    %479 = vector.multi_reduction <add>, %478, %cst_152 [2] : vector<2x8x128xf32> to vector<2x8xf32>
    %480 = vector.shape_cast %479 : vector<2x8xf32> to vector<2x8x1xf32>
    %481 = tpu.reciprocal %480 {approx = true} : vector<2x8x1xf32> -> vector<2x8x1xf32>
    %482 = vector.broadcast %481 : vector<2x8x1xf32> to vector<2x8x128xf32>
    %483 = arith.mulf %478, %482 : vector<2x8x128xf32>
    %484 = arith.truncf %483 : vector<2x8x128xf32> to vector<2x8x128xbf16>
    %485 = arith.truncf %466 : vector<2x128x64xf32> to vector<2x128x64xbf16>
    "tpu.trace_start"() <{level = 10 : i32, message = "bnk,bke->bne"}> : () -> ()
    %cst_153 = arith.constant dense<0.000000e+00> : vector<2x8x64xf32>
    %486 = tpu.matmul %484, %485, %cst_153 {dimension_numbers = #tpu.dot_dimension_numbers<[2], [1], [1], [2], [0, 0, 0, 1, 1, 2], [0], [0]>} : vector<2x8x128xbf16>, vector<2x128x64xbf16>, vector<2x8x64xf32> -> vector<2x8x64xf32>
    "tpu.trace_stop"() : () -> ()
    %487 = tpu.concatenate %351, %396, %441, %486 in 2 : vector<2x8x64xf32>, vector<2x8x64xf32>, vector<2x8x64xf32>, vector<2x8x64xf32> -> vector<2x8x256xf32>
    %488 = vector.shape_cast %487 : vector<2x8x256xf32> to vector<16x256xf32>
    %489 = arith.truncf %488 : vector<16x256xf32> to vector<16x256xbf16>
    %cst_154 = arith.constant dense<0.000000e+00> : vector<16x128xf32>
    %490 = tpu.matmul %489, %269, %cst_154 {dimension_numbers = #tpu.dot_dimension_numbers<[1], [0], [0], [1], [0, 0, 1, 1], [], []>} : vector<16x256xbf16>, vector<256x128xbf16>, vector<16x128xf32> -> vector<16x128xf32>
    %491 = arith.addf %249, %490 : vector<16x128xf32>
    %c0_155 = arith.constant 0 : index
    %c0_156 = arith.constant 0 : index
    %c0_157 = arith.constant 0 : index
    %492 = vector.load %arg23[%c0_155, %c0_156, %c0_157] : memref<1x1x128xf32, #tpu.memory_space<vmem>>, vector<1x1x128xf32>
    %493 = vector.shape_cast %492 : vector<1x1x128xf32> to vector<1x128xf32>
    %c0_158 = arith.constant 0 : index
    %c0_159 = arith.constant 0 : index
    %c0_160 = arith.constant 0 : index
    %494 = vector.load %arg24[%c0_158, %c0_159, %c0_160] : memref<1x128x512xbf16, #tpu.memory_space<vmem>>, vector<1x128x512xbf16>
    %495 = vector.shape_cast %494 : vector<1x128x512xbf16> to vector<128x512xbf16>
    %c0_161 = arith.constant 0 : index
    %c0_162 = arith.constant 0 : index
    %c0_163 = arith.constant 0 : index
    %496 = vector.load %arg25[%c0_161, %c0_162, %c0_163] : memref<1x1x256xf32, #tpu.memory_space<vmem>>, vector<1x1x256xf32>
    %497 = vector.shape_cast %496 : vector<1x1x256xf32> to vector<1x256xf32>
    %c0_164 = arith.constant 0 : index
    %c0_165 = arith.constant 0 : index
    %c0_166 = arith.constant 0 : index
    %498 = vector.load %arg26[%c0_164, %c0_165, %c0_166] : memref<1x256x128xbf16, #tpu.memory_space<vmem>>, vector<1x256x128xbf16>
    %499 = vector.shape_cast %498 : vector<1x256x128xbf16> to vector<256x128xbf16>
    %cst_167 = arith.constant dense<0.000000e+00> : vector<16xf32>
    %500 = vector.multi_reduction <add>, %491, %cst_167 [1] : vector<16x128xf32> to vector<16xf32>
    %501 = vector.shape_cast %500 : vector<16xf32> to vector<16x1xf32>
    %cst_168 = arith.constant 1.280000e+02 : f32
    %502 = vector.broadcast %cst_168 : f32 to vector<16x1xf32>
    %503 = arith.divf %501, %502 : vector<16x1xf32>
    %504 = vector.broadcast %503 : vector<16x1xf32> to vector<16x128xf32>
    %505 = arith.subf %491, %504 : vector<16x128xf32>
    %506 = arith.mulf %505, %505 : vector<16x128xf32>
    %cst_169 = arith.constant dense<0.000000e+00> : vector<16xf32>
    %507 = vector.multi_reduction <add>, %506, %cst_169 [1] : vector<16x128xf32> to vector<16xf32>
    %508 = vector.shape_cast %507 : vector<16xf32> to vector<16x1xf32>
    %cst_170 = arith.constant 1.280000e+02 : f32
    %509 = vector.broadcast %cst_170 : f32 to vector<16x1xf32>
    %510 = arith.divf %508, %509 : vector<16x1xf32>
    %511 = vector.broadcast %503 : vector<16x1xf32> to vector<16x128xf32>
    %512 = arith.subf %491, %511 : vector<16x128xf32>
    %cst_171 = arith.constant 9.99999974E-6 : f32
    %513 = vector.broadcast %cst_171 : f32 to vector<16x1xf32>
    %514 = arith.addf %510, %513 : vector<16x1xf32>
    %515 = math.rsqrt %514 : vector<16x1xf32>
    %516 = vector.broadcast %515 : vector<16x1xf32> to vector<16x128xf32>
    %517 = arith.mulf %512, %516 : vector<16x128xf32>
    %518 = vector.broadcast %493 : vector<1x128xf32> to vector<16x128xf32>
    %519 = arith.mulf %517, %518 : vector<16x128xf32>
    %520 = arith.truncf %519 : vector<16x128xf32> to vector<16x128xbf16>
    %cst_172 = arith.constant dense<0.000000e+00> : vector<16x512xf32>
    %521 = tpu.matmul %520, %495, %cst_172 {dimension_numbers = #tpu.dot_dimension_numbers<[1], [0], [0], [1], [0, 0, 1, 1], [], []>} : vector<16x128xbf16>, vector<128x512xbf16>, vector<16x512xf32> -> vector<16x512xf32>
    %522 = vector.extract_strided_slice %521 {offsets = [0, 0], sizes = [16, 256], strides = [1, 1]} : vector<16x512xf32> to vector<16x256xf32>
    %523 = vector.extract_strided_slice %521 {offsets = [0, 256], sizes = [16, 256], strides = [1, 1]} : vector<16x512xf32> to vector<16x256xf32>
    %cst_173 = arith.constant 5.000000e-01 : f32
    %524 = vector.broadcast %cst_173 : f32 to vector<16x256xf32>
    %525 = arith.mulf %524, %522 : vector<16x256xf32>
    %cst_174 = arith.constant 0.707106769 : f32
    %526 = vector.broadcast %cst_174 : f32 to vector<16x256xf32>
    %527 = arith.mulf %522, %526 : vector<16x256xf32>
    %528 = math.erf %527 : vector<16x256xf32>
    %cst_175 = arith.constant 1.000000e+00 : f32
    %529 = vector.broadcast %cst_175 : f32 to vector<16x256xf32>
    %530 = arith.addf %529, %528 : vector<16x256xf32>
    %531 = arith.mulf %525, %530 : vector<16x256xf32>
    %532 = arith.mulf %523, %531 : vector<16x256xf32>
    %cst_176 = arith.constant dense<0.000000e+00> : vector<16xf32>
    %533 = vector.multi_reduction <add>, %532, %cst_176 [1] : vector<16x256xf32> to vector<16xf32>
    %534 = vector.shape_cast %533 : vector<16xf32> to vector<16x1xf32>
    %cst_177 = arith.constant 2.560000e+02 : f32
    %535 = vector.broadcast %cst_177 : f32 to vector<16x1xf32>
    %536 = arith.divf %534, %535 : vector<16x1xf32>
    %537 = vector.broadcast %536 : vector<16x1xf32> to vector<16x256xf32>
    %538 = arith.subf %532, %537 : vector<16x256xf32>
    %539 = arith.mulf %538, %538 : vector<16x256xf32>
    %cst_178 = arith.constant dense<0.000000e+00> : vector<16xf32>
    %540 = vector.multi_reduction <add>, %539, %cst_178 [1] : vector<16x256xf32> to vector<16xf32>
    %541 = vector.shape_cast %540 : vector<16xf32> to vector<16x1xf32>
    %cst_179 = arith.constant 2.560000e+02 : f32
    %542 = vector.broadcast %cst_179 : f32 to vector<16x1xf32>
    %543 = arith.divf %541, %542 : vector<16x1xf32>
    %544 = vector.broadcast %536 : vector<16x1xf32> to vector<16x256xf32>
    %545 = arith.subf %532, %544 : vector<16x256xf32>
    %cst_180 = arith.constant 9.99999974E-6 : f32
    %546 = vector.broadcast %cst_180 : f32 to vector<16x1xf32>
    %547 = arith.addf %543, %546 : vector<16x1xf32>
    %548 = math.rsqrt %547 : vector<16x1xf32>
    %549 = vector.broadcast %548 : vector<16x1xf32> to vector<16x256xf32>
    %550 = arith.mulf %545, %549 : vector<16x256xf32>
    %551 = vector.broadcast %497 : vector<1x256xf32> to vector<16x256xf32>
    %552 = arith.mulf %550, %551 : vector<16x256xf32>
    %553 = arith.truncf %552 : vector<16x256xf32> to vector<16x256xbf16>
    %cst_181 = arith.constant dense<0.000000e+00> : vector<16x128xf32>
    %554 = tpu.matmul %553, %499, %cst_181 {dimension_numbers = #tpu.dot_dimension_numbers<[1], [0], [0], [1], [0, 0, 1, 1], [], []>} : vector<16x256xbf16>, vector<256x128xbf16>, vector<16x128xf32> -> vector<16x128xf32>
    %555 = arith.addf %491, %554 : vector<16x128xf32>
    %c0_182 = arith.constant 0 : index
    %c0_183 = arith.constant 0 : index
    %556 = vector.load %arg29[%c0_182, %c0_183] : memref<16x128xf32, #tpu.memory_space<vmem>>, vector<16x128xf32>
    tpu.vector_store %arg29[%c0_182, %c0_183], %555 {strides = array<i32>} : memref<16x128xf32, #tpu.memory_space<vmem>>, vector<16x128xf32>,
    %c1_i32 = arith.constant 1 : i32
    %557 = arith.cmpi eq, %arg0, %c1_i32 : i32
    %558 = arith.extui %557 : i1 to i32
    %c0_i32_184 = arith.constant 0 : i32
    %559 = arith.cmpi ne, %558, %c0_i32_184 : i32
    scf.if %559 {
      %c0_185 = arith.constant 0 : index
      %c0_186 = arith.constant 0 : index
      %560 = vector.load %arg27[%c0_185, %c0_186] : memref<1x128xf32, #tpu.memory_space<vmem>>, vector<1x128xf32>
      %cst_187 = arith.constant dense<0.000000e+00> : vector<16xf32>
      %561 = vector.multi_reduction <add>, %555, %cst_187 [1] : vector<16x128xf32> to vector<16xf32>
      %562 = vector.shape_cast %561 : vector<16xf32> to vector<16x1xf32>
      %cst_188 = arith.constant 1.280000e+02 : f32
      %563 = vector.broadcast %cst_188 : f32 to vector<16x1xf32>
      %564 = arith.divf %562, %563 : vector<16x1xf32>
      %565 = vector.broadcast %564 : vector<16x1xf32> to vector<16x128xf32>
      %566 = arith.subf %555, %565 : vector<16x128xf32>
      %567 = arith.mulf %566, %566 : vector<16x128xf32>
      %cst_189 = arith.constant dense<0.000000e+00> : vector<16xf32>
      %568 = vector.multi_reduction <add>, %567, %cst_189 [1] : vector<16x128xf32> to vector<16xf32>
      %569 = vector.shape_cast %568 : vector<16xf32> to vector<16x1xf32>
      %cst_190 = arith.constant 1.280000e+02 : f32
      %570 = vector.broadcast %cst_190 : f32 to vector<16x1xf32>
      %571 = arith.divf %569, %570 : vector<16x1xf32>
      %572 = vector.broadcast %564 : vector<16x1xf32> to vector<16x128xf32>
      %573 = arith.subf %555, %572 : vector<16x128xf32>
      %cst_191 = arith.constant 9.99999974E-6 : f32
      %574 = vector.broadcast %cst_191 : f32 to vector<16x1xf32>
      %575 = arith.addf %571, %574 : vector<16x1xf32>
      %576 = math.rsqrt %575 : vector<16x1xf32>
      %577 = vector.broadcast %576 : vector<16x1xf32> to vector<16x128xf32>
      %578 = arith.mulf %573, %577 : vector<16x128xf32>
      %579 = vector.broadcast %560 : vector<1x128xf32> to vector<16x128xf32>
      %580 = arith.mulf %578, %579 : vector<16x128xf32>
      %c0_192 = arith.constant 0 : index
      %c0_193 = arith.constant 0 : index
      %581 = vector.load %arg28[%c0_192, %c0_193] : memref<16x128xf32, #tpu.memory_space<vmem>>, vector<16x128xf32>
      tpu.vector_store %arg28[%c0_192, %c0_193], %580 {strides = array<i32>} : memref<16x128xf32, #tpu.memory_space<vmem>>, vector<16x128xf32>,
    } else {
    }
    return
  }
  func.func @transform_0(%arg0: i32) -> (i32, i32) {
    %c0_i32 = arith.constant 0 : i32
    %c0_i32_0 = arith.constant 0 : i32
    %c0_i32_1 = arith.constant 0 : i32
    return %c0_i32, %c0_i32_0 : i32, i32
  }
  func.func @transform_1(%arg0: i32) -> (i32, i32) {
    %c0_i32 = arith.constant 0 : i32
    %c0_i32_0 = arith.constant 0 : i32
    %c0_i32_1 = arith.constant 0 : i32
    return %c0_i32, %c0_i32_0 : i32, i32
  }
  func.func @transform_2(%arg0: i32) -> (i32, i32, i32) {
    %c0_i32 = arith.constant 0 : i32
    %c0_i32_0 = arith.constant 0 : i32
    %c0_i32_1 = arith.constant 0 : i32
    %c0_i32_2 = arith.constant 0 : i32
    return %c0_i32, %c0_i32_0, %c0_i32_1 : i32, i32, i32
  }
  func.func @transform_3(%arg0: i32) -> (i32, i32, i32) {
    %c0_i32 = arith.constant 0 : i32
    %c0_i32_0 = arith.constant 0 : i32
    %c0_i32_1 = arith.constant 0 : i32
    %c0_i32_2 = arith.constant 0 : i32
    return %c0_i32, %c0_i32_0, %c0_i32_1 : i32, i32, i32
  }
  func.func @transform_4(%arg0: i32) -> (i32, i32, i32) {
    %c0_i32 = arith.constant 0 : i32
    %c0_i32_0 = arith.constant 0 : i32
    %c0_i32_1 = arith.constant 0 : i32
    return %arg0, %c0_i32, %c0_i32_0 : i32, i32, i32
  }
  func.func @transform_5(%arg0: i32) -> (i32, i32, i32) {
    %c0_i32 = arith.constant 0 : i32
    %c0_i32_0 = arith.constant 0 : i32
    %c0_i32_1 = arith.constant 0 : i32
    return %arg0, %c0_i32, %c0_i32_0 : i32, i32, i32
  }
  func.func @transform_6(%arg0: i32) -> (i32, i32, i32) {
    %c0_i32 = arith.constant 0 : i32
    %c0_i32_0 = arith.constant 0 : i32
    %c0_i32_1 = arith.constant 0 : i32
    return %arg0, %c0_i32, %c0_i32_0 : i32, i32, i32
  }
  func.func @transform_7(%arg0: i32) -> (i32, i32, i32) {
    %c0_i32 = arith.constant 0 : i32
    %c0_i32_0 = arith.constant 0 : i32
    %c0_i32_1 = arith.constant 0 : i32
    return %arg0, %c0_i32, %c0_i32_0 : i32, i32, i32
  }
  func.func @transform_8(%arg0: i32) -> (i32, i32, i32) {
    %c0_i32 = arith.constant 0 : i32
    %c0_i32_0 = arith.constant 0 : i32
    %c0_i32_1 = arith.constant 0 : i32
    return %arg0, %c0_i32, %c0_i32_0 : i32, i32, i32
  }
  func.func @transform_9(%arg0: i32) -> (i32, i32, i32) {
    %c0_i32 = arith.constant 0 : i32
    %c0_i32_0 = arith.constant 0 : i32
    %c0_i32_1 = arith.constant 0 : i32
    return %arg0, %c0_i32, %c0_i32_0 : i32, i32, i32
  }
  func.func @transform_10(%arg0: i32) -> (i32, i32, i32) {
    %c0_i32 = arith.constant 0 : i32
    %c0_i32_0 = arith.constant 0 : i32
    %c0_i32_1 = arith.constant 0 : i32
    return %arg0, %c0_i32, %c0_i32_0 : i32, i32, i32
  }
  func.func @transform_11(%arg0: i32) -> (i32, i32, i32) {
    %c0_i32 = arith.constant 0 : i32
    %c0_i32_0 = arith.constant 0 : i32
    %c0_i32_1 = arith.constant 0 : i32
    return %arg0, %c0_i32, %c0_i32_0 : i32, i32, i32
  }
  func.func @transform_12(%arg0: i32) -> (i32, i32, i32) {
    %c0_i32 = arith.constant 0 : i32
    %c0_i32_0 = arith.constant 0 : i32
    %c0_i32_1 = arith.constant 0 : i32
    return %arg0, %c0_i32, %c0_i32_0 : i32, i32, i32
  }
  func.func @transform_13(%arg0: i32) -> (i32, i32, i32) {
    %c0_i32 = arith.constant 0 : i32
    %c0_i32_0 = arith.constant 0 : i32
    %c0_i32_1 = arith.constant 0 : i32
    return %arg0, %c0_i32, %c0_i32_0 : i32, i32, i32
  }
  func.func @transform_14(%arg0: i32) -> (i32, i32, i32) {
    %c0_i32 = arith.constant 0 : i32
    %c0_i32_0 = arith.constant 0 : i32
    %c0_i32_1 = arith.constant 0 : i32
    return %arg0, %c0_i32, %c0_i32_0 : i32, i32, i32
  }
  func.func @transform_15(%arg0: i32) -> (i32, i32, i32) {
    %c0_i32 = arith.constant 0 : i32
    %c0_i32_0 = arith.constant 0 : i32
    %c0_i32_1 = arith.constant 0 : i32
    return %arg0, %c0_i32, %c0_i32_0 : i32, i32, i32
  }
  func.func @transform_16(%arg0: i32) -> (i32, i32, i32) {
    %c0_i32 = arith.constant 0 : i32
    %c0_i32_0 = arith.constant 0 : i32
    %c0_i32_1 = arith.constant 0 : i32
    return %arg0, %c0_i32, %c0_i32_0 : i32, i32, i32
  }
  func.func @transform_17(%arg0: i32) -> (i32, i32, i32) {
    %c0_i32 = arith.constant 0 : i32
    %c0_i32_0 = arith.constant 0 : i32
    %c0_i32_1 = arith.constant 0 : i32
    return %arg0, %c0_i32, %c0_i32_0 : i32, i32, i32
  }
  func.func @transform_18(%arg0: i32) -> (i32, i32, i32) {
    %c0_i32 = arith.constant 0 : i32
    %c0_i32_0 = arith.constant 0 : i32
    %c0_i32_1 = arith.constant 0 : i32
    return %arg0, %c0_i32, %c0_i32_0 : i32, i32, i32
  }
  func.func @transform_19(%arg0: i32) -> (i32, i32, i32) {
    %c0_i32 = arith.constant 0 : i32
    %c0_i32_0 = arith.constant 0 : i32
    %c0_i32_1 = arith.constant 0 : i32
    return %arg0, %c0_i32, %c0_i32_0 : i32, i32, i32
  }
  func.func @transform_20(%arg0: i32) -> (i32, i32, i32) {
    %c0_i32 = arith.constant 0 : i32
    %c0_i32_0 = arith.constant 0 : i32
    %c0_i32_1 = arith.constant 0 : i32
    return %arg0, %c0_i32, %c0_i32_0 : i32, i32, i32
  }
  func.func @transform_21(%arg0: i32) -> (i32, i32, i32) {
    %c0_i32 = arith.constant 0 : i32
    %c0_i32_0 = arith.constant 0 : i32
    %c0_i32_1 = arith.constant 0 : i32
    return %arg0, %c0_i32, %c0_i32_0 : i32, i32, i32
  }
  func.func @transform_22(%arg0: i32) -> (i32, i32, i32) {
    %c0_i32 = arith.constant 0 : i32
    %c0_i32_0 = arith.constant 0 : i32
    %c0_i32_1 = arith.constant 0 : i32
    return %arg0, %c0_i32, %c0_i32_0 : i32, i32, i32
  }
  func.func @transform_23(%arg0: i32) -> (i32, i32, i32) {
    %c0_i32 = arith.constant 0 : i32
    %c0_i32_0 = arith.constant 0 : i32
    %c0_i32_1 = arith.constant 0 : i32
    return %arg0, %c0_i32, %c0_i32_0 : i32, i32, i32
  }
  func.func @transform_24(%arg0: i32) -> (i32, i32, i32) {
    %c0_i32 = arith.constant 0 : i32
    %c0_i32_0 = arith.constant 0 : i32
    %c0_i32_1 = arith.constant 0 : i32
    return %arg0, %c0_i32, %c0_i32_0 : i32, i32, i32
  }
  func.func @transform_25(%arg0: i32) -> (i32, i32, i32) {
    %c0_i32 = arith.constant 0 : i32
    %c0_i32_0 = arith.constant 0 : i32
    %c0_i32_1 = arith.constant 0 : i32
    return %arg0, %c0_i32, %c0_i32_0 : i32, i32, i32
  }
  func.func @transform_26(%arg0: i32) -> (i32, i32) {
    %c0_i32 = arith.constant 0 : i32
    %c0_i32_0 = arith.constant 0 : i32
    %c0_i32_1 = arith.constant 0 : i32
    return %c0_i32, %c0_i32_0 : i32, i32
  }
  func.func @transform_27(%arg0: i32) -> (i32, i32) {
    %c0_i32 = arith.constant 0 : i32
    %c0_i32_0 = arith.constant 0 : i32
    %c0_i32_1 = arith.constant 0 : i32
    return %c0_i32, %c0_i32_0 : i32, i32
  }
}

</mosaic_0001>

<llo_original>
// kernel: tpu_custom_call.1
$region0: #{tpu_custom_call.1}
  #allocation0 [shape = 'u32[]', space=smem, size = 0x4, offset = 0x4, fixed_abs, tag = 'smem constant byte address 0x4 - core index']
  #allocation1 [shape = 'u32[144,128]{1,0:T(1,128)}', space=vmem, size = 0x12000, scoped, tag = 'internal scratch']
  #allocation2 [shape = 'f32[16,128]{1,0:T(8,128)}', space=vmem, size = 0x2000, scoped, tag = 'scratch operand']
  %s0 = inlined_call_operand.hbm [shape: f32[16,128], index: 0, kind: input, shape index: {}]
  %s1 = inlined_call_operand.hbm [shape: f32[16,128], index: 1, kind: input, shape index: {}]
  %s2 = inlined_call_operand.hbm [shape: f32[1,1,128], index: 2, kind: input, shape index: {}]
  %s3 = inlined_call_operand.vmem [shape: f32[2,1,128], index: 3, kind: input, shape index: {}]
  %s4 = inlined_call_operand.hbm [shape: f32[2,1,128], index: 4, kind: input, shape index: {}]
  %s5 = inlined_call_operand.hbm [shape: bf16[2,128,256], index: 5, kind: input, shape index: {}]
  %s6 = inlined_call_operand.hbm [shape: bf16[2,128,256], index: 6, kind: input, shape index: {}]
  %s7 = inlined_call_operand.hbm [shape: bf16[2,128,256], index: 7, kind: input, shape index: {}]
  %s8 = inlined_call_operand.vmem [shape: f32[2,1,64], index: 8, kind: input, shape index: {}]
  %s9 = inlined_call_operand.vmem [shape: f32[2,1,64], index: 9, kind: input, shape index: {}]
  %s10 = inlined_call_operand.vmem [shape: f32[2,1,256], index: 10, kind: input, shape index: {}]
  %s11 = inlined_call_operand.vmem [shape: f32[2,1,256], index: 11, kind: input, shape index: {}]
  %s12 = inlined_call_operand.hbm [shape: bf16[2,256,128], index: 12, kind: input, shape index: {}]
  %s13 = inlined_call_operand.vmem [shape: f32[2,1,128], index: 13, kind: input, shape index: {}]
  %s14 = inlined_call_operand.hbm [shape: bf16[2,128,256], index: 14, kind: input, shape index: {}]
  %s15 = inlined_call_operand.hbm [shape: bf16[2,128,256], index: 15, kind: input, shape index: {}]
  %s16 = inlined_call_operand.hbm [shape: bf16[2,128,256], index: 16, kind: input, shape index: {}]
  %s17 = inlined_call_operand.vmem [shape: f32[2,1,64], index: 17, kind: input, shape index: {}]
  %s18 = inlined_call_operand.vmem [shape: f32[2,1,64], index: 18, kind: input, shape index: {}]
  %s19 = inlined_call_operand.vmem [shape: f32[2,1,256], index: 19, kind: input, shape index: {}]
  %s20 = inlined_call_operand.vmem [shape: f32[2,1,256], index: 20, kind: input, shape index: {}]
  %s21 = inlined_call_operand.hbm [shape: bf16[2,256,128], index: 21, kind: input, shape index: {}]
  %s22 = inlined_call_operand.vmem [shape: f32[2,1,128], index: 22, kind: input, shape index: {}]
  %s23 = inlined_call_operand.hbm [shape: bf16[2,128,512], index: 23, kind: input, shape index: {}]
  %s24 = inlined_call_operand.vmem [shape: f32[2,1,256], index: 24, kind: input, shape index: {}]
  %s25 = inlined_call_operand.hbm [shape: bf16[2,256,128], index: 25, kind: input, shape index: {}]
  %s26 = inlined_call_operand.vmem [shape: f32[1,128], index: 26, kind: input, shape index: {}]
  %s27 = inlined_call_operand.hbm [shape: f32[16,128], index: 27, kind: output, shape index: {}]
  %s28 = sld [smem:[#allocation0]]
  $region205: #{tpu_custom_call.1} parent=0
    _
  %s30 = ssub.s32 1, %s28
  %s31 = scalar_select 0, %s30, %s28
  $region1: #{tpu_custom_call.1} parent=0
    #allocation3 [shape = 'u8[8192]{0}', space=vmem, size = 0x2000, scoped, tag = 'input window, operand 0, single buffered']
    #allocation4 [shape = 's32[2]{0}', space=sflag, size = 0x8, scoped, tag = 'scoped memory for tpu_custom_call.1']
    #allocation5 [shape = 's32[2]{0}', space=sflag, size = 0x8, scoped, tag = 'scoped memory for tpu_custom_call.1']
    #allocation6 [shape = 'u8[8192]{0}', space=vmem, size = 0x2000, scoped, tag = 'input window, operand 1, single buffered']
    #allocation7 [shape = 's32[1]{0}', space=sflag, size = 0x4, scoped, tag = 'scoped memory for tpu_custom_call.1']
    #allocation8 [shape = 'u8[512]{0}', space=vmem, size = 0x400, scoped, tag = 'input window, operand 2, single buffered']
    #allocation9 [shape = 'u8[1024]{0}', space=vmem, size = 0x400, scoped, tag = 'input window, operand 4']
    #allocation10 [shape = 's32[2]{0}', space=sflag, size = 0x8, scoped, tag = 'scoped memory for tpu_custom_call.1']
    #allocation11 [shape = 'u8[131072]{0}', space=vmem, size = 0x20000, scoped, tag = 'input window, operand 5']
    #allocation12 [shape = 'u8[131072]{0}', space=vmem, size = 0x20000, scoped, tag = 'input window, operand 6']
    #allocation13 [shape = 's32[2]{0}', space=sflag, size = 0x8, scoped, tag = 'scoped memory for tpu_custom_call.1']
    #allocation14 [shape = 'u8[131072]{0}', space=vmem, size = 0x20000, scoped, tag = 'input window, operand 7']
    #allocation15 [shape = 'u8[131072]{0}', space=vmem, size = 0x20000, scoped, tag = 'input window, operand 12']
    #allocation16 [shape = 's32[2]{0}', space=sflag, size = 0x8, scoped, tag = 'scoped memory for tpu_custom_call.1']
    #allocation17 [shape = 'u8[131072]{0}', space=vmem, size = 0x20000, scoped, tag = 'input window, operand 14']
    #allocation18 [shape = 'u8[131072]{0}', space=vmem, size = 0x20000, scoped, tag = 'input window, operand 15']
    #allocation19 [shape = 's32[2]{0}', space=sflag, size = 0x8, scoped, tag = 'scoped memory for tpu_custom_call.1']
    #allocation20 [shape = 'u8[131072]{0}', space=vmem, size = 0x20000, scoped, tag = 'input window, operand 16']
    #allocation21 [shape = 'u8[131072]{0}', space=vmem, size = 0x20000, scoped, tag = 'input window, operand 21']
    #allocation22 [shape = 's32[2]{0}', space=sflag, size = 0x8, scoped, tag = 'scoped memory for tpu_custom_call.1']
    #allocation23 [shape = 'u8[262144]{0}', space=vmem, size = 0x40000, scoped, tag = 'input window, operand 23']
    #allocation24 [shape = 'u8[131072]{0}', space=vmem, size = 0x20000, scoped, tag = 'input window, operand 25']
    #allocation25 [shape = 's32[2]{0}', space=sflag, size = 0x8, scoped, tag = 'scoped memory for tpu_custom_call.1']
    #allocation26 [shape = 'u8[8192]{0}', space=vmem, size = 0x2000, scoped, tag = 'output window, operand 0, single buffered']
    %32 = vsyncpa [#allocation4], 0
    %33 = vsyncpa [#allocation7], 0
    %34 = vsyncpa [#allocation10], 0
    %s35 = scalar_lea.sflag [#allocation10], 1
    %36 = vsyncpa %s35, 0
    %37 = vsyncpa [#allocation13], 0
    %s38 = scalar_lea.sflag [#allocation13], 1
    %39 = vsyncpa %s38, 0
    %40 = vsyncpa [#allocation16], 0
    %s41 = scalar_lea.sflag [#allocation16], 1
    %42 = vsyncpa %s41, 0
    %43 = vsyncpa [#allocation19], 0
    %s44 = scalar_lea.sflag [#allocation19], 1
    %45 = vsyncpa %s44, 0
    %46 = vsyncpa [#allocation22], 0
    %s47 = scalar_lea.sflag [#allocation22], 1
    %48 = vsyncpa %s47, 0
    %49 = vsyncpa [#allocation25], 0
    %s50 = scalar_lea.sflag [#allocation25], 1
    %51 = vsyncpa %s50, 0
    %52 = vsyncpa [#allocation5], 0
    loop: start=0, step=1, limit=4
    $region2: #{tpu_custom_call.1} parent=1 // loop_pre_header
      _
    $region3: #{tpu_custom_call.1} parent=1 // loop_header
      %s54 = sphi 0, %s58
      %p55 = scmp.ge.s32.totalorder %s54, 4
      %s62 = sphi 0, %s62
      %s64 = sphi 0, %s62
      %s65 = sphi 0, %s64
      %s79 = sphi 0, %s65
      %s83 = sphi 0, %s83
      %s85 = sphi 0, %s83
      %s86 = sphi 0, %s85
      %s100 = sphi 0, %s86
      %s104 = sphi 0, %s104
      %s106 = sphi 0, %s104
      %s107 = sphi 0, %s106
      %s121 = sphi 0, %s107
      %s125 = sphi 0, %s125
      %s127 = sphi 0, %s125
      %s128 = sphi 0, %s127
      %s142 = sphi 0, %s128
      %s148 = sphi 0, %s150
      %s151 = sphi 0, %s148
      %s152 = sphi 0, %s151
      %s168 = sphi 0, %s152
      %s174 = sphi 0, %s176
      %s177 = sphi 0, %s174
      %s178 = sphi 0, %s177
      %s194 = sphi 0, %s178
      %s200 = sphi 0, %s202
      %s203 = sphi 0, %s200
      %s204 = sphi 0, %s203
      %s220 = sphi 0, %s204
      %s226 = sphi 0, %s228
      %s229 = sphi 0, %s226
      %s230 = sphi 0, %s229
      %s246 = sphi 0, %s230
      %s252 = sphi 0, %s254
      %s255 = sphi 0, %s252
      %s256 = sphi 0, %s255
      %s272 = sphi 0, %s256
      %s278 = sphi 0, %s280
      %s281 = sphi 0, %s278
      %s282 = sphi 0, %s281
      %s298 = sphi 0, %s282
      %s304 = sphi 0, %s306
      %s307 = sphi 0, %s304
      %s308 = sphi 0, %s307
      %s324 = sphi 0, %s308
      %s330 = sphi 0, %s332
      %s333 = sphi 0, %s330
      %s334 = sphi 0, %s333
      %s350 = sphi 0, %s334
      %s356 = sphi 0, %s358
      %s359 = sphi 0, %s356
      %s360 = sphi 0, %s359
      %s376 = sphi 0, %s360
      %s382 = sphi 0, %s384
      %s385 = sphi 0, %s382
      %s386 = sphi 0, %s385
      %s402 = sphi 0, %s386
      %s408 = sphi 0, %s410
      %s411 = sphi 0, %s408
      %s412 = sphi 0, %s411
      %s428 = sphi 0, %s412
      %s434 = sphi 0, %s436
      %s437 = sphi 0, %s434
      %s438 = sphi 0, %s437
      %s454 = sphi 0, %s438
      %s460 = sphi 0, %s462
      %s463 = sphi 0, %s460
      %s464 = sphi 0, %s463
      %s480 = sphi 0, %s464
      %s486 = sphi 0, %s488
      %s489 = sphi 0, %s486
      %s490 = sphi 0, %s489
      %s506 = sphi 0, %s490
      %s512 = sphi 0, %s514
      %s515 = sphi 0, %s512
      %s516 = sphi 0, %s515
      %s532 = sphi 0, %s516
      %s538 = sphi 0, %s540
      %s541 = sphi 0, %s538
      %s542 = sphi 0, %s541
      %s558 = sphi 0, %s542
      %s564 = sphi 0, %s566
      %s567 = sphi 0, %s564
      %s568 = sphi 0, %s567
      %s584 = sphi 0, %s568
      %s590 = sphi 0, %s592
      %s593 = sphi 0, %s590
      %s594 = sphi 0, %s593
      %s610 = sphi 0, %s594
      %s616 = sphi 0, %s618
      %s619 = sphi 0, %s616
      %s620 = sphi 0, %s619
      %s636 = sphi 0, %s620
      %s642 = sphi 0, %s644
      %s645 = sphi 0, %s642
      %s646 = sphi 0, %s645
      %s662 = sphi 0, %s646
      %s668 = sphi 0, %s670
      %s671 = sphi 0, %s668
      %s672 = sphi 0, %s671
      %s688 = sphi 0, %s672
      %s694 = sphi 0, %s696
      %s697 = sphi 0, %s694
      %s698 = sphi 0, %s697
      %s714 = sphi 0, %s698
      %s718 = sphi 0, %s718
      %s720 = sphi 0, %s718
      %s721 = sphi 0, %s720
      %s735 = sphi 0, %s721
      %s739 = sphi 0, %s739
      %s741 = sphi 0, %s739
      %s742 = sphi 0, %s741
      %s756 = sphi 0, %s742
    $region4: #{tpu_custom_call.1} parent=1 // loop_header_branch
      %57 = sbr.rel (%p55) target = $region8
    $region5: #{tpu_custom_call.1} parent=1 // loop_body
      %s59 = ssub.s32 %s54, 1
      %s60 = ssub.s32 %s54, 2
      %s61 = sadd.s32 %s54, 1
      %s63 = sadd.s32 %s62, 1
      %p66 = scmp.eq.s32.totalorder %s54, 1
      %p67 = scmp.ne.s32.totalorder %s62, %s64
      %p68 = scmp.eq.s32.totalorder %s54, 0
      %p69 = por %p67, %p68
      %p70 = scmp.ne.s32.totalorder %s62, %s64
      %p71 = scmp.eq.s32.totalorder %s59, 1
      %p72 = por %p70, %p71
      %p73 = scmp.ne.s32.totalorder %s64, %s65
      %p74 = scmp.eq.s32.totalorder %s59, 0
      %p75 = por %p73, %p74
      %p76 = scmp.ne.s32.totalorder %s64, %s65
      %p77 = scmp.eq.s32.totalorder %s60, 1
      %p78 = por %p76, %p77
      %p80 = scmp.ne.s32.totalorder %s65, %s79
      %p81 = scmp.eq.s32.totalorder %s60, 0
      %p82 = por %p80, %p81
      %s84 = sadd.s32 %s83, 1
      %p87 = scmp.eq.s32.totalorder %s54, 1
      %p88 = scmp.ne.s32.totalorder %s83, %s85
      %p89 = scmp.eq.s32.totalorder %s54, 0
      %p90 = por %p88, %p89
      %p91 = scmp.ne.s32.totalorder %s83, %s85
      %p92 = scmp.eq.s32.totalorder %s59, 1
      %p93 = por %p91, %p92
      %p94 = scmp.ne.s32.totalorder %s85, %s86
      %p95 = scmp.eq.s32.totalorder %s59, 0
      %p96 = por %p94, %p95
      %p97 = scmp.ne.s32.totalorder %s85, %s86
      %p98 = scmp.eq.s32.totalorder %s60, 1
      %p99 = por %p97, %p98
      %p101 = scmp.ne.s32.totalorder %s86, %s100
      %p102 = scmp.eq.s32.totalorder %s60, 0
      %p103 = por %p101, %p102
      %s105 = sadd.s32 %s104, 1
      %p108 = scmp.eq.s32.totalorder %s54, 1
      %p109 = scmp.ne.s32.totalorder %s104, %s106
      %p110 = scmp.eq.s32.totalorder %s54, 0
      %p111 = por %p109, %p110
      %p112 = scmp.ne.s32.totalorder %s104, %s106
      %p113 = scmp.eq.s32.totalorder %s59, 1
      %p114 = por %p112, %p113
      %p115 = scmp.ne.s32.totalorder %s106, %s107
      %p116 = scmp.eq.s32.totalorder %s59, 0
      %p117 = por %p115, %p116
      %p118 = scmp.ne.s32.totalorder %s106, %s107
      %p119 = scmp.eq.s32.totalorder %s60, 1
      %p120 = por %p118, %p119
      %p122 = scmp.ne.s32.totalorder %s107, %s121
      %p123 = scmp.eq.s32.totalorder %s60, 0
      %p124 = por %p122, %p123
      %s126 = sadd.s32 %s125, 1
      %p129 = scmp.eq.s32.totalorder %s54, 1
      %p130 = scmp.ne.s32.totalorder %s125, %s127
      %p131 = scmp.eq.s32.totalorder %s54, 0
      %p132 = por %p130, %p131
      %p133 = scmp.ne.s32.totalorder %s125, %s127
      %p134 = scmp.eq.s32.totalorder %s59, 1
      %p135 = por %p133, %p134
      %p136 = scmp.ne.s32.totalorder %s127, %s128
      %p137 = scmp.eq.s32.totalorder %s59, 0
      %p138 = por %p136, %p137
      %p139 = scmp.ne.s32.totalorder %s127, %s128
      %p140 = scmp.eq.s32.totalorder %s60, 1
      %p141 = por %p139, %p140
      %p143 = scmp.ne.s32.totalorder %s128, %s142
      %p144 = scmp.eq.s32.totalorder %s60, 0
      %p145 = por %p143, %p144
      %s146 = ssub.s32 %s54, %s61
      %p147 = scmp.eq.s32.totalorder %s146, 0
      %s149 = sadd.s32 %s148, 1
      %s150 = scalar_select %p147, %s148, %s149
      %p153 = pneg %p147
      %p154 = scmp.eq.s32.totalorder %s54, 1
      %p155 = por %p153, %p154
      %p156 = scmp.ne.s32.totalorder %s148, %s151
      %p157 = scmp.eq.s32.totalorder %s54, 0
      %p158 = por %p156, %p157
      %p159 = scmp.ne.s32.totalorder %s148, %s151
      %p160 = scmp.eq.s32.totalorder %s59, 1
      %p161 = por %p159, %p160
      %p162 = scmp.ne.s32.totalorder %s151, %s152
      %p163 = scmp.eq.s32.totalorder %s59, 0
      %p164 = por %p162, %p163
      %p165 = scmp.ne.s32.totalorder %s151, %s152
      %p166 = scmp.eq.s32.totalorder %s60, 1
      %p167 = por %p165, %p166
      %p169 = scmp.ne.s32.totalorder %s152, %s168
      %p170 = scmp.eq.s32.totalorder %s60, 0
      %p171 = por %p169, %p170
      %s172 = ssub.s32 %s54, %s61
      %p173 = scmp.eq.s32.totalorder %s172, 0
      %s175 = sadd.s32 %s174, 1
      %s176 = scalar_select %p173, %s174, %s175
      %p179 = pneg %p173
      %p180 = scmp.eq.s32.totalorder %s54, 1
      %p181 = por %p179, %p180
      %p182 = scmp.ne.s32.totalorder %s174, %s177
      %p183 = scmp.eq.s32.totalorder %s54, 0
      %p184 = por %p182, %p183
      %p185 = scmp.ne.s32.totalorder %s174, %s177
      %p186 = scmp.eq.s32.totalorder %s59, 1
      %p187 = por %p185, %p186
      %p188 = scmp.ne.s32.totalorder %s177, %s178
      %p189 = scmp.eq.s32.totalorder %s59, 0
      %p190 = por %p188, %p189
      %p191 = scmp.ne.s32.totalorder %s177, %s178
      %p192 = scmp.eq.s32.totalorder %s60, 1
      %p193 = por %p191, %p192
      %p195 = scmp.ne.s32.totalorder %s178, %s194
      %p196 = scmp.eq.s32.totalorder %s60, 0
      %p197 = por %p195, %p196
      %s198 = ssub.s32 %s54, %s61
      %p199 = scmp.eq.s32.totalorder %s198, 0
      %s201 = sadd.s32 %s200, 1
      %s202 = scalar_select %p199, %s200, %s201
      %p205 = pneg %p199
      %p206 = scmp.eq.s32.totalorder %s54, 1
      %p207 = por %p205, %p206
      %p208 = scmp.ne.s32.totalorder %s200, %s203
      %p209 = scmp.eq.s32.totalorder %s54, 0
      %p210 = por %p208, %p209
      %p211 = scmp.ne.s32.totalorder %s200, %s203
      %p212 = scmp.eq.s32.totalorder %s59, 1
      %p213 = por %p211, %p212
      %p214 = scmp.ne.s32.totalorder %s203, %s204
      %p215 = scmp.eq.s32.totalorder %s59, 0
      %p216 = por %p214, %p215
      %p217 = scmp.ne.s32.totalorder %s203, %s204
      %p218 = scmp.eq.s32.totalorder %s60, 1
      %p219 = por %p217, %p218
      %p221 = scmp.ne.s32.totalorder %s204, %s220
      %p222 = scmp.eq.s32.totalorder %s60, 0
      %p223 = por %p221, %p222
      %s224 = ssub.s32 %s54, %s61
      %p225 = scmp.eq.s32.totalorder %s224, 0
      %s227 = sadd.s32 %s226, 1
      %s228 = scalar_select %p225, %s226, %s227
      %p231 = pneg %p225
      %p232 = scmp.eq.s32.totalorder %s54, 1
      %p233 = por %p231, %p232
      %p234 = scmp.ne.s32.totalorder %s226, %s229
      %p235 = scmp.eq.s32.totalorder %s54, 0
      %p236 = por %p234, %p235
      %p237 = scmp.ne.s32.totalorder %s226, %s229
      %p238 = scmp.eq.s32.totalorder %s59, 1
      %p239 = por %p237, %p238
      %p240 = scmp.ne.s32.totalorder %s229, %s230
      %p241 = scmp.eq.s32.totalorder %s59, 0
      %p242 = por %p240, %p241
      %p243 = scmp.ne.s32.totalorder %s229, %s230
      %p244 = scmp.eq.s32.totalorder %s60, 1
      %p245 = por %p243, %p244
      %p247 = scmp.ne.s32.totalorder %s230, %s246
      %p248 = scmp.eq.s32.totalorder %s60, 0
      %p249 = por %p247, %p248
      %s250 = ssub.s32 %s54, %s61
      %p251 = scmp.eq.s32.totalorder %s250, 0
      %s253 = sadd.s32 %s252, 1
      %s254 = scalar_select %p251, %s252, %s253
      %p257 = pneg %p251
      %p258 = scmp.eq.s32.totalorder %s54, 1
      %p259 = por %p257, %p258
      %p260 = scmp.ne.s32.totalorder %s252, %s255
      %p261 = scmp.eq.s32.totalorder %s54, 0
      %p262 = por %p260, %p261
      %p263 = scmp.ne.s32.totalorder %s252, %s255
      %p264 = scmp.eq.s32.totalorder %s59, 1
      %p265 = por %p263, %p264
      %p266 = scmp.ne.s32.totalorder %s255, %s256
      %p267 = scmp.eq.s32.totalorder %s59, 0
      %p268 = por %p266, %p267
      %p269 = scmp.ne.s32.totalorder %s255, %s256
      %p270 = scmp.eq.s32.totalorder %s60, 1
      %p271 = por %p269, %p270
      %p273 = scmp.ne.s32.totalorder %s256, %s272
      %p274 = scmp.eq.s32.totalorder %s60, 0
      %p275 = por %p273, %p274
      %s276 = ssub.s32 %s54, %s61
      %p277 = scmp.eq.s32.totalorder %s276, 0
      %s279 = sadd.s32 %s278, 1
      %s280 = scalar_select %p277, %s278, %s279
      %p283 = pneg %p277
      %p284 = scmp.eq.s32.totalorder %s54, 1
      %p285 = por %p283, %p284
      %p286 = scmp.ne.s32.totalorder %s278, %s281
      %p287 = scmp.eq.s32.totalorder %s54, 0
      %p288 = por %p286, %p287
      %p289 = scmp.ne.s32.totalorder %s278, %s281
      %p290 = scmp.eq.s32.totalorder %s59, 1
      %p291 = por %p289, %p290
      %p292 = scmp.ne.s32.totalorder %s281, %s282
      %p293 = scmp.eq.s32.totalorder %s59, 0
      %p294 = por %p292, %p293
      %p295 = scmp.ne.s32.totalorder %s281, %s282
      %p296 = scmp.eq.s32.totalorder %s60, 1
      %p297 = por %p295, %p296
      %p299 = scmp.ne.s32.totalorder %s282, %s298
      %p300 = scmp.eq.s32.totalorder %s60, 0
      %p301 = por %p299, %p300
      %s302 = ssub.s32 %s54, %s61
      %p303 = scmp.eq.s32.totalorder %s302, 0
      %s305 = sadd.s32 %s304, 1
      %s306 = scalar_select %p303, %s304, %s305
      %p309 = pneg %p303
      %p310 = scmp.eq.s32.totalorder %s54, 1
      %p311 = por %p309, %p310
      %p312 = scmp.ne.s32.totalorder %s304, %s307
      %p313 = scmp.eq.s32.totalorder %s54, 0
      %p314 = por %p312, %p313
      %p315 = scmp.ne.s32.totalorder %s304, %s307
      %p316 = scmp.eq.s32.totalorder %s59, 1
      %p317 = por %p315, %p316
      %p318 = scmp.ne.s32.totalorder %s307, %s308
      %p319 = scmp.eq.s32.totalorder %s59, 0
      %p320 = por %p318, %p319
      %p321 = scmp.ne.s32.totalorder %s307, %s308
      %p322 = scmp.eq.s32.totalorder %s60, 1
      %p323 = por %p321, %p322
      %p325 = scmp.ne.s32.totalorder %s308, %s324
      %p326 = scmp.eq.s32.totalorder %s60, 0
      %p327 = por %p325, %p326
      %s328 = ssub.s32 %s54, %s61
      %p329 = scmp.eq.s32.totalorder %s328, 0
      %s331 = sadd.s32 %s330, 1
      %s332 = scalar_select %p329, %s330, %s331
      %p335 = pneg %p329
      %p336 = scmp.eq.s32.totalorder %s54, 1
      %p337 = por %p335, %p336
      %p338 = scmp.ne.s32.totalorder %s330, %s333
      %p339 = scmp.eq.s32.totalorder %s54, 0
      %p340 = por %p338, %p339
      %p341 = scmp.ne.s32.totalorder %s330, %s333
      %p342 = scmp.eq.s32.totalorder %s59, 1
      %p343 = por %p341, %p342
      %p344 = scmp.ne.s32.totalorder %s333, %s334
      %p345 = scmp.eq.s32.totalorder %s59, 0
      %p346 = por %p344, %p345
      %p347 = scmp.ne.s32.totalorder %s333, %s334
      %p348 = scmp.eq.s32.totalorder %s60, 1
      %p349 = por %p347, %p348
      %p351 = scmp.ne.s32.totalorder %s334, %s350
      %p352 = scmp.eq.s32.totalorder %s60, 0
      %p353 = por %p351, %p352
      %s354 = ssub.s32 %s54, %s61
      %p355 = scmp.eq.s32.totalorder %s354, 0
      %s357 = sadd.s32 %s356, 1
      %s358 = scalar_select %p355, %s356, %s357
      %p361 = pneg %p355
      %p362 = scmp.eq.s32.totalorder %s54, 1
      %p363 = por %p361, %p362
      %p364 = scmp.ne.s32.totalorder %s356, %s359
      %p365 = scmp.eq.s32.totalorder %s54, 0
      %p366 = por %p364, %p365
      %p367 = scmp.ne.s32.totalorder %s356, %s359
      %p368 = scmp.eq.s32.totalorder %s59, 1
      %p369 = por %p367, %p368
      %p370 = scmp.ne.s32.totalorder %s359, %s360
      %p371 = scmp.eq.s32.totalorder %s59, 0
      %p372 = por %p370, %p371
      %p373 = scmp.ne.s32.totalorder %s359, %s360
      %p374 = scmp.eq.s32.totalorder %s60, 1
      %p375 = por %p373, %p374
      %p377 = scmp.ne.s32.totalorder %s360, %s376
      %p378 = scmp.eq.s32.totalorder %s60, 0
      %p379 = por %p377, %p378
      %s380 = ssub.s32 %s54, %s61
      %p381 = scmp.eq.s32.totalorder %s380, 0
      %s383 = sadd.s32 %s382, 1
      %s384 = scalar_select %p381, %s382, %s383
      %p387 = pneg %p381
      %p388 = scmp.eq.s32.totalorder %s54, 1
      %p389 = por %p387, %p388
      %p390 = scmp.ne.s32.totalorder %s382, %s385
      %p391 = scmp.eq.s32.totalorder %s54, 0
      %p392 = por %p390, %p391
      %p393 = scmp.ne.s32.totalorder %s382, %s385
      %p394 = scmp.eq.s32.totalorder %s59, 1
      %p395 = por %p393, %p394
      %p396 = scmp.ne.s32.totalorder %s385, %s386
      %p397 = scmp.eq.s32.totalorder %s59, 0
      %p398 = por %p396, %p397
      %p399 = scmp.ne.s32.totalorder %s385, %s386
      %p400 = scmp.eq.s32.totalorder %s60, 1
      %p401 = por %p399, %p400
      %p403 = scmp.ne.s32.totalorder %s386, %s402
      %p404 = scmp.eq.s32.totalorder %s60, 0
      %p405 = por %p403, %p404
      %s406 = ssub.s32 %s54, %s61
      %p407 = scmp.eq.s32.totalorder %s406, 0
      %s409 = sadd.s32 %s408, 1
      %s410 = scalar_select %p407, %s408, %s409
      %p413 = pneg %p407
      %p414 = scmp.eq.s32.totalorder %s54, 1
      %p415 = por %p413, %p414
      %p416 = scmp.ne.s32.totalorder %s408, %s411
      %p417 = scmp.eq.s32.totalorder %s54, 0
      %p418 = por %p416, %p417
      %p419 = scmp.ne.s32.totalorder %s408, %s411
      %p420 = scmp.eq.s32.totalorder %s59, 1
      %p421 = por %p419, %p420
      %p422 = scmp.ne.s32.totalorder %s411, %s412
      %p423 = scmp.eq.s32.totalorder %s59, 0
      %p424 = por %p422, %p423
      %p425 = scmp.ne.s32.totalorder %s411, %s412
      %p426 = scmp.eq.s32.totalorder %s60, 1
      %p427 = por %p425, %p426
      %p429 = scmp.ne.s32.totalorder %s412, %s428
      %p430 = scmp.eq.s32.totalorder %s60, 0
      %p431 = por %p429, %p430
      %s432 = ssub.s32 %s54, %s61
      %p433 = scmp.eq.s32.totalorder %s432, 0
      %s435 = sadd.s32 %s434, 1
      %s436 = scalar_select %p433, %s434, %s435
      %p439 = pneg %p433
      %p440 = scmp.eq.s32.totalorder %s54, 1
      %p441 = por %p439, %p440
      %p442 = scmp.ne.s32.totalorder %s434, %s437
      %p443 = scmp.eq.s32.totalorder %s54, 0
      %p444 = por %p442, %p443
      %p445 = scmp.ne.s32.totalorder %s434, %s437
      %p446 = scmp.eq.s32.totalorder %s59, 1
      %p447 = por %p445, %p446
      %p448 = scmp.ne.s32.totalorder %s437, %s438
      %p449 = scmp.eq.s32.totalorder %s59, 0
      %p450 = por %p448, %p449
      %p451 = scmp.ne.s32.totalorder %s437, %s438
      %p452 = scmp.eq.s32.totalorder %s60, 1
      %p453 = por %p451, %p452
      %p455 = scmp.ne.s32.totalorder %s438, %s454
      %p456 = scmp.eq.s32.totalorder %s60, 0
      %p457 = por %p455, %p456
      %s458 = ssub.s32 %s54, %s61
      %p459 = scmp.eq.s32.totalorder %s458, 0
      %s461 = sadd.s32 %s460, 1
      %s462 = scalar_select %p459, %s460, %s461
      %p465 = pneg %p459
      %p466 = scmp.eq.s32.totalorder %s54, 1
      %p467 = por %p465, %p466
      %p468 = scmp.ne.s32.totalorder %s460, %s463
      %p469 = scmp.eq.s32.totalorder %s54, 0
      %p470 = por %p468, %p469
      %p471 = scmp.ne.s32.totalorder %s460, %s463
      %p472 = scmp.eq.s32.totalorder %s59, 1
      %p473 = por %p471, %p472
      %p474 = scmp.ne.s32.totalorder %s463, %s464
      %p475 = scmp.eq.s32.totalorder %s59, 0
      %p476 = por %p474, %p475
      %p477 = scmp.ne.s32.totalorder %s463, %s464
      %p478 = scmp.eq.s32.totalorder %s60, 1
      %p479 = por %p477, %p478
      %p481 = scmp.ne.s32.totalorder %s464, %s480
      %p482 = scmp.eq.s32.totalorder %s60, 0
      %p483 = por %p481, %p482
      %s484 = ssub.s32 %s54, %s61
      %p485 = scmp.eq.s32.totalorder %s484, 0
      %s487 = sadd.s32 %s486, 1
      %s488 = scalar_select %p485, %s486, %s487
      %p491 = pneg %p485
      %p492 = scmp.eq.s32.totalorder %s54, 1
      %p493 = por %p491, %p492
      %p494 = scmp.ne.s32.totalorder %s486, %s489
      %p495 = scmp.eq.s32.totalorder %s54, 0
      %p496 = por %p494, %p495
      %p497 = scmp.ne.s32.totalorder %s486, %s489
      %p498 = scmp.eq.s32.totalorder %s59, 1
      %p499 = por %p497, %p498
      %p500 = scmp.ne.s32.totalorder %s489, %s490
      %p501 = scmp.eq.s32.totalorder %s59, 0
      %p502 = por %p500, %p501
      %p503 = scmp.ne.s32.totalorder %s489, %s490
      %p504 = scmp.eq.s32.totalorder %s60, 1
      %p505 = por %p503, %p504
      %p507 = scmp.ne.s32.totalorder %s490, %s506
      %p508 = scmp.eq.s32.totalorder %s60, 0
      %p509 = por %p507, %p508
      %s510 = ssub.s32 %s54, %s61
      %p511 = scmp.eq.s32.totalorder %s510, 0
      %s513 = sadd.s32 %s512, 1
      %s514 = scalar_select %p511, %s512, %s513
      %p517 = pneg %p511
      %p518 = scmp.eq.s32.totalorder %s54, 1
      %p519 = por %p517, %p518
      %p520 = scmp.ne.s32.totalorder %s512, %s515
      %p521 = scmp.eq.s32.totalorder %s54, 0
      %p522 = por %p520, %p521
      %p523 = scmp.ne.s32.totalorder %s512, %s515
      %p524 = scmp.eq.s32.totalorder %s59, 1
      %p525 = por %p523, %p524
      %p526 = scmp.ne.s32.totalorder %s515, %s516
      %p527 = scmp.eq.s32.totalorder %s59, 0
      %p528 = por %p526, %p527
      %p529 = scmp.ne.s32.totalorder %s515, %s516
      %p530 = scmp.eq.s32.totalorder %s60, 1
      %p531 = por %p529, %p530
      %p533 = scmp.ne.s32.totalorder %s516, %s532
      %p534 = scmp.eq.s32.totalorder %s60, 0
      %p535 = por %p533, %p534
      %s536 = ssub.s32 %s54, %s61
      %p537 = scmp.eq.s32.totalorder %s536, 0
      %s539 = sadd.s32 %s538, 1
      %s540 = scalar_select %p537, %s538, %s539
      %p543 = pneg %p537
      %p544 = scmp.eq.s32.totalorder %s54, 1
      %p545 = por %p543, %p544
      %p546 = scmp.ne.s32.totalorder %s538, %s541
      %p547 = scmp.eq.s32.totalorder %s54, 0
      %p548 = por %p546, %p547
      %p549 = scmp.ne.s32.totalorder %s538, %s541
      %p550 = scmp.eq.s32.totalorder %s59, 1
      %p551 = por %p549, %p550
      %p552 = scmp.ne.s32.totalorder %s541, %s542
      %p553 = scmp.eq.s32.totalorder %s59, 0
      %p554 = por %p552, %p553
      %p555 = scmp.ne.s32.totalorder %s541, %s542
      %p556 = scmp.eq.s32.totalorder %s60, 1
      %p557 = por %p555, %p556
      %p559 = scmp.ne.s32.totalorder %s542, %s558
      %p560 = scmp.eq.s32.totalorder %s60, 0
      %p561 = por %p559, %p560
      %s562 = ssub.s32 %s54, %s61
      %p563 = scmp.eq.s32.totalorder %s562, 0
      %s565 = sadd.s32 %s564, 1
      %s566 = scalar_select %p563, %s564, %s565
      %p569 = pneg %p563
      %p570 = scmp.eq.s32.totalorder %s54, 1
      %p571 = por %p569, %p570
      %p572 = scmp.ne.s32.totalorder %s564, %s567
      %p573 = scmp.eq.s32.totalorder %s54, 0
      %p574 = por %p572, %p573
      %p575 = scmp.ne.s32.totalorder %s564, %s567
      %p576 = scmp.eq.s32.totalorder %s59, 1
      %p577 = por %p575, %p576
      %p578 = scmp.ne.s32.totalorder %s567, %s568
      %p579 = scmp.eq.s32.totalorder %s59, 0
      %p580 = por %p578, %p579
      %p581 = scmp.ne.s32.totalorder %s567, %s568
      %p582 = scmp.eq.s32.totalorder %s60, 1
      %p583 = por %p581, %p582
      %p585 = scmp.ne.s32.totalorder %s568, %s584
      %p586 = scmp.eq.s32.totalorder %s60, 0
      %p587 = por %p585, %p586
      %s588 = ssub.s32 %s54, %s61
      %p589 = scmp.eq.s32.totalorder %s588, 0
      %s591 = sadd.s32 %s590, 1
      %s592 = scalar_select %p589, %s590, %s591
      %p595 = pneg %p589
      %p596 = scmp.eq.s32.totalorder %s54, 1
      %p597 = por %p595, %p596
      %p598 = scmp.ne.s32.totalorder %s590, %s593
      %p599 = scmp.eq.s32.totalorder %s54, 0
      %p600 = por %p598, %p599
      %p601 = scmp.ne.s32.totalorder %s590, %s593
      %p602 = scmp.eq.s32.totalorder %s59, 1
      %p603 = por %p601, %p602
      %p604 = scmp.ne.s32.totalorder %s593, %s594
      %p605 = scmp.eq.s32.totalorder %s59, 0
      %p606 = por %p604, %p605
      %p607 = scmp.ne.s32.totalorder %s593, %s594
      %p608 = scmp.eq.s32.totalorder %s60, 1
      %p609 = por %p607, %p608
      %p611 = scmp.ne.s32.totalorder %s594, %s610
      %p612 = scmp.eq.s32.totalorder %s60, 0
      %p613 = por %p611, %p612
      %s614 = ssub.s32 %s54, %s61
      %p615 = scmp.eq.s32.totalorder %s614, 0
      %s617 = sadd.s32 %s616, 1
      %s618 = scalar_select %p615, %s616, %s617
      %p621 = pneg %p615
      %p622 = scmp.eq.s32.totalorder %s54, 1
      %p623 = por %p621, %p622
      %p624 = scmp.ne.s32.totalorder %s616, %s619
      %p625 = scmp.eq.s32.totalorder %s54, 0
      %p626 = por %p624, %p625
      %p627 = scmp.ne.s32.totalorder %s616, %s619
      %p628 = scmp.eq.s32.totalorder %s59, 1
      %p629 = por %p627, %p628
      %p630 = scmp.ne.s32.totalorder %s619, %s620
      %p631 = scmp.eq.s32.totalorder %s59, 0
      %p632 = por %p630, %p631
      %p633 = scmp.ne.s32.totalorder %s619, %s620
      %p634 = scmp.eq.s32.totalorder %s60, 1
      %p635 = por %p633, %p634
      %p637 = scmp.ne.s32.totalorder %s620, %s636
      %p638 = scmp.eq.s32.totalorder %s60, 0
      %p639 = por %p637, %p638
      %s640 = ssub.s32 %s54, %s61
      %p641 = scmp.eq.s32.totalorder %s640, 0
      %s643 = sadd.s32 %s642, 1
      %s644 = scalar_select %p641, %s642, %s643
      %p647 = pneg %p641
      %p648 = scmp.eq.s32.totalorder %s54, 1
      %p649 = por %p647, %p648
      %p650 = scmp.ne.s32.totalorder %s642, %s645
      %p651 = scmp.eq.s32.totalorder %s54, 0
      %p652 = por %p650, %p651
      %p653 = scmp.ne.s32.totalorder %s642, %s645
      %p654 = scmp.eq.s32.totalorder %s59, 1
      %p655 = por %p653, %p654
      %p656 = scmp.ne.s32.totalorder %s645, %s646
      %p657 = scmp.eq.s32.totalorder %s59, 0
      %p658 = por %p656, %p657
      %p659 = scmp.ne.s32.totalorder %s645, %s646
      %p660 = scmp.eq.s32.totalorder %s60, 1
      %p661 = por %p659, %p660
      %p663 = scmp.ne.s32.totalorder %s646, %s662
      %p664 = scmp.eq.s32.totalorder %s60, 0
      %p665 = por %p663, %p664
      %s666 = ssub.s32 %s54, %s61
      %p667 = scmp.eq.s32.totalorder %s666, 0
      %s669 = sadd.s32 %s668, 1
      %s670 = scalar_select %p667, %s668, %s669
      %p673 = pneg %p667
      %p674 = scmp.eq.s32.totalorder %s54, 1
      %p675 = por %p673, %p674
      %p676 = scmp.ne.s32.totalorder %s668, %s671
      %p677 = scmp.eq.s32.totalorder %s54, 0
      %p678 = por %p676, %p677
      %p679 = scmp.ne.s32.totalorder %s668, %s671
      %p680 = scmp.eq.s32.totalorder %s59, 1
      %p681 = por %p679, %p680
      %p682 = scmp.ne.s32.totalorder %s671, %s672
      %p683 = scmp.eq.s32.totalorder %s59, 0
      %p684 = por %p682, %p683
      %p685 = scmp.ne.s32.totalorder %s671, %s672
      %p686 = scmp.eq.s32.totalorder %s60, 1
      %p687 = por %p685, %p686
      %p689 = scmp.ne.s32.totalorder %s672, %s688
      %p690 = scmp.eq.s32.totalorder %s60, 0
      %p691 = por %p689, %p690
      %s692 = ssub.s32 %s54, %s61
      %p693 = scmp.eq.s32.totalorder %s692, 0
      %s695 = sadd.s32 %s694, 1
      %s696 = scalar_select %p693, %s694, %s695
      %p699 = pneg %p693
      %p700 = scmp.eq.s32.totalorder %s54, 1
      %p701 = por %p699, %p700
      %p702 = scmp.ne.s32.totalorder %s694, %s697
      %p703 = scmp.eq.s32.totalorder %s54, 0
      %p704 = por %p702, %p703
      %p705 = scmp.ne.s32.totalorder %s694, %s697
      %p706 = scmp.eq.s32.totalorder %s59, 1
      %p707 = por %p705, %p706
      %p708 = scmp.ne.s32.totalorder %s697, %s698
      %p709 = scmp.eq.s32.totalorder %s59, 0
      %p710 = por %p708, %p709
      %p711 = scmp.ne.s32.totalorder %s697, %s698
      %p712 = scmp.eq.s32.totalorder %s60, 1
      %p713 = por %p711, %p712
      %p715 = scmp.ne.s32.totalorder %s698, %s714
      %p716 = scmp.eq.s32.totalorder %s60, 0
      %p717 = por %p715, %p716
      %s719 = sadd.s32 %s718, 1
      %p722 = scmp.eq.s32.totalorder %s54, 1
      %p723 = scmp.ne.s32.totalorder %s718, %s720
      %p724 = scmp.eq.s32.totalorder %s54, 0
      %p725 = por %p723, %p724
      %p726 = scmp.ne.s32.totalorder %s718, %s720
      %p727 = scmp.eq.s32.totalorder %s59, 1
      %p728 = por %p726, %p727
      %p729 = scmp.ne.s32.totalorder %s720, %s721
      %p730 = scmp.eq.s32.totalorder %s59, 0
      %p731 = por %p729, %p730
      %p732 = scmp.ne.s32.totalorder %s720, %s721
      %p733 = scmp.eq.s32.totalorder %s60, 1
      %p734 = por %p732, %p733
      %p736 = scmp.ne.s32.totalorder %s721, %s735
      %p737 = scmp.eq.s32.totalorder %s60, 0
      %p738 = por %p736, %p737
      %s740 = sadd.s32 %s739, 1
      %p743 = scmp.eq.s32.totalorder %s54, 1
      %p744 = scmp.ne.s32.totalorder %s739, %s741
      %p745 = scmp.eq.s32.totalorder %s54, 0
      %p746 = por %p744, %p745
      %p747 = scmp.ne.s32.totalorder %s739, %s741
      %p748 = scmp.eq.s32.totalorder %s59, 1
      %p749 = por %p747, %p748
      %p750 = scmp.ne.s32.totalorder %s741, %s742
      %p751 = scmp.eq.s32.totalorder %s59, 0
      %p752 = por %p750, %p751
      %p753 = scmp.ne.s32.totalorder %s741, %s742
      %p754 = scmp.eq.s32.totalorder %s60, 1
      %p755 = por %p753, %p754
      %p757 = scmp.ne.s32.totalorder %s742, %s756
      %p758 = scmp.eq.s32.totalorder %s60, 0
      %p759 = por %p757, %p758
      %p760 = scmp.le.s32.totalorder 1, %s54
      %p761 = scmp.lt.s32.totalorder %s54, 3
      %p762 = pnand %p760, %p761
      %p763 = pneg %p762
      // Predicated region
      $region9: #{tpu_custom_call.1} parent=5 // pred_check
        _
      $region10: #{tpu_custom_call.1} parent=5 // pred_check_branch
        %765 = sbr.rel (%p762) target = $region12
      $region11: #{tpu_custom_call.1} parent=5 // pred_region
        %s766 = ssub.s32 %s54, 1
        // Predicated region
        $region13: #{tpu_custom_call.1} parent=11 // pred_check
          %p767 = pneg %p75
        $region14: #{tpu_custom_call.1} parent=11 // pred_check_branch
          %769 = sbr.rel (%p767) target = $region16
        $region15: #{tpu_custom_call.1} parent=11 // pred_region
          %s771 = ssub.s32 256, 256
          %772 = vsyncadd [#allocation4], %s771
          %s773 = sshll.u32 [#allocation3], 4
          %s774 = int_to_ptr.vmem [resolvable:$true] %s773
          %779 = dma.hbm_to_vmem [thread:$0]  %s0, 256, %s774, [#allocation4], 128, 128, 8
        $region16: #{tpu_custom_call.1} parent=11 // pred_fallthru
          _
        // Predicated region
        $region17: #{tpu_custom_call.1} parent=11 // pred_check
          %p780 = pneg %p96
        $region18: #{tpu_custom_call.1} parent=11 // pred_check_branch
          %782 = sbr.rel (%p780) target = $region20
        $region19: #{tpu_custom_call.1} parent=11 // pred_region
          %s784 = ssub.s32 256, 256
          %785 = vsyncadd [#allocation7], %s784
          %s786 = sshll.u32 [#allocation6], 4
          %s787 = int_to_ptr.vmem [resolvable:$true] %s786
          %792 = dma.hbm_to_vmem [thread:$0]  %s1, 256, %s787, [#allocation7], 128, 128, 8
        $region20: #{tpu_custom_call.1} parent=11 // pred_fallthru
          _
        // Predicated region
        $region21: #{tpu_custom_call.1} parent=11 // pred_check
          %p793 = pneg %p117
        $region22: #{tpu_custom_call.1} parent=11 // pred_check_branch
          %795 = sbr.rel (%p793) target = $region24
        $region23: #{tpu_custom_call.1} parent=11 // pred_region
          %s797 = ssub.s32 16, 16
          %798 = vsyncadd [#allocation7], %s797
          %s800 = sshll.u32 [#allocation8], 4
          %s801 = int_to_ptr.vmem [resolvable:$true] %s800
          %803 = dma.hbm_to_vmem [thread:$0]  %s2, 16, %s801, [#allocation7]
        $region24: #{tpu_custom_call.1} parent=11 // pred_fallthru
          _
        // Predicated region
        $region25: #{tpu_custom_call.1} parent=11 // pred_check
          %p804 = pneg %p138
        $region26: #{tpu_custom_call.1} parent=11 // pred_check_branch
          %806 = sbr.rel (%p804) target = $region28
        $region27: #{tpu_custom_call.1} parent=11 // pred_region
          _
        $region28: #{tpu_custom_call.1} parent=11 // pred_fallthru
          _
        // Predicated region
        $region29: #{tpu_custom_call.1} parent=11 // pred_check
          %p807 = pneg %p731
        $region30: #{tpu_custom_call.1} parent=11 // pred_check_branch
          %809 = sbr.rel (%p807) target = $region32
        $region31: #{tpu_custom_call.1} parent=11 // pred_region
          _
        $region32: #{tpu_custom_call.1} parent=11 // pred_fallthru
          _
      $region12: #{tpu_custom_call.1} parent=5 // pred_fallthru
        _
      %p810 = scmp.lt.s32.totalorder %s54, 2
      // Predicated region
      $region33: #{tpu_custom_call.1} parent=5 // pred_check
        %p811 = pneg %p810
      $region34: #{tpu_custom_call.1} parent=5 // pred_check_branch
        %813 = sbr.rel (%p811) target = $region36
      $region35: #{tpu_custom_call.1} parent=5 // pred_region
        // Predicated region
        $region37: #{tpu_custom_call.1} parent=35 // pred_check
          %p814 = pneg %p158
        $region38: #{tpu_custom_call.1} parent=35 // pred_check_branch
          %816 = sbr.rel (%p814) target = $region40
        $region39: #{tpu_custom_call.1} parent=35 // pred_region
          %s817 = sand.u32 %s54, 1
          %s818 = scalar_lea.sflag [#allocation10], %s817
          %s819 = sand.u32 %s148, 1
          %s820 = scalar_lea.vmem [#allocation9], %s819
          %s822 = ssub.s32 16, 16
          %823 = vsyncadd %s818, %s822
          %s824 = smul.addr %s54, 16
          %s825 = scalar_lea.hbm %s4, %s824
          %s827 = sshll.u32 %s820, 4
          %s828 = int_to_ptr.vmem [resolvable:$true] %s827
          %830 = dma.hbm_to_vmem [thread:$0]  %s825, 16, %s828, %s818
        $region40: #{tpu_custom_call.1} parent=35 // pred_fallthru
          _
        // Predicated region
        $region41: #{tpu_custom_call.1} parent=35 // pred_check
          %p831 = pneg %p184
        $region42: #{tpu_custom_call.1} parent=35 // pred_check_branch
          %833 = sbr.rel (%p831) target = $region44
        $region43: #{tpu_custom_call.1} parent=35 // pred_region
          %s834 = sand.u32 %s54, 1
          %s835 = scalar_lea.sflag [#allocation10], %s834
          %s836 = sand.u32 %s174, 1
          %s837 = smul.addr %s836, 128
          %s838 = scalar_lea.vmem [#allocation11], %s837
          %s840 = ssub.s32 2048, 2048
          %841 = vsyncadd %s835, %s840
          %s842 = smul.addr %s54, 32
          %s843 = smul.addr %s842, 64
          %s844 = scalar_lea.hbm %s5, %s843
          %s845 = sshll.u32 %s838, 4
          %s846 = int_to_ptr.vmem [resolvable:$true] %s845
          %851 = dma.hbm_to_vmem [thread:$0]  %s844, 2048, %s846, %s835, 128, 128, 8
        $region44: #{tpu_custom_call.1} parent=35 // pred_fallthru
          _
        // Predicated region
        $region45: #{tpu_custom_call.1} parent=35 // pred_check
          %p852 = pneg %p210
        $region46: #{tpu_custom_call.1} parent=35 // pred_check_branch
          %854 = sbr.rel (%p852) target = $region48
        $region47: #{tpu_custom_call.1} parent=35 // pred_region
          %s855 = sand.u32 %s54, 1
          %s856 = scalar_lea.sflag [#allocation13], %s855
          %s857 = sand.u32 %s200, 1
          %s858 = smul.addr %s857, 128
          %s859 = scalar_lea.vmem [#allocation12], %s858
          %s861 = ssub.s32 2048, 2048
          %862 = vsyncadd %s856, %s861
          %s863 = smul.addr %s54, 32
          %s864 = smul.addr %s863, 64
          %s865 = scalar_lea.hbm %s6, %s864
          %s866 = sshll.u32 %s859, 4
          %s867 = int_to_ptr.vmem [resolvable:$true] %s866
          %872 = dma.hbm_to_vmem [thread:$0]  %s865, 2048, %s867, %s856, 128, 128, 8
        $region48: #{tpu_custom_call.1} parent=35 // pred_fallthru
          _
        // Predicated region
        $region49: #{tpu_custom_call.1} parent=35 // pred_check
          %p873 = pneg %p236
        $region50: #{tpu_custom_call.1} parent=35 // pred_check_branch
          %875 = sbr.rel (%p873) target = $region52
        $region51: #{tpu_custom_call.1} parent=35 // pred_region
          %s876 = sand.u32 %s54, 1
          %s877 = scalar_lea.sflag [#allocation13], %s876
          %s878 = sand.u32 %s226, 1
          %s879 = smul.addr %s878, 128
          %s880 = scalar_lea.vmem [#allocation14], %s879
          %s882 = ssub.s32 2048, 2048
          %883 = vsyncadd %s877, %s882
          %s884 = smul.addr %s54, 32
          %s885 = smul.addr %s884, 64
          %s886 = scalar_lea.hbm %s7, %s885
          %s887 = sshll.u32 %s880, 4
          %s888 = int_to_ptr.vmem [resolvable:$true] %s887
          %893 = dma.hbm_to_vmem [thread:$0]  %s886, 2048, %s888, %s877, 128, 128, 8
        $region52: #{tpu_custom_call.1} parent=35 // pred_fallthru
          _
        // Predicated region
        $region53: #{tpu_custom_call.1} parent=35 // pred_check
          %p894 = pneg %p262
        $region54: #{tpu_custom_call.1} parent=35 // pred_check_branch
          %896 = sbr.rel (%p894) target = $region56
        $region55: #{tpu_custom_call.1} parent=35 // pred_region
          %p897 = scmp.lt.s32.totalorder %s54, 1
          %s898 = scalar_select %p897, %s54, 1
          %s899 = scalar_lea.vmem %s8, %s898
        $region56: #{tpu_custom_call.1} parent=35 // pred_fallthru
          _
        // Predicated region
        $region57: #{tpu_custom_call.1} parent=35 // pred_check
          %p900 = pneg %p288
        $region58: #{tpu_custom_call.1} parent=35 // pred_check_branch
          %902 = sbr.rel (%p900) target = $region60
        $region59: #{tpu_custom_call.1} parent=35 // pred_region
          %p903 = scmp.lt.s32.totalorder %s54, 1
          %s904 = scalar_select %p903, %s54, 1
          %s905 = scalar_lea.vmem %s9, %s904
        $region60: #{tpu_custom_call.1} parent=35 // pred_fallthru
          _
        // Predicated region
        $region61: #{tpu_custom_call.1} parent=35 // pred_check
          %p906 = pneg %p314
        $region62: #{tpu_custom_call.1} parent=35 // pred_check_branch
          %908 = sbr.rel (%p906) target = $region64
        $region63: #{tpu_custom_call.1} parent=35 // pred_region
          %p909 = scmp.lt.s32.totalorder %s54, 1
          %s910 = scalar_select %p909, %s54, 1
          %s911 = smul.addr %s910, 2
          %s912 = scalar_lea.vmem %s10, %s911
        $region64: #{tpu_custom_call.1} parent=35 // pred_fallthru
          _
        // Predicated region
        $region65: #{tpu_custom_call.1} parent=35 // pred_check
          %p913 = pneg %p340
        $region66: #{tpu_custom_call.1} parent=35 // pred_check_branch
          %915 = sbr.rel (%p913) target = $region68
        $region67: #{tpu_custom_call.1} parent=35 // pred_region
          %p916 = scmp.lt.s32.totalorder %s54, 1
          %s917 = scalar_select %p916, %s54, 1
          %s918 = smul.addr %s917, 2
          %s919 = scalar_lea.vmem %s11, %s918
        $region68: #{tpu_custom_call.1} parent=35 // pred_fallthru
          _
        // Predicated region
        $region69: #{tpu_custom_call.1} parent=35 // pred_check
          %p920 = pneg %p366
        $region70: #{tpu_custom_call.1} parent=35 // pred_check_branch
          %922 = sbr.rel (%p920) target = $region72
        $region71: #{tpu_custom_call.1} parent=35 // pred_region
          %s923 = sand.u32 %s54, 1
          %s924 = scalar_lea.sflag [#allocation16], %s923
          %s925 = sand.u32 %s356, 1
          %s926 = smul.addr %s925, 128
          %s927 = scalar_lea.vmem [#allocation15], %s926
          %s929 = ssub.s32 2048, 2048
          %930 = vsyncadd %s924, %s929
          %s931 = smul.addr %s54, 32
          %s932 = smul.addr %s931, 64
          %s933 = scalar_lea.hbm %s12, %s932
          %s934 = sshll.u32 %s927, 4
          %s935 = int_to_ptr.vmem [resolvable:$true] %s934
          %940 = dma.hbm_to_vmem [thread:$0]  %s933, 2048, %s935, %s924, 64, 64, 4
        $region72: #{tpu_custom_call.1} parent=35 // pred_fallthru
          _
        // Predicated region
        $region73: #{tpu_custom_call.1} parent=35 // pred_check
          %p941 = pneg %p392
        $region74: #{tpu_custom_call.1} parent=35 // pred_check_branch
          %943 = sbr.rel (%p941) target = $region76
        $region75: #{tpu_custom_call.1} parent=35 // pred_region
          %p944 = scmp.lt.s32.totalorder %s54, 1
          %s945 = scalar_select %p944, %s54, 1
          %s946 = scalar_lea.vmem %s13, %s945
        $region76: #{tpu_custom_call.1} parent=35 // pred_fallthru
          _
        // Predicated region
        $region77: #{tpu_custom_call.1} parent=35 // pred_check
          %p947 = pneg %p418
        $region78: #{tpu_custom_call.1} parent=35 // pred_check_branch
          %949 = sbr.rel (%p947) target = $region80
        $region79: #{tpu_custom_call.1} parent=35 // pred_region
          %s950 = sand.u32 %s54, 1
          %s951 = scalar_lea.sflag [#allocation16], %s950
          %s952 = sand.u32 %s408, 1
          %s953 = smul.addr %s952, 128
          %s954 = scalar_lea.vmem [#allocation17], %s953
          %s956 = ssub.s32 2048, 2048
          %957 = vsyncadd %s951, %s956
          %s958 = smul.addr %s54, 32
          %s959 = smul.addr %s958, 64
          %s960 = scalar_lea.hbm %s14, %s959
          %s961 = sshll.u32 %s954, 4
          %s962 = int_to_ptr.vmem [resolvable:$true] %s961
          %967 = dma.hbm_to_vmem [thread:$0]  %s960, 2048, %s962, %s951, 128, 128, 8
        $region80: #{tpu_custom_call.1} parent=35 // pred_fallthru
          _
        // Predicated region
        $region81: #{tpu_custom_call.1} parent=35 // pred_check
          %p968 = pneg %p444
        $region82: #{tpu_custom_call.1} parent=35 // pred_check_branch
          %970 = sbr.rel (%p968) target = $region84
        $region83: #{tpu_custom_call.1} parent=35 // pred_region
          %s971 = sand.u32 %s54, 1
          %s972 = scalar_lea.sflag [#allocation19], %s971
          %s973 = sand.u32 %s434, 1
          %s974 = smul.addr %s973, 128
          %s975 = scalar_lea.vmem [#allocation18], %s974
          %s977 = ssub.s32 2048, 2048
          %978 = vsyncadd %s972, %s977
          %s979 = smul.addr %s54, 32
          %s980 = smul.addr %s979, 64
          %s981 = scalar_lea.hbm %s15, %s980
          %s982 = sshll.u32 %s975, 4
          %s983 = int_to_ptr.vmem [resolvable:$true] %s982
          %988 = dma.hbm_to_vmem [thread:$0]  %s981, 2048, %s983, %s972, 128, 128, 8
        $region84: #{tpu_custom_call.1} parent=35 // pred_fallthru
          _
        // Predicated region
        $region85: #{tpu_custom_call.1} parent=35 // pred_check
          %p989 = pneg %p470
        $region86: #{tpu_custom_call.1} parent=35 // pred_check_branch
          %991 = sbr.rel (%p989) target = $region88
        $region87: #{tpu_custom_call.1} parent=35 // pred_region
          %s992 = sand.u32 %s54, 1
          %s993 = scalar_lea.sflag [#allocation19], %s992
          %s994 = sand.u32 %s460, 1
          %s995 = smul.addr %s994, 128
          %s996 = scalar_lea.vmem [#allocation20], %s995
          %s998 = ssub.s32 2048, 2048
          %999 = vsyncadd %s993, %s998
          %s1000 = smul.addr %s54, 32
          %s1001 = smul.addr %s1000, 64
          %s1002 = scalar_lea.hbm %s16, %s1001
          %s1003 = sshll.u32 %s996, 4
          %s1004 = int_to_ptr.vmem [resolvable:$true] %s1003
          %1009 = dma.hbm_to_vmem [thread:$0]  %s1002, 2048, %s1004, %s993, 128, 128, 8
        $region88: #{tpu_custom_call.1} parent=35 // pred_fallthru
          _
        // Predicated region
        $region89: #{tpu_custom_call.1} parent=35 // pred_check
          %p1010 = pneg %p496
        $region90: #{tpu_custom_call.1} parent=35 // pred_check_branch
          %1012 = sbr.rel (%p1010) target = $region92
        $region91: #{tpu_custom_call.1} parent=35 // pred_region
          %p1013 = scmp.lt.s32.totalorder %s54, 1
          %s1014 = scalar_select %p1013, %s54, 1
          %s1015 = scalar_lea.vmem %s17, %s1014
        $region92: #{tpu_custom_call.1} parent=35 // pred_fallthru
          _
        // Predicated region
        $region93: #{tpu_custom_call.1} parent=35 // pred_check
          %p1016 = pneg %p522
        $region94: #{tpu_custom_call.1} parent=35 // pred_check_branch
          %1018 = sbr.rel (%p1016) target = $region96
        $region95: #{tpu_custom_call.1} parent=35 // pred_region
          %p1019 = scmp.lt.s32.totalorder %s54, 1
          %s1020 = scalar_select %p1019, %s54, 1
          %s1021 = scalar_lea.vmem %s18, %s1020
        $region96: #{tpu_custom_call.1} parent=35 // pred_fallthru
          _
        // Predicated region
        $region97: #{tpu_custom_call.1} parent=35 // pred_check
          %p1022 = pneg %p548
        $region98: #{tpu_custom_call.1} parent=35 // pred_check_branch
          %1024 = sbr.rel (%p1022) target = $region100
        $region99: #{tpu_custom_call.1} parent=35 // pred_region
          %p1025 = scmp.lt.s32.totalorder %s54, 1
          %s1026 = scalar_select %p1025, %s54, 1
          %s1027 = smul.addr %s1026, 2
          %s1028 = scalar_lea.vmem %s19, %s1027
        $region100: #{tpu_custom_call.1} parent=35 // pred_fallthru
          _
        // Predicated region
        $region101: #{tpu_custom_call.1} parent=35 // pred_check
          %p1029 = pneg %p574
        $region102: #{tpu_custom_call.1} parent=35 // pred_check_branch
          %1031 = sbr.rel (%p1029) target = $region104
        $region103: #{tpu_custom_call.1} parent=35 // pred_region
          %p1032 = scmp.lt.s32.totalorder %s54, 1
          %s1033 = scalar_select %p1032, %s54, 1
          %s1034 = smul.addr %s1033, 2
          %s1035 = scalar_lea.vmem %s20, %s1034
        $region104: #{tpu_custom_call.1} parent=35 // pred_fallthru
          _
        // Predicated region
        $region105: #{tpu_custom_call.1} parent=35 // pred_check
          %p1036 = pneg %p600
        $region106: #{tpu_custom_call.1} parent=35 // pred_check_branch
          %1038 = sbr.rel (%p1036) target = $region108
        $region107: #{tpu_custom_call.1} parent=35 // pred_region
          %s1039 = sand.u32 %s54, 1
          %s1040 = scalar_lea.sflag [#allocation22], %s1039
          %s1041 = sand.u32 %s590, 1
          %s1042 = smul.addr %s1041, 128
          %s1043 = scalar_lea.vmem [#allocation21], %s1042
          %s1045 = ssub.s32 2048, 2048
          %1046 = vsyncadd %s1040, %s1045
          %s1047 = smul.addr %s54, 32
          %s1048 = smul.addr %s1047, 64
          %s1049 = scalar_lea.hbm %s21, %s1048
          %s1050 = sshll.u32 %s1043, 4
          %s1051 = int_to_ptr.vmem [resolvable:$true] %s1050
          %1056 = dma.hbm_to_vmem [thread:$0]  %s1049, 2048, %s1051, %s1040, 64, 64, 4
        $region108: #{tpu_custom_call.1} parent=35 // pred_fallthru
          _
        // Predicated region
        $region109: #{tpu_custom_call.1} parent=35 // pred_check
          %p1057 = pneg %p626
        $region110: #{tpu_custom_call.1} parent=35 // pred_check_branch
          %1059 = sbr.rel (%p1057) target = $region112
        $region111: #{tpu_custom_call.1} parent=35 // pred_region
          %p1060 = scmp.lt.s32.totalorder %s54, 1
          %s1061 = scalar_select %p1060, %s54, 1
          %s1062 = scalar_lea.vmem %s22, %s1061
        $region112: #{tpu_custom_call.1} parent=35 // pred_fallthru
          _
        // Predicated region
        $region113: #{tpu_custom_call.1} parent=35 // pred_check
          %p1063 = pneg %p652
        $region114: #{tpu_custom_call.1} parent=35 // pred_check_branch
          %1065 = sbr.rel (%p1063) target = $region116
        $region115: #{tpu_custom_call.1} parent=35 // pred_region
          %s1066 = sand.u32 %s54, 1
          %s1067 = scalar_lea.sflag [#allocation22], %s1066
          %s1068 = sand.u32 %s642, 1
          %s1069 = smul.addr %s1068, 256
          %s1070 = scalar_lea.vmem [#allocation23], %s1069
          %s1072 = ssub.s32 4096, 4096
          %1073 = vsyncadd %s1067, %s1072
          %s1074 = smul.addr %s54, 64
          %s1075 = smul.addr %s1074, 64
          %s1076 = scalar_lea.hbm %s23, %s1075
          %s1077 = sshll.u32 %s1070, 4
          %s1078 = int_to_ptr.vmem [resolvable:$true] %s1077
          %1083 = dma.hbm_to_vmem [thread:$0]  %s1076, 4096, %s1078, %s1067, 256, 256, 16
        $region116: #{tpu_custom_call.1} parent=35 // pred_fallthru
          _
        // Predicated region
        $region117: #{tpu_custom_call.1} parent=35 // pred_check
          %p1084 = pneg %p678
        $region118: #{tpu_custom_call.1} parent=35 // pred_check_branch
          %1086 = sbr.rel (%p1084) target = $region120
        $region119: #{tpu_custom_call.1} parent=35 // pred_region
          %p1087 = scmp.lt.s32.totalorder %s54, 1
          %s1088 = scalar_select %p1087, %s54, 1
          %s1089 = smul.addr %s1088, 2
          %s1090 = scalar_lea.vmem %s24, %s1089
        $region120: #{tpu_custom_call.1} parent=35 // pred_fallthru
          _
        // Predicated region
        $region121: #{tpu_custom_call.1} parent=35 // pred_check
          %p1091 = pneg %p704
        $region122: #{tpu_custom_call.1} parent=35 // pred_check_branch
          %1093 = sbr.rel (%p1091) target = $region124
        $region123: #{tpu_custom_call.1} parent=35 // pred_region
          %s1094 = sand.u32 %s694, 1
          %s1095 = scalar_lea.sflag [#allocation25], %s1094
          %s1096 = sand.u32 %s694, 1
          %s1097 = smul.addr %s1096, 128
          %s1098 = scalar_lea.vmem [#allocation24], %s1097
          %s1100 = ssub.s32 2048, 2048
          %1101 = vsyncadd %s1095, %s1100
          %s1102 = smul.addr %s54, 32
          %s1103 = smul.addr %s1102, 64
          %s1104 = scalar_lea.hbm %s25, %s1103
          %s1105 = sshll.u32 %s1098, 4
          %s1106 = int_to_ptr.vmem [resolvable:$true] %s1105
          %1111 = dma.hbm_to_vmem [thread:$0]  %s1104, 2048, %s1106, %s1095, 64, 64, 4
        $region124: #{tpu_custom_call.1} parent=35 // pred_fallthru
          _
      $region36: #{tpu_custom_call.1} parent=5 // pred_fallthru
        _
      %p1112 = scmp.le.s32.totalorder 1, %s54
      %p1113 = scmp.lt.s32.totalorder %s54, 3
      %p1114 = pnand %p1112, %p1113
      %p1115 = pneg %p1114
      // Predicated region
      $region125: #{tpu_custom_call.1} parent=5 // pred_check
        _
      $region126: #{tpu_custom_call.1} parent=5 // pred_check_branch
        %1117 = sbr.rel (%p1114) target = $region128
      $region127: #{tpu_custom_call.1} parent=5 // pred_region
        %s1118 = ssub.s32 %s54, 1
        // Predicated region
        $region129: #{tpu_custom_call.1} parent=127 // pred_check
          %p1119 = pneg %p75
        $region130: #{tpu_custom_call.1} parent=127 // pred_check_branch
          %1121 = sbr.rel (%p1119) target = $region132
        $region131: #{tpu_custom_call.1} parent=127 // pred_region
          %1122 = dma.done [#allocation4], 256
        $region132: #{tpu_custom_call.1} parent=127 // pred_fallthru
          _
        // Predicated region
        $region133: #{tpu_custom_call.1} parent=127 // pred_check
          %p1123 = pneg %p96
        $region134: #{tpu_custom_call.1} parent=127 // pred_check_branch
          %1125 = sbr.rel (%p1123) target = $region136
        $region135: #{tpu_custom_call.1} parent=127 // pred_region
          %1126 = dma.done [#allocation7], 256
        $region136: #{tpu_custom_call.1} parent=127 // pred_fallthru
          _
        // Predicated region
        $region137: #{tpu_custom_call.1} parent=127 // pred_check
          %p1127 = pneg %p117
        $region138: #{tpu_custom_call.1} parent=127 // pred_check_branch
          %1129 = sbr.rel (%p1127) target = $region140
        $region139: #{tpu_custom_call.1} parent=127 // pred_region
          %1130 = dma.done [#allocation7], 16
        $region140: #{tpu_custom_call.1} parent=127 // pred_fallthru
          _
        %s1131 = sand.u32 %s59, 1
        %s1132 = scalar_lea.sflag [#allocation10], %s1131
        %s1133 = sand.u32 %s151, 1
        %s1134 = scalar_lea.vmem [#allocation9], %s1133
        // Predicated region
        $region141: #{tpu_custom_call.1} parent=127 // pred_check
          %p1135 = pneg %p164
        $region142: #{tpu_custom_call.1} parent=127 // pred_check_branch
          %1137 = sbr.rel (%p1135) target = $region144
        $region143: #{tpu_custom_call.1} parent=127 // pred_region
          %1138 = dma.done %s1132, 16
        $region144: #{tpu_custom_call.1} parent=127 // pred_fallthru
          _
        %s1139 = sand.u32 %s59, 1
        %s1140 = scalar_lea.sflag [#allocation10], %s1139
        %s1141 = sand.u32 %s177, 1
        %s1142 = smul.addr %s1141, 128
        %s1143 = scalar_lea.vmem [#allocation11], %s1142
        // Predicated region
        $region145: #{tpu_custom_call.1} parent=127 // pred_check
          %p1144 = pneg %p190
        $region146: #{tpu_custom_call.1} parent=127 // pred_check_branch
          %1146 = sbr.rel (%p1144) target = $region148
        $region147: #{tpu_custom_call.1} parent=127 // pred_region
          %1147 = dma.done %s1140, 2048
        $region148: #{tpu_custom_call.1} parent=127 // pred_fallthru
          _
        %s1148 = sand.u32 %s59, 1
        %s1149 = scalar_lea.sflag [#allocation13], %s1148
        %s1150 = sand.u32 %s203, 1
        %s1151 = smul.addr %s1150, 128
        %s1152 = scalar_lea.vmem [#allocation12], %s1151
        // Predicated region
        $region149: #{tpu_custom_call.1} parent=127 // pred_check
          %p1153 = pneg %p216
        $region150: #{tpu_custom_call.1} parent=127 // pred_check_branch
          %1155 = sbr.rel (%p1153) target = $region152
        $region151: #{tpu_custom_call.1} parent=127 // pred_region
          %1156 = dma.done %s1149, 2048
        $region152: #{tpu_custom_call.1} parent=127 // pred_fallthru
          _
        %s1157 = sand.u32 %s59, 1
        %s1158 = scalar_lea.sflag [#allocation13], %s1157
        %s1159 = sand.u32 %s229, 1
        %s1160 = smul.addr %s1159, 128
        %s1161 = scalar_lea.vmem [#allocation14], %s1160
        // Predicated region
        $region153: #{tpu_custom_call.1} parent=127 // pred_check
          %p1162 = pneg %p242
        $region154: #{tpu_custom_call.1} parent=127 // pred_check_branch
          %1164 = sbr.rel (%p1162) target = $region156
        $region155: #{tpu_custom_call.1} parent=127 // pred_region
          %1165 = dma.done %s1158, 2048
        $region156: #{tpu_custom_call.1} parent=127 // pred_fallthru
          _
        %s1166 = sand.u32 %s59, 1
        %s1167 = scalar_lea.sflag [#allocation16], %s1166
        %s1168 = sand.u32 %s359, 1
        %s1169 = smul.addr %s1168, 128
        %s1170 = scalar_lea.vmem [#allocation15], %s1169
        // Predicated region
        $region157: #{tpu_custom_call.1} parent=127 // pred_check
          %p1171 = pneg %p372
        $region158: #{tpu_custom_call.1} parent=127 // pred_check_branch
          %1173 = sbr.rel (%p1171) target = $region160
        $region159: #{tpu_custom_call.1} parent=127 // pred_region
          %1174 = dma.done %s1167, 2048
        $region160: #{tpu_custom_call.1} parent=127 // pred_fallthru
          _
        %s1175 = sand.u32 %s59, 1
        %s1176 = scalar_lea.sflag [#allocation16], %s1175
        %s1177 = sand.u32 %s411, 1
        %s1178 = smul.addr %s1177, 128
        %s1179 = scalar_lea.vmem [#allocation17], %s1178
        // Predicated region
        $region161: #{tpu_custom_call.1} parent=127 // pred_check
          %p1180 = pneg %p424
        $region162: #{tpu_custom_call.1} parent=127 // pred_check_branch
          %1182 = sbr.rel (%p1180) target = $region164
        $region163: #{tpu_custom_call.1} parent=127 // pred_region
          %1183 = dma.done %s1176, 2048
        $region164: #{tpu_custom_call.1} parent=127 // pred_fallthru
          _
        %s1184 = sand.u32 %s59, 1
        %s1185 = scalar_lea.sflag [#allocation19], %s1184
        %s1186 = sand.u32 %s437, 1
        %s1187 = smul.addr %s1186, 128
        %s1188 = scalar_lea.vmem [#allocation18], %s1187
        // Predicated region
        $region165: #{tpu_custom_call.1} parent=127 // pred_check
          %p1189 = pneg %p450
        $region166: #{tpu_custom_call.1} parent=127 // pred_check_branch
          %1191 = sbr.rel (%p1189) target = $region168
        $region167: #{tpu_custom_call.1} parent=127 // pred_region
          %1192 = dma.done %s1185, 2048
        $region168: #{tpu_custom_call.1} parent=127 // pred_fallthru
          _
        %s1193 = sand.u32 %s59, 1
        %s1194 = scalar_lea.sflag [#allocation19], %s1193
        %s1195 = sand.u32 %s463, 1
        %s1196 = smul.addr %s1195, 128
        %s1197 = scalar_lea.vmem [#allocation20], %s1196
        // Predicated region
        $region169: #{tpu_custom_call.1} parent=127 // pred_check
          %p1198 = pneg %p476
        $region170: #{tpu_custom_call.1} parent=127 // pred_check_branch
          %1200 = sbr.rel (%p1198) target = $region172
        $region171: #{tpu_custom_call.1} parent=127 // pred_region
          %1201 = dma.done %s1194, 2048
        $region172: #{tpu_custom_call.1} parent=127 // pred_fallthru
          _
        %s1202 = sand.u32 %s59, 1
        %s1203 = scalar_lea.sflag [#allocation22], %s1202
        %s1204 = sand.u32 %s593, 1
        %s1205 = smul.addr %s1204, 128
        %s1206 = scalar_lea.vmem [#allocation21], %s1205
        // Predicated region
        $region173: #{tpu_custom_call.1} parent=127 // pred_check
          %p1207 = pneg %p606
        $region174: #{tpu_custom_call.1} parent=127 // pred_check_branch
          %1209 = sbr.rel (%p1207) target = $region176
        $region175: #{tpu_custom_call.1} parent=127 // pred_region
          %1210 = dma.done %s1203, 2048
        $region176: #{tpu_custom_call.1} parent=127 // pred_fallthru
          _
        %s1211 = sand.u32 %s59, 1
        %s1212 = scalar_lea.sflag [#allocation22], %s1211
        %s1213 = sand.u32 %s645, 1
        %s1214 = smul.addr %s1213, 256
        %s1215 = scalar_lea.vmem [#allocation23], %s1214
        // Predicated region
        $region177: #{tpu_custom_call.1} parent=127 // pred_check
          %p1216 = pneg %p658
        $region178: #{tpu_custom_call.1} parent=127 // pred_check_branch
          %1218 = sbr.rel (%p1216) target = $region180
        $region179: #{tpu_custom_call.1} parent=127 // pred_region
          %1219 = dma.done %s1212, 4096
        $region180: #{tpu_custom_call.1} parent=127 // pred_fallthru
          _
        %s1220 = sand.u32 %s697, 1
        %s1221 = scalar_lea.sflag [#allocation25], %s1220
        %s1222 = sand.u32 %s697, 1
        %s1223 = smul.addr %s1222, 128
        %s1224 = scalar_lea.vmem [#allocation24], %s1223
        // Predicated region
        $region181: #{tpu_custom_call.1} parent=127 // pred_check
          %p1225 = pneg %p710
        $region182: #{tpu_custom_call.1} parent=127 // pred_check_branch
          %1227 = sbr.rel (%p1225) target = $region184
        $region183: #{tpu_custom_call.1} parent=127 // pred_region
          %1228 = dma.done %s1221, 2048
        $region184: #{tpu_custom_call.1} parent=127 // pred_fallthru
          _
        %p1229 = pneg %p75
        %p1230 = pneg %p72
        %p1231 = pneg %p96
        %p1232 = pneg %p93
        %p1233 = pneg %p117
        %p1234 = pneg %p114
        %p1235 = pneg %p138
        %p1236 = pneg %p135
        %s1237 = sand.u32 %s59, 1
        %s1238 = scalar_lea.sflag [#allocation10], %s1237
        %s1239 = sand.u32 %s151, 1
        %s1240 = scalar_lea.vmem [#allocation9], %s1239
        %p1241 = pneg %p164
        %p1242 = pneg %p161
        %s1243 = sand.u32 %s59, 1
        %s1244 = scalar_lea.sflag [#allocation10], %s1243
        %s1245 = sand.u32 %s177, 1
        %s1246 = smul.addr %s1245, 128
        %s1247 = scalar_lea.vmem [#allocation11], %s1246
        %p1248 = pneg %p190
        %p1249 = pneg %p187
        %s1250 = sand.u32 %s59, 1
        %s1251 = scalar_lea.sflag [#allocation13], %s1250
        %s1252 = sand.u32 %s203, 1
        %s1253 = smul.addr %s1252, 128
        %s1254 = scalar_lea.vmem [#allocation12], %s1253
        %p1255 = pneg %p216
        %p1256 = pneg %p213
        %s1257 = sand.u32 %s59, 1
        %s1258 = scalar_lea.sflag [#allocation13], %s1257
        %s1259 = sand.u32 %s229, 1
        %s1260 = smul.addr %s1259, 128
        %s1261 = scalar_lea.vmem [#allocation14], %s1260
        %p1262 = pneg %p242
        %p1263 = pneg %p239
        %p1264 = scmp.lt.s32.totalorder %s59, 1
        %s1265 = scalar_select %p1264, %s59, 1
        %s1266 = scalar_lea.vmem %s8, %s1265
        %p1267 = pneg %p268
        %p1268 = pneg %p265
        %p1269 = scmp.lt.s32.totalorder %s59, 1
        %s1270 = scalar_select %p1269, %s59, 1
        %s1271 = scalar_lea.vmem %s9, %s1270
        %p1272 = pneg %p294
        %p1273 = pneg %p291
        %p1274 = scmp.lt.s32.totalorder %s59, 1
        %s1275 = scalar_select %p1274, %s59, 1
        %s1276 = smul.addr %s1275, 2
        %s1277 = scalar_lea.vmem %s10, %s1276
        %p1278 = pneg %p320
        %p1279 = pneg %p317
        %p1280 = scmp.lt.s32.totalorder %s59, 1
        %s1281 = scalar_select %p1280, %s59, 1
        %s1282 = smul.addr %s1281, 2
        %s1283 = scalar_lea.vmem %s11, %s1282
        %p1284 = pneg %p346
        %p1285 = pneg %p343
        %s1286 = sand.u32 %s59, 1
        %s1287 = scalar_lea.sflag [#allocation16], %s1286
        %s1288 = sand.u32 %s359, 1
        %s1289 = smul.addr %s1288, 128
        %s1290 = scalar_lea.vmem [#allocation15], %s1289
        %p1291 = pneg %p372
        %p1292 = pneg %p369
        %p1293 = scmp.lt.s32.totalorder %s59, 1
        %s1294 = scalar_select %p1293, %s59, 1
        %s1295 = scalar_lea.vmem %s13, %s1294
        %p1296 = pneg %p398
        %p1297 = pneg %p395
        %s1298 = sand.u32 %s59, 1
        %s1299 = scalar_lea.sflag [#allocation16], %s1298
        %s1300 = sand.u32 %s411, 1
        %s1301 = smul.addr %s1300, 128
        %s1302 = scalar_lea.vmem [#allocation17], %s1301
        %p1303 = pneg %p424
        %p1304 = pneg %p421
        %s1305 = sand.u32 %s59, 1
        %s1306 = scalar_lea.sflag [#allocation19], %s1305
        %s1307 = sand.u32 %s437, 1
        %s1308 = smul.addr %s1307, 128
        %s1309 = scalar_lea.vmem [#allocation18], %s1308
        %p1310 = pneg %p450
        %p1311 = pneg %p447
        %s1312 = sand.u32 %s59, 1
        %s1313 = scalar_lea.sflag [#allocation19], %s1312
        %s1314 = sand.u32 %s463, 1
        %s1315 = smul.addr %s1314, 128
        %s1316 = scalar_lea.vmem [#allocation20], %s1315
        %p1317 = pneg %p476
        %p1318 = pneg %p473
        %p1319 = scmp.lt.s32.totalorder %s59, 1
        %s1320 = scalar_select %p1319, %s59, 1
        %s1321 = scalar_lea.vmem %s17, %s1320
        %p1322 = pneg %p502
        %p1323 = pneg %p499
        %p1324 = scmp.lt.s32.totalorder %s59, 1
        %s1325 = scalar_select %p1324, %s59, 1
        %s1326 = scalar_lea.vmem %s18, %s1325
        %p1327 = pneg %p528
        %p1328 = pneg %p525
        %p1329 = scmp.lt.s32.totalorder %s59, 1
        %s1330 = scalar_select %p1329, %s59, 1
        %s1331 = smul.addr %s1330, 2
        %s1332 = scalar_lea.vmem %s19, %s1331
        %p1333 = pneg %p554
        %p1334 = pneg %p551
        %p1335 = scmp.lt.s32.totalorder %s59, 1
        %s1336 = scalar_select %p1335, %s59, 1
        %s1337 = smul.addr %s1336, 2
        %s1338 = scalar_lea.vmem %s20, %s1337
        %p1339 = pneg %p580
        %p1340 = pneg %p577
        %s1341 = sand.u32 %s59, 1
        %s1342 = scalar_lea.sflag [#allocation22], %s1341
        %s1343 = sand.u32 %s593, 1
        %s1344 = smul.addr %s1343, 128
        %s1345 = scalar_lea.vmem [#allocation21], %s1344
        %p1346 = pneg %p606
        %p1347 = pneg %p603
        %p1348 = scmp.lt.s32.totalorder %s59, 1
        %s1349 = scalar_select %p1348, %s59, 1
        %s1350 = scalar_lea.vmem %s22, %s1349
        %p1351 = pneg %p632
        %p1352 = pneg %p629
        %s1353 = sand.u32 %s59, 1
        %s1354 = scalar_lea.sflag [#allocation22], %s1353
        %s1355 = sand.u32 %s645, 1
        %s1356 = smul.addr %s1355, 256
        %s1357 = scalar_lea.vmem [#allocation23], %s1356
        %p1358 = pneg %p658
        %p1359 = pneg %p655
        %p1360 = scmp.lt.s32.totalorder %s59, 1
        %s1361 = scalar_select %p1360, %s59, 1
        %s1362 = smul.addr %s1361, 2
        %s1363 = scalar_lea.vmem %s24, %s1362
        %p1364 = pneg %p684
        %p1365 = pneg %p681
        %s1366 = sand.u32 %s697, 1
        %s1367 = scalar_lea.sflag [#allocation25], %s1366
        %s1368 = sand.u32 %s697, 1
        %s1369 = smul.addr %s1368, 128
        %s1370 = scalar_lea.vmem [#allocation24], %s1369
        %p1371 = pneg %p710
        %p1372 = pneg %p707
        %p1373 = pneg %p731
        %p1374 = pneg %p728
        %p1375 = pneg %p752
        %p1376 = pneg %p749
        %p1377 = scmp.lt.s32.totalorder %s59, 1
        %s1378 = scalar_select %p1377, %s59, 1
        %s1379 = scalar_lea.vmem %s8, %s1378
        %p1380 = scmp.lt.s32.totalorder %s59, 1
        %s1381 = scalar_select %p1380, %s59, 1
        %s1382 = scalar_lea.vmem %s9, %s1381
        %p1383 = scmp.lt.s32.totalorder %s59, 1
        %s1384 = scalar_select %p1383, %s59, 1
        %s1385 = smul.addr %s1384, 2
        %s1386 = scalar_lea.vmem %s10, %s1385
        %p1387 = scmp.lt.s32.totalorder %s59, 1
        %s1388 = scalar_select %p1387, %s59, 1
        %s1389 = smul.addr %s1388, 2
        %s1390 = scalar_lea.vmem %s11, %s1389
        %p1391 = scmp.lt.s32.totalorder %s59, 1
        %s1392 = scalar_select %p1391, %s59, 1
        %s1393 = scalar_lea.vmem %s13, %s1392
        %p1394 = scmp.lt.s32.totalorder %s59, 1
        %s1395 = scalar_select %p1394, %s59, 1
        %s1396 = scalar_lea.vmem %s17, %s1395
        %p1397 = scmp.lt.s32.totalorder %s59, 1
        %s1398 = scalar_select %p1397, %s59, 1
        %s1399 = scalar_lea.vmem %s18, %s1398
        %p1400 = scmp.lt.s32.totalorder %s59, 1
        %s1401 = scalar_select %p1400, %s59, 1
        %s1402 = smul.addr %s1401, 2
        %s1403 = scalar_lea.vmem %s19, %s1402
        %p1404 = scmp.lt.s32.totalorder %s59, 1
        %s1405 = scalar_select %p1404, %s59, 1
        %s1406 = smul.addr %s1405, 2
        %s1407 = scalar_lea.vmem %s20, %s1406
        %p1408 = scmp.lt.s32.totalorder %s59, 1
        %s1409 = scalar_select %p1408, %s59, 1
        %s1410 = scalar_lea.vmem %s22, %s1409
        %p1411 = scmp.lt.s32.totalorder %s59, 1
        %s1412 = scalar_select %p1411, %s59, 1
        %s1413 = smul.addr %s1412, 2
        %s1414 = scalar_lea.vmem %s24, %s1413
        %p1416 = scmp.eq.s32.totalorder %s59, 0
        // Predicated region
        $region185: #{tpu_custom_call.1} parent=127 // pred_check
          %p1417 = pneg %p1416
        $region186: #{tpu_custom_call.1} parent=127 // pred_check_branch
          %1419 = sbr.rel (%p1417) target = $region188
        $region187: #{tpu_custom_call.1} parent=127 // pred_region
          %v1420 = vld [vmem:[#allocation3] sm:$0xff]
          %v1421 = vld [vmem:[#allocation3 + $0x8] sm:$0xff]
          %1422 = vst [vmem:[#allocation2] sm:$0xff] %v1420
          %1423 = vst [vmem:[#allocation2 + $0x8] sm:$0xff] %v1421
        $region188: #{tpu_custom_call.1} parent=127 // pred_fallthru
          _
        %v1424 = vld [vmem:[#allocation2] sm:$0xff]
        %v1425 = vld [vmem:[#allocation2 + $0x8] sm:$0xff]
        %v1426 = vld [vmem:[#allocation8] sm:$0x1]
        %v1427 = vld [vmem:[%s1134] sm:$0x1]
        %v1428 = vld [vmem:[%s1143] sm:$0xff]
        %v1429 = vld [vmem:[%s1143 + $0x8] sm:$0xff]
        %v1430 = vld [vmem:[%s1143 + $0x10] sm:$0xff]
        %v1431 = vld [vmem:[%s1143 + $0x18] sm:$0xff]
        %v1432 = vld [vmem:[%s1143 + $0x20] sm:$0xff]
        %v1433 = vld [vmem:[%s1143 + $0x28] sm:$0xff]
        %v1434 = vld [vmem:[%s1143 + $0x30] sm:$0xff]
        %v1435 = vld [vmem:[%s1143 + $0x38] sm:$0xff]
        %v1436 = vld [vmem:[%s1143 + $0x40] sm:$0xff]
        %v1437 = vld [vmem:[%s1143 + $0x48] sm:$0xff]
        %v1438 = vld [vmem:[%s1143 + $0x50] sm:$0xff]
        %v1439 = vld [vmem:[%s1143 + $0x58] sm:$0xff]
        %v1440 = vld [vmem:[%s1143 + $0x60] sm:$0xff]
        %v1441 = vld [vmem:[%s1143 + $0x68] sm:$0xff]
        %v1442 = vld [vmem:[%s1143 + $0x70] sm:$0xff]
        %v1443 = vld [vmem:[%s1143 + $0x78] sm:$0xff]
        %v1444 = vld [vmem:[%s1152] sm:$0xff]
        %v1445 = vld [vmem:[%s1152 + $0x8] sm:$0xff]
        %v1446 = vld [vmem:[%s1152 + $0x10] sm:$0xff]
        %v1447 = vld [vmem:[%s1152 + $0x18] sm:$0xff]
        %v1448 = vld [vmem:[%s1152 + $0x20] sm:$0xff]
        %v1449 = vld [vmem:[%s1152 + $0x28] sm:$0xff]
        %v1450 = vld [vmem:[%s1152 + $0x30] sm:$0xff]
        %v1451 = vld [vmem:[%s1152 + $0x38] sm:$0xff]
        %v1452 = vld [vmem:[%s1152 + $0x40] sm:$0xff]
        %v1453 = vld [vmem:[%s1152 + $0x48] sm:$0xff]
        %v1454 = vld [vmem:[%s1152 + $0x50] sm:$0xff]
        %v1455 = vld [vmem:[%s1152 + $0x58] sm:$0xff]
        %v1456 = vld [vmem:[%s1152 + $0x60] sm:$0xff]
        %v1457 = vld [vmem:[%s1152 + $0x68] sm:$0xff]
        %v1458 = vld [vmem:[%s1152 + $0x70] sm:$0xff]
        %v1459 = vld [vmem:[%s1152 + $0x78] sm:$0xff]
        %v1460 = vld [vmem:[%s1161] sm:$0xff]
        %v1461 = vld [vmem:[%s1161 + $0x8] sm:$0xff]
        %v1462 = vld [vmem:[%s1161 + $0x10] sm:$0xff]
        %v1463 = vld [vmem:[%s1161 + $0x18] sm:$0xff]
        %v1464 = vld [vmem:[%s1161 + $0x20] sm:$0xff]
        %v1465 = vld [vmem:[%s1161 + $0x28] sm:$0xff]
        %v1466 = vld [vmem:[%s1161 + $0x30] sm:$0xff]
        %v1467 = vld [vmem:[%s1161 + $0x38] sm:$0xff]
        %v1468 = vld [vmem:[%s1161 + $0x40] sm:$0xff]
        %v1469 = vld [vmem:[%s1161 + $0x48] sm:$0xff]
        %v1470 = vld [vmem:[%s1161 + $0x50] sm:$0xff]
        %v1471 = vld [vmem:[%s1161 + $0x58] sm:$0xff]
        %v1472 = vld [vmem:[%s1161 + $0x60] sm:$0xff]
        %v1473 = vld [vmem:[%s1161 + $0x68] sm:$0xff]
        %v1474 = vld [vmem:[%s1161 + $0x70] sm:$0xff]
        %v1475 = vld [vmem:[%s1161 + $0x78] sm:$0xff]
        %v1476 = vld [vmem:[%s1379] sm:$0x1]
        %v1477 = vld [vmem:[%s1382] sm:$0x1]
        %v1478 = vld [vmem:[%s1386] sm:$0x3]
        %v1479 = vld [vmem:[%s1390] sm:$0x3]
        %v1480 = vld [vmem:[%s1170] sm:$0xf]
        %v1481 = vld [vmem:[%s1170 + $0x4] sm:$0xf]
        %v1482 = vld [vmem:[%s1170 + $0x8] sm:$0xf]
        %v1483 = vld [vmem:[%s1170 + $0xc] sm:$0xf]
        %v1484 = vld [vmem:[%s1170 + $0x10] sm:$0xf]
        %v1485 = vld [vmem:[%s1170 + $0x14] sm:$0xf]
        %v1486 = vld [vmem:[%s1170 + $0x18] sm:$0xf]
        %v1487 = vld [vmem:[%s1170 + $0x1c] sm:$0xf]
        %v1488 = vld [vmem:[%s1170 + $0x20] sm:$0xf]
        %v1489 = vld [vmem:[%s1170 + $0x24] sm:$0xf]
        %v1490 = vld [vmem:[%s1170 + $0x28] sm:$0xf]
        %v1491 = vld [vmem:[%s1170 + $0x2c] sm:$0xf]
        %v1492 = vld [vmem:[%s1170 + $0x30] sm:$0xf]
        %v1493 = vld [vmem:[%s1170 + $0x34] sm:$0xf]
        %v1494 = vld [vmem:[%s1170 + $0x38] sm:$0xf]
        %v1495 = vld [vmem:[%s1170 + $0x3c] sm:$0xf]
        %v1496 = vld [vmem:[%s1170 + $0x40] sm:$0xf]
        %v1497 = vld [vmem:[%s1170 + $0x44] sm:$0xf]
        %v1498 = vld [vmem:[%s1170 + $0x48] sm:$0xf]
        %v1499 = vld [vmem:[%s1170 + $0x4c] sm:$0xf]
        %v1500 = vld [vmem:[%s1170 + $0x50] sm:$0xf]
        %v1501 = vld [vmem:[%s1170 + $0x54] sm:$0xf]
        %v1502 = vld [vmem:[%s1170 + $0x58] sm:$0xf]
        %v1503 = vld [vmem:[%s1170 + $0x5c] sm:$0xf]
        %v1504 = vld [vmem:[%s1170 + $0x60] sm:$0xf]
        %v1505 = vld [vmem:[%s1170 + $0x64] sm:$0xf]
        %v1506 = vld [vmem:[%s1170 + $0x68] sm:$0xf]
        %v1507 = vld [vmem:[%s1170 + $0x6c] sm:$0xf]
        %v1508 = vld [vmem:[%s1170 + $0x70] sm:$0xf]
        %v1509 = vld [vmem:[%s1170 + $0x74] sm:$0xf]
        %v1510 = vld [vmem:[%s1170 + $0x78] sm:$0xf]
        %v1511 = vld [vmem:[%s1170 + $0x7c] sm:$0xf]
        %1512 = vadd.xlane.f32.xlu0 %v1424
        %v1513 = vpop.xlane.xlu0 %1512
        %1514 = vadd.xlane.f32.xlu0 %v1425
        %v1515 = vpop.xlane.xlu0 %1514
        %v1516 = vrcp.pop 128.0
        %v1517 = vmul.f32 %v1513, %v1516
        %v1518 = vmul.f32 %v1515, %v1516
        %v1519 = vsub.f32 %v1424, %v1517
        %v1520 = vsub.f32 %v1425, %v1518
        %v1521 = vmul.f32 %v1519, %v1519
        %v1522 = vmul.f32 %v1520, %v1520
        %1523 = vadd.xlane.f32.xlu0 %v1521
        %v1524 = vpop.xlane.xlu0 %1523
        %1525 = vadd.xlane.f32.xlu0 %v1522
        %v1526 = vpop.xlane.xlu0 %1525
        %v1527 = vmul.f32 %v1524, %v1516
        %v1528 = vmul.f32 %v1526, %v1516
        %v1529 = vadd.f32 %v1527, 1e-05
        %v1530 = vadd.f32 %v1528, 1e-05
        %v1531 = vrsqrt.pop %v1529
        %v1532 = vrsqrt.pop %v1530
        %v1533 = vmul.f32 %v1519, %v1531
        %v1534 = vmul.f32 %v1520, %v1532
        %v1536 = vlaneseq
        %v1537 = vshrl.u32 %v1536, 7
        %v1538 = vsub.s32 0, %v1537
        %v1539 = vrot.slane %v1427, %v1538
        %v1541 = vmul.f32 %v1533, %v1539
        %v1542 = vmul.f32 %v1534, %v1539
        %v1543 = vpack.c.bf16 %v1542, %v1541
        %v1560 = vunpack.c.l.b16 %v1428
        %v1561 = vunpack.c.h.b16 %v1428
        %v1562 = vunpack.c.l.b16 %v1429
        %v1563 = vunpack.c.h.b16 %v1429
        %v1564 = vunpack.c.l.b16 %v1430
        %v1565 = vunpack.c.h.b16 %v1430
        %v1566 = vunpack.c.l.b16 %v1431
        %v1567 = vunpack.c.h.b16 %v1431
        %v1568 = vunpack.c.l.b16 %v1432
        %v1569 = vunpack.c.h.b16 %v1432
        %v1570 = vunpack.c.l.b16 %v1433
        %v1571 = vunpack.c.h.b16 %v1433
        %v1572 = vunpack.c.l.b16 %v1434
        %v1573 = vunpack.c.h.b16 %v1434
        %v1574 = vunpack.c.l.b16 %v1435
        %v1575 = vunpack.c.h.b16 %v1435
        %v1576 = vunpack.c.l.b16 %v1436
        %v1577 = vunpack.c.h.b16 %v1436
        %v1578 = vunpack.c.l.b16 %v1437
        %v1579 = vunpack.c.h.b16 %v1437
        %v1580 = vunpack.c.l.b16 %v1438
        %v1581 = vunpack.c.h.b16 %v1438
        %v1582 = vunpack.c.l.b16 %v1439
        %v1583 = vunpack.c.h.b16 %v1439
        %v1584 = vunpack.c.l.b16 %v1440
        %v1585 = vunpack.c.h.b16 %v1440
        %v1586 = vunpack.c.l.b16 %v1441
        %v1587 = vunpack.c.h.b16 %v1441
        %v1588 = vunpack.c.l.b16 %v1442
        %v1589 = vunpack.c.h.b16 %v1442
        %v1590 = vunpack.c.l.b16 %v1443
        %v1591 = vunpack.c.h.b16 %v1443
        %v1592 = vpack.c.b16 %v1562, %v1560
        %v1593 = vpack.c.b16 %v1563, %v1561
        %v1594 = vpack.c.b16 %v1566, %v1564
        %v1595 = vpack.c.b16 %v1567, %v1565
        %v1596 = vpack.c.b16 %v1570, %v1568
        %v1597 = vpack.c.b16 %v1571, %v1569
        %v1598 = vpack.c.b16 %v1574, %v1572
        %v1599 = vpack.c.b16 %v1575, %v1573
        %v1600 = vpack.c.b16 %v1578, %v1576
        %v1601 = vpack.c.b16 %v1579, %v1577
        %v1602 = vpack.c.b16 %v1582, %v1580
        %v1603 = vpack.c.b16 %v1583, %v1581
        %v1604 = vpack.c.b16 %v1586, %v1584
        %v1605 = vpack.c.b16 %v1587, %v1585
        %v1606 = vpack.c.b16 %v1590, %v1588
        %v1607 = vpack.c.b16 %v1591, %v1589
        %1624 = vmatprep.subr.bf16.mxu0 %v1593
        %1625 = vmatpush1.bf16.msra.mxu0 %v1592
        %1626 = vmatprep.subr.bf16.mxu0 %v1595
        %1627 = vmatpush1.bf16.msra.mxu0 %v1594
        %1628 = vmatprep.subr.bf16.mxu0 %v1597
        %1629 = vmatpush1.bf16.msra.mxu0 %v1596
        %1630 = vmatprep.subr.bf16.mxu0 %v1599
        %1631 = vmatpush1.bf16.msra.mxu0 %v1598
        %1632 = vmatprep.subr.bf16.mxu0 %v1601
        %1633 = vmatpush1.bf16.msra.mxu0 %v1600
        %1634 = vmatprep.subr.bf16.mxu0 %v1603
        %1635 = vmatpush1.bf16.msra.mxu0 %v1602
        %1636 = vmatprep.subr.bf16.mxu0 %v1605
        %1637 = vmatpush1.bf16.msra.mxu0 %v1604
        %1638 = vmatprep.subr.bf16.mxu0 %v1607
        %1639 = vmatpush1.bf16.msra.mxu0 %v1606
        %1640 = vmatprep.subr.bf16.mxu0 0
        %1641 = vmatpush1.bf16.msra.mxu0 0
        %1642 = vmatprep.subr.bf16.mxu0 0
        %1643 = vmatpush1.bf16.msra.mxu0 0
        %1644 = vmatprep.subr.bf16.mxu0 0
        %1645 = vmatpush1.bf16.msra.mxu0 0
        %1646 = vmatprep.subr.bf16.mxu0 0
        %1647 = vmatpush1.bf16.msra.mxu0 0
        %1648 = vmatprep.subr.bf16.mxu0 0
        %1649 = vmatpush1.bf16.msra.mxu0 0
        %1650 = vmatprep.subr.bf16.mxu0 0
        %1651 = vmatpush1.bf16.msra.mxu0 0
        %1652 = vmatprep.subr.bf16.mxu0 0
        %1653 = vmatpush1.bf16.msra.mxu0 0
        %1654 = vmatprep.subr.bf16.mxu0 0
        %1655 = vmatpush1.bf16.msra.mxu0 0
        %1656 = vmatprep.mubr.bf16.mxu0 0
        %1657 = vmatmul.mubr.bf16.gmra.mrb[0].mxu0 %v1543
        %v1658 = vpop.f32.mrb[0].mxu0
        %v1659 = vadd.f32 0.0, %v1658
        %v1660 = vpop.f32.mrb[0].mxu0
        %v1661 = vadd.f32 0.0, %v1660
        %v1662 = vpop.f32.mrb[0].mxu0
        %v1663 = vadd.f32 0.0, %v1662
        %v1664 = vpop.f32.mrb[0].mxu0
        %v1665 = vadd.f32 0.0, %v1664
        %1666 = vdwg.mxu0
        %v1683 = vunpack.c.l.b16 %v1444
        %v1684 = vunpack.c.h.b16 %v1444
        %v1685 = vunpack.c.l.b16 %v1445
        %v1686 = vunpack.c.h.b16 %v1445
        %v1687 = vunpack.c.l.b16 %v1446
        %v1688 = vunpack.c.h.b16 %v1446
        %v1689 = vunpack.c.l.b16 %v1447
        %v1690 = vunpack.c.h.b16 %v1447
        %v1691 = vunpack.c.l.b16 %v1448
        %v1692 = vunpack.c.h.b16 %v1448
        %v1693 = vunpack.c.l.b16 %v1449
        %v1694 = vunpack.c.h.b16 %v1449
        %v1695 = vunpack.c.l.b16 %v1450
        %v1696 = vunpack.c.h.b16 %v1450
        %v1697 = vunpack.c.l.b16 %v1451
        %v1698 = vunpack.c.h.b16 %v1451
        %v1699 = vunpack.c.l.b16 %v1452
        %v1700 = vunpack.c.h.b16 %v1452
        %v1701 = vunpack.c.l.b16 %v1453
        %v1702 = vunpack.c.h.b16 %v1453
        %v1703 = vunpack.c.l.b16 %v1454
        %v1704 = vunpack.c.h.b16 %v1454
        %v1705 = vunpack.c.l.b16 %v1455
        %v1706 = vunpack.c.h.b16 %v1455
        %v1707 = vunpack.c.l.b16 %v1456
        %v1708 = vunpack.c.h.b16 %v1456
        %v1709 = vunpack.c.l.b16 %v1457
        %v1710 = vunpack.c.h.b16 %v1457
        %v1711 = vunpack.c.l.b16 %v1458
        %v1712 = vunpack.c.h.b16 %v1458
        %v1713 = vunpack.c.l.b16 %v1459
        %v1714 = vunpack.c.h.b16 %v1459
        %v1715 = vpack.c.b16 %v1685, %v1683
        %v1716 = vpack.c.b16 %v1686, %v1684
        %v1717 = vpack.c.b16 %v1689, %v1687
        %v1718 = vpack.c.b16 %v1690, %v1688
        %v1719 = vpack.c.b16 %v1693, %v1691
        %v1720 = vpack.c.b16 %v1694, %v1692
        %v1721 = vpack.c.b16 %v1697, %v1695
        %v1722 = vpack.c.b16 %v1698, %v1696
        %v1723 = vpack.c.b16 %v1701, %v1699
        %v1724 = vpack.c.b16 %v1702, %v1700
        %v1725 = vpack.c.b16 %v1705, %v1703
        %v1726 = vpack.c.b16 %v1706, %v1704
        %v1727 = vpack.c.b16 %v1709, %v1707
        %v1728 = vpack.c.b16 %v1710, %v1708
        %v1729 = vpack.c.b16 %v1713, %v1711
        %v1730 = vpack.c.b16 %v1714, %v1712
        %1747 = vmatprep.subr.bf16.mxu0 %v1716
        %1748 = vmatpush1.bf16.msra.mxu0 %v1715
        %1749 = vmatprep.subr.bf16.mxu0 %v1718
        %1750 = vmatpush1.bf16.msra.mxu0 %v1717
        %1751 = vmatprep.subr.bf16.mxu0 %v1720
        %1752 = vmatpush1.bf16.msra.mxu0 %v1719
        %1753 = vmatprep.subr.bf16.mxu0 %v1722
        %1754 = vmatpush1.bf16.msra.mxu0 %v1721
        %1755 = vmatprep.subr.bf16.mxu0 %v1724
        %1756 = vmatpush1.bf16.msra.mxu0 %v1723
        %1757 = vmatprep.subr.bf16.mxu0 %v1726
        %1758 = vmatpush1.bf16.msra.mxu0 %v1725
        %1759 = vmatprep.subr.bf16.mxu0 %v1728
        %1760 = vmatpush1.bf16.msra.mxu0 %v1727
        %1761 = vmatprep.subr.bf16.mxu0 %v1730
        %1762 = vmatpush1.bf16.msra.mxu0 %v1729
        %1763 = vmatprep.subr.bf16.mxu0 0
        %1764 = vmatpush1.bf16.msra.mxu0 0
        %1765 = vmatprep.subr.bf16.mxu0 0
        %1766 = vmatpush1.bf16.msra.mxu0 0
        %1767 = vmatprep.subr.bf16.mxu0 0
        %1768 = vmatpush1.bf16.msra.mxu0 0
        %1769 = vmatprep.subr.bf16.mxu0 0
        %1770 = vmatpush1.bf16.msra.mxu0 0
        %1771 = vmatprep.subr.bf16.mxu0 0
        %1772 = vmatpush1.bf16.msra.mxu0 0
        %1773 = vmatprep.subr.bf16.mxu0 0
        %1774 = vmatpush1.bf16.msra.mxu0 0
        %1775 = vmatprep.subr.bf16.mxu0 0
        %1776 = vmatpush1.bf16.msra.mxu0 0
        %1777 = vmatprep.subr.bf16.mxu0 0
        %1778 = vmatpush1.bf16.msra.mxu0 0
        %1779 = vmatprep.mubr.bf16.mxu0 0
        %1780 = vmatmul.mubr.bf16.gmra.mrb[0].mxu0 %v1543
        %v1781 = vpop.f32.mrb[0].mxu0
        %v1782 = vadd.f32 0.0, %v1781
        %v1783 = vpop.f32.mrb[0].mxu0
        %v1784 = vadd.f32 0.0, %v1783
        %v1785 = vpop.f32.mrb[0].mxu0
        %v1786 = vadd.f32 0.0, %v1785
        %v1787 = vpop.f32.mrb[0].mxu0
        %v1788 = vadd.f32 0.0, %v1787
        %1789 = vdwg.mxu0
        %v1806 = vunpack.c.l.b16 %v1460
        %v1807 = vunpack.c.h.b16 %v1460
        %v1808 = vunpack.c.l.b16 %v1461
        %v1809 = vunpack.c.h.b16 %v1461
        %v1810 = vunpack.c.l.b16 %v1462
        %v1811 = vunpack.c.h.b16 %v1462
        %v1812 = vunpack.c.l.b16 %v1463
        %v1813 = vunpack.c.h.b16 %v1463
        %v1814 = vunpack.c.l.b16 %v1464
        %v1815 = vunpack.c.h.b16 %v1464
        %v1816 = vunpack.c.l.b16 %v1465
        %v1817 = vunpack.c.h.b16 %v1465
        %v1818 = vunpack.c.l.b16 %v1466
        %v1819 = vunpack.c.h.b16 %v1466
        %v1820 = vunpack.c.l.b16 %v1467
        %v1821 = vunpack.c.h.b16 %v1467
        %v1822 = vunpack.c.l.b16 %v1468
        %v1823 = vunpack.c.h.b16 %v1468
        %v1824 = vunpack.c.l.b16 %v1469
        %v1825 = vunpack.c.h.b16 %v1469
        %v1826 = vunpack.c.l.b16 %v1470
        %v1827 = vunpack.c.h.b16 %v1470
        %v1828 = vunpack.c.l.b16 %v1471
        %v1829 = vunpack.c.h.b16 %v1471
        %v1830 = vunpack.c.l.b16 %v1472
        %v1831 = vunpack.c.h.b16 %v1472
        %v1832 = vunpack.c.l.b16 %v1473
        %v1833 = vunpack.c.h.b16 %v1473
        %v1834 = vunpack.c.l.b16 %v1474
        %v1835 = vunpack.c.h.b16 %v1474
        %v1836 = vunpack.c.l.b16 %v1475
        %v1837 = vunpack.c.h.b16 %v1475
        %v1838 = vpack.c.b16 %v1808, %v1806
        %v1839 = vpack.c.b16 %v1809, %v1807
        %v1840 = vpack.c.b16 %v1812, %v1810
        %v1841 = vpack.c.b16 %v1813, %v1811
        %v1842 = vpack.c.b16 %v1816, %v1814
        %v1843 = vpack.c.b16 %v1817, %v1815
        %v1844 = vpack.c.b16 %v1820, %v1818
        %v1845 = vpack.c.b16 %v1821, %v1819
        %v1846 = vpack.c.b16 %v1824, %v1822
        %v1847 = vpack.c.b16 %v1825, %v1823
        %v1848 = vpack.c.b16 %v1828, %v1826
        %v1849 = vpack.c.b16 %v1829, %v1827
        %v1850 = vpack.c.b16 %v1832, %v1830
        %v1851 = vpack.c.b16 %v1833, %v1831
        %v1852 = vpack.c.b16 %v1836, %v1834
        %v1853 = vpack.c.b16 %v1837, %v1835
        %1870 = vmatprep.subr.bf16.mxu0 %v1839
        %1871 = vmatpush1.bf16.msra.mxu0 %v1838
        %1872 = vmatprep.subr.bf16.mxu0 %v1841
        %1873 = vmatpush1.bf16.msra.mxu0 %v1840
        %1874 = vmatprep.subr.bf16.mxu0 %v1843
        %1875 = vmatpush1.bf16.msra.mxu0 %v1842
        %1876 = vmatprep.subr.bf16.mxu0 %v1845
        %1877 = vmatpush1.bf16.msra.mxu0 %v1844
        %1878 = vmatprep.subr.bf16.mxu0 %v1847
        %1879 = vmatpush1.bf16.msra.mxu0 %v1846
        %1880 = vmatprep.subr.bf16.mxu0 %v1849
        %1881 = vmatpush1.bf16.msra.mxu0 %v1848
        %1882 = vmatprep.subr.bf16.mxu0 %v1851
        %1883 = vmatpush1.bf16.msra.mxu0 %v1850
        %1884 = vmatprep.subr.bf16.mxu0 %v1853
        %1885 = vmatpush1.bf16.msra.mxu0 %v1852
        %1886 = vmatprep.subr.bf16.mxu0 0
        %1887 = vmatpush1.bf16.msra.mxu0 0
        %1888 = vmatprep.subr.bf16.mxu0 0
        %1889 = vmatpush1.bf16.msra.mxu0 0
        %1890 = vmatprep.subr.bf16.mxu0 0
        %1891 = vmatpush1.bf16.msra.mxu0 0
        %1892 = vmatprep.subr.bf16.mxu0 0
        %1893 = vmatpush1.bf16.msra.mxu0 0
        %1894 = vmatprep.subr.bf16.mxu0 0
        %1895 = vmatpush1.bf16.msra.mxu0 0
        %1896 = vmatprep.subr.bf16.mxu0 0
        %1897 = vmatpush1.bf16.msra.mxu0 0
        %1898 = vmatprep.subr.bf16.mxu0 0
        %1899 = vmatpush1.bf16.msra.mxu0 0
        %1900 = vmatprep.subr.bf16.mxu0 0
        %1901 = vmatpush1.bf16.msra.mxu0 0
        %1902 = vmatprep.mubr.bf16.mxu0 0
        %1903 = vmatmul.mubr.bf16.gmra.mrb[0].mxu0 %v1543
        %v1904 = vpop.f32.mrb[0].mxu0
        %v1905 = vadd.f32 0.0, %v1904
        %v1906 = vpop.f32.mrb[0].mxu0
        %v1907 = vadd.f32 0.0, %v1906
        %v1908 = vpop.f32.mrb[0].mxu0
        %v1909 = vadd.f32 0.0, %v1908
        %v1910 = vpop.f32.mrb[0].mxu0
        %v1911 = vadd.f32 0.0, %v1910
        %1912 = vdwg.mxu0
        %v1914 = vlaneseq
        %v1915 = vshrl.u32 %v1914, 7
        %v1916 = vsub.s32 0, %v1915
        %v1917 = vrot.slane %v1478, %v1916
        %v1918 = vlaneseq
        %v1919 = vshrl.u32 %v1918, 7
        %v1920 = vsub.s32 1, %v1919
        %v1921 = vrot.slane %v1478, %v1920
        %v1928 = vrot.slane %v1782, 7
        %v1929 = vrot.slane %v1784, 7
        %v1930 = vrot.slane %v1786, 7
        %v1931 = vrot.slane %v1788, 7
        %vm1936 = vcmask 1040384
        %v1937 = vsel %vm1936, %v1917, %v1928
        %v1938 = vsel %vm1936, %v1921, %v1929
        %v1939 = vsel %vm1936, %v1917, %v1930
        %v1940 = vsel %vm1936, %v1921, %v1931
        %v1941 = vsel %vm1936, %v1928, 0.0
        %v1942 = vsel %vm1936, %v1929, 0.0
        %v1943 = vsel %vm1936, %v1930, 0.0
        %v1944 = vsel %vm1936, %v1931, 0.0
        %v1946 = vlaneseq
        %v1947 = vshrl.u32 %v1946, 7
        %v1948 = vsub.s32 0, %v1947
        %v1949 = vrot.slane %v1479, %v1948
        %v1950 = vlaneseq
        %v1951 = vshrl.u32 %v1950, 7
        %v1952 = vsub.s32 1, %v1951
        %v1953 = vrot.slane %v1479, %v1952
        %v1960 = vrot.slane %v1905, 7
        %v1961 = vrot.slane %v1907, 7
        %v1962 = vrot.slane %v1909, 7
        %v1963 = vrot.slane %v1911, 7
        %v1968 = vsel %vm1936, %v1949, %v1960
        %v1969 = vsel %vm1936, %v1953, %v1961
        %v1970 = vsel %vm1936, %v1949, %v1962
        %v1971 = vsel %vm1936, %v1953, %v1963
        %v1972 = vsel %vm1936, %v1960, 0.0
        %v1973 = vsel %vm1936, %v1961, 0.0
        %v1974 = vsel %vm1936, %v1962, 0.0
        %v1975 = vsel %vm1936, %v1963, 0.0
        %v1976 = vmul.f32 %v1659, %v1659
        %v1977 = vmul.f32 %v1663, %v1663
        %vm1978 = vcmask 523264
        %v1979 = vsel %vm1978, %v1976, 0.0
        %1980 = vadd.xlane.f32.xlu0 %v1979
        %v1981 = vpop.xlane.xlu0 %1980
        %v1982 = vsel %vm1978, %v1977, 0.0
        %1983 = vadd.xlane.f32.xlu0 %v1982
        %v1984 = vpop.xlane.xlu0 %1983
        %v1985 = vadd.f32 %v1981, 1e-12
        %v1986 = vadd.f32 %v1984, 1e-12
        %v1987 = vrsqrt.pop %v1985
        %v1988 = vrsqrt.pop %v1986
        %v1989 = vmul.f32 %v1659, %v1987
        %v1990 = vmul.f32 %v1663, %v1988
        %v1992 = vlaneseq
        %v1993 = vshrl.u32 %v1992, 7
        %v1994 = vsub.s32 0, %v1993
        %v1995 = vrot.slane %v1476, %v1994
        %v1997 = vmul.f32 %v1989, %v1995
        %v1998 = vmul.f32 %v1990, %v1995
        %v1999 = vmul.f32 %v1937, %v1937
        %v2000 = vmul.f32 %v1941, %v1941
        %v2001 = vmul.f32 %v1939, %v1939
        %v2002 = vmul.f32 %v1943, %v1943
        %v2003 = vsel %vm1978, %v1999, 0.0
        %2004 = vadd.xlane.f32.xlu0 %v2003
        %v2005 = vpop.xlane.xlu0 %2004
        %v2006 = vsel %vm1978, %v2000, 0.0
        %2007 = vadd.xlane.f32.xlu0 %v2006
        %v2008 = vpop.xlane.xlu0 %2007
        %2009 = vadd.xlane.f32.xlu0 0.0
        %v2010 = vpop.xlane.xlu0 %2009
        %v2011 = vsel %vm1978, %v2001, 0.0
        %2012 = vadd.xlane.f32.xlu0 %v2011
        %v2013 = vpop.xlane.xlu0 %2012
        %v2014 = vsel %vm1978, %v2002, 0.0
        %2015 = vadd.xlane.f32.xlu0 %v2014
        %v2016 = vpop.xlane.xlu0 %2015
        %v2017 = vadd.f32 %v2005, 1e-12
        %v2018 = vadd.f32 %v2008, 1e-12
        %v2019 = vadd.f32 %v2010, 1e-12
        %v2020 = vadd.f32 %v2013, 1e-12
        %v2021 = vadd.f32 %v2016, 1e-12
        %v2022 = vrsqrt.pop %v2017
        %v2023 = vrsqrt.pop %v2018
        %v2024 = vrsqrt.pop %v2019
        %v2025 = vrsqrt.pop %v2020
        %v2026 = vrsqrt.pop %v2021
        %v2027 = vmul.f32 %v1937, %v2022
        %v2028 = vmul.f32 %v1941, %v2023
        %v2029 = vmul.f32 %v2024, 0.0
        %v2030 = vmul.f32 %v1939, %v2025
        %v2031 = vmul.f32 %v1943, %v2026
        %v2033 = vlaneseq
        %v2034 = vshrl.u32 %v2033, 7
        %v2035 = vsub.s32 0, %v2034
        %v2036 = vrot.slane %v1477, %v2035
        %v2038 = vmul.f32 %v2027, %v2036
        %v2039 = vmul.f32 %v2028, %v2036
        %v2040 = vmul.f32 %v2029, %v2036
        %v2041 = vmul.f32 %v2030, %v2036
        %v2042 = vmul.f32 %v2031, %v2036
        %v2043 = vpack.c.bf16 %v1997, %v1997
        %v2044 = vpack.c.bf16 %v1998, %v1998
        %v2045 = vpack.c.bf16 %v2039, %v2038
        %v2046 = vpack.c.bf16 %v2040, %v2040
        %v2047 = vpack.c.bf16 %v2042, %v2041
        %v2049 = vsel %vm1978, %v2043, 0
        %v2052 = vsel %vm1978, %v2045, 0
        %v2055 = vsel %vm1978, %v2046, 0
        %2057 = vmatprep.subr.bf16.mxu0 0
        %2058 = vmatpush1.bf16.xpose.msra.mxu0 %v2052
        %2059 = vmatprep.subr.bf16.mxu0 0
        %2060 = vmatpush1.bf16.xpose.msra.mxu0 %v2055
        %2061 = vmatprep.subr.bf16.mxu0 0
        %2062 = vmatpush1.bf16.xpose.msra.mxu0 %v2055
        %2063 = vmatprep.subr.bf16.mxu0 0
        %2064 = vmatpush1.bf16.xpose.msra.mxu0 %v2055
        %2065 = vmatprep.subr.bf16.mxu0 0
        %2066 = vmatpush1.bf16.xpose.msra.mxu0 %v2055
        %2067 = vmatprep.subr.bf16.mxu0 0
        %2068 = vmatpush1.bf16.xpose.msra.mxu0 %v2055
        %2069 = vmatprep.subr.bf16.mxu0 0
        %2070 = vmatpush1.bf16.xpose.msra.mxu0 %v2055
        %2071 = vmatprep.subr.bf16.mxu0 0
        %2072 = vmatpush1.bf16.xpose.msra.mxu0 %v2055
        %2073 = vmatprep.subr.bf16.mxu0 0
        %2074 = vmatpush1.bf16.xpose.msra.mxu0 0
        %2075 = vmatprep.subr.bf16.mxu0 0
        %2076 = vmatpush1.bf16.xpose.msra.mxu0 0
        %2077 = vmatprep.subr.bf16.mxu0 0
        %2078 = vmatpush1.bf16.xpose.msra.mxu0 0
        %2079 = vmatprep.subr.bf16.mxu0 0
        %2080 = vmatpush1.bf16.xpose.msra.mxu0 0
        %2081 = vmatprep.subr.bf16.mxu0 0
        %2082 = vmatpush1.bf16.xpose.msra.mxu0 0
        %2083 = vmatprep.subr.bf16.mxu0 0
        %2084 = vmatpush1.bf16.xpose.msra.mxu0 0
        %2085 = vmatprep.subr.bf16.mxu0 0
        %2086 = vmatpush1.bf16.xpose.msra.mxu0 0
        %2087 = vmatprep.subr.bf16.mxu0 0
        %2088 = vmatpush1.bf16.xpose.msra.mxu0 0
        %2089 = vmatprep.mubr.bf16.mxu0 0
        %2090 = vmatmul.mubr.bf16.gmra.mrb[0].mxu0 %v2049
        %v2091 = vpop.f32.mrb[0].mxu0
        %v2092 = vadd.f32 0.0, %v2091
        %v2093 = vpop.f32.mrb[0].mxu0
        %v2094 = vpop.f32.mrb[0].mxu0
        %v2095 = vpop.f32.mrb[0].mxu0
        %2096 = vdwg.mxu0
        %v2098 = vsel %vm1978, %v2044, 0
        %v2101 = vsel %vm1978, %v2047, 0
        %2103 = vmatprep.subr.bf16.mxu0 0
        %2104 = vmatpush1.bf16.xpose.msra.mxu0 %v2101
        %2105 = vmatprep.subr.bf16.mxu0 0
        %2106 = vmatpush1.bf16.xpose.msra.mxu0 %v2055
        %2107 = vmatprep.subr.bf16.mxu0 0
        %2108 = vmatpush1.bf16.xpose.msra.mxu0 %v2055
        %2109 = vmatprep.subr.bf16.mxu0 0
        %2110 = vmatpush1.bf16.xpose.msra.mxu0 %v2055
        %2111 = vmatprep.subr.bf16.mxu0 0
        %2112 = vmatpush1.bf16.xpose.msra.mxu0 %v2055
        %2113 = vmatprep.subr.bf16.mxu0 0
        %2114 = vmatpush1.bf16.xpose.msra.mxu0 %v2055
        %2115 = vmatprep.subr.bf16.mxu0 0
        %2116 = vmatpush1.bf16.xpose.msra.mxu0 %v2055
        %2117 = vmatprep.subr.bf16.mxu0 0
        %2118 = vmatpush1.bf16.xpose.msra.mxu0 %v2055
        %2119 = vmatprep.subr.bf16.mxu0 0
        %2120 = vmatpush1.bf16.xpose.msra.mxu0 0
        %2121 = vmatprep.subr.bf16.mxu0 0
        %2122 = vmatpush1.bf16.xpose.msra.mxu0 0
        %2123 = vmatprep.subr.bf16.mxu0 0
        %2124 = vmatpush1.bf16.xpose.msra.mxu0 0
        %2125 = vmatprep.subr.bf16.mxu0 0
        %2126 = vmatpush1.bf16.xpose.msra.mxu0 0
        %2127 = vmatprep.subr.bf16.mxu0 0
        %2128 = vmatpush1.bf16.xpose.msra.mxu0 0
        %2129 = vmatprep.subr.bf16.mxu0 0
        %2130 = vmatpush1.bf16.xpose.msra.mxu0 0
        %2131 = vmatprep.subr.bf16.mxu0 0
        %2132 = vmatpush1.bf16.xpose.msra.mxu0 0
        %2133 = vmatprep.subr.bf16.mxu0 0
        %2134 = vmatpush1.bf16.xpose.msra.mxu0 0
        %2135 = vmatprep.mubr.bf16.mxu0 0
        %2136 = vmatmul.mubr.bf16.gmra.mrb[0].mxu0 %v2098
        %v2137 = vpop.f32.mrb[0].mxu0
        %v2138 = vadd.f32 0.0, %v2137
        %v2139 = vpop.f32.mrb[0].mxu0
        %v2140 = vpop.f32.mrb[0].mxu0
        %v2141 = vpop.f32.mrb[0].mxu0
        %2142 = vdwg.mxu0
        %v2143 = vmul.f32 %v2092, 8.0
        %v2144 = vmul.f32 %v2138, 8.0
        %v2146 = vlaneseq
        %v2147 = vshrl.u32 %v2146, 7
        %v2148 = vsub.s32 0, %v2147
        %v2149 = vrot.slane %v1426, %v2148
        %v2151 = vadd.f32 %v2143, %v2149
        %v2152 = vadd.f32 %v2144, %v2149
        %2153 = vmax.xlane.f32.xlu0 %v2151
        %v2154 = vpop.xlane.xlu0 %2153
        %2155 = vmax.xlane.f32.xlu0 %v2152
        %v2156 = vpop.xlane.xlu0 %2155
        %v2157 = vsub.f32 %v2151, %v2154
        %v2158 = vsub.f32 %v2152, %v2156
        %v2159 = vmul.f32 %v2157, 1.442695
        %v2160 = vpow.pop %v2159
        %v2161 = vmul.f32 %v2158, 1.442695
        %v2162 = vpow.pop %v2161
        %2163 = vadd.xlane.f32.xlu0 %v2160
        %v2164 = vpop.xlane.xlu0 %2163
        %2165 = vadd.xlane.f32.xlu0 %v2162
        %v2166 = vpop.xlane.xlu0 %2165
        %v2167 = vrcp.pop %v2164
        %v2168 = vrcp.pop %v2166
        %v2169 = vmul.f32 %v2160, %v2167
        %v2170 = vmul.f32 %v2162, %v2168
        %v2171 = vpack.c.bf16 %v2169, %v2169
        %v2172 = vpack.c.bf16 %v2170, %v2170
        %v2173 = vpack.c.bf16 %v1972, %v1968
        %v2174 = vpack.c.bf16 0.0, 0.0
        %v2175 = vpack.c.bf16 %v1974, %v1970
        %2176 = vmatprep.subr.bf16.mxu0 0
        %2177 = vmatpush1.bf16.msra.mxu0 %v2173
        %2178 = vmatprep.subr.bf16.mxu0 0
        %2179 = vmatpush1.bf16.msra.mxu0 %v2174
        %2180 = vmatprep.subr.bf16.mxu0 0
        %2181 = vmatpush1.bf16.msra.mxu0 %v2174
        %2182 = vmatprep.subr.bf16.mxu0 0
        %2183 = vmatpush1.bf16.msra.mxu0 %v2174
        %2184 = vmatprep.subr.bf16.mxu0 0
        %2185 = vmatpush1.bf16.msra.mxu0 %v2174
        %2186 = vmatprep.subr.bf16.mxu0 0
        %2187 = vmatpush1.bf16.msra.mxu0 %v2174
        %2188 = vmatprep.subr.bf16.mxu0 0
        %2189 = vmatpush1.bf16.msra.mxu0 %v2174
        %2190 = vmatprep.subr.bf16.mxu0 0
        %2191 = vmatpush1.bf16.msra.mxu0 %v2174
        %2192 = vmatprep.subr.bf16.mxu0 0
        %2193 = vmatpush1.bf16.msra.mxu0 0
        %2194 = vmatprep.subr.bf16.mxu0 0
        %2195 = vmatpush1.bf16.msra.mxu0 0
        %2196 = vmatprep.subr.bf16.mxu0 0
        %2197 = vmatpush1.bf16.msra.mxu0 0
        %2198 = vmatprep.subr.bf16.mxu0 0
        %2199 = vmatpush1.bf16.msra.mxu0 0
        %2200 = vmatprep.subr.bf16.mxu0 0
        %2201 = vmatpush1.bf16.msra.mxu0 0
        %2202 = vmatprep.subr.bf16.mxu0 0
        %2203 = vmatpush1.bf16.msra.mxu0 0
        %2204 = vmatprep.subr.bf16.mxu0 0
        %2205 = vmatpush1.bf16.msra.mxu0 0
        %2206 = vmatprep.subr.bf16.mxu0 0
        %2207 = vmatpush1.bf16.msra.mxu0 0
        %2208 = vmatprep.mubr.bf16.mxu0 0
        %2209 = vmatmul.mubr.bf16.gmra.mrb[0].mxu0 %v2171
        %v2210 = vpop.f32.mrb[0].mxu0
        %v2211 = vadd.f32 0.0, %v2210
        %v2212 = vpop.f32.mrb[0].mxu0
        %v2213 = vpop.f32.mrb[0].mxu0
        %v2214 = vpop.f32.mrb[0].mxu0
        %2215 = vdwg.mxu0
        %2216 = vmatprep.subr.bf16.mxu0 0
        %2217 = vmatpush1.bf16.msra.mxu0 %v2175
        %2218 = vmatprep.subr.bf16.mxu0 0
        %2219 = vmatpush1.bf16.msra.mxu0 %v2174
        %2220 = vmatprep.subr.bf16.mxu0 0
        %2221 = vmatpush1.bf16.msra.mxu0 %v2174
        %2222 = vmatprep.subr.bf16.mxu0 0
        %2223 = vmatpush1.bf16.msra.mxu0 %v2174
        %2224 = vmatprep.subr.bf16.mxu0 0
        %2225 = vmatpush1.bf16.msra.mxu0 %v2174
        %2226 = vmatprep.subr.bf16.mxu0 0
        %2227 = vmatpush1.bf16.msra.mxu0 %v2174
        %2228 = vmatprep.subr.bf16.mxu0 0
        %2229 = vmatpush1.bf16.msra.mxu0 %v2174
        %2230 = vmatprep.subr.bf16.mxu0 0
        %2231 = vmatpush1.bf16.msra.mxu0 %v2174
        %2232 = vmatprep.subr.bf16.mxu0 0
        %2233 = vmatpush1.bf16.msra.mxu0 0
        %2234 = vmatprep.subr.bf16.mxu0 0
        %2235 = vmatpush1.bf16.msra.mxu0 0
        %2236 = vmatprep.subr.bf16.mxu0 0
        %2237 = vmatpush1.bf16.msra.mxu0 0
        %2238 = vmatprep.subr.bf16.mxu0 0
        %2239 = vmatpush1.bf16.msra.mxu0 0
        %2240 = vmatprep.subr.bf16.mxu0 0
        %2241 = vmatpush1.bf16.msra.mxu0 0
        %2242 = vmatprep.subr.bf16.mxu0 0
        %2243 = vmatpush1.bf16.msra.mxu0 0
        %2244 = vmatprep.subr.bf16.mxu0 0
        %2245 = vmatpush1.bf16.msra.mxu0 0
        %2246 = vmatprep.subr.bf16.mxu0 0
        %2247 = vmatpush1.bf16.msra.mxu0 0
        %2248 = vmatprep.mubr.bf16.mxu0 0
        %2249 = vmatmul.mubr.bf16.gmra.mrb[0].mxu0 %v2172
        %v2250 = vpop.f32.mrb[0].mxu0
        %v2251 = vadd.f32 0.0, %v2250
        %v2252 = vpop.f32.mrb[0].mxu0
        %v2253 = vpop.f32.mrb[0].mxu0
        %v2254 = vpop.f32.mrb[0].mxu0
        %2255 = vdwg.mxu0
        %2258 = vrot.lane.b32.xlu0 %v1976, 64
        %v2259 = vpop.permute.xlu0 %2258
        %2260 = vrot.lane.b32.xlu0 %v1977, 64
        %v2261 = vpop.permute.xlu0 %2260
        %v2264 = vsel %vm1978, %v2259, 0.0
        %2265 = vadd.xlane.f32.xlu0 %v2264
        %v2266 = vpop.xlane.xlu0 %2265
        %v2267 = vsel %vm1978, %v2261, 0.0
        %2268 = vadd.xlane.f32.xlu0 %v2267
        %v2269 = vpop.xlane.xlu0 %2268
        %v2270 = vadd.f32 %v2266, 1e-12
        %v2271 = vadd.f32 %v2269, 1e-12
        %v2272 = vrsqrt.pop %v2270
        %v2273 = vrsqrt.pop %v2271
        %v2274 = vmul.f32 %v1659, %v2272
        %v2275 = vmul.f32 %v1663, %v2273
        %2276 = vrot.lane.b32.xlu0 %v1995, 64
        %v2277 = vpop.permute.xlu0 %2276
        %v2279 = vmul.f32 %v2274, %v2277
        %v2280 = vmul.f32 %v2275, %v2277
        %2286 = vrot.lane.b32.xlu0 %v1999, 64
        %v2287 = vpop.permute.xlu0 %2286
        %2288 = vrot.lane.b32.xlu0 %v2000, 64
        %v2289 = vpop.permute.xlu0 %2288
        %2290 = vrot.lane.b32.xlu0 0.0, 64
        %v2291 = vpop.permute.xlu0 %2290
        %2292 = vrot.lane.b32.xlu0 %v2001, 64
        %v2293 = vpop.permute.xlu0 %2292
        %2294 = vrot.lane.b32.xlu0 %v2002, 64
        %v2295 = vpop.permute.xlu0 %2294
        %v2301 = vsel %vm1978, %v2287, 0.0
        %2302 = vadd.xlane.f32.xlu0 %v2301
        %v2303 = vpop.xlane.xlu0 %2302
        %v2304 = vsel %vm1978, %v2289, 0.0
        %2305 = vadd.xlane.f32.xlu0 %v2304
        %v2306 = vpop.xlane.xlu0 %2305
        %v2307 = vsel %vm1978, %v2291, 0.0
        %2308 = vadd.xlane.f32.xlu0 %v2307
        %v2309 = vpop.xlane.xlu0 %2308
        %v2310 = vsel %vm1978, %v2293, 0.0
        %2311 = vadd.xlane.f32.xlu0 %v2310
        %v2312 = vpop.xlane.xlu0 %2311
        %v2313 = vsel %vm1978, %v2295, 0.0
        %2314 = vadd.xlane.f32.xlu0 %v2313
        %v2315 = vpop.xlane.xlu0 %2314
        %v2316 = vadd.f32 %v2303, 1e-12
        %v2317 = vadd.f32 %v2306, 1e-12
        %v2318 = vadd.f32 %v2309, 1e-12
        %v2319 = vadd.f32 %v2312, 1e-12
        %v2320 = vadd.f32 %v2315, 1e-12
        %v2321 = vrsqrt.pop %v2316
        %v2322 = vrsqrt.pop %v2317
        %v2323 = vrsqrt.pop %v2318
        %v2324 = vrsqrt.pop %v2319
        %v2325 = vrsqrt.pop %v2320
        %v2326 = vmul.f32 %v1937, %v2321
        %v2327 = vmul.f32 %v1941, %v2322
        %v2328 = vmul.f32 %v2323, 0.0
        %v2329 = vmul.f32 %v1939, %v2324
        %v2330 = vmul.f32 %v1943, %v2325
        %2331 = vrot.lane.b32.xlu0 %v2036, 64
        %v2332 = vpop.permute.xlu0 %2331
        %v2334 = vmul.f32 %v2326, %v2332
        %v2335 = vmul.f32 %v2327, %v2332
        %v2336 = vmul.f32 %v2328, %v2332
        %v2337 = vmul.f32 %v2329, %v2332
        %v2338 = vmul.f32 %v2330, %v2332
        %v2339 = vpack.c.bf16 %v2279, %v2279
        %v2340 = vpack.c.bf16 %v2280, %v2280
        %v2341 = vpack.c.bf16 %v2335, %v2334
        %v2342 = vpack.c.bf16 %v2336, %v2336
        %v2343 = vpack.c.bf16 %v2338, %v2337
        %2345 = vrot.lane.b32.xlu0 %v2339, 64
        %v2346 = vpop.permute.xlu0 %2345
        %2349 = vrot.lane.b32.xlu0 %v2341, 64
        %v2350 = vpop.permute.xlu0 %2349
        %2351 = vrot.lane.b32.xlu0 %v2342, 64
        %v2352 = vpop.permute.xlu0 %2351
        %v2354 = vsel %vm1978, %v2346, 0
        %v2357 = vsel %vm1978, %v2350, 0
        %v2360 = vsel %vm1978, %v2352, 0
        %2362 = vmatprep.subr.bf16.mxu0 0
        %2363 = vmatpush1.bf16.xpose.msra.mxu0 %v2357
        %2364 = vmatprep.subr.bf16.mxu0 0
        %2365 = vmatpush1.bf16.xpose.msra.mxu0 %v2360
        %2366 = vmatprep.subr.bf16.mxu0 0
        %2367 = vmatpush1.bf16.xpose.msra.mxu0 %v2360
        %2368 = vmatprep.subr.bf16.mxu0 0
        %2369 = vmatpush1.bf16.xpose.msra.mxu0 %v2360
        %2370 = vmatprep.subr.bf16.mxu0 0
        %2371 = vmatpush1.bf16.xpose.msra.mxu0 %v2360
        %2372 = vmatprep.subr.bf16.mxu0 0
        %2373 = vmatpush1.bf16.xpose.msra.mxu0 %v2360
        %2374 = vmatprep.subr.bf16.mxu0 0
        %2375 = vmatpush1.bf16.xpose.msra.mxu0 %v2360
        %2376 = vmatprep.subr.bf16.mxu0 0
        %2377 = vmatpush1.bf16.xpose.msra.mxu0 %v2360
        %2378 = vmatprep.subr.bf16.mxu0 0
        %2379 = vmatpush1.bf16.xpose.msra.mxu0 0
        %2380 = vmatprep.subr.bf16.mxu0 0
        %2381 = vmatpush1.bf16.xpose.msra.mxu0 0
        %2382 = vmatprep.subr.bf16.mxu0 0
        %2383 = vmatpush1.bf16.xpose.msra.mxu0 0
        %2384 = vmatprep.subr.bf16.mxu0 0
        %2385 = vmatpush1.bf16.xpose.msra.mxu0 0
        %2386 = vmatprep.subr.bf16.mxu0 0
        %2387 = vmatpush1.bf16.xpose.msra.mxu0 0
        %2388 = vmatprep.subr.bf16.mxu0 0
        %2389 = vmatpush1.bf16.xpose.msra.mxu0 0
        %2390 = vmatprep.subr.bf16.mxu0 0
        %2391 = vmatpush1.bf16.xpose.msra.mxu0 0
        %2392 = vmatprep.subr.bf16.mxu0 0
        %2393 = vmatpush1.bf16.xpose.msra.mxu0 0
        %2394 = vmatprep.mubr.bf16.mxu0 0
        %2395 = vmatmul.mubr.bf16.gmra.mrb[0].mxu0 %v2354
        %v2396 = vpop.f32.mrb[0].mxu0
        %v2397 = vadd.f32 0.0, %v2396
        %v2398 = vpop.f32.mrb[0].mxu0
        %v2399 = vpop.f32.mrb[0].mxu0
        %v2400 = vpop.f32.mrb[0].mxu0
        %2401 = vdwg.mxu0
        %2403 = vrot.lane.b32.xlu0 %v2340, 64
        %v2404 = vpop.permute.xlu0 %2403
        %2406 = vrot.lane.b32.xlu0 %v2343, 64
        %v2407 = vpop.permute.xlu0 %2406
        %v2409 = vsel %vm1978, %v2404, 0
        %v2412 = vsel %vm1978, %v2407, 0
        %2414 = vmatprep.subr.bf16.mxu0 0
        %2415 = vmatpush1.bf16.xpose.msra.mxu0 %v2412
        %2416 = vmatprep.subr.bf16.mxu0 0
        %2417 = vmatpush1.bf16.xpose.msra.mxu0 %v2360
        %2418 = vmatprep.subr.bf16.mxu0 0
        %2419 = vmatpush1.bf16.xpose.msra.mxu0 %v2360
        %2420 = vmatprep.subr.bf16.mxu0 0
        %2421 = vmatpush1.bf16.xpose.msra.mxu0 %v2360
        %2422 = vmatprep.subr.bf16.mxu0 0
        %2423 = vmatpush1.bf16.xpose.msra.mxu0 %v2360
        %2424 = vmatprep.subr.bf16.mxu0 0
        %2425 = vmatpush1.bf16.xpose.msra.mxu0 %v2360
        %2426 = vmatprep.subr.bf16.mxu0 0
        %2427 = vmatpush1.bf16.xpose.msra.mxu0 %v2360
        %2428 = vmatprep.subr.bf16.mxu0 0
        %2429 = vmatpush1.bf16.xpose.msra.mxu0 %v2360
        %2430 = vmatprep.subr.bf16.mxu0 0
        %2431 = vmatpush1.bf16.xpose.msra.mxu0 0
        %2432 = vmatprep.subr.bf16.mxu0 0
        %2433 = vmatpush1.bf16.xpose.msra.mxu0 0
        %2434 = vmatprep.subr.bf16.mxu0 0
        %2435 = vmatpush1.bf16.xpose.msra.mxu0 0
        %2436 = vmatprep.subr.bf16.mxu0 0
        %2437 = vmatpush1.bf16.xpose.msra.mxu0 0
        %2438 = vmatprep.subr.bf16.mxu0 0
        %2439 = vmatpush1.bf16.xpose.msra.mxu0 0
        %2440 = vmatprep.subr.bf16.mxu0 0
        %2441 = vmatpush1.bf16.xpose.msra.mxu0 0
        %2442 = vmatprep.subr.bf16.mxu0 0
        %2443 = vmatpush1.bf16.xpose.msra.mxu0 0
        %2444 = vmatprep.subr.bf16.mxu0 0
        %2445 = vmatpush1.bf16.xpose.msra.mxu0 0
        %2446 = vmatprep.mubr.bf16.mxu0 0
        %2447 = vmatmul.mubr.bf16.gmra.mrb[0].mxu0 %v2409
        %v2448 = vpop.f32.mrb[0].mxu0
        %v2449 = vadd.f32 0.0, %v2448
        %v2450 = vpop.f32.mrb[0].mxu0
        %v2451 = vpop.f32.mrb[0].mxu0
        %v2452 = vpop.f32.mrb[0].mxu0
        %2453 = vdwg.mxu0
        %v2454 = vmul.f32 %v2397, 8.0
        %v2455 = vmul.f32 %v2449, 8.0
        %v2456 = vadd.f32 %v2454, %v2149
        %v2457 = vadd.f32 %v2455, %v2149
        %2458 = vmax.xlane.f32.xlu0 %v2456
        %v2459 = vpop.xlane.xlu0 %2458
        %2460 = vmax.xlane.f32.xlu0 %v2457
        %v2461 = vpop.xlane.xlu0 %2460
        %v2462 = vsub.f32 %v2456, %v2459
        %v2463 = vsub.f32 %v2457, %v2461
        %v2464 = vmul.f32 %v2462, 1.442695
        %v2465 = vpow.pop %v2464
        %v2466 = vmul.f32 %v2463, 1.442695
        %v2467 = vpow.pop %v2466
        %2468 = vadd.xlane.f32.xlu0 %v2465
        %v2469 = vpop.xlane.xlu0 %2468
        %2470 = vadd.xlane.f32.xlu0 %v2467
        %v2471 = vpop.xlane.xlu0 %2470
        %v2472 = vrcp.pop %v2469
        %v2473 = vrcp.pop %v2471
        %v2474 = vmul.f32 %v2465, %v2472
        %v2475 = vmul.f32 %v2467, %v2473
        %v2476 = vpack.c.bf16 %v2474, %v2474
        %v2477 = vpack.c.bf16 %v2475, %v2475
        %2480 = vrot.lane.b32.xlu0 %v2173, 64
        %v2481 = vpop.permute.xlu0 %2480
        %2482 = vrot.lane.b32.xlu0 %v2174, 64
        %v2483 = vpop.permute.xlu0 %2482
        %2486 = vmatprep.subr.bf16.mxu0 0
        %2487 = vmatpush1.bf16.msra.mxu0 %v2481
        %2488 = vmatprep.subr.bf16.mxu0 0
        %2489 = vmatpush1.bf16.msra.mxu0 %v2483
        %2490 = vmatprep.subr.bf16.mxu0 0
        %2491 = vmatpush1.bf16.msra.mxu0 %v2483
        %2492 = vmatprep.subr.bf16.mxu0 0
        %2493 = vmatpush1.bf16.msra.mxu0 %v2483
        %2494 = vmatprep.subr.bf16.mxu0 0
        %2495 = vmatpush1.bf16.msra.mxu0 %v2483
        %2496 = vmatprep.subr.bf16.mxu0 0
        %2497 = vmatpush1.bf16.msra.mxu0 %v2483
        %2498 = vmatprep.subr.bf16.mxu0 0
        %2499 = vmatpush1.bf16.msra.mxu0 %v2483
        %2500 = vmatprep.subr.bf16.mxu0 0
        %2501 = vmatpush1.bf16.msra.mxu0 %v2483
        %2502 = vmatprep.subr.bf16.mxu0 0
        %2503 = vmatpush1.bf16.msra.mxu0 0
        %2504 = vmatprep.subr.bf16.mxu0 0
        %2505 = vmatpush1.bf16.msra.mxu0 0
        %2506 = vmatprep.subr.bf16.mxu0 0
        %2507 = vmatpush1.bf16.msra.mxu0 0
        %2508 = vmatprep.subr.bf16.mxu0 0
        %2509 = vmatpush1.bf16.msra.mxu0 0
        %2510 = vmatprep.subr.bf16.mxu0 0
        %2511 = vmatpush1.bf16.msra.mxu0 0
        %2512 = vmatprep.subr.bf16.mxu0 0
        %2513 = vmatpush1.bf16.msra.mxu0 0
        %2514 = vmatprep.subr.bf16.mxu0 0
        %2515 = vmatpush1.bf16.msra.mxu0 0
        %2516 = vmatprep.subr.bf16.mxu0 0
        %2517 = vmatpush1.bf16.msra.mxu0 0
        %2518 = vmatprep.mubr.bf16.mxu0 0
        %2519 = vmatmul.mubr.bf16.gmra.mrb[0].mxu0 %v2476
        %v2520 = vpop.f32.mrb[0].mxu0
        %v2521 = vadd.f32 0.0, %v2520
        %v2522 = vpop.f32.mrb[0].mxu0
        %v2523 = vpop.f32.mrb[0].mxu0
        %v2524 = vpop.f32.mrb[0].mxu0
        %2525 = vdwg.mxu0
        %2527 = vrot.lane.b32.xlu0 %v2175, 64
        %v2528 = vpop.permute.xlu0 %2527
        %2530 = vmatprep.subr.bf16.mxu0 0
        %2531 = vmatpush1.bf16.msra.mxu0 %v2528
        %2532 = vmatprep.subr.bf16.mxu0 0
        %2533 = vmatpush1.bf16.msra.mxu0 %v2483
        %2534 = vmatprep.subr.bf16.mxu0 0
        %2535 = vmatpush1.bf16.msra.mxu0 %v2483
        %2536 = vmatprep.subr.bf16.mxu0 0
        %2537 = vmatpush1.bf16.msra.mxu0 %v2483
        %2538 = vmatprep.subr.bf16.mxu0 0
        %2539 = vmatpush1.bf16.msra.mxu0 %v2483
        %2540 = vmatprep.subr.bf16.mxu0 0
        %2541 = vmatpush1.bf16.msra.mxu0 %v2483
        %2542 = vmatprep.subr.bf16.mxu0 0
        %2543 = vmatpush1.bf16.msra.mxu0 %v2483
        %2544 = vmatprep.subr.bf16.mxu0 0
        %2545 = vmatpush1.bf16.msra.mxu0 %v2483
        %2546 = vmatprep.subr.bf16.mxu0 0
        %2547 = vmatpush1.bf16.msra.mxu0 0
        %2548 = vmatprep.subr.bf16.mxu0 0
        %2549 = vmatpush1.bf16.msra.mxu0 0
        %2550 = vmatprep.subr.bf16.mxu0 0
        %2551 = vmatpush1.bf16.msra.mxu0 0
        %2552 = vmatprep.subr.bf16.mxu0 0
        %2553 = vmatpush1.bf16.msra.mxu0 0
        %2554 = vmatprep.subr.bf16.mxu0 0
        %2555 = vmatpush1.bf16.msra.mxu0 0
        %2556 = vmatprep.subr.bf16.mxu0 0
        %2557 = vmatpush1.bf16.msra.mxu0 0
        %2558 = vmatprep.subr.bf16.mxu0 0
        %2559 = vmatpush1.bf16.msra.mxu0 0
        %2560 = vmatprep.subr.bf16.mxu0 0
        %2561 = vmatpush1.bf16.msra.mxu0 0
        %2562 = vmatprep.mubr.bf16.mxu0 0
        %2563 = vmatmul.mubr.bf16.gmra.mrb[0].mxu0 %v2477
        %v2564 = vpop.f32.mrb[0].mxu0
        %v2565 = vadd.f32 0.0, %v2564
        %v2566 = vpop.f32.mrb[0].mxu0
        %v2567 = vpop.f32.mrb[0].mxu0
        %v2568 = vpop.f32.mrb[0].mxu0
        %2569 = vdwg.mxu0
        %v2570 = vmul.f32 %v1661, %v1661
        %v2571 = vmul.f32 %v1665, %v1665
        %v2572 = vsel %vm1978, %v2570, 0.0
        %2573 = vadd.xlane.f32.xlu0 %v2572
        %v2574 = vpop.xlane.xlu0 %2573
        %v2575 = vsel %vm1978, %v2571, 0.0
        %2576 = vadd.xlane.f32.xlu0 %v2575
        %v2577 = vpop.xlane.xlu0 %2576
        %v2578 = vadd.f32 %v2574, 1e-12
        %v2579 = vadd.f32 %v2577, 1e-12
        %v2580 = vrsqrt.pop %v2578
        %v2581 = vrsqrt.pop %v2579
        %v2582 = vmul.f32 %v1661, %v2580
        %v2583 = vmul.f32 %v1665, %v2581
        %v2584 = vmul.f32 %v2582, %v1995
        %v2585 = vmul.f32 %v2583, %v1995
        %v2586 = vmul.f32 %v1938, %v1938
        %v2587 = vmul.f32 %v1942, %v1942
        %v2588 = vmul.f32 %v1940, %v1940
        %v2589 = vmul.f32 %v1944, %v1944
        %v2590 = vsel %vm1978, %v2586, 0.0
        %2591 = vadd.xlane.f32.xlu0 %v2590
        %v2592 = vpop.xlane.xlu0 %2591
        %v2593 = vsel %vm1978, %v2587, 0.0
        %2594 = vadd.xlane.f32.xlu0 %v2593
        %v2595 = vpop.xlane.xlu0 %2594
        %v2596 = vsel %vm1978, %v2588, 0.0
        %2597 = vadd.xlane.f32.xlu0 %v2596
        %v2598 = vpop.xlane.xlu0 %2597
        %v2599 = vsel %vm1978, %v2589, 0.0
        %2600 = vadd.xlane.f32.xlu0 %v2599
        %v2601 = vpop.xlane.xlu0 %2600
        %v2602 = vadd.f32 %v2592, 1e-12
        %v2603 = vadd.f32 %v2595, 1e-12
        %v2604 = vadd.f32 %v2598, 1e-12
        %v2605 = vadd.f32 %v2601, 1e-12
        %v2606 = vrsqrt.pop %v2602
        %v2607 = vrsqrt.pop %v2603
        %v2608 = vrsqrt.pop %v2604
        %v2609 = vrsqrt.pop %v2605
        %v2610 = vmul.f32 %v1938, %v2606
        %v2611 = vmul.f32 %v1942, %v2607
        %v2612 = vmul.f32 %v1940, %v2608
        %v2613 = vmul.f32 %v1944, %v2609
        %v2614 = vmul.f32 %v2610, %v2036
        %v2615 = vmul.f32 %v2611, %v2036
        %v2616 = vmul.f32 %v2612, %v2036
        %v2617 = vmul.f32 %v2613, %v2036
        %v2618 = vpack.c.bf16 %v2584, %v2584
        %v2619 = vpack.c.bf16 %v2585, %v2585
        %v2620 = vpack.c.bf16 %v2615, %v2614
        %v2621 = vpack.c.bf16 %v2617, %v2616
        %v2623 = vsel %vm1978, %v2618, 0
        %v2626 = vsel %vm1978, %v2620, 0
        %2628 = vmatprep.subr.bf16.mxu0 0
        %2629 = vmatpush1.bf16.xpose.msra.mxu0 %v2626
        %2630 = vmatprep.subr.bf16.mxu0 0
        %2631 = vmatpush1.bf16.xpose.msra.mxu0 %v2055
        %2632 = vmatprep.subr.bf16.mxu0 0
        %2633 = vmatpush1.bf16.xpose.msra.mxu0 %v2055
        %2634 = vmatprep.subr.bf16.mxu0 0
        %2635 = vmatpush1.bf16.xpose.msra.mxu0 %v2055
        %2636 = vmatprep.subr.bf16.mxu0 0
        %2637 = vmatpush1.bf16.xpose.msra.mxu0 %v2055
        %2638 = vmatprep.subr.bf16.mxu0 0
        %2639 = vmatpush1.bf16.xpose.msra.mxu0 %v2055
        %2640 = vmatprep.subr.bf16.mxu0 0
        %2641 = vmatpush1.bf16.xpose.msra.mxu0 %v2055
        %2642 = vmatprep.subr.bf16.mxu0 0
        %2643 = vmatpush1.bf16.xpose.msra.mxu0 %v2055
        %2644 = vmatprep.subr.bf16.mxu0 0
        %2645 = vmatpush1.bf16.xpose.msra.mxu0 0
        %2646 = vmatprep.subr.bf16.mxu0 0
        %2647 = vmatpush1.bf16.xpose.msra.mxu0 0
        %2648 = vmatprep.subr.bf16.mxu0 0
        %2649 = vmatpush1.bf16.xpose.msra.mxu0 0
        %2650 = vmatprep.subr.bf16.mxu0 0
        %2651 = vmatpush1.bf16.xpose.msra.mxu0 0
        %2652 = vmatprep.subr.bf16.mxu0 0
        %2653 = vmatpush1.bf16.xpose.msra.mxu0 0
        %2654 = vmatprep.subr.bf16.mxu0 0
        %2655 = vmatpush1.bf16.xpose.msra.mxu0 0
        %2656 = vmatprep.subr.bf16.mxu0 0
        %2657 = vmatpush1.bf16.xpose.msra.mxu0 0
        %2658 = vmatprep.subr.bf16.mxu0 0
        %2659 = vmatpush1.bf16.xpose.msra.mxu0 0
        %2660 = vmatprep.mubr.bf16.mxu0 0
        %2661 = vmatmul.mubr.bf16.gmra.mrb[0].mxu0 %v2623
        %v2662 = vpop.f32.mrb[0].mxu0
        %v2663 = vadd.f32 0.0, %v2662
        %v2664 = vpop.f32.mrb[0].mxu0
        %v2665 = vpop.f32.mrb[0].mxu0
        %v2666 = vpop.f32.mrb[0].mxu0
        %2667 = vdwg.mxu0
        %v2669 = vsel %vm1978, %v2619, 0
        %v2672 = vsel %vm1978, %v2621, 0
        %2674 = vmatprep.subr.bf16.mxu0 0
        %2675 = vmatpush1.bf16.xpose.msra.mxu0 %v2672
        %2676 = vmatprep.subr.bf16.mxu0 0
        %2677 = vmatpush1.bf16.xpose.msra.mxu0 %v2055
        %2678 = vmatprep.subr.bf16.mxu0 0
        %2679 = vmatpush1.bf16.xpose.msra.mxu0 %v2055
        %2680 = vmatprep.subr.bf16.mxu0 0
        %2681 = vmatpush1.bf16.xpose.msra.mxu0 %v2055
        %2682 = vmatprep.subr.bf16.mxu0 0
        %2683 = vmatpush1.bf16.xpose.msra.mxu0 %v2055
        %2684 = vmatprep.subr.bf16.mxu0 0
        %2685 = vmatpush1.bf16.xpose.msra.mxu0 %v2055
        %2686 = vmatprep.subr.bf16.mxu0 0
        %2687 = vmatpush1.bf16.xpose.msra.mxu0 %v2055
        %2688 = vmatprep.subr.bf16.mxu0 0
        %2689 = vmatpush1.bf16.xpose.msra.mxu0 %v2055
        %2690 = vmatprep.subr.bf16.mxu0 0
        %2691 = vmatpush1.bf16.xpose.msra.mxu0 0
        %2692 = vmatprep.subr.bf16.mxu0 0
        %2693 = vmatpush1.bf16.xpose.msra.mxu0 0
        %2694 = vmatprep.subr.bf16.mxu0 0
        %2695 = vmatpush1.bf16.xpose.msra.mxu0 0
        %2696 = vmatprep.subr.bf16.mxu0 0
        %2697 = vmatpush1.bf16.xpose.msra.mxu0 0
        %2698 = vmatprep.subr.bf16.mxu0 0
        %2699 = vmatpush1.bf16.xpose.msra.mxu0 0
        %2700 = vmatprep.subr.bf16.mxu0 0
        %2701 = vmatpush1.bf16.xpose.msra.mxu0 0
        %2702 = vmatprep.subr.bf16.mxu0 0
        %2703 = vmatpush1.bf16.xpose.msra.mxu0 0
        %2704 = vmatprep.subr.bf16.mxu0 0
        %2705 = vmatpush1.bf16.xpose.msra.mxu0 0
        %2706 = vmatprep.mubr.bf16.mxu0 0
        %2707 = vmatmul.mubr.bf16.gmra.mrb[0].mxu0 %v2669
        %v2708 = vpop.f32.mrb[0].mxu0
        %v2709 = vadd.f32 0.0, %v2708
        %v2710 = vpop.f32.mrb[0].mxu0
        %v2711 = vpop.f32.mrb[0].mxu0
        %v2712 = vpop.f32.mrb[0].mxu0
        %2713 = vdwg.mxu0
        %v2714 = vmul.f32 %v2663, 8.0
        %v2715 = vmul.f32 %v2709, 8.0
        %v2716 = vadd.f32 %v2714, %v2149
        %v2717 = vadd.f32 %v2715, %v2149
        %2718 = vmax.xlane.f32.xlu0 %v2716
        %v2719 = vpop.xlane.xlu0 %2718
        %2720 = vmax.xlane.f32.xlu0 %v2717
        %v2721 = vpop.xlane.xlu0 %2720
        %v2722 = vsub.f32 %v2716, %v2719
        %v2723 = vsub.f32 %v2717, %v2721
        %v2724 = vmul.f32 %v2722, 1.442695
        %v2725 = vpow.pop %v2724
        %v2726 = vmul.f32 %v2723, 1.442695
        %v2727 = vpow.pop %v2726
        %2728 = vadd.xlane.f32.xlu0 %v2725
        %v2729 = vpop.xlane.xlu0 %2728
        %2730 = vadd.xlane.f32.xlu0 %v2727
        %v2731 = vpop.xlane.xlu0 %2730
        %v2732 = vrcp.pop %v2729
        %v2733 = vrcp.pop %v2731
        %v2734 = vmul.f32 %v2725, %v2732
        %v2735 = vmul.f32 %v2727, %v2733
        %v2736 = vpack.c.bf16 %v2734, %v2734
        %v2737 = vpack.c.bf16 %v2735, %v2735
        %v2738 = vpack.c.bf16 %v1973, %v1969
        %v2739 = vpack.c.bf16 %v1975, %v1971
        %2740 = vmatprep.subr.bf16.mxu0 0
        %2741 = vmatpush1.bf16.msra.mxu0 %v2738
        %2742 = vmatprep.subr.bf16.mxu0 0
        %2743 = vmatpush1.bf16.msra.mxu0 %v2174
        %2744 = vmatprep.subr.bf16.mxu0 0
        %2745 = vmatpush1.bf16.msra.mxu0 %v2174
        %2746 = vmatprep.subr.bf16.mxu0 0
        %2747 = vmatpush1.bf16.msra.mxu0 %v2174
        %2748 = vmatprep.subr.bf16.mxu0 0
        %2749 = vmatpush1.bf16.msra.mxu0 %v2174
        %2750 = vmatprep.subr.bf16.mxu0 0
        %2751 = vmatpush1.bf16.msra.mxu0 %v2174
        %2752 = vmatprep.subr.bf16.mxu0 0
        %2753 = vmatpush1.bf16.msra.mxu0 %v2174
        %2754 = vmatprep.subr.bf16.mxu0 0
        %2755 = vmatpush1.bf16.msra.mxu0 %v2174
        %2756 = vmatprep.subr.bf16.mxu0 0
        %2757 = vmatpush1.bf16.msra.mxu0 0
        %2758 = vmatprep.subr.bf16.mxu0 0
        %2759 = vmatpush1.bf16.msra.mxu0 0
        %2760 = vmatprep.subr.bf16.mxu0 0
        %2761 = vmatpush1.bf16.msra.mxu0 0
        %2762 = vmatprep.subr.bf16.mxu0 0
        %2763 = vmatpush1.bf16.msra.mxu0 0
        %2764 = vmatprep.subr.bf16.mxu0 0
        %2765 = vmatpush1.bf16.msra.mxu0 0
        %2766 = vmatprep.subr.bf16.mxu0 0
        %2767 = vmatpush1.bf16.msra.mxu0 0
        %2768 = vmatprep.subr.bf16.mxu0 0
        %2769 = vmatpush1.bf16.msra.mxu0 0
        %2770 = vmatprep.subr.bf16.mxu0 0
        %2771 = vmatpush1.bf16.msra.mxu0 0
        %2772 = vmatprep.mubr.bf16.mxu0 0
        %2773 = vmatmul.mubr.bf16.gmra.mrb[0].mxu0 %v2736
        %v2774 = vpop.f32.mrb[0].mxu0
        %v2775 = vadd.f32 0.0, %v2774
        %v2776 = vpop.f32.mrb[0].mxu0
        %v2777 = vpop.f32.mrb[0].mxu0
        %v2778 = vpop.f32.mrb[0].mxu0
        %2779 = vdwg.mxu0
        %2780 = vmatprep.subr.bf16.mxu0 0
        %2781 = vmatpush1.bf16.msra.mxu0 %v2739
        %2782 = vmatprep.subr.bf16.mxu0 0
        %2783 = vmatpush1.bf16.msra.mxu0 %v2174
        %2784 = vmatprep.subr.bf16.mxu0 0
        %2785 = vmatpush1.bf16.msra.mxu0 %v2174
        %2786 = vmatprep.subr.bf16.mxu0 0
        %2787 = vmatpush1.bf16.msra.mxu0 %v2174
        %2788 = vmatprep.subr.bf16.mxu0 0
        %2789 = vmatpush1.bf16.msra.mxu0 %v2174
        %2790 = vmatprep.subr.bf16.mxu0 0
        %2791 = vmatpush1.bf16.msra.mxu0 %v2174
        %2792 = vmatprep.subr.bf16.mxu0 0
        %2793 = vmatpush1.bf16.msra.mxu0 %v2174
        %2794 = vmatprep.subr.bf16.mxu0 0
        %2795 = vmatpush1.bf16.msra.mxu0 %v2174
        %2796 = vmatprep.subr.bf16.mxu0 0
        %2797 = vmatpush1.bf16.msra.mxu0 0
        %2798 = vmatprep.subr.bf16.mxu0 0
        %2799 = vmatpush1.bf16.msra.mxu0 0
        %2800 = vmatprep.subr.bf16.mxu0 0
        %2801 = vmatpush1.bf16.msra.mxu0 0
        %2802 = vmatprep.subr.bf16.mxu0 0
        %2803 = vmatpush1.bf16.msra.mxu0 0
        %2804 = vmatprep.subr.bf16.mxu0 0
        %2805 = vmatpush1.bf16.msra.mxu0 0
        %2806 = vmatprep.subr.bf16.mxu0 0
        %2807 = vmatpush1.bf16.msra.mxu0 0
        %2808 = vmatprep.subr.bf16.mxu0 0
        %2809 = vmatpush1.bf16.msra.mxu0 0
        %2810 = vmatprep.subr.bf16.mxu0 0
        %2811 = vmatpush1.bf16.msra.mxu0 0
        %2812 = vmatprep.mubr.bf16.mxu0 0
        %2813 = vmatmul.mubr.bf16.gmra.mrb[0].mxu0 %v2737
        %v2814 = vpop.f32.mrb[0].mxu0
        %v2815 = vadd.f32 0.0, %v2814
        %v2816 = vpop.f32.mrb[0].mxu0
        %v2817 = vpop.f32.mrb[0].mxu0
        %v2818 = vpop.f32.mrb[0].mxu0
        %2819 = vdwg.mxu0
        %2822 = vrot.lane.b32.xlu0 %v2570, 64
        %v2823 = vpop.permute.xlu0 %2822
        %2824 = vrot.lane.b32.xlu0 %v2571, 64
        %v2825 = vpop.permute.xlu0 %2824
        %v2828 = vsel %vm1978, %v2823, 0.0
        %2829 = vadd.xlane.f32.xlu0 %v2828
        %v2830 = vpop.xlane.xlu0 %2829
        %v2831 = vsel %vm1978, %v2825, 0.0
        %2832 = vadd.xlane.f32.xlu0 %v2831
        %v2833 = vpop.xlane.xlu0 %2832
        %v2834 = vadd.f32 %v2830, 1e-12
        %v2835 = vadd.f32 %v2833, 1e-12
        %v2836 = vrsqrt.pop %v2834
        %v2837 = vrsqrt.pop %v2835
        %v2838 = vmul.f32 %v1661, %v2836
        %v2839 = vmul.f32 %v1665, %v2837
        %v2840 = vmul.f32 %v2838, %v2277
        %v2841 = vmul.f32 %v2839, %v2277
        %2846 = vrot.lane.b32.xlu0 %v2586, 64
        %v2847 = vpop.permute.xlu0 %2846
        %2848 = vrot.lane.b32.xlu0 %v2587, 64
        %v2849 = vpop.permute.xlu0 %2848
        %2850 = vrot.lane.b32.xlu0 %v2588, 64
        %v2851 = vpop.permute.xlu0 %2850
        %2852 = vrot.lane.b32.xlu0 %v2589, 64
        %v2853 = vpop.permute.xlu0 %2852
        %v2858 = vsel %vm1978, %v2847, 0.0
        %2859 = vadd.xlane.f32.xlu0 %v2858
        %v2860 = vpop.xlane.xlu0 %2859
        %v2861 = vsel %vm1978, %v2849, 0.0
        %2862 = vadd.xlane.f32.xlu0 %v2861
        %v2863 = vpop.xlane.xlu0 %2862
        %v2864 = vsel %vm1978, %v2851, 0.0
        %2865 = vadd.xlane.f32.xlu0 %v2864
        %v2866 = vpop.xlane.xlu0 %2865
        %v2867 = vsel %vm1978, %v2853, 0.0
        %2868 = vadd.xlane.f32.xlu0 %v2867
        %v2869 = vpop.xlane.xlu0 %2868
        %v2870 = vadd.f32 %v2860, 1e-12
        %v2871 = vadd.f32 %v2863, 1e-12
        %v2872 = vadd.f32 %v2866, 1e-12
        %v2873 = vadd.f32 %v2869, 1e-12
        %v2874 = vrsqrt.pop %v2870
        %v2875 = vrsqrt.pop %v2871
        %v2876 = vrsqrt.pop %v2872
        %v2877 = vrsqrt.pop %v2873
        %v2878 = vmul.f32 %v1938, %v2874
        %v2879 = vmul.f32 %v1942, %v2875
        %v2880 = vmul.f32 %v1940, %v2876
        %v2881 = vmul.f32 %v1944, %v2877
        %v2882 = vmul.f32 %v2878, %v2332
        %v2883 = vmul.f32 %v2879, %v2332
        %v2884 = vmul.f32 %v2880, %v2332
        %v2885 = vmul.f32 %v2881, %v2332
        %v2886 = vpack.c.bf16 %v2840, %v2840
        %v2887 = vpack.c.bf16 %v2841, %v2841
        %v2888 = vpack.c.bf16 %v2883, %v2882
        %v2889 = vpack.c.bf16 %v2885, %v2884
        %2891 = vrot.lane.b32.xlu0 %v2886, 64
        %v2892 = vpop.permute.xlu0 %2891
        %2894 = vrot.lane.b32.xlu0 %v2888, 64
        %v2895 = vpop.permute.xlu0 %2894
        %v2897 = vsel %vm1978, %v2892, 0
        %v2900 = vsel %vm1978, %v2895, 0
        %2902 = vmatprep.subr.bf16.mxu0 0
        %2903 = vmatpush1.bf16.xpose.msra.mxu0 %v2900
        %2904 = vmatprep.subr.bf16.mxu0 0
        %2905 = vmatpush1.bf16.xpose.msra.mxu0 %v2360
        %2906 = vmatprep.subr.bf16.mxu0 0
        %2907 = vmatpush1.bf16.xpose.msra.mxu0 %v2360
        %2908 = vmatprep.subr.bf16.mxu0 0
        %2909 = vmatpush1.bf16.xpose.msra.mxu0 %v2360
        %2910 = vmatprep.subr.bf16.mxu0 0
        %2911 = vmatpush1.bf16.xpose.msra.mxu0 %v2360
        %2912 = vmatprep.subr.bf16.mxu0 0
        %2913 = vmatpush1.bf16.xpose.msra.mxu0 %v2360
        %2914 = vmatprep.subr.bf16.mxu0 0
        %2915 = vmatpush1.bf16.xpose.msra.mxu0 %v2360
        %2916 = vmatprep.subr.bf16.mxu0 0
        %2917 = vmatpush1.bf16.xpose.msra.mxu0 %v2360
        %2918 = vmatprep.subr.bf16.mxu0 0
        %2919 = vmatpush1.bf16.xpose.msra.mxu0 0
        %2920 = vmatprep.subr.bf16.mxu0 0
        %2921 = vmatpush1.bf16.xpose.msra.mxu0 0
        %2922 = vmatprep.subr.bf16.mxu0 0
        %2923 = vmatpush1.bf16.xpose.msra.mxu0 0
        %2924 = vmatprep.subr.bf16.mxu0 0
        %2925 = vmatpush1.bf16.xpose.msra.mxu0 0
        %2926 = vmatprep.subr.bf16.mxu0 0
        %2927 = vmatpush1.bf16.xpose.msra.mxu0 0
        %2928 = vmatprep.subr.bf16.mxu0 0
        %2929 = vmatpush1.bf16.xpose.msra.mxu0 0
        %2930 = vmatprep.subr.bf16.mxu0 0
        %2931 = vmatpush1.bf16.xpose.msra.mxu0 0
        %2932 = vmatprep.subr.bf16.mxu0 0
        %2933 = vmatpush1.bf16.xpose.msra.mxu0 0
        %2934 = vmatprep.mubr.bf16.mxu0 0
        %2935 = vmatmul.mubr.bf16.gmra.mrb[0].mxu0 %v2897
        %v2936 = vpop.f32.mrb[0].mxu0
        %v2937 = vadd.f32 0.0, %v2936
        %v2938 = vpop.f32.mrb[0].mxu0
        %v2939 = vpop.f32.mrb[0].mxu0
        %v2940 = vpop.f32.mrb[0].mxu0
        %2941 = vdwg.mxu0
        %2943 = vrot.lane.b32.xlu0 %v2887, 64
        %v2944 = vpop.permute.xlu0 %2943
        %2946 = vrot.lane.b32.xlu0 %v2889, 64
        %v2947 = vpop.permute.xlu0 %2946
        %v2949 = vsel %vm1978, %v2944, 0
        %v2952 = vsel %vm1978, %v2947, 0
        %2954 = vmatprep.subr.bf16.mxu0 0
        %2955 = vmatpush1.bf16.xpose.msra.mxu0 %v2952
        %2956 = vmatprep.subr.bf16.mxu0 0
        %2957 = vmatpush1.bf16.xpose.msra.mxu0 %v2360
        %2958 = vmatprep.subr.bf16.mxu0 0
        %2959 = vmatpush1.bf16.xpose.msra.mxu0 %v2360
        %2960 = vmatprep.subr.bf16.mxu0 0
        %2961 = vmatpush1.bf16.xpose.msra.mxu0 %v2360
        %2962 = vmatprep.subr.bf16.mxu0 0
        %2963 = vmatpush1.bf16.xpose.msra.mxu0 %v2360
        %2964 = vmatprep.subr.bf16.mxu0 0
        %2965 = vmatpush1.bf16.xpose.msra.mxu0 %v2360
        %2966 = vmatprep.subr.bf16.mxu0 0
        %2967 = vmatpush1.bf16.xpose.msra.mxu0 %v2360
        %2968 = vmatprep.subr.bf16.mxu0 0
        %2969 = vmatpush1.bf16.xpose.msra.mxu0 %v2360
        %2970 = vmatprep.subr.bf16.mxu0 0
        %2971 = vmatpush1.bf16.xpose.msra.mxu0 0
        %2972 = vmatprep.subr.bf16.mxu0 0
        %2973 = vmatpush1.bf16.xpose.msra.mxu0 0
        %2974 = vmatprep.subr.bf16.mxu0 0
        %2975 = vmatpush1.bf16.xpose.msra.mxu0 0
        %2976 = vmatprep.subr.bf16.mxu0 0
        %2977 = vmatpush1.bf16.xpose.msra.mxu0 0
        %2978 = vmatprep.subr.bf16.mxu0 0
        %2979 = vmatpush1.bf16.xpose.msra.mxu0 0
        %2980 = vmatprep.subr.bf16.mxu0 0
        %2981 = vmatpush1.bf16.xpose.msra.mxu0 0
        %2982 = vmatprep.subr.bf16.mxu0 0
        %2983 = vmatpush1.bf16.xpose.msra.mxu0 0
        %2984 = vmatprep.subr.bf16.mxu0 0
        %2985 = vmatpush1.bf16.xpose.msra.mxu0 0
        %2986 = vmatprep.mubr.bf16.mxu0 0
        %2987 = vmatmul.mubr.bf16.gmra.mrb[0].mxu0 %v2949
        %v2988 = vpop.f32.mrb[0].mxu0
        %v2989 = vadd.f32 0.0, %v2988
        %v2990 = vpop.f32.mrb[0].mxu0
        %v2991 = vpop.f32.mrb[0].mxu0
        %v2992 = vpop.f32.mrb[0].mxu0
        %2993 = vdwg.mxu0
        %v2994 = vmul.f32 %v2937, 8.0
        %v2995 = vmul.f32 %v2989, 8.0
        %v2996 = vadd.f32 %v2994, %v2149
        %v2997 = vadd.f32 %v2995, %v2149
        %2998 = vmax.xlane.f32.xlu0 %v2996
        %v2999 = vpop.xlane.xlu0 %2998
        %3000 = vmax.xlane.f32.xlu0 %v2997
        %v3001 = vpop.xlane.xlu0 %3000
        %v3002 = vsub.f32 %v2996, %v2999
        %v3003 = vsub.f32 %v2997, %v3001
        %v3004 = vmul.f32 %v3002, 1.442695
        %v3005 = vpow.pop %v3004
        %v3006 = vmul.f32 %v3003, 1.442695
        %v3007 = vpow.pop %v3006
        %3008 = vadd.xlane.f32.xlu0 %v3005
        %v3009 = vpop.xlane.xlu0 %3008
        %3010 = vadd.xlane.f32.xlu0 %v3007
        %v3011 = vpop.xlane.xlu0 %3010
        %v3012 = vrcp.pop %v3009
        %v3013 = vrcp.pop %v3011
        %v3014 = vmul.f32 %v3005, %v3012
        %v3015 = vmul.f32 %v3007, %v3013
        %v3016 = vpack.c.bf16 %v3014, %v3014
        %v3017 = vpack.c.bf16 %v3015, %v3015
        %3019 = vrot.lane.b32.xlu0 %v2738, 64
        %v3020 = vpop.permute.xlu0 %3019
        %3022 = vmatprep.subr.bf16.mxu0 0
        %3023 = vmatpush1.bf16.msra.mxu0 %v3020
        %3024 = vmatprep.subr.bf16.mxu0 0
        %3025 = vmatpush1.bf16.msra.mxu0 %v2483
        %3026 = vmatprep.subr.bf16.mxu0 0
        %3027 = vmatpush1.bf16.msra.mxu0 %v2483
        %3028 = vmatprep.subr.bf16.mxu0 0
        %3029 = vmatpush1.bf16.msra.mxu0 %v2483
        %3030 = vmatprep.subr.bf16.mxu0 0
        %3031 = vmatpush1.bf16.msra.mxu0 %v2483
        %3032 = vmatprep.subr.bf16.mxu0 0
        %3033 = vmatpush1.bf16.msra.mxu0 %v2483
        %3034 = vmatprep.subr.bf16.mxu0 0
        %3035 = vmatpush1.bf16.msra.mxu0 %v2483
        %3036 = vmatprep.subr.bf16.mxu0 0
        %3037 = vmatpush1.bf16.msra.mxu0 %v2483
        %3038 = vmatprep.subr.bf16.mxu0 0
        %3039 = vmatpush1.bf16.msra.mxu0 0
        %3040 = vmatprep.subr.bf16.mxu0 0
        %3041 = vmatpush1.bf16.msra.mxu0 0
        %3042 = vmatprep.subr.bf16.mxu0 0
        %3043 = vmatpush1.bf16.msra.mxu0 0
        %3044 = vmatprep.subr.bf16.mxu0 0
        %3045 = vmatpush1.bf16.msra.mxu0 0
        %3046 = vmatprep.subr.bf16.mxu0 0
        %3047 = vmatpush1.bf16.msra.mxu0 0
        %3048 = vmatprep.subr.bf16.mxu0 0
        %3049 = vmatpush1.bf16.msra.mxu0 0
        %3050 = vmatprep.subr.bf16.mxu0 0
        %3051 = vmatpush1.bf16.msra.mxu0 0
        %3052 = vmatprep.subr.bf16.mxu0 0
        %3053 = vmatpush1.bf16.msra.mxu0 0
        %3054 = vmatprep.mubr.bf16.mxu0 0
        %3055 = vmatmul.mubr.bf16.gmra.mrb[0].mxu0 %v3016
        %v3056 = vpop.f32.mrb[0].mxu0
        %v3057 = vadd.f32 0.0, %v3056
        %v3058 = vpop.f32.mrb[0].mxu0
        %v3059 = vpop.f32.mrb[0].mxu0
        %v3060 = vpop.f32.mrb[0].mxu0
        %3061 = vdwg.mxu0
        %3063 = vrot.lane.b32.xlu0 %v2739, 64
        %v3064 = vpop.permute.xlu0 %3063
        %3066 = vmatprep.subr.bf16.mxu0 0
        %3067 = vmatpush1.bf16.msra.mxu0 %v3064
        %3068 = vmatprep.subr.bf16.mxu0 0
        %3069 = vmatpush1.bf16.msra.mxu0 %v2483
        %3070 = vmatprep.subr.bf16.mxu0 0
        %3071 = vmatpush1.bf16.msra.mxu0 %v2483
        %3072 = vmatprep.subr.bf16.mxu0 0
        %3073 = vmatpush1.bf16.msra.mxu0 %v2483
        %3074 = vmatprep.subr.bf16.mxu0 0
        %3075 = vmatpush1.bf16.msra.mxu0 %v2483
        %3076 = vmatprep.subr.bf16.mxu0 0
        %3077 = vmatpush1.bf16.msra.mxu0 %v2483
        %3078 = vmatprep.subr.bf16.mxu0 0
        %3079 = vmatpush1.bf16.msra.mxu0 %v2483
        %3080 = vmatprep.subr.bf16.mxu0 0
        %3081 = vmatpush1.bf16.msra.mxu0 %v2483
        %3082 = vmatprep.subr.bf16.mxu0 0
        %3083 = vmatpush1.bf16.msra.mxu0 0
        %3084 = vmatprep.subr.bf16.mxu0 0
        %3085 = vmatpush1.bf16.msra.mxu0 0
        %3086 = vmatprep.subr.bf16.mxu0 0
        %3087 = vmatpush1.bf16.msra.mxu0 0
        %3088 = vmatprep.subr.bf16.mxu0 0
        %3089 = vmatpush1.bf16.msra.mxu0 0
        %3090 = vmatprep.subr.bf16.mxu0 0
        %3091 = vmatpush1.bf16.msra.mxu0 0
        %3092 = vmatprep.subr.bf16.mxu0 0
        %3093 = vmatpush1.bf16.msra.mxu0 0
        %3094 = vmatprep.subr.bf16.mxu0 0
        %3095 = vmatpush1.bf16.msra.mxu0 0
        %3096 = vmatprep.subr.bf16.mxu0 0
        %3097 = vmatpush1.bf16.msra.mxu0 0
        %3098 = vmatprep.mubr.bf16.mxu0 0
        %3099 = vmatmul.mubr.bf16.gmra.mrb[0].mxu0 %v3017
        %v3100 = vpop.f32.mrb[0].mxu0
        %v3101 = vadd.f32 0.0, %v3100
        %v3102 = vpop.f32.mrb[0].mxu0
        %v3103 = vpop.f32.mrb[0].mxu0
        %v3104 = vpop.f32.mrb[0].mxu0
        %3105 = vdwg.mxu0
        %3108 = vrot.lane.b32.xlu0 %v2521, 64
        %v3109 = vpop.permute.xlu0 %3108
        %3110 = vrot.lane.b32.xlu0 %v2565, 64
        %v3111 = vpop.permute.xlu0 %3110
        %3116 = vrot.lane.b32.xlu0 %v3057, 64
        %v3117 = vpop.permute.xlu0 %3116
        %3118 = vrot.lane.b32.xlu0 %v3101, 64
        %v3119 = vpop.permute.xlu0 %3118
        %v3122 = vsel %vm1978, %v2211, %v3109
        %v3123 = vsel %vm1978, %v2251, %v3111
        %v3124 = vsel %vm1978, %v2775, %v3117
        %v3125 = vsel %vm1978, %v2815, %v3119
        %v3126 = vpack.c.bf16 %v3123, %v3122
        %v3127 = vpack.c.bf16 %v3125, %v3124
        %v3160 = vunpack.c.l.b16 %v1480
        %v3161 = vunpack.c.l.b16 %v1481
        %v3162 = vunpack.c.l.b16 %v1482
        %v3163 = vunpack.c.l.b16 %v1483
        %v3164 = vunpack.c.l.b16 %v1484
        %v3165 = vunpack.c.l.b16 %v1485
        %v3166 = vunpack.c.l.b16 %v1486
        %v3167 = vunpack.c.l.b16 %v1487
        %v3168 = vunpack.c.l.b16 %v1488
        %v3169 = vunpack.c.l.b16 %v1489
        %v3170 = vunpack.c.l.b16 %v1490
        %v3171 = vunpack.c.l.b16 %v1491
        %v3172 = vunpack.c.l.b16 %v1492
        %v3173 = vunpack.c.l.b16 %v1493
        %v3174 = vunpack.c.l.b16 %v1494
        %v3175 = vunpack.c.l.b16 %v1495
        %v3176 = vunpack.c.l.b16 %v1496
        %v3177 = vunpack.c.l.b16 %v1497
        %v3178 = vunpack.c.l.b16 %v1498
        %v3179 = vunpack.c.l.b16 %v1499
        %v3180 = vunpack.c.l.b16 %v1500
        %v3181 = vunpack.c.l.b16 %v1501
        %v3182 = vunpack.c.l.b16 %v1502
        %v3183 = vunpack.c.l.b16 %v1503
        %v3184 = vunpack.c.l.b16 %v1504
        %v3185 = vunpack.c.l.b16 %v1505
        %v3186 = vunpack.c.l.b16 %v1506
        %v3187 = vunpack.c.l.b16 %v1507
        %v3188 = vunpack.c.l.b16 %v1508
        %v3189 = vunpack.c.l.b16 %v1509
        %v3190 = vunpack.c.l.b16 %v1510
        %v3191 = vunpack.c.l.b16 %v1511
        %v3192 = vpack.c.b16 %v3161, %v3160
        %v3193 = vpack.c.b16 %v3163, %v3162
        %v3194 = vpack.c.b16 %v3165, %v3164
        %v3195 = vpack.c.b16 %v3167, %v3166
        %v3196 = vpack.c.b16 %v3169, %v3168
        %v3197 = vpack.c.b16 %v3171, %v3170
        %v3198 = vpack.c.b16 %v3173, %v3172
        %v3199 = vpack.c.b16 %v3175, %v3174
        %v3200 = vpack.c.b16 %v3177, %v3176
        %v3201 = vpack.c.b16 %v3179, %v3178
        %v3202 = vpack.c.b16 %v3181, %v3180
        %v3203 = vpack.c.b16 %v3183, %v3182
        %v3204 = vpack.c.b16 %v3185, %v3184
        %v3205 = vpack.c.b16 %v3187, %v3186
        %v3206 = vpack.c.b16 %v3189, %v3188
        %v3207 = vpack.c.b16 %v3191, %v3190
        %3224 = vmatprep.subr.bf16.mxu0 0
        %3225 = vmatpush1.bf16.msra.mxu0 %v3192
        %3226 = vmatprep.subr.bf16.mxu0 0
        %3227 = vmatpush1.bf16.msra.mxu0 %v3193
        %3228 = vmatprep.subr.bf16.mxu0 0
        %3229 = vmatpush1.bf16.msra.mxu0 %v3194
        %3230 = vmatprep.subr.bf16.mxu0 0
        %3231 = vmatpush1.bf16.msra.mxu0 %v3195
        %3232 = vmatprep.subr.bf16.mxu0 0
        %3233 = vmatpush1.bf16.msra.mxu0 %v3196
        %3234 = vmatprep.subr.bf16.mxu0 0
        %3235 = vmatpush1.bf16.msra.mxu0 %v3197
        %3236 = vmatprep.subr.bf16.mxu0 0
        %3237 = vmatpush1.bf16.msra.mxu0 %v3198
        %3238 = vmatprep.subr.bf16.mxu0 0
        %3239 = vmatpush1.bf16.msra.mxu0 %v3199
        %3240 = vmatprep.subr.bf16.mxu0 0
        %3241 = vmatpush1.bf16.msra.mxu0 %v3200
        %3242 = vmatprep.subr.bf16.mxu0 0
        %3243 = vmatpush1.bf16.msra.mxu0 %v3201
        %3244 = vmatprep.subr.bf16.mxu0 0
        %3245 = vmatpush1.bf16.msra.mxu0 %v3202
        %3246 = vmatprep.subr.bf16.mxu0 0
        %3247 = vmatpush1.bf16.msra.mxu0 %v3203
        %3248 = vmatprep.subr.bf16.mxu0 0
        %3249 = vmatpush1.bf16.msra.mxu0 %v3204
        %3250 = vmatprep.subr.bf16.mxu0 0
        %3251 = vmatpush1.bf16.msra.mxu0 %v3205
        %3252 = vmatprep.subr.bf16.mxu0 0
        %3253 = vmatpush1.bf16.msra.mxu0 %v3206
        %3254 = vmatprep.subr.bf16.mxu0 0
        %3255 = vmatpush1.bf16.msra.mxu0 %v3207
        %3256 = vmatprep.mubr.bf16.mxu0 %v3127
        %3257 = vmatmul.mubr.bf16.gmra.mrb[0].mxu0 %v3126
        %v3258 = vpop.f32.mrb[0].mxu0
        %v3259 = vadd.f32 0.0, %v3258
        %v3260 = vpop.f32.mrb[0].mxu0
        %v3261 = vpop.f32.mrb[0].mxu0
        %v3262 = vadd.f32 0.0, %v3261
        %v3263 = vpop.f32.mrb[0].mxu0
        %3264 = vdwg.mxu0
        %v3265 = vadd.f32 %v1424, %v3259
        %v3266 = vadd.f32 %v1425, %v3262
        %v3267 = vld [vmem:[#allocation6] sm:$0xff]
        %v3268 = vld [vmem:[#allocation6 + $0x8] sm:$0xff]
        %v3269 = vld [vmem:[%s3] sm:$0x1]
        %v3270 = vld [vmem:[%s3 + $0x1] sm:$0x1]
        %v3271 = vld [vmem:[%s1393] sm:$0x1]
        %v3272 = vld [vmem:[%s1179] sm:$0xff]
        %v3273 = vld [vmem:[%s1179 + $0x8] sm:$0xff]
        %v3274 = vld [vmem:[%s1179 + $0x10] sm:$0xff]
        %v3275 = vld [vmem:[%s1179 + $0x18] sm:$0xff]
        %v3276 = vld [vmem:[%s1179 + $0x20] sm:$0xff]
        %v3277 = vld [vmem:[%s1179 + $0x28] sm:$0xff]
        %v3278 = vld [vmem:[%s1179 + $0x30] sm:$0xff]
        %v3279 = vld [vmem:[%s1179 + $0x38] sm:$0xff]
        %v3280 = vld [vmem:[%s1179 + $0x40] sm:$0xff]
        %v3281 = vld [vmem:[%s1179 + $0x48] sm:$0xff]
        %v3282 = vld [vmem:[%s1179 + $0x50] sm:$0xff]
        %v3283 = vld [vmem:[%s1179 + $0x58] sm:$0xff]
        %v3284 = vld [vmem:[%s1179 + $0x60] sm:$0xff]
        %v3285 = vld [vmem:[%s1179 + $0x68] sm:$0xff]
        %v3286 = vld [vmem:[%s1179 + $0x70] sm:$0xff]
        %v3287 = vld [vmem:[%s1179 + $0x78] sm:$0xff]
        %v3288 = vld [vmem:[%s1188] sm:$0xff]
        %v3289 = vld [vmem:[%s1188 + $0x8] sm:$0xff]
        %v3290 = vld [vmem:[%s1188 + $0x10] sm:$0xff]
        %v3291 = vld [vmem:[%s1188 + $0x18] sm:$0xff]
        %v3292 = vld [vmem:[%s1188 + $0x20] sm:$0xff]
        %v3293 = vld [vmem:[%s1188 + $0x28] sm:$0xff]
        %v3294 = vld [vmem:[%s1188 + $0x30] sm:$0xff]
        %v3295 = vld [vmem:[%s1188 + $0x38] sm:$0xff]
        %v3296 = vld [vmem:[%s1188 + $0x40] sm:$0xff]
        %v3297 = vld [vmem:[%s1188 + $0x48] sm:$0xff]
        %v3298 = vld [vmem:[%s1188 + $0x50] sm:$0xff]
        %v3299 = vld [vmem:[%s1188 + $0x58] sm:$0xff]
        %v3300 = vld [vmem:[%s1188 + $0x60] sm:$0xff]
        %v3301 = vld [vmem:[%s1188 + $0x68] sm:$0xff]
        %v3302 = vld [vmem:[%s1188 + $0x70] sm:$0xff]
        %v3303 = vld [vmem:[%s1188 + $0x78] sm:$0xff]
        %v3304 = vld [vmem:[%s1197] sm:$0xff]
        %v3305 = vld [vmem:[%s1197 + $0x8] sm:$0xff]
        %v3306 = vld [vmem:[%s1197 + $0x10] sm:$0xff]
        %v3307 = vld [vmem:[%s1197 + $0x18] sm:$0xff]
        %v3308 = vld [vmem:[%s1197 + $0x20] sm:$0xff]
        %v3309 = vld [vmem:[%s1197 + $0x28] sm:$0xff]
        %v3310 = vld [vmem:[%s1197 + $0x30] sm:$0xff]
        %v3311 = vld [vmem:[%s1197 + $0x38] sm:$0xff]
        %v3312 = vld [vmem:[%s1197 + $0x40] sm:$0xff]
        %v3313 = vld [vmem:[%s1197 + $0x48] sm:$0xff]
        %v3314 = vld [vmem:[%s1197 + $0x50] sm:$0xff]
        %v3315 = vld [vmem:[%s1197 + $0x58] sm:$0xff]
        %v3316 = vld [vmem:[%s1197 + $0x60] sm:$0xff]
        %v3317 = vld [vmem:[%s1197 + $0x68] sm:$0xff]
        %v3318 = vld [vmem:[%s1197 + $0x70] sm:$0xff]
        %v3319 = vld [vmem:[%s1197 + $0x78] sm:$0xff]
        %v3320 = vld [vmem:[%s1396] sm:$0x1]
        %v3321 = vld [vmem:[%s1399] sm:$0x1]
        %v3322 = vld [vmem:[%s1403] sm:$0x3]
        %v3323 = vld [vmem:[%s1407] sm:$0x3]
        %v3324 = vld [vmem:[%s1206] sm:$0xf]
        %v3325 = vld [vmem:[%s1206 + $0x4] sm:$0xf]
        %v3326 = vld [vmem:[%s1206 + $0x8] sm:$0xf]
        %v3327 = vld [vmem:[%s1206 + $0xc] sm:$0xf]
        %v3328 = vld [vmem:[%s1206 + $0x10] sm:$0xf]
        %v3329 = vld [vmem:[%s1206 + $0x14] sm:$0xf]
        %v3330 = vld [vmem:[%s1206 + $0x18] sm:$0xf]
        %v3331 = vld [vmem:[%s1206 + $0x1c] sm:$0xf]
        %v3332 = vld [vmem:[%s1206 + $0x20] sm:$0xf]
        %v3333 = vld [vmem:[%s1206 + $0x24] sm:$0xf]
        %v3334 = vld [vmem:[%s1206 + $0x28] sm:$0xf]
        %v3335 = vld [vmem:[%s1206 + $0x2c] sm:$0xf]
        %v3336 = vld [vmem:[%s1206 + $0x30] sm:$0xf]
        %v3337 = vld [vmem:[%s1206 + $0x34] sm:$0xf]
        %v3338 = vld [vmem:[%s1206 + $0x38] sm:$0xf]
        %v3339 = vld [vmem:[%s1206 + $0x3c] sm:$0xf]
        %v3340 = vld [vmem:[%s1206 + $0x40] sm:$0xf]
        %v3341 = vld [vmem:[%s1206 + $0x44] sm:$0xf]
        %v3342 = vld [vmem:[%s1206 + $0x48] sm:$0xf]
        %v3343 = vld [vmem:[%s1206 + $0x4c] sm:$0xf]
        %v3344 = vld [vmem:[%s1206 + $0x50] sm:$0xf]
        %v3345 = vld [vmem:[%s1206 + $0x54] sm:$0xf]
        %v3346 = vld [vmem:[%s1206 + $0x58] sm:$0xf]
        %v3347 = vld [vmem:[%s1206 + $0x5c] sm:$0xf]
        %v3348 = vld [vmem:[%s1206 + $0x60] sm:$0xf]
        %v3349 = vld [vmem:[%s1206 + $0x64] sm:$0xf]
        %v3350 = vld [vmem:[%s1206 + $0x68] sm:$0xf]
        %v3351 = vld [vmem:[%s1206 + $0x6c] sm:$0xf]
        %v3352 = vld [vmem:[%s1206 + $0x70] sm:$0xf]
        %v3353 = vld [vmem:[%s1206 + $0x74] sm:$0xf]
        %v3354 = vld [vmem:[%s1206 + $0x78] sm:$0xf]
        %v3355 = vld [vmem:[%s1206 + $0x7c] sm:$0xf]
        %3356 = vadd.xlane.f32.xlu0 %v3265
        %v3357 = vpop.xlane.xlu0 %3356
        %3358 = vadd.xlane.f32.xlu0 %v3266
        %v3359 = vpop.xlane.xlu0 %3358
        %v3360 = vmul.f32 %v3357, %v1516
        %v3361 = vmul.f32 %v3359, %v1516
        %v3362 = vsub.f32 %v3265, %v3360
        %v3363 = vsub.f32 %v3266, %v3361
        %v3364 = vmul.f32 %v3362, %v3362
        %v3365 = vmul.f32 %v3363, %v3363
        %3366 = vadd.xlane.f32.xlu0 %v3364
        %v3367 = vpop.xlane.xlu0 %3366
        %3368 = vadd.xlane.f32.xlu0 %v3365
        %v3369 = vpop.xlane.xlu0 %3368
        %v3370 = vmul.f32 %v3367, %v1516
        %v3371 = vmul.f32 %v3369, %v1516
        %v3372 = vadd.f32 %v3370, 1e-05
        %v3373 = vadd.f32 %v3371, 1e-05
        %v3374 = vrsqrt.pop %v3372
        %v3375 = vrsqrt.pop %v3373
        %v3376 = vmul.f32 %v3362, %v3374
        %v3377 = vmul.f32 %v3363, %v3375
        %v3379 = vlaneseq
        %v3380 = vshrl.u32 %v3379, 7
        %v3381 = vsub.s32 0, %v3380
        %v3382 = vrot.slane %v3271, %v3381
        %v3384 = vmul.f32 %v3376, %v3382
        %v3385 = vmul.f32 %v3377, %v3382
        %v3386 = vpack.c.bf16 %v3385, %v3384
        %v3387 = vpack.c.bf16 %v3268, %v3267
        %v3404 = vunpack.c.l.b16 %v3272
        %v3405 = vunpack.c.h.b16 %v3272
        %v3406 = vunpack.c.l.b16 %v3273
        %v3407 = vunpack.c.h.b16 %v3273
        %v3408 = vunpack.c.l.b16 %v3274
        %v3409 = vunpack.c.h.b16 %v3274
        %v3410 = vunpack.c.l.b16 %v3275
        %v3411 = vunpack.c.h.b16 %v3275
        %v3412 = vunpack.c.l.b16 %v3276
        %v3413 = vunpack.c.h.b16 %v3276
        %v3414 = vunpack.c.l.b16 %v3277
        %v3415 = vunpack.c.h.b16 %v3277
        %v3416 = vunpack.c.l.b16 %v3278
        %v3417 = vunpack.c.h.b16 %v3278
        %v3418 = vunpack.c.l.b16 %v3279
        %v3419 = vunpack.c.h.b16 %v3279
        %v3420 = vunpack.c.l.b16 %v3280
        %v3421 = vunpack.c.h.b16 %v3280
        %v3422 = vunpack.c.l.b16 %v3281
        %v3423 = vunpack.c.h.b16 %v3281
        %v3424 = vunpack.c.l.b16 %v3282
        %v3425 = vunpack.c.h.b16 %v3282
        %v3426 = vunpack.c.l.b16 %v3283
        %v3427 = vunpack.c.h.b16 %v3283
        %v3428 = vunpack.c.l.b16 %v3284
        %v3429 = vunpack.c.h.b16 %v3284
        %v3430 = vunpack.c.l.b16 %v3285
        %v3431 = vunpack.c.h.b16 %v3285
        %v3432 = vunpack.c.l.b16 %v3286
        %v3433 = vunpack.c.h.b16 %v3286
        %v3434 = vunpack.c.l.b16 %v3287
        %v3435 = vunpack.c.h.b16 %v3287
        %v3436 = vpack.c.b16 %v3406, %v3404
        %v3437 = vpack.c.b16 %v3407, %v3405
        %v3438 = vpack.c.b16 %v3410, %v3408
        %v3439 = vpack.c.b16 %v3411, %v3409
        %v3440 = vpack.c.b16 %v3414, %v3412
        %v3441 = vpack.c.b16 %v3415, %v3413
        %v3442 = vpack.c.b16 %v3418, %v3416
        %v3443 = vpack.c.b16 %v3419, %v3417
        %v3444 = vpack.c.b16 %v3422, %v3420
        %v3445 = vpack.c.b16 %v3423, %v3421
        %v3446 = vpack.c.b16 %v3426, %v3424
        %v3447 = vpack.c.b16 %v3427, %v3425
        %v3448 = vpack.c.b16 %v3430, %v3428
        %v3449 = vpack.c.b16 %v3431, %v3429
        %v3450 = vpack.c.b16 %v3434, %v3432
        %v3451 = vpack.c.b16 %v3435, %v3433
        %3468 = vmatprep.subr.bf16.mxu0 %v3437
        %3469 = vmatpush1.bf16.msra.mxu0 %v3436
        %3470 = vmatprep.subr.bf16.mxu0 %v3439
        %3471 = vmatpush1.bf16.msra.mxu0 %v3438
        %3472 = vmatprep.subr.bf16.mxu0 %v3441
        %3473 = vmatpush1.bf16.msra.mxu0 %v3440
        %3474 = vmatprep.subr.bf16.mxu0 %v3443
        %3475 = vmatpush1.bf16.msra.mxu0 %v3442
        %3476 = vmatprep.subr.bf16.mxu0 %v3445
        %3477 = vmatpush1.bf16.msra.mxu0 %v3444
        %3478 = vmatprep.subr.bf16.mxu0 %v3447
        %3479 = vmatpush1.bf16.msra.mxu0 %v3446
        %3480 = vmatprep.subr.bf16.mxu0 %v3449
        %3481 = vmatpush1.bf16.msra.mxu0 %v3448
        %3482 = vmatprep.subr.bf16.mxu0 %v3451
        %3483 = vmatpush1.bf16.msra.mxu0 %v3450
        %3484 = vmatprep.subr.bf16.mxu0 0
        %3485 = vmatpush1.bf16.msra.mxu0 0
        %3486 = vmatprep.subr.bf16.mxu0 0
        %3487 = vmatpush1.bf16.msra.mxu0 0
        %3488 = vmatprep.subr.bf16.mxu0 0
        %3489 = vmatpush1.bf16.msra.mxu0 0
        %3490 = vmatprep.subr.bf16.mxu0 0
        %3491 = vmatpush1.bf16.msra.mxu0 0
        %3492 = vmatprep.subr.bf16.mxu0 0
        %3493 = vmatpush1.bf16.msra.mxu0 0
        %3494 = vmatprep.subr.bf16.mxu0 0
        %3495 = vmatpush1.bf16.msra.mxu0 0
        %3496 = vmatprep.subr.bf16.mxu0 0
        %3497 = vmatpush1.bf16.msra.mxu0 0
        %3498 = vmatprep.subr.bf16.mxu0 0
        %3499 = vmatpush1.bf16.msra.mxu0 0
        %3500 = vmatprep.mubr.bf16.mxu0 0
        %3501 = vmatmul.mubr.bf16.gmra.mrb[0].mxu0 %v3386
        %v3502 = vpop.f32.mrb[0].mxu0
        %v3503 = vadd.f32 0.0, %v3502
        %v3504 = vpop.f32.mrb[0].mxu0
        %v3505 = vadd.f32 0.0, %v3504
        %v3506 = vpop.f32.mrb[0].mxu0
        %v3507 = vadd.f32 0.0, %v3506
        %v3508 = vpop.f32.mrb[0].mxu0
        %v3509 = vadd.f32 0.0, %v3508
        %3510 = vdwg.mxu0
        %v3527 = vunpack.c.l.b16 %v3288
        %v3528 = vunpack.c.h.b16 %v3288
        %v3529 = vunpack.c.l.b16 %v3289
        %v3530 = vunpack.c.h.b16 %v3289
        %v3531 = vunpack.c.l.b16 %v3290
        %v3532 = vunpack.c.h.b16 %v3290
        %v3533 = vunpack.c.l.b16 %v3291
        %v3534 = vunpack.c.h.b16 %v3291
        %v3535 = vunpack.c.l.b16 %v3292
        %v3536 = vunpack.c.h.b16 %v3292
        %v3537 = vunpack.c.l.b16 %v3293
        %v3538 = vunpack.c.h.b16 %v3293
        %v3539 = vunpack.c.l.b16 %v3294
        %v3540 = vunpack.c.h.b16 %v3294
        %v3541 = vunpack.c.l.b16 %v3295
        %v3542 = vunpack.c.h.b16 %v3295
        %v3543 = vunpack.c.l.b16 %v3296
        %v3544 = vunpack.c.h.b16 %v3296
        %v3545 = vunpack.c.l.b16 %v3297
        %v3546 = vunpack.c.h.b16 %v3297
        %v3547 = vunpack.c.l.b16 %v3298
        %v3548 = vunpack.c.h.b16 %v3298
        %v3549 = vunpack.c.l.b16 %v3299
        %v3550 = vunpack.c.h.b16 %v3299
        %v3551 = vunpack.c.l.b16 %v3300
        %v3552 = vunpack.c.h.b16 %v3300
        %v3553 = vunpack.c.l.b16 %v3301
        %v3554 = vunpack.c.h.b16 %v3301
        %v3555 = vunpack.c.l.b16 %v3302
        %v3556 = vunpack.c.h.b16 %v3302
        %v3557 = vunpack.c.l.b16 %v3303
        %v3558 = vunpack.c.h.b16 %v3303
        %v3559 = vpack.c.b16 %v3529, %v3527
        %v3560 = vpack.c.b16 %v3530, %v3528
        %v3561 = vpack.c.b16 %v3533, %v3531
        %v3562 = vpack.c.b16 %v3534, %v3532
        %v3563 = vpack.c.b16 %v3537, %v3535
        %v3564 = vpack.c.b16 %v3538, %v3536
        %v3565 = vpack.c.b16 %v3541, %v3539
        %v3566 = vpack.c.b16 %v3542, %v3540
        %v3567 = vpack.c.b16 %v3545, %v3543
        %v3568 = vpack.c.b16 %v3546, %v3544
        %v3569 = vpack.c.b16 %v3549, %v3547
        %v3570 = vpack.c.b16 %v3550, %v3548
        %v3571 = vpack.c.b16 %v3553, %v3551
        %v3572 = vpack.c.b16 %v3554, %v3552
        %v3573 = vpack.c.b16 %v3557, %v3555
        %v3574 = vpack.c.b16 %v3558, %v3556
        %3591 = vmatprep.subr.bf16.mxu0 %v3560
        %3592 = vmatpush1.bf16.msra.mxu0 %v3559
        %3593 = vmatprep.subr.bf16.mxu0 %v3562
        %3594 = vmatpush1.bf16.msra.mxu0 %v3561
        %3595 = vmatprep.subr.bf16.mxu0 %v3564
        %3596 = vmatpush1.bf16.msra.mxu0 %v3563
        %3597 = vmatprep.subr.bf16.mxu0 %v3566
        %3598 = vmatpush1.bf16.msra.mxu0 %v3565
        %3599 = vmatprep.subr.bf16.mxu0 %v3568
        %3600 = vmatpush1.bf16.msra.mxu0 %v3567
        %3601 = vmatprep.subr.bf16.mxu0 %v3570
        %3602 = vmatpush1.bf16.msra.mxu0 %v3569
        %3603 = vmatprep.subr.bf16.mxu0 %v3572
        %3604 = vmatpush1.bf16.msra.mxu0 %v3571
        %3605 = vmatprep.subr.bf16.mxu0 %v3574
        %3606 = vmatpush1.bf16.msra.mxu0 %v3573
        %3607 = vmatprep.subr.bf16.mxu0 0
        %3608 = vmatpush1.bf16.msra.mxu0 0
        %3609 = vmatprep.subr.bf16.mxu0 0
        %3610 = vmatpush1.bf16.msra.mxu0 0
        %3611 = vmatprep.subr.bf16.mxu0 0
        %3612 = vmatpush1.bf16.msra.mxu0 0
        %3613 = vmatprep.subr.bf16.mxu0 0
        %3614 = vmatpush1.bf16.msra.mxu0 0
        %3615 = vmatprep.subr.bf16.mxu0 0
        %3616 = vmatpush1.bf16.msra.mxu0 0
        %3617 = vmatprep.subr.bf16.mxu0 0
        %3618 = vmatpush1.bf16.msra.mxu0 0
        %3619 = vmatprep.subr.bf16.mxu0 0
        %3620 = vmatpush1.bf16.msra.mxu0 0
        %3621 = vmatprep.subr.bf16.mxu0 0
        %3622 = vmatpush1.bf16.msra.mxu0 0
        %3623 = vmatprep.mubr.bf16.mxu0 0
        %3624 = vmatmul.mubr.bf16.gmra.mrb[0].mxu0 %v3387
        %v3625 = vpop.f32.mrb[0].mxu0
        %v3626 = vadd.f32 0.0, %v3625
        %v3627 = vpop.f32.mrb[0].mxu0
        %v3628 = vadd.f32 0.0, %v3627
        %v3629 = vpop.f32.mrb[0].mxu0
        %v3630 = vadd.f32 0.0, %v3629
        %v3631 = vpop.f32.mrb[0].mxu0
        %v3632 = vadd.f32 0.0, %v3631
        %3633 = vdwg.mxu0
        %v3650 = vunpack.c.l.b16 %v3304
        %v3651 = vunpack.c.h.b16 %v3304
        %v3652 = vunpack.c.l.b16 %v3305
        %v3653 = vunpack.c.h.b16 %v3305
        %v3654 = vunpack.c.l.b16 %v3306
        %v3655 = vunpack.c.h.b16 %v3306
        %v3656 = vunpack.c.l.b16 %v3307
        %v3657 = vunpack.c.h.b16 %v3307
        %v3658 = vunpack.c.l.b16 %v3308
        %v3659 = vunpack.c.h.b16 %v3308
        %v3660 = vunpack.c.l.b16 %v3309
        %v3661 = vunpack.c.h.b16 %v3309
        %v3662 = vunpack.c.l.b16 %v3310
        %v3663 = vunpack.c.h.b16 %v3310
        %v3664 = vunpack.c.l.b16 %v3311
        %v3665 = vunpack.c.h.b16 %v3311
        %v3666 = vunpack.c.l.b16 %v3312
        %v3667 = vunpack.c.h.b16 %v3312
        %v3668 = vunpack.c.l.b16 %v3313
        %v3669 = vunpack.c.h.b16 %v3313
        %v3670 = vunpack.c.l.b16 %v3314
        %v3671 = vunpack.c.h.b16 %v3314
        %v3672 = vunpack.c.l.b16 %v3315
        %v3673 = vunpack.c.h.b16 %v3315
        %v3674 = vunpack.c.l.b16 %v3316
        %v3675 = vunpack.c.h.b16 %v3316
        %v3676 = vunpack.c.l.b16 %v3317
        %v3677 = vunpack.c.h.b16 %v3317
        %v3678 = vunpack.c.l.b16 %v3318
        %v3679 = vunpack.c.h.b16 %v3318
        %v3680 = vunpack.c.l.b16 %v3319
        %v3681 = vunpack.c.h.b16 %v3319
        %v3682 = vpack.c.b16 %v3652, %v3650
        %v3683 = vpack.c.b16 %v3653, %v3651
        %v3684 = vpack.c.b16 %v3656, %v3654
        %v3685 = vpack.c.b16 %v3657, %v3655
        %v3686 = vpack.c.b16 %v3660, %v3658
        %v3687 = vpack.c.b16 %v3661, %v3659
        %v3688 = vpack.c.b16 %v3664, %v3662
        %v3689 = vpack.c.b16 %v3665, %v3663
        %v3690 = vpack.c.b16 %v3668, %v3666
        %v3691 = vpack.c.b16 %v3669, %v3667
        %v3692 = vpack.c.b16 %v3672, %v3670
        %v3693 = vpack.c.b16 %v3673, %v3671
        %v3694 = vpack.c.b16 %v3676, %v3674
        %v3695 = vpack.c.b16 %v3677, %v3675
        %v3696 = vpack.c.b16 %v3680, %v3678
        %v3697 = vpack.c.b16 %v3681, %v3679
        %3714 = vmatprep.subr.bf16.mxu0 %v3683
        %3715 = vmatpush1.bf16.msra.mxu0 %v3682
        %3716 = vmatprep.subr.bf16.mxu0 %v3685
        %3717 = vmatpush1.bf16.msra.mxu0 %v3684
        %3718 = vmatprep.subr.bf16.mxu0 %v3687
        %3719 = vmatpush1.bf16.msra.mxu0 %v3686
        %3720 = vmatprep.subr.bf16.mxu0 %v3689
        %3721 = vmatpush1.bf16.msra.mxu0 %v3688
        %3722 = vmatprep.subr.bf16.mxu0 %v3691
        %3723 = vmatpush1.bf16.msra.mxu0 %v3690
        %3724 = vmatprep.subr.bf16.mxu0 %v3693
        %3725 = vmatpush1.bf16.msra.mxu0 %v3692
        %3726 = vmatprep.subr.bf16.mxu0 %v3695
        %3727 = vmatpush1.bf16.msra.mxu0 %v3694
        %3728 = vmatprep.subr.bf16.mxu0 %v3697
        %3729 = vmatpush1.bf16.msra.mxu0 %v3696
        %3730 = vmatprep.subr.bf16.mxu0 0
        %3731 = vmatpush1.bf16.msra.mxu0 0
        %3732 = vmatprep.subr.bf16.mxu0 0
        %3733 = vmatpush1.bf16.msra.mxu0 0
        %3734 = vmatprep.subr.bf16.mxu0 0
        %3735 = vmatpush1.bf16.msra.mxu0 0
        %3736 = vmatprep.subr.bf16.mxu0 0
        %3737 = vmatpush1.bf16.msra.mxu0 0
        %3738 = vmatprep.subr.bf16.mxu0 0
        %3739 = vmatpush1.bf16.msra.mxu0 0
        %3740 = vmatprep.subr.bf16.mxu0 0
        %3741 = vmatpush1.bf16.msra.mxu0 0
        %3742 = vmatprep.subr.bf16.mxu0 0
        %3743 = vmatpush1.bf16.msra.mxu0 0
        %3744 = vmatprep.subr.bf16.mxu0 0
        %3745 = vmatpush1.bf16.msra.mxu0 0
        %3746 = vmatprep.mubr.bf16.mxu0 0
        %3747 = vmatmul.mubr.bf16.gmra.mrb[0].mxu0 %v3387
        %v3748 = vpop.f32.mrb[0].mxu0
        %v3749 = vadd.f32 0.0, %v3748
        %v3750 = vpop.f32.mrb[0].mxu0
        %v3751 = vadd.f32 0.0, %v3750
        %v3752 = vpop.f32.mrb[0].mxu0
        %v3753 = vadd.f32 0.0, %v3752
        %v3754 = vpop.f32.mrb[0].mxu0
        %v3755 = vadd.f32 0.0, %v3754
        %3756 = vdwg.mxu0
        %v3758 = vlaneseq
        %v3759 = vshrl.u32 %v3758, 7
        %v3760 = vsub.s32 0, %v3759
        %v3761 = vrot.slane %v3322, %v3760
        %v3762 = vlaneseq
        %v3763 = vshrl.u32 %v3762, 7
        %v3764 = vsub.s32 1, %v3763
        %v3765 = vrot.slane %v3322, %v3764
        %v3772 = vrot.slane %v3626, 7
        %v3773 = vrot.slane %v3628, 7
        %v3774 = vrot.slane %v3630, 7
        %v3775 = vrot.slane %v3632, 7
        %v3780 = vsel %vm1936, %v3761, %v3772
        %v3781 = vsel %vm1936, %v3765, %v3773
        %v3782 = vsel %vm1936, %v3761, %v3774
        %v3783 = vsel %vm1936, %v3765, %v3775
        %v3784 = vsel %vm1936, %v3772, 0.0
        %v3785 = vsel %vm1936, %v3773, 0.0
        %v3786 = vsel %vm1936, %v3774, 0.0
        %v3787 = vsel %vm1936, %v3775, 0.0
        %v3789 = vlaneseq
        %v3790 = vshrl.u32 %v3789, 7
        %v3791 = vsub.s32 0, %v3790
        %v3792 = vrot.slane %v3323, %v3791
        %v3793 = vlaneseq
        %v3794 = vshrl.u32 %v3793, 7
        %v3795 = vsub.s32 1, %v3794
        %v3796 = vrot.slane %v3323, %v3795
        %v3803 = vrot.slane %v3749, 7
        %v3804 = vrot.slane %v3751, 7
        %v3805 = vrot.slane %v3753, 7
        %v3806 = vrot.slane %v3755, 7
        %v3811 = vsel %vm1936, %v3792, %v3803
        %v3812 = vsel %vm1936, %v3796, %v3804
        %v3813 = vsel %vm1936, %v3792, %v3805
        %v3814 = vsel %vm1936, %v3796, %v3806
        %v3815 = vsel %vm1936, %v3803, 0.0
        %v3816 = vsel %vm1936, %v3804, 0.0
        %v3817 = vsel %vm1936, %v3805, 0.0
        %v3818 = vsel %vm1936, %v3806, 0.0
        %v3819 = vmul.f32 %v3503, %v3503
        %v3820 = vmul.f32 %v3507, %v3507
        %v3821 = vsel %vm1978, %v3819, 0.0
        %3822 = vadd.xlane.f32.xlu0 %v3821
        %v3823 = vpop.xlane.xlu0 %3822
        %v3824 = vsel %vm1978, %v3820, 0.0
        %3825 = vadd.xlane.f32.xlu0 %v3824
        %v3826 = vpop.xlane.xlu0 %3825
        %v3827 = vadd.f32 %v3823, 1e-12
        %v3828 = vadd.f32 %v3826, 1e-12
        %v3829 = vrsqrt.pop %v3827
        %v3830 = vrsqrt.pop %v3828
        %v3831 = vmul.f32 %v3503, %v3829
        %v3832 = vmul.f32 %v3507, %v3830
        %v3834 = vlaneseq
        %v3835 = vshrl.u32 %v3834, 7
        %v3836 = vsub.s32 0, %v3835
        %v3837 = vrot.slane %v3320, %v3836
        %v3839 = vmul.f32 %v3831, %v3837
        %v3840 = vmul.f32 %v3832, %v3837
        %v3841 = vmul.f32 %v3780, %v3780
        %v3842 = vmul.f32 %v3784, %v3784
        %v3843 = vmul.f32 %v3782, %v3782
        %v3844 = vmul.f32 %v3786, %v3786
        %v3845 = vsel %vm1978, %v3841, 0.0
        %3846 = vadd.xlane.f32.xlu0 %v3845
        %v3847 = vpop.xlane.xlu0 %3846
        %v3848 = vsel %vm1978, %v3842, 0.0
        %3849 = vadd.xlane.f32.xlu0 %v3848
        %v3850 = vpop.xlane.xlu0 %3849
        %v3851 = vsel %vm1978, %v3843, 0.0
        %3852 = vadd.xlane.f32.xlu0 %v3851
        %v3853 = vpop.xlane.xlu0 %3852
        %v3854 = vsel %vm1978, %v3844, 0.0
        %3855 = vadd.xlane.f32.xlu0 %v3854
        %v3856 = vpop.xlane.xlu0 %3855
        %v3857 = vadd.f32 %v3847, 1e-12
        %v3858 = vadd.f32 %v3850, 1e-12
        %v3859 = vadd.f32 %v3853, 1e-12
        %v3860 = vadd.f32 %v3856, 1e-12
        %v3861 = vrsqrt.pop %v3857
        %v3862 = vrsqrt.pop %v3858
        %v3863 = vrsqrt.pop %v3859
        %v3864 = vrsqrt.pop %v3860
        %v3865 = vmul.f32 %v3780, %v3861
        %v3866 = vmul.f32 %v3784, %v3862
        %v3867 = vmul.f32 %v3782, %v3863
        %v3868 = vmul.f32 %v3786, %v3864
        %v3870 = vlaneseq
        %v3871 = vshrl.u32 %v3870, 7
        %v3872 = vsub.s32 0, %v3871
        %v3873 = vrot.slane %v3321, %v3872
        %v3875 = vmul.f32 %v3865, %v3873
        %v3876 = vmul.f32 %v3866, %v3873
        %v3877 = vmul.f32 %v2029, %v3873
        %v3878 = vmul.f32 %v3867, %v3873
        %v3879 = vmul.f32 %v3868, %v3873
        %v3880 = vpack.c.bf16 %v3839, %v3839
        %v3881 = vpack.c.bf16 %v3840, %v3840
        %v3882 = vpack.c.bf16 %v3876, %v3875
        %v3883 = vpack.c.bf16 %v3877, %v3877
        %v3884 = vpack.c.bf16 %v3879, %v3878
        %v3886 = vsel %vm1978, %v3880, 0
        %v3889 = vsel %vm1978, %v3882, 0
        %v3892 = vsel %vm1978, %v3883, 0
        %3894 = vmatprep.subr.bf16.mxu0 0
        %3895 = vmatpush1.bf16.xpose.msra.mxu0 %v3889
        %3896 = vmatprep.subr.bf16.mxu0 0
        %3897 = vmatpush1.bf16.xpose.msra.mxu0 %v3892
        %3898 = vmatprep.subr.bf16.mxu0 0
        %3899 = vmatpush1.bf16.xpose.msra.mxu0 %v3892
        %3900 = vmatprep.subr.bf16.mxu0 0
        %3901 = vmatpush1.bf16.xpose.msra.mxu0 %v3892
        %3902 = vmatprep.subr.bf16.mxu0 0
        %3903 = vmatpush1.bf16.xpose.msra.mxu0 %v3892
        %3904 = vmatprep.subr.bf16.mxu0 0
        %3905 = vmatpush1.bf16.xpose.msra.mxu0 %v3892
        %3906 = vmatprep.subr.bf16.mxu0 0
        %3907 = vmatpush1.bf16.xpose.msra.mxu0 %v3892
        %3908 = vmatprep.subr.bf16.mxu0 0
        %3909 = vmatpush1.bf16.xpose.msra.mxu0 %v3892
        %3910 = vmatprep.subr.bf16.mxu0 0
        %3911 = vmatpush1.bf16.xpose.msra.mxu0 0
        %3912 = vmatprep.subr.bf16.mxu0 0
        %3913 = vmatpush1.bf16.xpose.msra.mxu0 0
        %3914 = vmatprep.subr.bf16.mxu0 0
        %3915 = vmatpush1.bf16.xpose.msra.mxu0 0
        %3916 = vmatprep.subr.bf16.mxu0 0
        %3917 = vmatpush1.bf16.xpose.msra.mxu0 0
        %3918 = vmatprep.subr.bf16.mxu0 0
        %3919 = vmatpush1.bf16.xpose.msra.mxu0 0
        %3920 = vmatprep.subr.bf16.mxu0 0
        %3921 = vmatpush1.bf16.xpose.msra.mxu0 0
        %3922 = vmatprep.subr.bf16.mxu0 0
        %3923 = vmatpush1.bf16.xpose.msra.mxu0 0
        %3924 = vmatprep.subr.bf16.mxu0 0
        %3925 = vmatpush1.bf16.xpose.msra.mxu0 0
        %3926 = vmatprep.mubr.bf16.mxu0 0
        %3927 = vmatmul.mubr.bf16.gmra.mrb[0].mxu0 %v3886
        %v3928 = vpop.f32.mrb[0].mxu0
        %v3929 = vadd.f32 0.0, %v3928
        %v3930 = vpop.f32.mrb[0].mxu0
        %v3931 = vpop.f32.mrb[0].mxu0
        %v3932 = vpop.f32.mrb[0].mxu0
        %3933 = vdwg.mxu0
        %v3935 = vsel %vm1978, %v3881, 0
        %v3938 = vsel %vm1978, %v3884, 0
        %3940 = vmatprep.subr.bf16.mxu0 0
        %3941 = vmatpush1.bf16.xpose.msra.mxu0 %v3938
        %3942 = vmatprep.subr.bf16.mxu0 0
        %3943 = vmatpush1.bf16.xpose.msra.mxu0 %v3892
        %3944 = vmatprep.subr.bf16.mxu0 0
        %3945 = vmatpush1.bf16.xpose.msra.mxu0 %v3892
        %3946 = vmatprep.subr.bf16.mxu0 0
        %3947 = vmatpush1.bf16.xpose.msra.mxu0 %v3892
        %3948 = vmatprep.subr.bf16.mxu0 0
        %3949 = vmatpush1.bf16.xpose.msra.mxu0 %v3892
        %3950 = vmatprep.subr.bf16.mxu0 0
        %3951 = vmatpush1.bf16.xpose.msra.mxu0 %v3892
        %3952 = vmatprep.subr.bf16.mxu0 0
        %3953 = vmatpush1.bf16.xpose.msra.mxu0 %v3892
        %3954 = vmatprep.subr.bf16.mxu0 0
        %3955 = vmatpush1.bf16.xpose.msra.mxu0 %v3892
        %3956 = vmatprep.subr.bf16.mxu0 0
        %3957 = vmatpush1.bf16.xpose.msra.mxu0 0
        %3958 = vmatprep.subr.bf16.mxu0 0
        %3959 = vmatpush1.bf16.xpose.msra.mxu0 0
        %3960 = vmatprep.subr.bf16.mxu0 0
        %3961 = vmatpush1.bf16.xpose.msra.mxu0 0
        %3962 = vmatprep.subr.bf16.mxu0 0
        %3963 = vmatpush1.bf16.xpose.msra.mxu0 0
        %3964 = vmatprep.subr.bf16.mxu0 0
        %3965 = vmatpush1.bf16.xpose.msra.mxu0 0
        %3966 = vmatprep.subr.bf16.mxu0 0
        %3967 = vmatpush1.bf16.xpose.msra.mxu0 0
        %3968 = vmatprep.subr.bf16.mxu0 0
        %3969 = vmatpush1.bf16.xpose.msra.mxu0 0
        %3970 = vmatprep.subr.bf16.mxu0 0
        %3971 = vmatpush1.bf16.xpose.msra.mxu0 0
        %3972 = vmatprep.mubr.bf16.mxu0 0
        %3973 = vmatmul.mubr.bf16.gmra.mrb[0].mxu0 %v3935
        %v3974 = vpop.f32.mrb[0].mxu0
        %v3975 = vadd.f32 0.0, %v3974
        %v3976 = vpop.f32.mrb[0].mxu0
        %v3977 = vpop.f32.mrb[0].mxu0
        %v3978 = vpop.f32.mrb[0].mxu0
        %3979 = vdwg.mxu0
        %v3980 = vmul.f32 %v3929, 8.0
        %v3981 = vmul.f32 %v3975, 8.0
        %v3984 = vlaneseq
        %v3985 = vshrl.u32 %v3984, 7
        %v3986 = vsub.s32 0, %v3985
        %v3987 = vrot.slane %v3269, %v3986
        %v3988 = vlaneseq
        %v3989 = vshrl.u32 %v3988, 7
        %v3990 = vsub.s32 0, %v3989
        %v3991 = vrot.slane %v3270, %v3990
        %v3994 = vadd.f32 %v3980, %v3987
        %v3995 = vadd.f32 %v3981, %v3991
        %3996 = vmax.xlane.f32.xlu0 %v3994
        %v3997 = vpop.xlane.xlu0 %3996
        %3998 = vmax.xlane.f32.xlu0 %v3995
        %v3999 = vpop.xlane.xlu0 %3998
        %v4000 = vsub.f32 %v3994, %v3997
        %v4001 = vsub.f32 %v3995, %v3999
        %v4002 = vmul.f32 %v4000, 1.442695
        %v4003 = vpow.pop %v4002
        %v4004 = vmul.f32 %v4001, 1.442695
        %v4005 = vpow.pop %v4004
        %4006 = vadd.xlane.f32.xlu0 %v4003
        %v4007 = vpop.xlane.xlu0 %4006
        %4008 = vadd.xlane.f32.xlu0 %v4005
        %v4009 = vpop.xlane.xlu0 %4008
        %v4010 = vrcp.pop %v4007
        %v4011 = vrcp.pop %v4009
        %v4012 = vmul.f32 %v4003, %v4010
        %v4013 = vmul.f32 %v4005, %v4011
        %v4014 = vpack.c.bf16 %v4012, %v4012
        %v4015 = vpack.c.bf16 %v4013, %v4013
        %v4016 = vpack.c.bf16 %v3815, %v3811
        %v4017 = vpack.c.bf16 %v3817, %v3813
        %4018 = vmatprep.subr.bf16.mxu0 0
        %4019 = vmatpush1.bf16.msra.mxu0 %v4016
        %4020 = vmatprep.subr.bf16.mxu0 0
        %4021 = vmatpush1.bf16.msra.mxu0 %v2174
        %4022 = vmatprep.subr.bf16.mxu0 0
        %4023 = vmatpush1.bf16.msra.mxu0 %v2174
        %4024 = vmatprep.subr.bf16.mxu0 0
        %4025 = vmatpush1.bf16.msra.mxu0 %v2174
        %4026 = vmatprep.subr.bf16.mxu0 0
        %4027 = vmatpush1.bf16.msra.mxu0 %v2174
        %4028 = vmatprep.subr.bf16.mxu0 0
        %4029 = vmatpush1.bf16.msra.mxu0 %v2174
        %4030 = vmatprep.subr.bf16.mxu0 0
        %4031 = vmatpush1.bf16.msra.mxu0 %v2174
        %4032 = vmatprep.subr.bf16.mxu0 0
        %4033 = vmatpush1.bf16.msra.mxu0 %v2174
        %4034 = vmatprep.subr.bf16.mxu0 0
        %4035 = vmatpush1.bf16.msra.mxu0 0
        %4036 = vmatprep.subr.bf16.mxu0 0
        %4037 = vmatpush1.bf16.msra.mxu0 0
        %4038 = vmatprep.subr.bf16.mxu0 0
        %4039 = vmatpush1.bf16.msra.mxu0 0
        %4040 = vmatprep.subr.bf16.mxu0 0
        %4041 = vmatpush1.bf16.msra.mxu0 0
        %4042 = vmatprep.subr.bf16.mxu0 0
        %4043 = vmatpush1.bf16.msra.mxu0 0
        %4044 = vmatprep.subr.bf16.mxu0 0
        %4045 = vmatpush1.bf16.msra.mxu0 0
        %4046 = vmatprep.subr.bf16.mxu0 0
        %4047 = vmatpush1.bf16.msra.mxu0 0
        %4048 = vmatprep.subr.bf16.mxu0 0
        %4049 = vmatpush1.bf16.msra.mxu0 0
        %4050 = vmatprep.mubr.bf16.mxu0 0
        %4051 = vmatmul.mubr.bf16.gmra.mrb[0].mxu0 %v4014
        %v4052 = vpop.f32.mrb[0].mxu0
        %v4053 = vadd.f32 0.0, %v4052
        %v4054 = vpop.f32.mrb[0].mxu0
        %v4055 = vpop.f32.mrb[0].mxu0
        %v4056 = vpop.f32.mrb[0].mxu0
        %4057 = vdwg.mxu0
        %4058 = vmatprep.subr.bf16.mxu0 0
        %4059 = vmatpush1.bf16.msra.mxu0 %v4017
        %4060 = vmatprep.subr.bf16.mxu0 0
        %4061 = vmatpush1.bf16.msra.mxu0 %v2174
        %4062 = vmatprep.subr.bf16.mxu0 0
        %4063 = vmatpush1.bf16.msra.mxu0 %v2174
        %4064 = vmatprep.subr.bf16.mxu0 0
        %4065 = vmatpush1.bf16.msra.mxu0 %v2174
        %4066 = vmatprep.subr.bf16.mxu0 0
        %4067 = vmatpush1.bf16.msra.mxu0 %v2174
        %4068 = vmatprep.subr.bf16.mxu0 0
        %4069 = vmatpush1.bf16.msra.mxu0 %v2174
        %4070 = vmatprep.subr.bf16.mxu0 0
        %4071 = vmatpush1.bf16.msra.mxu0 %v2174
        %4072 = vmatprep.subr.bf16.mxu0 0
        %4073 = vmatpush1.bf16.msra.mxu0 %v2174
        %4074 = vmatprep.subr.bf16.mxu0 0
        %4075 = vmatpush1.bf16.msra.mxu0 0
        %4076 = vmatprep.subr.bf16.mxu0 0
        %4077 = vmatpush1.bf16.msra.mxu0 0
        %4078 = vmatprep.subr.bf16.mxu0 0
        %4079 = vmatpush1.bf16.msra.mxu0 0
        %4080 = vmatprep.subr.bf16.mxu0 0
        %4081 = vmatpush1.bf16.msra.mxu0 0
        %4082 = vmatprep.subr.bf16.mxu0 0
        %4083 = vmatpush1.bf16.msra.mxu0 0
        %4084 = vmatprep.subr.bf16.mxu0 0
        %4085 = vmatpush1.bf16.msra.mxu0 0
        %4086 = vmatprep.subr.bf16.mxu0 0
        %4087 = vmatpush1.bf16.msra.mxu0 0
        %4088 = vmatprep.subr.bf16.mxu0 0
        %4089 = vmatpush1.bf16.msra.mxu0 0
        %4090 = vmatprep.mubr.bf16.mxu0 0
        %4091 = vmatmul.mubr.bf16.gmra.mrb[0].mxu0 %v4015
        %v4092 = vpop.f32.mrb[0].mxu0
        %v4093 = vadd.f32 0.0, %v4092
        %v4094 = vpop.f32.mrb[0].mxu0
        %v4095 = vpop.f32.mrb[0].mxu0
        %v4096 = vpop.f32.mrb[0].mxu0
        %4097 = vdwg.mxu0
        %4100 = vrot.lane.b32.xlu0 %v3819, 64
        %v4101 = vpop.permute.xlu0 %4100
        %4102 = vrot.lane.b32.xlu0 %v3820, 64
        %v4103 = vpop.permute.xlu0 %4102
        %v4106 = vsel %vm1978, %v4101, 0.0
        %4107 = vadd.xlane.f32.xlu0 %v4106
        %v4108 = vpop.xlane.xlu0 %4107
        %v4109 = vsel %vm1978, %v4103, 0.0
        %4110 = vadd.xlane.f32.xlu0 %v4109
        %v4111 = vpop.xlane.xlu0 %4110
        %v4112 = vadd.f32 %v4108, 1e-12
        %v4113 = vadd.f32 %v4111, 1e-12
        %v4114 = vrsqrt.pop %v4112
        %v4115 = vrsqrt.pop %v4113
        %v4116 = vmul.f32 %v3503, %v4114
        %v4117 = vmul.f32 %v3507, %v4115
        %4118 = vrot.lane.b32.xlu0 %v3837, 64
        %v4119 = vpop.permute.xlu0 %4118
        %v4121 = vmul.f32 %v4116, %v4119
        %v4122 = vmul.f32 %v4117, %v4119
        %4127 = vrot.lane.b32.xlu0 %v3841, 64
        %v4128 = vpop.permute.xlu0 %4127
        %4129 = vrot.lane.b32.xlu0 %v3842, 64
        %v4130 = vpop.permute.xlu0 %4129
        %4131 = vrot.lane.b32.xlu0 %v3843, 64
        %v4132 = vpop.permute.xlu0 %4131
        %4133 = vrot.lane.b32.xlu0 %v3844, 64
        %v4134 = vpop.permute.xlu0 %4133
        %v4139 = vsel %vm1978, %v4128, 0.0
        %4140 = vadd.xlane.f32.xlu0 %v4139
        %v4141 = vpop.xlane.xlu0 %4140
        %v4142 = vsel %vm1978, %v4130, 0.0
        %4143 = vadd.xlane.f32.xlu0 %v4142
        %v4144 = vpop.xlane.xlu0 %4143
        %v4145 = vsel %vm1978, %v4132, 0.0
        %4146 = vadd.xlane.f32.xlu0 %v4145
        %v4147 = vpop.xlane.xlu0 %4146
        %v4148 = vsel %vm1978, %v4134, 0.0
        %4149 = vadd.xlane.f32.xlu0 %v4148
        %v4150 = vpop.xlane.xlu0 %4149
        %v4151 = vadd.f32 %v4141, 1e-12
        %v4152 = vadd.f32 %v4144, 1e-12
        %v4153 = vadd.f32 %v4147, 1e-12
        %v4154 = vadd.f32 %v4150, 1e-12
        %v4155 = vrsqrt.pop %v4151
        %v4156 = vrsqrt.pop %v4152
        %v4157 = vrsqrt.pop %v4153
        %v4158 = vrsqrt.pop %v4154
        %v4159 = vmul.f32 %v3780, %v4155
        %v4160 = vmul.f32 %v3784, %v4156
        %v4161 = vmul.f32 %v3782, %v4157
        %v4162 = vmul.f32 %v3786, %v4158
        %4163 = vrot.lane.b32.xlu0 %v3873, 64
        %v4164 = vpop.permute.xlu0 %4163
        %v4166 = vmul.f32 %v4159, %v4164
        %v4167 = vmul.f32 %v4160, %v4164
        %v4168 = vmul.f32 %v2328, %v4164
        %v4169 = vmul.f32 %v4161, %v4164
        %v4170 = vmul.f32 %v4162, %v4164
        %v4171 = vpack.c.bf16 %v4121, %v4121
        %v4172 = vpack.c.bf16 %v4122, %v4122
        %v4173 = vpack.c.bf16 %v4167, %v4166
        %v4174 = vpack.c.bf16 %v4168, %v4168
        %v4175 = vpack.c.bf16 %v4170, %v4169
        %4177 = vrot.lane.b32.xlu0 %v4171, 64
        %v4178 = vpop.permute.xlu0 %4177
        %4181 = vrot.lane.b32.xlu0 %v4173, 64
        %v4182 = vpop.permute.xlu0 %4181
        %4183 = vrot.lane.b32.xlu0 %v4174, 64
        %v4184 = vpop.permute.xlu0 %4183
        %v4186 = vsel %vm1978, %v4178, 0
        %v4189 = vsel %vm1978, %v4182, 0
        %v4192 = vsel %vm1978, %v4184, 0
        %4194 = vmatprep.subr.bf16.mxu0 0
        %4195 = vmatpush1.bf16.xpose.msra.mxu0 %v4189
        %4196 = vmatprep.subr.bf16.mxu0 0
        %4197 = vmatpush1.bf16.xpose.msra.mxu0 %v4192
        %4198 = vmatprep.subr.bf16.mxu0 0
        %4199 = vmatpush1.bf16.xpose.msra.mxu0 %v4192
        %4200 = vmatprep.subr.bf16.mxu0 0
        %4201 = vmatpush1.bf16.xpose.msra.mxu0 %v4192
        %4202 = vmatprep.subr.bf16.mxu0 0
        %4203 = vmatpush1.bf16.xpose.msra.mxu0 %v4192
        %4204 = vmatprep.subr.bf16.mxu0 0
        %4205 = vmatpush1.bf16.xpose.msra.mxu0 %v4192
        %4206 = vmatprep.subr.bf16.mxu0 0
        %4207 = vmatpush1.bf16.xpose.msra.mxu0 %v4192
        %4208 = vmatprep.subr.bf16.mxu0 0
        %4209 = vmatpush1.bf16.xpose.msra.mxu0 %v4192
        %4210 = vmatprep.subr.bf16.mxu0 0
        %4211 = vmatpush1.bf16.xpose.msra.mxu0 0
        %4212 = vmatprep.subr.bf16.mxu0 0
        %4213 = vmatpush1.bf16.xpose.msra.mxu0 0
        %4214 = vmatprep.subr.bf16.mxu0 0
        %4215 = vmatpush1.bf16.xpose.msra.mxu0 0
        %4216 = vmatprep.subr.bf16.mxu0 0
        %4217 = vmatpush1.bf16.xpose.msra.mxu0 0
        %4218 = vmatprep.subr.bf16.mxu0 0
        %4219 = vmatpush1.bf16.xpose.msra.mxu0 0
        %4220 = vmatprep.subr.bf16.mxu0 0
        %4221 = vmatpush1.bf16.xpose.msra.mxu0 0
        %4222 = vmatprep.subr.bf16.mxu0 0
        %4223 = vmatpush1.bf16.xpose.msra.mxu0 0
        %4224 = vmatprep.subr.bf16.mxu0 0
        %4225 = vmatpush1.bf16.xpose.msra.mxu0 0
        %4226 = vmatprep.mubr.bf16.mxu0 0
        %4227 = vmatmul.mubr.bf16.gmra.mrb[0].mxu0 %v4186
        %v4228 = vpop.f32.mrb[0].mxu0
        %v4229 = vadd.f32 0.0, %v4228
        %v4230 = vpop.f32.mrb[0].mxu0
        %v4231 = vpop.f32.mrb[0].mxu0
        %v4232 = vpop.f32.mrb[0].mxu0
        %4233 = vdwg.mxu0
        %4235 = vrot.lane.b32.xlu0 %v4172, 64
        %v4236 = vpop.permute.xlu0 %4235
        %4238 = vrot.lane.b32.xlu0 %v4175, 64
        %v4239 = vpop.permute.xlu0 %4238
        %v4241 = vsel %vm1978, %v4236, 0
        %v4244 = vsel %vm1978, %v4239, 0
        %4246 = vmatprep.subr.bf16.mxu0 0
        %4247 = vmatpush1.bf16.xpose.msra.mxu0 %v4244
        %4248 = vmatprep.subr.bf16.mxu0 0
        %4249 = vmatpush1.bf16.xpose.msra.mxu0 %v4192
        %4250 = vmatprep.subr.bf16.mxu0 0
        %4251 = vmatpush1.bf16.xpose.msra.mxu0 %v4192
        %4252 = vmatprep.subr.bf16.mxu0 0
        %4253 = vmatpush1.bf16.xpose.msra.mxu0 %v4192
        %4254 = vmatprep.subr.bf16.mxu0 0
        %4255 = vmatpush1.bf16.xpose.msra.mxu0 %v4192
        %4256 = vmatprep.subr.bf16.mxu0 0
        %4257 = vmatpush1.bf16.xpose.msra.mxu0 %v4192
        %4258 = vmatprep.subr.bf16.mxu0 0
        %4259 = vmatpush1.bf16.xpose.msra.mxu0 %v4192
        %4260 = vmatprep.subr.bf16.mxu0 0
        %4261 = vmatpush1.bf16.xpose.msra.mxu0 %v4192
        %4262 = vmatprep.subr.bf16.mxu0 0
        %4263 = vmatpush1.bf16.xpose.msra.mxu0 0
        %4264 = vmatprep.subr.bf16.mxu0 0
        %4265 = vmatpush1.bf16.xpose.msra.mxu0 0
        %4266 = vmatprep.subr.bf16.mxu0 0
        %4267 = vmatpush1.bf16.xpose.msra.mxu0 0
        %4268 = vmatprep.subr.bf16.mxu0 0
        %4269 = vmatpush1.bf16.xpose.msra.mxu0 0
        %4270 = vmatprep.subr.bf16.mxu0 0
        %4271 = vmatpush1.bf16.xpose.msra.mxu0 0
        %4272 = vmatprep.subr.bf16.mxu0 0
        %4273 = vmatpush1.bf16.xpose.msra.mxu0 0
        %4274 = vmatprep.subr.bf16.mxu0 0
        %4275 = vmatpush1.bf16.xpose.msra.mxu0 0
        %4276 = vmatprep.subr.bf16.mxu0 0
        %4277 = vmatpush1.bf16.xpose.msra.mxu0 0
        %4278 = vmatprep.mubr.bf16.mxu0 0
        %4279 = vmatmul.mubr.bf16.gmra.mrb[0].mxu0 %v4241
        %v4280 = vpop.f32.mrb[0].mxu0
        %v4281 = vadd.f32 0.0, %v4280
        %v4282 = vpop.f32.mrb[0].mxu0
        %v4283 = vpop.f32.mrb[0].mxu0
        %v4284 = vpop.f32.mrb[0].mxu0
        %4285 = vdwg.mxu0
        %v4286 = vmul.f32 %v4229, 8.0
        %v4287 = vmul.f32 %v4281, 8.0
        %v4288 = vadd.f32 %v4286, %v3987
        %v4289 = vadd.f32 %v4287, %v3991
        %4290 = vmax.xlane.f32.xlu0 %v4288
        %v4291 = vpop.xlane.xlu0 %4290
        %4292 = vmax.xlane.f32.xlu0 %v4289
        %v4293 = vpop.xlane.xlu0 %4292
        %v4294 = vsub.f32 %v4288, %v4291
        %v4295 = vsub.f32 %v4289, %v4293
        %v4296 = vmul.f32 %v4294, 1.442695
        %v4297 = vpow.pop %v4296
        %v4298 = vmul.f32 %v4295, 1.442695
        %v4299 = vpow.pop %v4298
        %4300 = vadd.xlane.f32.xlu0 %v4297
        %v4301 = vpop.xlane.xlu0 %4300
        %4302 = vadd.xlane.f32.xlu0 %v4299
        %v4303 = vpop.xlane.xlu0 %4302
        %v4304 = vrcp.pop %v4301
        %v4305 = vrcp.pop %v4303
        %v4306 = vmul.f32 %v4297, %v4304
        %v4307 = vmul.f32 %v4299, %v4305
        %v4308 = vpack.c.bf16 %v4306, %v4306
        %v4309 = vpack.c.bf16 %v4307, %v4307
        %4311 = vrot.lane.b32.xlu0 %v4016, 64
        %v4312 = vpop.permute.xlu0 %4311
        %4314 = vmatprep.subr.bf16.mxu0 0
        %4315 = vmatpush1.bf16.msra.mxu0 %v4312
        %4316 = vmatprep.subr.bf16.mxu0 0
        %4317 = vmatpush1.bf16.msra.mxu0 %v2483
        %4318 = vmatprep.subr.bf16.mxu0 0
        %4319 = vmatpush1.bf16.msra.mxu0 %v2483
        %4320 = vmatprep.subr.bf16.mxu0 0
        %4321 = vmatpush1.bf16.msra.mxu0 %v2483
        %4322 = vmatprep.subr.bf16.mxu0 0
        %4323 = vmatpush1.bf16.msra.mxu0 %v2483
        %4324 = vmatprep.subr.bf16.mxu0 0
        %4325 = vmatpush1.bf16.msra.mxu0 %v2483
        %4326 = vmatprep.subr.bf16.mxu0 0
        %4327 = vmatpush1.bf16.msra.mxu0 %v2483
        %4328 = vmatprep.subr.bf16.mxu0 0
        %4329 = vmatpush1.bf16.msra.mxu0 %v2483
        %4330 = vmatprep.subr.bf16.mxu0 0
        %4331 = vmatpush1.bf16.msra.mxu0 0
        %4332 = vmatprep.subr.bf16.mxu0 0
        %4333 = vmatpush1.bf16.msra.mxu0 0
        %4334 = vmatprep.subr.bf16.mxu0 0
        %4335 = vmatpush1.bf16.msra.mxu0 0
        %4336 = vmatprep.subr.bf16.mxu0 0
        %4337 = vmatpush1.bf16.msra.mxu0 0
        %4338 = vmatprep.subr.bf16.mxu0 0
        %4339 = vmatpush1.bf16.msra.mxu0 0
        %4340 = vmatprep.subr.bf16.mxu0 0
        %4341 = vmatpush1.bf16.msra.mxu0 0
        %4342 = vmatprep.subr.bf16.mxu0 0
        %4343 = vmatpush1.bf16.msra.mxu0 0
        %4344 = vmatprep.subr.bf16.mxu0 0
        %4345 = vmatpush1.bf16.msra.mxu0 0
        %4346 = vmatprep.mubr.bf16.mxu0 0
        %4347 = vmatmul.mubr.bf16.gmra.mrb[0].mxu0 %v4308
        %v4348 = vpop.f32.mrb[0].mxu0
        %v4349 = vadd.f32 0.0, %v4348
        %v4350 = vpop.f32.mrb[0].mxu0
        %v4351 = vpop.f32.mrb[0].mxu0
        %v4352 = vpop.f32.mrb[0].mxu0
        %4353 = vdwg.mxu0
        %4355 = vrot.lane.b32.xlu0 %v4017, 64
        %v4356 = vpop.permute.xlu0 %4355
        %4358 = vmatprep.subr.bf16.mxu0 0
        %4359 = vmatpush1.bf16.msra.mxu0 %v4356
        %4360 = vmatprep.subr.bf16.mxu0 0
        %4361 = vmatpush1.bf16.msra.mxu0 %v2483
        %4362 = vmatprep.subr.bf16.mxu0 0
        %4363 = vmatpush1.bf16.msra.mxu0 %v2483
        %4364 = vmatprep.subr.bf16.mxu0 0
        %4365 = vmatpush1.bf16.msra.mxu0 %v2483
        %4366 = vmatprep.subr.bf16.mxu0 0
        %4367 = vmatpush1.bf16.msra.mxu0 %v2483
        %4368 = vmatprep.subr.bf16.mxu0 0
        %4369 = vmatpush1.bf16.msra.mxu0 %v2483
        %4370 = vmatprep.subr.bf16.mxu0 0
        %4371 = vmatpush1.bf16.msra.mxu0 %v2483
        %4372 = vmatprep.subr.bf16.mxu0 0
        %4373 = vmatpush1.bf16.msra.mxu0 %v2483
        %4374 = vmatprep.subr.bf16.mxu0 0
        %4375 = vmatpush1.bf16.msra.mxu0 0
        %4376 = vmatprep.subr.bf16.mxu0 0
        %4377 = vmatpush1.bf16.msra.mxu0 0
        %4378 = vmatprep.subr.bf16.mxu0 0
        %4379 = vmatpush1.bf16.msra.mxu0 0
        %4380 = vmatprep.subr.bf16.mxu0 0
        %4381 = vmatpush1.bf16.msra.mxu0 0
        %4382 = vmatprep.subr.bf16.mxu0 0
        %4383 = vmatpush1.bf16.msra.mxu0 0
        %4384 = vmatprep.subr.bf16.mxu0 0
        %4385 = vmatpush1.bf16.msra.mxu0 0
        %4386 = vmatprep.subr.bf16.mxu0 0
        %4387 = vmatpush1.bf16.msra.mxu0 0
        %4388 = vmatprep.subr.bf16.mxu0 0
        %4389 = vmatpush1.bf16.msra.mxu0 0
        %4390 = vmatprep.mubr.bf16.mxu0 0
        %4391 = vmatmul.mubr.bf16.gmra.mrb[0].mxu0 %v4309
        %v4392 = vpop.f32.mrb[0].mxu0
        %v4393 = vadd.f32 0.0, %v4392
        %v4394 = vpop.f32.mrb[0].mxu0
        %v4395 = vpop.f32.mrb[0].mxu0
        %v4396 = vpop.f32.mrb[0].mxu0
        %4397 = vdwg.mxu0
        %v4398 = vmul.f32 %v3505, %v3505
        %v4399 = vmul.f32 %v3509, %v3509
        %v4400 = vsel %vm1978, %v4398, 0.0
        %4401 = vadd.xlane.f32.xlu0 %v4400
        %v4402 = vpop.xlane.xlu0 %4401
        %v4403 = vsel %vm1978, %v4399, 0.0
        %4404 = vadd.xlane.f32.xlu0 %v4403
        %v4405 = vpop.xlane.xlu0 %4404
        %v4406 = vadd.f32 %v4402, 1e-12
        %v4407 = vadd.f32 %v4405, 1e-12
        %v4408 = vrsqrt.pop %v4406
        %v4409 = vrsqrt.pop %v4407
        %v4410 = vmul.f32 %v3505, %v4408
        %v4411 = vmul.f32 %v3509, %v4409
        %v4412 = vmul.f32 %v4410, %v3837
        %v4413 = vmul.f32 %v4411, %v3837
        %v4414 = vmul.f32 %v3781, %v3781
        %v4415 = vmul.f32 %v3785, %v3785
        %v4416 = vmul.f32 %v3783, %v3783
        %v4417 = vmul.f32 %v3787, %v3787
        %v4418 = vsel %vm1978, %v4414, 0.0
        %4419 = vadd.xlane.f32.xlu0 %v4418
        %v4420 = vpop.xlane.xlu0 %4419
        %v4421 = vsel %vm1978, %v4415, 0.0
        %4422 = vadd.xlane.f32.xlu0 %v4421
        %v4423 = vpop.xlane.xlu0 %4422
        %v4424 = vsel %vm1978, %v4416, 0.0
        %4425 = vadd.xlane.f32.xlu0 %v4424
        %v4426 = vpop.xlane.xlu0 %4425
        %v4427 = vsel %vm1978, %v4417, 0.0
        %4428 = vadd.xlane.f32.xlu0 %v4427
        %v4429 = vpop.xlane.xlu0 %4428
        %v4430 = vadd.f32 %v4420, 1e-12
        %v4431 = vadd.f32 %v4423, 1e-12
        %v4432 = vadd.f32 %v4426, 1e-12
        %v4433 = vadd.f32 %v4429, 1e-12
        %v4434 = vrsqrt.pop %v4430
        %v4435 = vrsqrt.pop %v4431
        %v4436 = vrsqrt.pop %v4432
        %v4437 = vrsqrt.pop %v4433
        %v4438 = vmul.f32 %v3781, %v4434
        %v4439 = vmul.f32 %v3785, %v4435
        %v4440 = vmul.f32 %v3783, %v4436
        %v4441 = vmul.f32 %v3787, %v4437
        %v4442 = vmul.f32 %v4438, %v3873
        %v4443 = vmul.f32 %v4439, %v3873
        %v4444 = vmul.f32 %v4440, %v3873
        %v4445 = vmul.f32 %v4441, %v3873
        %v4446 = vpack.c.bf16 %v4412, %v4412
        %v4447 = vpack.c.bf16 %v4413, %v4413
        %v4448 = vpack.c.bf16 %v4443, %v4442
        %v4449 = vpack.c.bf16 %v4445, %v4444
        %v4451 = vsel %vm1978, %v4446, 0
        %v4454 = vsel %vm1978, %v4448, 0
        %4456 = vmatprep.subr.bf16.mxu0 0
        %4457 = vmatpush1.bf16.xpose.msra.mxu0 %v4454
        %4458 = vmatprep.subr.bf16.mxu0 0
        %4459 = vmatpush1.bf16.xpose.msra.mxu0 %v3892
        %4460 = vmatprep.subr.bf16.mxu0 0
        %4461 = vmatpush1.bf16.xpose.msra.mxu0 %v3892
        %4462 = vmatprep.subr.bf16.mxu0 0
        %4463 = vmatpush1.bf16.xpose.msra.mxu0 %v3892
        %4464 = vmatprep.subr.bf16.mxu0 0
        %4465 = vmatpush1.bf16.xpose.msra.mxu0 %v3892
        %4466 = vmatprep.subr.bf16.mxu0 0
        %4467 = vmatpush1.bf16.xpose.msra.mxu0 %v3892
        %4468 = vmatprep.subr.bf16.mxu0 0
        %4469 = vmatpush1.bf16.xpose.msra.mxu0 %v3892
        %4470 = vmatprep.subr.bf16.mxu0 0
        %4471 = vmatpush1.bf16.xpose.msra.mxu0 %v3892
        %4472 = vmatprep.subr.bf16.mxu0 0
        %4473 = vmatpush1.bf16.xpose.msra.mxu0 0
        %4474 = vmatprep.subr.bf16.mxu0 0
        %4475 = vmatpush1.bf16.xpose.msra.mxu0 0
        %4476 = vmatprep.subr.bf16.mxu0 0
        %4477 = vmatpush1.bf16.xpose.msra.mxu0 0
        %4478 = vmatprep.subr.bf16.mxu0 0
        %4479 = vmatpush1.bf16.xpose.msra.mxu0 0
        %4480 = vmatprep.subr.bf16.mxu0 0
        %4481 = vmatpush1.bf16.xpose.msra.mxu0 0
        %4482 = vmatprep.subr.bf16.mxu0 0
        %4483 = vmatpush1.bf16.xpose.msra.mxu0 0
        %4484 = vmatprep.subr.bf16.mxu0 0
        %4485 = vmatpush1.bf16.xpose.msra.mxu0 0
        %4486 = vmatprep.subr.bf16.mxu0 0
        %4487 = vmatpush1.bf16.xpose.msra.mxu0 0
        %4488 = vmatprep.mubr.bf16.mxu0 0
        %4489 = vmatmul.mubr.bf16.gmra.mrb[0].mxu0 %v4451
        %v4490 = vpop.f32.mrb[0].mxu0
        %v4491 = vadd.f32 0.0, %v4490
        %v4492 = vpop.f32.mrb[0].mxu0
        %v4493 = vpop.f32.mrb[0].mxu0
        %v4494 = vpop.f32.mrb[0].mxu0
        %4495 = vdwg.mxu0
        %v4497 = vsel %vm1978, %v4447, 0
        %v4500 = vsel %vm1978, %v4449, 0
        %4502 = vmatprep.subr.bf16.mxu0 0
        %4503 = vmatpush1.bf16.xpose.msra.mxu0 %v4500
        %4504 = vmatprep.subr.bf16.mxu0 0
        %4505 = vmatpush1.bf16.xpose.msra.mxu0 %v3892
        %4506 = vmatprep.subr.bf16.mxu0 0
        %4507 = vmatpush1.bf16.xpose.msra.mxu0 %v3892
        %4508 = vmatprep.subr.bf16.mxu0 0
        %4509 = vmatpush1.bf16.xpose.msra.mxu0 %v3892
        %4510 = vmatprep.subr.bf16.mxu0 0
        %4511 = vmatpush1.bf16.xpose.msra.mxu0 %v3892
        %4512 = vmatprep.subr.bf16.mxu0 0
        %4513 = vmatpush1.bf16.xpose.msra.mxu0 %v3892
        %4514 = vmatprep.subr.bf16.mxu0 0
        %4515 = vmatpush1.bf16.xpose.msra.mxu0 %v3892
        %4516 = vmatprep.subr.bf16.mxu0 0
        %4517 = vmatpush1.bf16.xpose.msra.mxu0 %v3892
        %4518 = vmatprep.subr.bf16.mxu0 0
        %4519 = vmatpush1.bf16.xpose.msra.mxu0 0
        %4520 = vmatprep.subr.bf16.mxu0 0
        %4521 = vmatpush1.bf16.xpose.msra.mxu0 0
        %4522 = vmatprep.subr.bf16.mxu0 0
        %4523 = vmatpush1.bf16.xpose.msra.mxu0 0
        %4524 = vmatprep.subr.bf16.mxu0 0
        %4525 = vmatpush1.bf16.xpose.msra.mxu0 0
        %4526 = vmatprep.subr.bf16.mxu0 0
        %4527 = vmatpush1.bf16.xpose.msra.mxu0 0
        %4528 = vmatprep.subr.bf16.mxu0 0
        %4529 = vmatpush1.bf16.xpose.msra.mxu0 0
        %4530 = vmatprep.subr.bf16.mxu0 0
        %4531 = vmatpush1.bf16.xpose.msra.mxu0 0
        %4532 = vmatprep.subr.bf16.mxu0 0
        %4533 = vmatpush1.bf16.xpose.msra.mxu0 0
        %4534 = vmatprep.mubr.bf16.mxu0 0
        %4535 = vmatmul.mubr.bf16.gmra.mrb[0].mxu0 %v4497
        %v4536 = vpop.f32.mrb[0].mxu0
        %v4537 = vadd.f32 0.0, %v4536
        %v4538 = vpop.f32.mrb[0].mxu0
        %v4539 = vpop.f32.mrb[0].mxu0
        %v4540 = vpop.f32.mrb[0].mxu0
        %4541 = vdwg.mxu0
        %v4542 = vmul.f32 %v4491, 8.0
        %v4543 = vmul.f32 %v4537, 8.0
        %v4544 = vadd.f32 %v4542, %v3987
        %v4545 = vadd.f32 %v4543, %v3991
        %4546 = vmax.xlane.f32.xlu0 %v4544
        %v4547 = vpop.xlane.xlu0 %4546
        %4548 = vmax.xlane.f32.xlu0 %v4545
        %v4549 = vpop.xlane.xlu0 %4548
        %v4550 = vsub.f32 %v4544, %v4547
        %v4551 = vsub.f32 %v4545, %v4549
        %v4552 = vmul.f32 %v4550, 1.442695
        %v4553 = vpow.pop %v4552
        %v4554 = vmul.f32 %v4551, 1.442695
        %v4555 = vpow.pop %v4554
        %4556 = vadd.xlane.f32.xlu0 %v4553
        %v4557 = vpop.xlane.xlu0 %4556
        %4558 = vadd.xlane.f32.xlu0 %v4555
        %v4559 = vpop.xlane.xlu0 %4558
        %v4560 = vrcp.pop %v4557
        %v4561 = vrcp.pop %v4559
        %v4562 = vmul.f32 %v4553, %v4560
        %v4563 = vmul.f32 %v4555, %v4561
        %v4564 = vpack.c.bf16 %v4562, %v4562
        %v4565 = vpack.c.bf16 %v4563, %v4563
        %v4566 = vpack.c.bf16 %v3816, %v3812
        %v4567 = vpack.c.bf16 %v3818, %v3814
        %4568 = vmatprep.subr.bf16.mxu0 0
        %4569 = vmatpush1.bf16.msra.mxu0 %v4566
        %4570 = vmatprep.subr.bf16.mxu0 0
        %4571 = vmatpush1.bf16.msra.mxu0 %v2174
        %4572 = vmatprep.subr.bf16.mxu0 0
        %4573 = vmatpush1.bf16.msra.mxu0 %v2174
        %4574 = vmatprep.subr.bf16.mxu0 0
        %4575 = vmatpush1.bf16.msra.mxu0 %v2174
        %4576 = vmatprep.subr.bf16.mxu0 0
        %4577 = vmatpush1.bf16.msra.mxu0 %v2174
        %4578 = vmatprep.subr.bf16.mxu0 0
        %4579 = vmatpush1.bf16.msra.mxu0 %v2174
        %4580 = vmatprep.subr.bf16.mxu0 0
        %4581 = vmatpush1.bf16.msra.mxu0 %v2174
        %4582 = vmatprep.subr.bf16.mxu0 0
        %4583 = vmatpush1.bf16.msra.mxu0 %v2174
        %4584 = vmatprep.subr.bf16.mxu0 0
        %4585 = vmatpush1.bf16.msra.mxu0 0
        %4586 = vmatprep.subr.bf16.mxu0 0
        %4587 = vmatpush1.bf16.msra.mxu0 0
        %4588 = vmatprep.subr.bf16.mxu0 0
        %4589 = vmatpush1.bf16.msra.mxu0 0
        %4590 = vmatprep.subr.bf16.mxu0 0
        %4591 = vmatpush1.bf16.msra.mxu0 0
        %4592 = vmatprep.subr.bf16.mxu0 0
        %4593 = vmatpush1.bf16.msra.mxu0 0
        %4594 = vmatprep.subr.bf16.mxu0 0
        %4595 = vmatpush1.bf16.msra.mxu0 0
        %4596 = vmatprep.subr.bf16.mxu0 0
        %4597 = vmatpush1.bf16.msra.mxu0 0
        %4598 = vmatprep.subr.bf16.mxu0 0
        %4599 = vmatpush1.bf16.msra.mxu0 0
        %4600 = vmatprep.mubr.bf16.mxu0 0
        %4601 = vmatmul.mubr.bf16.gmra.mrb[0].mxu0 %v4564
        %v4602 = vpop.f32.mrb[0].mxu0
        %v4603 = vadd.f32 0.0, %v4602
        %v4604 = vpop.f32.mrb[0].mxu0
        %v4605 = vpop.f32.mrb[0].mxu0
        %v4606 = vpop.f32.mrb[0].mxu0
        %4607 = vdwg.mxu0
        %4608 = vmatprep.subr.bf16.mxu0 0
        %4609 = vmatpush1.bf16.msra.mxu0 %v4567
        %4610 = vmatprep.subr.bf16.mxu0 0
        %4611 = vmatpush1.bf16.msra.mxu0 %v2174
        %4612 = vmatprep.subr.bf16.mxu0 0
        %4613 = vmatpush1.bf16.msra.mxu0 %v2174
        %4614 = vmatprep.subr.bf16.mxu0 0
        %4615 = vmatpush1.bf16.msra.mxu0 %v2174
        %4616 = vmatprep.subr.bf16.mxu0 0
        %4617 = vmatpush1.bf16.msra.mxu0 %v2174
        %4618 = vmatprep.subr.bf16.mxu0 0
        %4619 = vmatpush1.bf16.msra.mxu0 %v2174
        %4620 = vmatprep.subr.bf16.mxu0 0
        %4621 = vmatpush1.bf16.msra.mxu0 %v2174
        %4622 = vmatprep.subr.bf16.mxu0 0
        %4623 = vmatpush1.bf16.msra.mxu0 %v2174
        %4624 = vmatprep.subr.bf16.mxu0 0
        %4625 = vmatpush1.bf16.msra.mxu0 0
        %4626 = vmatprep.subr.bf16.mxu0 0
        %4627 = vmatpush1.bf16.msra.mxu0 0
        %4628 = vmatprep.subr.bf16.mxu0 0
        %4629 = vmatpush1.bf16.msra.mxu0 0
        %4630 = vmatprep.subr.bf16.mxu0 0
        %4631 = vmatpush1.bf16.msra.mxu0 0
        %4632 = vmatprep.subr.bf16.mxu0 0
        %4633 = vmatpush1.bf16.msra.mxu0 0
        %4634 = vmatprep.subr.bf16.mxu0 0
        %4635 = vmatpush1.bf16.msra.mxu0 0
        %4636 = vmatprep.subr.bf16.mxu0 0
        %4637 = vmatpush1.bf16.msra.mxu0 0
        %4638 = vmatprep.subr.bf16.mxu0 0
        %4639 = vmatpush1.bf16.msra.mxu0 0
        %4640 = vmatprep.mubr.bf16.mxu0 0
        %4641 = vmatmul.mubr.bf16.gmra.mrb[0].mxu0 %v4565
        %v4642 = vpop.f32.mrb[0].mxu0
        %v4643 = vadd.f32 0.0, %v4642
        %v4644 = vpop.f32.mrb[0].mxu0
        %v4645 = vpop.f32.mrb[0].mxu0
        %v4646 = vpop.f32.mrb[0].mxu0
        %4647 = vdwg.mxu0
        %4650 = vrot.lane.b32.xlu0 %v4398, 64
        %v4651 = vpop.permute.xlu0 %4650
        %4652 = vrot.lane.b32.xlu0 %v4399, 64
        %v4653 = vpop.permute.xlu0 %4652
        %v4656 = vsel %vm1978, %v4651, 0.0
        %4657 = vadd.xlane.f32.xlu0 %v4656
        %v4658 = vpop.xlane.xlu0 %4657
        %v4659 = vsel %vm1978, %v4653, 0.0
        %4660 = vadd.xlane.f32.xlu0 %v4659
        %v4661 = vpop.xlane.xlu0 %4660
        %v4662 = vadd.f32 %v4658, 1e-12
        %v4663 = vadd.f32 %v4661, 1e-12
        %v4664 = vrsqrt.pop %v4662
        %v4665 = vrsqrt.pop %v4663
        %v4666 = vmul.f32 %v3505, %v4664
        %v4667 = vmul.f32 %v3509, %v4665
        %v4668 = vmul.f32 %v4666, %v4119
        %v4669 = vmul.f32 %v4667, %v4119
        %4674 = vrot.lane.b32.xlu0 %v4414, 64
        %v4675 = vpop.permute.xlu0 %4674
        %4676 = vrot.lane.b32.xlu0 %v4415, 64
        %v4677 = vpop.permute.xlu0 %4676
        %4678 = vrot.lane.b32.xlu0 %v4416, 64
        %v4679 = vpop.permute.xlu0 %4678
        %4680 = vrot.lane.b32.xlu0 %v4417, 64
        %v4681 = vpop.permute.xlu0 %4680
        %v4686 = vsel %vm1978, %v4675, 0.0
        %4687 = vadd.xlane.f32.xlu0 %v4686
        %v4688 = vpop.xlane.xlu0 %4687
        %v4689 = vsel %vm1978, %v4677, 0.0
        %4690 = vadd.xlane.f32.xlu0 %v4689
        %v4691 = vpop.xlane.xlu0 %4690
        %v4692 = vsel %vm1978, %v4679, 0.0
        %4693 = vadd.xlane.f32.xlu0 %v4692
        %v4694 = vpop.xlane.xlu0 %4693
        %v4695 = vsel %vm1978, %v4681, 0.0
        %4696 = vadd.xlane.f32.xlu0 %v4695
        %v4697 = vpop.xlane.xlu0 %4696
        %v4698 = vadd.f32 %v4688, 1e-12
        %v4699 = vadd.f32 %v4691, 1e-12
        %v4700 = vadd.f32 %v4694, 1e-12
        %v4701 = vadd.f32 %v4697, 1e-12
        %v4702 = vrsqrt.pop %v4698
        %v4703 = vrsqrt.pop %v4699
        %v4704 = vrsqrt.pop %v4700
        %v4705 = vrsqrt.pop %v4701
        %v4706 = vmul.f32 %v3781, %v4702
        %v4707 = vmul.f32 %v3785, %v4703
        %v4708 = vmul.f32 %v3783, %v4704
        %v4709 = vmul.f32 %v3787, %v4705
        %v4710 = vmul.f32 %v4706, %v4164
        %v4711 = vmul.f32 %v4707, %v4164
        %v4712 = vmul.f32 %v4708, %v4164
        %v4713 = vmul.f32 %v4709, %v4164
        %v4714 = vpack.c.bf16 %v4668, %v4668
        %v4715 = vpack.c.bf16 %v4669, %v4669
        %v4716 = vpack.c.bf16 %v4711, %v4710
        %v4717 = vpack.c.bf16 %v4713, %v4712
        %4719 = vrot.lane.b32.xlu0 %v4714, 64
        %v4720 = vpop.permute.xlu0 %4719
        %4722 = vrot.lane.b32.xlu0 %v4716, 64
        %v4723 = vpop.permute.xlu0 %4722
        %v4725 = vsel %vm1978, %v4720, 0
        %v4728 = vsel %vm1978, %v4723, 0
        %4730 = vmatprep.subr.bf16.mxu0 0
        %4731 = vmatpush1.bf16.xpose.msra.mxu0 %v4728
        %4732 = vmatprep.subr.bf16.mxu0 0
        %4733 = vmatpush1.bf16.xpose.msra.mxu0 %v4192
        %4734 = vmatprep.subr.bf16.mxu0 0
        %4735 = vmatpush1.bf16.xpose.msra.mxu0 %v4192
        %4736 = vmatprep.subr.bf16.mxu0 0
        %4737 = vmatpush1.bf16.xpose.msra.mxu0 %v4192
        %4738 = vmatprep.subr.bf16.mxu0 0
        %4739 = vmatpush1.bf16.xpose.msra.mxu0 %v4192
        %4740 = vmatprep.subr.bf16.mxu0 0
        %4741 = vmatpush1.bf16.xpose.msra.mxu0 %v4192
        %4742 = vmatprep.subr.bf16.mxu0 0
        %4743 = vmatpush1.bf16.xpose.msra.mxu0 %v4192
        %4744 = vmatprep.subr.bf16.mxu0 0
        %4745 = vmatpush1.bf16.xpose.msra.mxu0 %v4192
        %4746 = vmatprep.subr.bf16.mxu0 0
        %4747 = vmatpush1.bf16.xpose.msra.mxu0 0
        %4748 = vmatprep.subr.bf16.mxu0 0
        %4749 = vmatpush1.bf16.xpose.msra.mxu0 0
        %4750 = vmatprep.subr.bf16.mxu0 0
        %4751 = vmatpush1.bf16.xpose.msra.mxu0 0
        %4752 = vmatprep.subr.bf16.mxu0 0
        %4753 = vmatpush1.bf16.xpose.msra.mxu0 0
        %4754 = vmatprep.subr.bf16.mxu0 0
        %4755 = vmatpush1.bf16.xpose.msra.mxu0 0
        %4756 = vmatprep.subr.bf16.mxu0 0
        %4757 = vmatpush1.bf16.xpose.msra.mxu0 0
        %4758 = vmatprep.subr.bf16.mxu0 0
        %4759 = vmatpush1.bf16.xpose.msra.mxu0 0
        %4760 = vmatprep.subr.bf16.mxu0 0
        %4761 = vmatpush1.bf16.xpose.msra.mxu0 0
        %4762 = vmatprep.mubr.bf16.mxu0 0
        %4763 = vmatmul.mubr.bf16.gmra.mrb[0].mxu0 %v4725
        %v4764 = vpop.f32.mrb[0].mxu0
        %v4765 = vadd.f32 0.0, %v4764
        %v4766 = vpop.f32.mrb[0].mxu0
        %v4767 = vpop.f32.mrb[0].mxu0
        %v4768 = vpop.f32.mrb[0].mxu0
        %4769 = vdwg.mxu0
        %4771 = vrot.lane.b32.xlu0 %v4715, 64
        %v4772 = vpop.permute.xlu0 %4771
        %4774 = vrot.lane.b32.xlu0 %v4717, 64
        %v4775 = vpop.permute.xlu0 %4774
        %v4777 = vsel %vm1978, %v4772, 0
        %v4780 = vsel %vm1978, %v4775, 0
        %4782 = vmatprep.subr.bf16.mxu0 0
        %4783 = vmatpush1.bf16.xpose.msra.mxu0 %v4780
        %4784 = vmatprep.subr.bf16.mxu0 0
        %4785 = vmatpush1.bf16.xpose.msra.mxu0 %v4192
        %4786 = vmatprep.subr.bf16.mxu0 0
        %4787 = vmatpush1.bf16.xpose.msra.mxu0 %v4192
        %4788 = vmatprep.subr.bf16.mxu0 0
        %4789 = vmatpush1.bf16.xpose.msra.mxu0 %v4192
        %4790 = vmatprep.subr.bf16.mxu0 0
        %4791 = vmatpush1.bf16.xpose.msra.mxu0 %v4192
        %4792 = vmatprep.subr.bf16.mxu0 0
        %4793 = vmatpush1.bf16.xpose.msra.mxu0 %v4192
        %4794 = vmatprep.subr.bf16.mxu0 0
        %4795 = vmatpush1.bf16.xpose.msra.mxu0 %v4192
        %4796 = vmatprep.subr.bf16.mxu0 0
        %4797 = vmatpush1.bf16.xpose.msra.mxu0 %v4192
        %4798 = vmatprep.subr.bf16.mxu0 0
        %4799 = vmatpush1.bf16.xpose.msra.mxu0 0
        %4800 = vmatprep.subr.bf16.mxu0 0
        %4801 = vmatpush1.bf16.xpose.msra.mxu0 0
        %4802 = vmatprep.subr.bf16.mxu0 0
        %4803 = vmatpush1.bf16.xpose.msra.mxu0 0
        %4804 = vmatprep.subr.bf16.mxu0 0
        %4805 = vmatpush1.bf16.xpose.msra.mxu0 0
        %4806 = vmatprep.subr.bf16.mxu0 0
        %4807 = vmatpush1.bf16.xpose.msra.mxu0 0
        %4808 = vmatprep.subr.bf16.mxu0 0
        %4809 = vmatpush1.bf16.xpose.msra.mxu0 0
        %4810 = vmatprep.subr.bf16.mxu0 0
        %4811 = vmatpush1.bf16.xpose.msra.mxu0 0
        %4812 = vmatprep.subr.bf16.mxu0 0
        %4813 = vmatpush1.bf16.xpose.msra.mxu0 0
        %4814 = vmatprep.mubr.bf16.mxu0 0
        %4815 = vmatmul.mubr.bf16.gmra.mrb[0].mxu0 %v4777
        %v4816 = vpop.f32.mrb[0].mxu0
        %v4817 = vadd.f32 0.0, %v4816
        %v4818 = vpop.f32.mrb[0].mxu0
        %v4819 = vpop.f32.mrb[0].mxu0
        %v4820 = vpop.f32.mrb[0].mxu0
        %4821 = vdwg.mxu0
        %v4822 = vmul.f32 %v4765, 8.0
        %v4823 = vmul.f32 %v4817, 8.0
        %v4824 = vadd.f32 %v4822, %v3987
        %v4825 = vadd.f32 %v4823, %v3991
        %4826 = vmax.xlane.f32.xlu0 %v4824
        %v4827 = vpop.xlane.xlu0 %4826
        %4828 = vmax.xlane.f32.xlu0 %v4825
        %v4829 = vpop.xlane.xlu0 %4828
        %v4830 = vsub.f32 %v4824, %v4827
        %v4831 = vsub.f32 %v4825, %v4829
        %v4832 = vmul.f32 %v4830, 1.442695
        %v4833 = vpow.pop %v4832
        %v4834 = vmul.f32 %v4831, 1.442695
        %v4835 = vpow.pop %v4834
        %4836 = vadd.xlane.f32.xlu0 %v4833
        %v4837 = vpop.xlane.xlu0 %4836
        %4838 = vadd.xlane.f32.xlu0 %v4835
        %v4839 = vpop.xlane.xlu0 %4838
        %v4840 = vrcp.pop %v4837
        %v4841 = vrcp.pop %v4839
        %v4842 = vmul.f32 %v4833, %v4840
        %v4843 = vmul.f32 %v4835, %v4841
        %v4844 = vpack.c.bf16 %v4842, %v4842
        %v4845 = vpack.c.bf16 %v4843, %v4843
        %4847 = vrot.lane.b32.xlu0 %v4566, 64
        %v4848 = vpop.permute.xlu0 %4847
        %4850 = vmatprep.subr.bf16.mxu0 0
        %4851 = vmatpush1.bf16.msra.mxu0 %v4848
        %4852 = vmatprep.subr.bf16.mxu0 0
        %4853 = vmatpush1.bf16.msra.mxu0 %v2483
        %4854 = vmatprep.subr.bf16.mxu0 0
        %4855 = vmatpush1.bf16.msra.mxu0 %v2483
        %4856 = vmatprep.subr.bf16.mxu0 0
        %4857 = vmatpush1.bf16.msra.mxu0 %v2483
        %4858 = vmatprep.subr.bf16.mxu0 0
        %4859 = vmatpush1.bf16.msra.mxu0 %v2483
        %4860 = vmatprep.subr.bf16.mxu0 0
        %4861 = vmatpush1.bf16.msra.mxu0 %v2483
        %4862 = vmatprep.subr.bf16.mxu0 0
        %4863 = vmatpush1.bf16.msra.mxu0 %v2483
        %4864 = vmatprep.subr.bf16.mxu0 0
        %4865 = vmatpush1.bf16.msra.mxu0 %v2483
        %4866 = vmatprep.subr.bf16.mxu0 0
        %4867 = vmatpush1.bf16.msra.mxu0 0
        %4868 = vmatprep.subr.bf16.mxu0 0
        %4869 = vmatpush1.bf16.msra.mxu0 0
        %4870 = vmatprep.subr.bf16.mxu0 0
        %4871 = vmatpush1.bf16.msra.mxu0 0
        %4872 = vmatprep.subr.bf16.mxu0 0
        %4873 = vmatpush1.bf16.msra.mxu0 0
        %4874 = vmatprep.subr.bf16.mxu0 0
        %4875 = vmatpush1.bf16.msra.mxu0 0
        %4876 = vmatprep.subr.bf16.mxu0 0
        %4877 = vmatpush1.bf16.msra.mxu0 0
        %4878 = vmatprep.subr.bf16.mxu0 0
        %4879 = vmatpush1.bf16.msra.mxu0 0
        %4880 = vmatprep.subr.bf16.mxu0 0
        %4881 = vmatpush1.bf16.msra.mxu0 0
        %4882 = vmatprep.mubr.bf16.mxu0 0
        %4883 = vmatmul.mubr.bf16.gmra.mrb[0].mxu0 %v4844
        %v4884 = vpop.f32.mrb[0].mxu0
        %v4885 = vadd.f32 0.0, %v4884
        %v4886 = vpop.f32.mrb[0].mxu0
        %v4887 = vpop.f32.mrb[0].mxu0
        %v4888 = vpop.f32.mrb[0].mxu0
        %4889 = vdwg.mxu0
        %4891 = vrot.lane.b32.xlu0 %v4567, 64
        %v4892 = vpop.permute.xlu0 %4891
        %4894 = vmatprep.subr.bf16.mxu0 0
        %4895 = vmatpush1.bf16.msra.mxu0 %v4892
        %4896 = vmatprep.subr.bf16.mxu0 0
        %4897 = vmatpush1.bf16.msra.mxu0 %v2483
        %4898 = vmatprep.subr.bf16.mxu0 0
        %4899 = vmatpush1.bf16.msra.mxu0 %v2483
        %4900 = vmatprep.subr.bf16.mxu0 0
        %4901 = vmatpush1.bf16.msra.mxu0 %v2483
        %4902 = vmatprep.subr.bf16.mxu0 0
        %4903 = vmatpush1.bf16.msra.mxu0 %v2483
        %4904 = vmatprep.subr.bf16.mxu0 0
        %4905 = vmatpush1.bf16.msra.mxu0 %v2483
        %4906 = vmatprep.subr.bf16.mxu0 0
        %4907 = vmatpush1.bf16.msra.mxu0 %v2483
        %4908 = vmatprep.subr.bf16.mxu0 0
        %4909 = vmatpush1.bf16.msra.mxu0 %v2483
        %4910 = vmatprep.subr.bf16.mxu0 0
        %4911 = vmatpush1.bf16.msra.mxu0 0
        %4912 = vmatprep.subr.bf16.mxu0 0
        %4913 = vmatpush1.bf16.msra.mxu0 0
        %4914 = vmatprep.subr.bf16.mxu0 0
        %4915 = vmatpush1.bf16.msra.mxu0 0
        %4916 = vmatprep.subr.bf16.mxu0 0
        %4917 = vmatpush1.bf16.msra.mxu0 0
        %4918 = vmatprep.subr.bf16.mxu0 0
        %4919 = vmatpush1.bf16.msra.mxu0 0
        %4920 = vmatprep.subr.bf16.mxu0 0
        %4921 = vmatpush1.bf16.msra.mxu0 0
        %4922 = vmatprep.subr.bf16.mxu0 0
        %4923 = vmatpush1.bf16.msra.mxu0 0
        %4924 = vmatprep.subr.bf16.mxu0 0
        %4925 = vmatpush1.bf16.msra.mxu0 0
        %4926 = vmatprep.mubr.bf16.mxu0 0
        %4927 = vmatmul.mubr.bf16.gmra.mrb[0].mxu0 %v4845
        %v4928 = vpop.f32.mrb[0].mxu0
        %v4929 = vadd.f32 0.0, %v4928
        %v4930 = vpop.f32.mrb[0].mxu0
        %v4931 = vpop.f32.mrb[0].mxu0
        %v4932 = vpop.f32.mrb[0].mxu0
        %4933 = vdwg.mxu0
        %4936 = vrot.lane.b32.xlu0 %v4349, 64
        %v4937 = vpop.permute.xlu0 %4936
        %4938 = vrot.lane.b32.xlu0 %v4393, 64
        %v4939 = vpop.permute.xlu0 %4938
        %4944 = vrot.lane.b32.xlu0 %v4885, 64
        %v4945 = vpop.permute.xlu0 %4944
        %4946 = vrot.lane.b32.xlu0 %v4929, 64
        %v4947 = vpop.permute.xlu0 %4946
        %v4950 = vsel %vm1978, %v4053, %v4937
        %v4951 = vsel %vm1978, %v4093, %v4939
        %v4952 = vsel %vm1978, %v4603, %v4945
        %v4953 = vsel %vm1978, %v4643, %v4947
        %v4954 = vpack.c.bf16 %v4951, %v4950
        %v4955 = vpack.c.bf16 %v4953, %v4952
        %v4988 = vunpack.c.l.b16 %v3324
        %v4989 = vunpack.c.l.b16 %v3325
        %v4990 = vunpack.c.l.b16 %v3326
        %v4991 = vunpack.c.l.b16 %v3327
        %v4992 = vunpack.c.l.b16 %v3328
        %v4993 = vunpack.c.l.b16 %v3329
        %v4994 = vunpack.c.l.b16 %v3330
        %v4995 = vunpack.c.l.b16 %v3331
        %v4996 = vunpack.c.l.b16 %v3332
        %v4997 = vunpack.c.l.b16 %v3333
        %v4998 = vunpack.c.l.b16 %v3334
        %v4999 = vunpack.c.l.b16 %v3335
        %v5000 = vunpack.c.l.b16 %v3336
        %v5001 = vunpack.c.l.b16 %v3337
        %v5002 = vunpack.c.l.b16 %v3338
        %v5003 = vunpack.c.l.b16 %v3339
        %v5004 = vunpack.c.l.b16 %v3340
        %v5005 = vunpack.c.l.b16 %v3341
        %v5006 = vunpack.c.l.b16 %v3342
        %v5007 = vunpack.c.l.b16 %v3343
        %v5008 = vunpack.c.l.b16 %v3344
        %v5009 = vunpack.c.l.b16 %v3345
        %v5010 = vunpack.c.l.b16 %v3346
        %v5011 = vunpack.c.l.b16 %v3347
        %v5012 = vunpack.c.l.b16 %v3348
        %v5013 = vunpack.c.l.b16 %v3349
        %v5014 = vunpack.c.l.b16 %v3350
        %v5015 = vunpack.c.l.b16 %v3351
        %v5016 = vunpack.c.l.b16 %v3352
        %v5017 = vunpack.c.l.b16 %v3353
        %v5018 = vunpack.c.l.b16 %v3354
        %v5019 = vunpack.c.l.b16 %v3355
        %v5020 = vpack.c.b16 %v4989, %v4988
        %v5021 = vpack.c.b16 %v4991, %v4990
        %v5022 = vpack.c.b16 %v4993, %v4992
        %v5023 = vpack.c.b16 %v4995, %v4994
        %v5024 = vpack.c.b16 %v4997, %v4996
        %v5025 = vpack.c.b16 %v4999, %v4998
        %v5026 = vpack.c.b16 %v5001, %v5000
        %v5027 = vpack.c.b16 %v5003, %v5002
        %v5028 = vpack.c.b16 %v5005, %v5004
        %v5029 = vpack.c.b16 %v5007, %v5006
        %v5030 = vpack.c.b16 %v5009, %v5008
        %v5031 = vpack.c.b16 %v5011, %v5010
        %v5032 = vpack.c.b16 %v5013, %v5012
        %v5033 = vpack.c.b16 %v5015, %v5014
        %v5034 = vpack.c.b16 %v5017, %v5016
        %v5035 = vpack.c.b16 %v5019, %v5018
        %5052 = vmatprep.subr.bf16.mxu0 0
        %5053 = vmatpush1.bf16.msra.mxu0 %v5020
        %5054 = vmatprep.subr.bf16.mxu0 0
        %5055 = vmatpush1.bf16.msra.mxu0 %v5021
        %5056 = vmatprep.subr.bf16.mxu0 0
        %5057 = vmatpush1.bf16.msra.mxu0 %v5022
        %5058 = vmatprep.subr.bf16.mxu0 0
        %5059 = vmatpush1.bf16.msra.mxu0 %v5023
        %5060 = vmatprep.subr.bf16.mxu0 0
        %5061 = vmatpush1.bf16.msra.mxu0 %v5024
        %5062 = vmatprep.subr.bf16.mxu0 0
        %5063 = vmatpush1.bf16.msra.mxu0 %v5025
        %5064 = vmatprep.subr.bf16.mxu0 0
        %5065 = vmatpush1.bf16.msra.mxu0 %v5026
        %5066 = vmatprep.subr.bf16.mxu0 0
        %5067 = vmatpush1.bf16.msra.mxu0 %v5027
        %5068 = vmatprep.subr.bf16.mxu0 0
        %5069 = vmatpush1.bf16.msra.mxu0 %v5028
        %5070 = vmatprep.subr.bf16.mxu0 0
        %5071 = vmatpush1.bf16.msra.mxu0 %v5029
        %5072 = vmatprep.subr.bf16.mxu0 0
        %5073 = vmatpush1.bf16.msra.mxu0 %v5030
        %5074 = vmatprep.subr.bf16.mxu0 0
        %5075 = vmatpush1.bf16.msra.mxu0 %v5031
        %5076 = vmatprep.subr.bf16.mxu0 0
        %5077 = vmatpush1.bf16.msra.mxu0 %v5032
        %5078 = vmatprep.subr.bf16.mxu0 0
        %5079 = vmatpush1.bf16.msra.mxu0 %v5033
        %5080 = vmatprep.subr.bf16.mxu0 0
        %5081 = vmatpush1.bf16.msra.mxu0 %v5034
        %5082 = vmatprep.subr.bf16.mxu0 0
        %5083 = vmatpush1.bf16.msra.mxu0 %v5035
        %5084 = vmatprep.mubr.bf16.mxu0 %v4955
        %5085 = vmatmul.mubr.bf16.gmra.mrb[0].mxu0 %v4954
        %v5086 = vpop.f32.mrb[0].mxu0
        %v5087 = vadd.f32 0.0, %v5086
        %v5088 = vpop.f32.mrb[0].mxu0
        %v5089 = vpop.f32.mrb[0].mxu0
        %v5090 = vadd.f32 0.0, %v5089
        %v5091 = vpop.f32.mrb[0].mxu0
        %5092 = vdwg.mxu0
        %v5093 = vadd.f32 %v3265, %v5087
        %v5094 = vadd.f32 %v3266, %v5090
        %v5095 = vld [vmem:[%s1410] sm:$0x1]
        %v5096 = vld [vmem:[%s1215] sm:$0xff]
        %v5097 = vld [vmem:[%s1215 + $0x8] sm:$0xff]
        %v5098 = vld [vmem:[%s1215 + $0x10] sm:$0xff]
        %v5099 = vld [vmem:[%s1215 + $0x18] sm:$0xff]
        %v5100 = vld [vmem:[%s1215 + $0x20] sm:$0xff]
        %v5101 = vld [vmem:[%s1215 + $0x28] sm:$0xff]
        %v5102 = vld [vmem:[%s1215 + $0x30] sm:$0xff]
        %v5103 = vld [vmem:[%s1215 + $0x38] sm:$0xff]
        %v5104 = vld [vmem:[%s1215 + $0x40] sm:$0xff]
        %v5105 = vld [vmem:[%s1215 + $0x48] sm:$0xff]
        %v5106 = vld [vmem:[%s1215 + $0x50] sm:$0xff]
        %v5107 = vld [vmem:[%s1215 + $0x58] sm:$0xff]
        %v5108 = vld [vmem:[%s1215 + $0x60] sm:$0xff]
        %v5109 = vld [vmem:[%s1215 + $0x68] sm:$0xff]
        %v5110 = vld [vmem:[%s1215 + $0x70] sm:$0xff]
        %v5111 = vld [vmem:[%s1215 + $0x78] sm:$0xff]
        %v5112 = vld [vmem:[%s1215 + $0x80] sm:$0xff]
        %v5113 = vld [vmem:[%s1215 + $0x88] sm:$0xff]
        %v5114 = vld [vmem:[%s1215 + $0x90] sm:$0xff]
        %v5115 = vld [vmem:[%s1215 + $0x98] sm:$0xff]
        %v5116 = vld [vmem:[%s1215 + $0xa0] sm:$0xff]
        %v5117 = vld [vmem:[%s1215 + $0xa8] sm:$0xff]
        %v5118 = vld [vmem:[%s1215 + $0xb0] sm:$0xff]
        %v5119 = vld [vmem:[%s1215 + $0xb8] sm:$0xff]
        %v5120 = vld [vmem:[%s1215 + $0xc0] sm:$0xff]
        %v5121 = vld [vmem:[%s1215 + $0xc8] sm:$0xff]
        %v5122 = vld [vmem:[%s1215 + $0xd0] sm:$0xff]
        %v5123 = vld [vmem:[%s1215 + $0xd8] sm:$0xff]
        %v5124 = vld [vmem:[%s1215 + $0xe0] sm:$0xff]
        %v5125 = vld [vmem:[%s1215 + $0xe8] sm:$0xff]
        %v5126 = vld [vmem:[%s1215 + $0xf0] sm:$0xff]
        %v5127 = vld [vmem:[%s1215 + $0xf8] sm:$0xff]
        %v5128 = vld [vmem:[%s1414] sm:$0x3]
        %v5129 = vld [vmem:[%s1224] sm:$0xf]
        %v5130 = vld [vmem:[%s1224 + $0x4] sm:$0xf]
        %v5131 = vld [vmem:[%s1224 + $0x8] sm:$0xf]
        %v5132 = vld [vmem:[%s1224 + $0xc] sm:$0xf]
        %v5133 = vld [vmem:[%s1224 + $0x10] sm:$0xf]
        %v5134 = vld [vmem:[%s1224 + $0x14] sm:$0xf]
        %v5135 = vld [vmem:[%s1224 + $0x18] sm:$0xf]
        %v5136 = vld [vmem:[%s1224 + $0x1c] sm:$0xf]
        %v5137 = vld [vmem:[%s1224 + $0x20] sm:$0xf]
        %v5138 = vld [vmem:[%s1224 + $0x24] sm:$0xf]
        %v5139 = vld [vmem:[%s1224 + $0x28] sm:$0xf]
        %v5140 = vld [vmem:[%s1224 + $0x2c] sm:$0xf]
        %v5141 = vld [vmem:[%s1224 + $0x30] sm:$0xf]
        %v5142 = vld [vmem:[%s1224 + $0x34] sm:$0xf]
        %v5143 = vld [vmem:[%s1224 + $0x38] sm:$0xf]
        %v5144 = vld [vmem:[%s1224 + $0x3c] sm:$0xf]
        %v5145 = vld [vmem:[%s1224 + $0x40] sm:$0xf]
        %v5146 = vld [vmem:[%s1224 + $0x44] sm:$0xf]
        %v5147 = vld [vmem:[%s1224 + $0x48] sm:$0xf]
        %v5148 = vld [vmem:[%s1224 + $0x4c] sm:$0xf]
        %v5149 = vld [vmem:[%s1224 + $0x50] sm:$0xf]
        %v5150 = vld [vmem:[%s1224 + $0x54] sm:$0xf]
        %v5151 = vld [vmem:[%s1224 + $0x58] sm:$0xf]
        %v5152 = vld [vmem:[%s1224 + $0x5c] sm:$0xf]
        %v5153 = vld [vmem:[%s1224 + $0x60] sm:$0xf]
        %v5154 = vld [vmem:[%s1224 + $0x64] sm:$0xf]
        %v5155 = vld [vmem:[%s1224 + $0x68] sm:$0xf]
        %v5156 = vld [vmem:[%s1224 + $0x6c] sm:$0xf]
        %v5157 = vld [vmem:[%s1224 + $0x70] sm:$0xf]
        %v5158 = vld [vmem:[%s1224 + $0x74] sm:$0xf]
        %v5159 = vld [vmem:[%s1224 + $0x78] sm:$0xf]
        %v5160 = vld [vmem:[%s1224 + $0x7c] sm:$0xf]
        %5161 = vadd.xlane.f32.xlu0 %v5093
        %v5162 = vpop.xlane.xlu0 %5161
        %5163 = vadd.xlane.f32.xlu0 %v5094
        %v5164 = vpop.xlane.xlu0 %5163
        %v5165 = vmul.f32 %v5162, %v1516
        %v5166 = vmul.f32 %v5164, %v1516
        %v5167 = vsub.f32 %v5093, %v5165
        %v5168 = vsub.f32 %v5094, %v5166
        %v5169 = vmul.f32 %v5167, %v5167
        %v5170 = vmul.f32 %v5168, %v5168
        %5171 = vadd.xlane.f32.xlu0 %v5169
        %v5172 = vpop.xlane.xlu0 %5171
        %5173 = vadd.xlane.f32.xlu0 %v5170
        %v5174 = vpop.xlane.xlu0 %5173
        %v5175 = vmul.f32 %v5172, %v1516
        %v5176 = vmul.f32 %v5174, %v1516
        %v5177 = vadd.f32 %v5175, 1e-05
        %v5178 = vadd.f32 %v5176, 1e-05
        %v5179 = vrsqrt.pop %v5177
        %v5180 = vrsqrt.pop %v5178
        %v5181 = vmul.f32 %v5167, %v5179
        %v5182 = vmul.f32 %v5168, %v5180
        %v5184 = vlaneseq
        %v5185 = vshrl.u32 %v5184, 7
        %v5186 = vsub.s32 0, %v5185
        %v5187 = vrot.slane %v5095, %v5186
        %v5189 = vmul.f32 %v5181, %v5187
        %v5190 = vmul.f32 %v5182, %v5187
        %v5191 = vpack.c.bf16 %v5190, %v5189
        %v5224 = vunpack.c.l.b16 %v5096
        %v5225 = vunpack.c.h.b16 %v5096
        %v5226 = vunpack.c.l.b16 %v5097
        %v5227 = vunpack.c.h.b16 %v5097
        %v5228 = vunpack.c.l.b16 %v5098
        %v5229 = vunpack.c.h.b16 %v5098
        %v5230 = vunpack.c.l.b16 %v5099
        %v5231 = vunpack.c.h.b16 %v5099
        %v5232 = vunpack.c.l.b16 %v5100
        %v5233 = vunpack.c.h.b16 %v5100
        %v5234 = vunpack.c.l.b16 %v5101
        %v5235 = vunpack.c.h.b16 %v5101
        %v5236 = vunpack.c.l.b16 %v5102
        %v5237 = vunpack.c.h.b16 %v5102
        %v5238 = vunpack.c.l.b16 %v5103
        %v5239 = vunpack.c.h.b16 %v5103
        %v5240 = vunpack.c.l.b16 %v5104
        %v5241 = vunpack.c.h.b16 %v5104
        %v5242 = vunpack.c.l.b16 %v5105
        %v5243 = vunpack.c.h.b16 %v5105
        %v5244 = vunpack.c.l.b16 %v5106
        %v5245 = vunpack.c.h.b16 %v5106
        %v5246 = vunpack.c.l.b16 %v5107
        %v5247 = vunpack.c.h.b16 %v5107
        %v5248 = vunpack.c.l.b16 %v5108
        %v5249 = vunpack.c.h.b16 %v5108
        %v5250 = vunpack.c.l.b16 %v5109
        %v5251 = vunpack.c.h.b16 %v5109
        %v5252 = vunpack.c.l.b16 %v5110
        %v5253 = vunpack.c.h.b16 %v5110
        %v5254 = vunpack.c.l.b16 %v5111
        %v5255 = vunpack.c.h.b16 %v5111
        %v5256 = vunpack.c.l.b16 %v5112
        %v5257 = vunpack.c.h.b16 %v5112
        %v5258 = vunpack.c.l.b16 %v5113
        %v5259 = vunpack.c.h.b16 %v5113
        %v5260 = vunpack.c.l.b16 %v5114
        %v5261 = vunpack.c.h.b16 %v5114
        %v5262 = vunpack.c.l.b16 %v5115
        %v5263 = vunpack.c.h.b16 %v5115
        %v5264 = vunpack.c.l.b16 %v5116
        %v5265 = vunpack.c.h.b16 %v5116
        %v5266 = vunpack.c.l.b16 %v5117
        %v5267 = vunpack.c.h.b16 %v5117
        %v5268 = vunpack.c.l.b16 %v5118
        %v5269 = vunpack.c.h.b16 %v5118
        %v5270 = vunpack.c.l.b16 %v5119
        %v5271 = vunpack.c.h.b16 %v5119
        %v5272 = vunpack.c.l.b16 %v5120
        %v5273 = vunpack.c.h.b16 %v5120
        %v5274 = vunpack.c.l.b16 %v5121
        %v5275 = vunpack.c.h.b16 %v5121
        %v5276 = vunpack.c.l.b16 %v5122
        %v5277 = vunpack.c.h.b16 %v5122
        %v5278 = vunpack.c.l.b16 %v5123
        %v5279 = vunpack.c.h.b16 %v5123
        %v5280 = vunpack.c.l.b16 %v5124
        %v5281 = vunpack.c.h.b16 %v5124
        %v5282 = vunpack.c.l.b16 %v5125
        %v5283 = vunpack.c.h.b16 %v5125
        %v5284 = vunpack.c.l.b16 %v5126
        %v5285 = vunpack.c.h.b16 %v5126
        %v5286 = vunpack.c.l.b16 %v5127
        %v5287 = vunpack.c.h.b16 %v5127
        %v5288 = vpack.c.b16 %v5228, %v5224
        %v5289 = vpack.c.b16 %v5229, %v5225
        %v5290 = vpack.c.b16 %v5230, %v5226
        %v5291 = vpack.c.b16 %v5231, %v5227
        %v5292 = vpack.c.b16 %v5236, %v5232
        %v5293 = vpack.c.b16 %v5237, %v5233
        %v5294 = vpack.c.b16 %v5238, %v5234
        %v5295 = vpack.c.b16 %v5239, %v5235
        %v5296 = vpack.c.b16 %v5244, %v5240
        %v5297 = vpack.c.b16 %v5245, %v5241
        %v5298 = vpack.c.b16 %v5246, %v5242
        %v5299 = vpack.c.b16 %v5247, %v5243
        %v5300 = vpack.c.b16 %v5252, %v5248
        %v5301 = vpack.c.b16 %v5253, %v5249
        %v5302 = vpack.c.b16 %v5254, %v5250
        %v5303 = vpack.c.b16 %v5255, %v5251
        %v5304 = vpack.c.b16 %v5260, %v5256
        %v5305 = vpack.c.b16 %v5261, %v5257
        %v5306 = vpack.c.b16 %v5262, %v5258
        %v5307 = vpack.c.b16 %v5263, %v5259
        %v5308 = vpack.c.b16 %v5268, %v5264
        %v5309 = vpack.c.b16 %v5269, %v5265
        %v5310 = vpack.c.b16 %v5270, %v5266
        %v5311 = vpack.c.b16 %v5271, %v5267
        %v5312 = vpack.c.b16 %v5276, %v5272
        %v5313 = vpack.c.b16 %v5277, %v5273
        %v5314 = vpack.c.b16 %v5278, %v5274
        %v5315 = vpack.c.b16 %v5279, %v5275
        %v5316 = vpack.c.b16 %v5284, %v5280
        %v5317 = vpack.c.b16 %v5285, %v5281
        %v5318 = vpack.c.b16 %v5286, %v5282
        %v5319 = vpack.c.b16 %v5287, %v5283
        %5352 = vmatprep.subr.bf16.mxu0 %v5289
        %5353 = vmatpush1.bf16.msra.mxu0 %v5288
        %5354 = vmatprep.subr.bf16.mxu0 %v5293
        %5355 = vmatpush1.bf16.msra.mxu0 %v5292
        %5356 = vmatprep.subr.bf16.mxu0 %v5297
        %5357 = vmatpush1.bf16.msra.mxu0 %v5296
        %5358 = vmatprep.subr.bf16.mxu0 %v5301
        %5359 = vmatpush1.bf16.msra.mxu0 %v5300
        %5360 = vmatprep.subr.bf16.mxu0 %v5305
        %5361 = vmatpush1.bf16.msra.mxu0 %v5304
        %5362 = vmatprep.subr.bf16.mxu0 %v5309
        %5363 = vmatpush1.bf16.msra.mxu0 %v5308
        %5364 = vmatprep.subr.bf16.mxu0 %v5313
        %5365 = vmatpush1.bf16.msra.mxu0 %v5312
        %5366 = vmatprep.subr.bf16.mxu0 %v5317
        %5367 = vmatpush1.bf16.msra.mxu0 %v5316
        %5368 = vmatprep.subr.bf16.mxu0 0
        %5369 = vmatpush1.bf16.msra.mxu0 0
        %5370 = vmatprep.subr.bf16.mxu0 0
        %5371 = vmatpush1.bf16.msra.mxu0 0
        %5372 = vmatprep.subr.bf16.mxu0 0
        %5373 = vmatpush1.bf16.msra.mxu0 0
        %5374 = vmatprep.subr.bf16.mxu0 0
        %5375 = vmatpush1.bf16.msra.mxu0 0
        %5376 = vmatprep.subr.bf16.mxu0 0
        %5377 = vmatpush1.bf16.msra.mxu0 0
        %5378 = vmatprep.subr.bf16.mxu0 0
        %5379 = vmatpush1.bf16.msra.mxu0 0
        %5380 = vmatprep.subr.bf16.mxu0 0
        %5381 = vmatpush1.bf16.msra.mxu0 0
        %5382 = vmatprep.subr.bf16.mxu0 0
        %5383 = vmatpush1.bf16.msra.mxu0 0
        %5384 = vmatprep.mubr.bf16.mxu0 0
        %5385 = vmatmul.mubr.bf16.gmra.mrb[0].mxu0 %v5191
        %v5386 = vpop.f32.mrb[0].mxu0
        %v5387 = vadd.f32 0.0, %v5386
        %v5388 = vpop.f32.mrb[0].mxu0
        %v5389 = vadd.f32 0.0, %v5388
        %v5390 = vpop.f32.mrb[0].mxu0
        %v5391 = vadd.f32 0.0, %v5390
        %v5392 = vpop.f32.mrb[0].mxu0
        %v5393 = vadd.f32 0.0, %v5392
        %5394 = vdwg.mxu0
        %5395 = vmatprep.subr.bf16.mxu0 %v5291
        %5396 = vmatpush1.bf16.msra.mxu0 %v5290
        %5397 = vmatprep.subr.bf16.mxu0 %v5295
        %5398 = vmatpush1.bf16.msra.mxu0 %v5294
        %5399 = vmatprep.subr.bf16.mxu0 %v5299
        %5400 = vmatpush1.bf16.msra.mxu0 %v5298
        %5401 = vmatprep.subr.bf16.mxu0 %v5303
        %5402 = vmatpush1.bf16.msra.mxu0 %v5302
        %5403 = vmatprep.subr.bf16.mxu0 %v5307
        %5404 = vmatpush1.bf16.msra.mxu0 %v5306
        %5405 = vmatprep.subr.bf16.mxu0 %v5311
        %5406 = vmatpush1.bf16.msra.mxu0 %v5310
        %5407 = vmatprep.subr.bf16.mxu0 %v5315
        %5408 = vmatpush1.bf16.msra.mxu0 %v5314
        %5409 = vmatprep.subr.bf16.mxu0 %v5319
        %5410 = vmatpush1.bf16.msra.mxu0 %v5318
        %5411 = vmatprep.subr.bf16.mxu0 0
        %5412 = vmatpush1.bf16.msra.mxu0 0
        %5413 = vmatprep.subr.bf16.mxu0 0
        %5414 = vmatpush1.bf16.msra.mxu0 0
        %5415 = vmatprep.subr.bf16.mxu0 0
        %5416 = vmatpush1.bf16.msra.mxu0 0
        %5417 = vmatprep.subr.bf16.mxu0 0
        %5418 = vmatpush1.bf16.msra.mxu0 0
        %5419 = vmatprep.subr.bf16.mxu0 0
        %5420 = vmatpush1.bf16.msra.mxu0 0
        %5421 = vmatprep.subr.bf16.mxu0 0
        %5422 = vmatpush1.bf16.msra.mxu0 0
        %5423 = vmatprep.subr.bf16.mxu0 0
        %5424 = vmatpush1.bf16.msra.mxu0 0
        %5425 = vmatprep.subr.bf16.mxu0 0
        %5426 = vmatpush1.bf16.msra.mxu0 0
        %5427 = vmatprep.mubr.bf16.mxu0 0
        %5428 = vmatmul.mubr.bf16.gmra.mrb[0].mxu0 %v5191
        %v5429 = vpop.f32.mrb[0].mxu0
        %v5430 = vadd.f32 0.0, %v5429
        %v5431 = vpop.f32.mrb[0].mxu0
        %v5432 = vadd.f32 0.0, %v5431
        %v5433 = vpop.f32.mrb[0].mxu0
        %v5434 = vadd.f32 0.0, %v5433
        %v5435 = vpop.f32.mrb[0].mxu0
        %v5436 = vadd.f32 0.0, %v5435
        %5437 = vdwg.mxu0
        %v5438 = vmul.f32 %v5387, 0.5
        %v5439 = vmul.f32 %v5389, 0.5
        %v5440 = vmul.f32 %v5391, 0.5
        %v5441 = vmul.f32 %v5393, 0.5
        %v5442 = vmul.f32 %v5387, 0.70710677
        %v5443 = vmul.f32 %v5389, 0.70710677
        %v5444 = vmul.f32 %v5391, 0.70710677
        %v5445 = vmul.f32 %v5393, 0.70710677
        %v5446 = verf.f32.pop %v5442
        %v5447 = verf.f32.pop %v5443
        %v5448 = verf.f32.pop %v5444
        %v5449 = verf.f32.pop %v5445
        %v5450 = vadd.f32 %v5446, 1.0
        %v5451 = vadd.f32 %v5447, 1.0
        %v5452 = vadd.f32 %v5448, 1.0
        %v5453 = vadd.f32 %v5449, 1.0
        %v5454 = vmul.f32 %v5438, %v5450
        %v5455 = vmul.f32 %v5439, %v5451
        %v5456 = vmul.f32 %v5440, %v5452
        %v5457 = vmul.f32 %v5441, %v5453
        %v5458 = vmul.f32 %v5430, %v5454
        %v5459 = vmul.f32 %v5432, %v5455
        %v5460 = vmul.f32 %v5434, %v5456
        %v5461 = vmul.f32 %v5436, %v5457
        %v5462 = vadd.f32 %v5458, %v5459
        %5463 = vadd.xlane.f32.xlu0 %v5462
        %v5464 = vpop.xlane.xlu0 %5463
        %v5465 = vadd.f32 %v5460, %v5461
        %5466 = vadd.xlane.f32.xlu0 %v5465
        %v5467 = vpop.xlane.xlu0 %5466
        %v5468 = vrcp.pop 256.0
        %v5469 = vmul.f32 %v5464, %v5468
        %v5470 = vmul.f32 %v5467, %v5468
        %v5471 = vsub.f32 %v5458, %v5469
        %v5472 = vsub.f32 %v5459, %v5469
        %v5473 = vsub.f32 %v5460, %v5470
        %v5474 = vsub.f32 %v5461, %v5470
        %v5475 = vmul.f32 %v5471, %v5471
        %v5476 = vmul.f32 %v5472, %v5472
        %v5477 = vmul.f32 %v5473, %v5473
        %v5478 = vmul.f32 %v5474, %v5474
        %v5479 = vadd.f32 %v5475, %v5476
        %5480 = vadd.xlane.f32.xlu0 %v5479
        %v5481 = vpop.xlane.xlu0 %5480
        %v5482 = vadd.f32 %v5477, %v5478
        %5483 = vadd.xlane.f32.xlu0 %v5482
        %v5484 = vpop.xlane.xlu0 %5483
        %v5485 = vmul.f32 %v5481, %v5468
        %v5486 = vmul.f32 %v5484, %v5468
        %v5487 = vadd.f32 %v5485, 1e-05
        %v5488 = vadd.f32 %v5486, 1e-05
        %v5489 = vrsqrt.pop %v5487
        %v5490 = vrsqrt.pop %v5488
        %v5491 = vmul.f32 %v5471, %v5489
        %v5492 = vmul.f32 %v5472, %v5489
        %v5493 = vmul.f32 %v5473, %v5490
        %v5494 = vmul.f32 %v5474, %v5490
        %v5496 = vlaneseq
        %v5497 = vshrl.u32 %v5496, 7
        %v5498 = vsub.s32 0, %v5497
        %v5499 = vrot.slane %v5128, %v5498
        %v5500 = vlaneseq
        %v5501 = vshrl.u32 %v5500, 7
        %v5502 = vsub.s32 1, %v5501
        %v5503 = vrot.slane %v5128, %v5502
        %v5506 = vmul.f32 %v5491, %v5499
        %v5507 = vmul.f32 %v5492, %v5503
        %v5508 = vmul.f32 %v5493, %v5499
        %v5509 = vmul.f32 %v5494, %v5503
        %v5510 = vpack.c.bf16 %v5508, %v5506
        %v5511 = vpack.c.bf16 %v5509, %v5507
        %v5544 = vunpack.c.l.b16 %v5129
        %v5545 = vunpack.c.l.b16 %v5130
        %v5546 = vunpack.c.l.b16 %v5131
        %v5547 = vunpack.c.l.b16 %v5132
        %v5548 = vunpack.c.l.b16 %v5133
        %v5549 = vunpack.c.l.b16 %v5134
        %v5550 = vunpack.c.l.b16 %v5135
        %v5551 = vunpack.c.l.b16 %v5136
        %v5552 = vunpack.c.l.b16 %v5137
        %v5553 = vunpack.c.l.b16 %v5138
        %v5554 = vunpack.c.l.b16 %v5139
        %v5555 = vunpack.c.l.b16 %v5140
        %v5556 = vunpack.c.l.b16 %v5141
        %v5557 = vunpack.c.l.b16 %v5142
        %v5558 = vunpack.c.l.b16 %v5143
        %v5559 = vunpack.c.l.b16 %v5144
        %v5560 = vunpack.c.l.b16 %v5145
        %v5561 = vunpack.c.l.b16 %v5146
        %v5562 = vunpack.c.l.b16 %v5147
        %v5563 = vunpack.c.l.b16 %v5148
        %v5564 = vunpack.c.l.b16 %v5149
        %v5565 = vunpack.c.l.b16 %v5150
        %v5566 = vunpack.c.l.b16 %v5151
        %v5567 = vunpack.c.l.b16 %v5152
        %v5568 = vunpack.c.l.b16 %v5153
        %v5569 = vunpack.c.l.b16 %v5154
        %v5570 = vunpack.c.l.b16 %v5155
        %v5571 = vunpack.c.l.b16 %v5156
        %v5572 = vunpack.c.l.b16 %v5157
        %v5573 = vunpack.c.l.b16 %v5158
        %v5574 = vunpack.c.l.b16 %v5159
        %v5575 = vunpack.c.l.b16 %v5160
        %v5576 = vpack.c.b16 %v5545, %v5544
        %v5577 = vpack.c.b16 %v5547, %v5546
        %v5578 = vpack.c.b16 %v5549, %v5548
        %v5579 = vpack.c.b16 %v5551, %v5550
        %v5580 = vpack.c.b16 %v5553, %v5552
        %v5581 = vpack.c.b16 %v5555, %v5554
        %v5582 = vpack.c.b16 %v5557, %v5556
        %v5583 = vpack.c.b16 %v5559, %v5558
        %v5584 = vpack.c.b16 %v5561, %v5560
        %v5585 = vpack.c.b16 %v5563, %v5562
        %v5586 = vpack.c.b16 %v5565, %v5564
        %v5587 = vpack.c.b16 %v5567, %v5566
        %v5588 = vpack.c.b16 %v5569, %v5568
        %v5589 = vpack.c.b16 %v5571, %v5570
        %v5590 = vpack.c.b16 %v5573, %v5572
        %v5591 = vpack.c.b16 %v5575, %v5574
        %5608 = vmatprep.subr.bf16.mxu0 0
        %5609 = vmatpush1.bf16.msra.mxu0 %v5576
        %5610 = vmatprep.subr.bf16.mxu0 0
        %5611 = vmatpush1.bf16.msra.mxu0 %v5577
        %5612 = vmatprep.subr.bf16.mxu0 0
        %5613 = vmatpush1.bf16.msra.mxu0 %v5578
        %5614 = vmatprep.subr.bf16.mxu0 0
        %5615 = vmatpush1.bf16.msra.mxu0 %v5579
        %5616 = vmatprep.subr.bf16.mxu0 0
        %5617 = vmatpush1.bf16.msra.mxu0 %v5580
        %5618 = vmatprep.subr.bf16.mxu0 0
        %5619 = vmatpush1.bf16.msra.mxu0 %v5581
        %5620 = vmatprep.subr.bf16.mxu0 0
        %5621 = vmatpush1.bf16.msra.mxu0 %v5582
        %5622 = vmatprep.subr.bf16.mxu0 0
        %5623 = vmatpush1.bf16.msra.mxu0 %v5583
        %5624 = vmatprep.subr.bf16.mxu0 0
        %5625 = vmatpush1.bf16.msra.mxu0 %v5584
        %5626 = vmatprep.subr.bf16.mxu0 0
        %5627 = vmatpush1.bf16.msra.mxu0 %v5585
        %5628 = vmatprep.subr.bf16.mxu0 0
        %5629 = vmatpush1.bf16.msra.mxu0 %v5586
        %5630 = vmatprep.subr.bf16.mxu0 0
        %5631 = vmatpush1.bf16.msra.mxu0 %v5587
        %5632 = vmatprep.subr.bf16.mxu0 0
        %5633 = vmatpush1.bf16.msra.mxu0 %v5588
        %5634 = vmatprep.subr.bf16.mxu0 0
        %5635 = vmatpush1.bf16.msra.mxu0 %v5589
        %5636 = vmatprep.subr.bf16.mxu0 0
        %5637 = vmatpush1.bf16.msra.mxu0 %v5590
        %5638 = vmatprep.subr.bf16.mxu0 0
        %5639 = vmatpush1.bf16.msra.mxu0 %v5591
        %5640 = vmatprep.mubr.bf16.mxu0 %v5511
        %5641 = vmatmul.mubr.bf16.gmra.mrb[0].mxu0 %v5510
        %v5642 = vpop.f32.mrb[0].mxu0
        %v5643 = vadd.f32 0.0, %v5642
        %v5644 = vpop.f32.mrb[0].mxu0
        %v5645 = vpop.f32.mrb[0].mxu0
        %v5646 = vadd.f32 0.0, %v5645
        %v5647 = vpop.f32.mrb[0].mxu0
        %5648 = vdwg.mxu0
        %v5649 = vadd.f32 %v5093, %v5643
        %v5650 = vadd.f32 %v5094, %v5646
        %5651 = vst [vmem:[#allocation2] sm:$0xff] %v5649
        %5652 = vst [vmem:[#allocation2 + $0x8] sm:$0xff] %v5650
        %p5653 = scmp.eq.s32.totalorder %s59, 1
        // Predicated region
        $region189: #{tpu_custom_call.1} parent=127 // pred_check
          %p5654 = pneg %p5653
        $region190: #{tpu_custom_call.1} parent=127 // pred_check_branch
          %5656 = sbr.rel (%p5654) target = $region192
        $region191: #{tpu_custom_call.1} parent=127 // pred_region
          %v5657 = vld [vmem:[%s26] sm:$0x1]
          %5658 = vadd.xlane.f32.xlu0 %v5649
          %v5659 = vpop.xlane.xlu0 %5658
          %5660 = vadd.xlane.f32.xlu0 %v5650
          %v5661 = vpop.xlane.xlu0 %5660
          %v5662 = vmul.f32 %v5659, %v1516
          %v5663 = vmul.f32 %v5661, %v1516
          %v5664 = vsub.f32 %v5649, %v5662
          %v5665 = vsub.f32 %v5650, %v5663
          %v5666 = vmul.f32 %v5664, %v5664
          %v5667 = vmul.f32 %v5665, %v5665
          %5668 = vadd.xlane.f32.xlu0 %v5666
          %v5669 = vpop.xlane.xlu0 %5668
          %5670 = vadd.xlane.f32.xlu0 %v5667
          %v5671 = vpop.xlane.xlu0 %5670
          %v5672 = vmul.f32 %v5669, %v1516
          %v5673 = vmul.f32 %v5671, %v1516
          %v5674 = vadd.f32 %v5672, 1e-05
          %v5675 = vadd.f32 %v5673, 1e-05
          %v5676 = vrsqrt.pop %v5674
          %v5677 = vrsqrt.pop %v5675
          %v5678 = vmul.f32 %v5664, %v5676
          %v5679 = vmul.f32 %v5665, %v5677
          %v5681 = vlaneseq
          %v5682 = vshrl.u32 %v5681, 7
          %v5683 = vsub.s32 0, %v5682
          %v5684 = vrot.slane %v5657, %v5683
          %v5686 = vmul.f32 %v5678, %v5684
          %v5687 = vmul.f32 %v5679, %v5684
          %5688 = vst [vmem:[#allocation26] sm:$0xff] %v5686
          %5689 = vst [vmem:[#allocation26 + $0x8] sm:$0xff] %v5687
        $region192: #{tpu_custom_call.1} parent=127 // pred_fallthru
          _
        // Predicated region
        $region193: #{tpu_custom_call.1} parent=127 // pred_check
          %p5690 = pneg %p749
        $region194: #{tpu_custom_call.1} parent=127 // pred_check_branch
          %5692 = sbr.rel (%p5690) target = $region196
        $region195: #{tpu_custom_call.1} parent=127 // pred_region
          %s5694 = ssub.s32 256, 256
          %5695 = vsyncadd [#allocation5], %s5694
          %s5696 = sshll.u32 [#allocation26], 4
          %s5697 = int_to_ptr.vmem [resolvable:$true] %s5696
          %5702 = dma.vmem_to_hbm [thread:$0]  %s5697, 256, %s27, [#allocation5], 128, 128, 8
        $region196: #{tpu_custom_call.1} parent=127 // pred_fallthru
          _
        // Predicated region
        $region197: #{tpu_custom_call.1} parent=127 // pred_check
          %p5703 = pneg %p749
        $region198: #{tpu_custom_call.1} parent=127 // pred_check_branch
          %5705 = sbr.rel (%p5703) target = $region200
        $region199: #{tpu_custom_call.1} parent=127 // pred_region
          %5706 = dma.done [#allocation5], 256
        $region200: #{tpu_custom_call.1} parent=127 // pred_fallthru
          _
      $region128: #{tpu_custom_call.1} parent=5 // pred_fallthru
        _
      %p5707 = scmp.le.s32.totalorder 2, %s54
      // Predicated region
      $region201: #{tpu_custom_call.1} parent=5 // pred_check
        %p5708 = pneg %p5707
      $region202: #{tpu_custom_call.1} parent=5 // pred_check_branch
        %5710 = sbr.rel (%p5708) target = $region204
      $region203: #{tpu_custom_call.1} parent=5 // pred_region
        %s5711 = ssub.s32 %s54, 2
      $region204: #{tpu_custom_call.1} parent=5 // pred_fallthru
        _
    $region6: #{tpu_custom_call.1} parent=1 // loop_footer
      %s58 = sadd.s32 1, %s54
    $region7: #{tpu_custom_call.1} parent=1 // loop_footer_branch
      %53 = sbr.rel target = $region3
    $region8: #{tpu_custom_call.1} parent=1 // loop_exit
      _
    %5712 = vsyncpa [#allocation4], 1
    %s5713 = scalar_lea.sflag [#allocation4], 1
    %5714 = vsyncpa %s5713, 1
    %5715 = vsyncpa [#allocation7], 1
    %5716 = vsyncpa [#allocation10], 1
    %s5717 = scalar_lea.sflag [#allocation10], 1
    %5718 = vsyncpa %s5717, 1
    %5719 = vsyncpa [#allocation13], 1
    %s5720 = scalar_lea.sflag [#allocation13], 1
    %5721 = vsyncpa %s5720, 1
    %5722 = vsyncpa [#allocation16], 1
    %s5723 = scalar_lea.sflag [#allocation16], 1
    %5724 = vsyncpa %s5723, 1
    %5725 = vsyncpa [#allocation19], 1
    %s5726 = scalar_lea.sflag [#allocation19], 1
    %5727 = vsyncpa %s5726, 1
    %5728 = vsyncpa [#allocation22], 1
    %s5729 = scalar_lea.sflag [#allocation22], 1
    %5730 = vsyncpa %s5729, 1
    %5731 = vsyncpa [#allocation25], 1
    %s5732 = scalar_lea.sflag [#allocation25], 1
    %5733 = vsyncpa %s5732, 1
    %5734 = vsyncpa [#allocation5], 1
    %s5735 = scalar_lea.sflag [#allocation5], 1
    %5736 = vsyncpa %s5735, 1

</llo_original>
